<compile_context>
chip_gen: v7x
topology: tpu7x:2x2x1
jax: 0.10.0
libtpu: 0.0.40
codegen_flags: <defaults>
</compile_context>

<pallas_src>
import functools

import jax
import jax.numpy as jnp
from jax.experimental import pallas as pl
from jax.experimental.pallas import tpu as pltpu


def _round_up(x, m):
    return -(-x // m) * m


def _choose_block_items(n):
    """Items per grid step: multiple of 8, <= 128, aiming for >= 2 grid tiles."""
    return min(128, max(8, _round_up((n + 1) // 2, 8)))


# ----------------------------------------------------------------------------
# Pallas kernel: NewEncoder forward for a tile of T items
# ----------------------------------------------------------------------------
def _new_encoder_kernel(x_ref, wqkv_ref, w1_ref, b1_ref, w2_ref, b2_ref,
                        out_ref, *, num_heads, seq_valid, dim_k, dim_v):
    # x_ref: (T, S, D)  with S a multiple of 8 (padded rows are zero).
    T, S, D = x_ref.shape
    x2 = x_ref[...].reshape(T * S, D)                     # tile-aligned, no-op reshape

    # Fused Q|K|V projection: one (T*S, D) x (D, 2K+V) matmul on the MXU.
    qkv = jnp.dot(x2, wqkv_ref[...], preferred_element_type=jnp.float32)
    q = qkv[:, :dim_k].reshape(T, S, dim_k)
    k = qkv[:, dim_k:2 * dim_k].reshape(T, S, dim_k)
    v = qkv[:, 2 * dim_k:2 * dim_k + dim_v].reshape(T, S, dim_v)

    dk = dim_k // num_heads
    dv = dim_v // num_heads
    scale = 1.0 / float(dk) ** 0.5

    need_mask = seq_valid < S                             # static Python bool
    if need_mask:
        key_mask = jax.lax.broadcasted_iota(jnp.int32, (T, S, S), 2) < seq_valid

    # Per-head attention, batched over the T item axis.
    head_outs = []
    for h in range(num_heads):                            # static, small
        qh = q[:, :, h * dk:(h + 1) * dk]                 # (T, S, dk)
        kh = k[:, :, h * dk:(h + 1) * dk]
        vh = v[:, :, h * dv:(h + 1) * dv]
        dist = jnp.einsum("tqd,tkd->tqk", qh, kh,
                          preferred_element_type=jnp.float32) * scale
        if need_mask:
            dist = jnp.where(key_mask, dist, -1e30)       # mask padded keys
        m = jnp.max(dist, axis=-1, keepdims=True)
        e = jnp.exp(dist - m)
        p = e * pl.reciprocal(jnp.sum(e, axis=-1, keepdims=True), approx=True)
        head_outs.append(jnp.einsum("tqk,tkd->tqd", p, vh,
                                    preferred_element_type=jnp.float32))
    word_att = (head_outs[0] if num_heads == 1
                else jnp.concatenate(head_outs, axis=-1))  # (T, S, V)

    # news_layer: Linear(V,H) -> Tanh -> Linear(H,1) -> Softmax over seq
    wa2 = word_att.reshape(T * S, dim_v)
    hdn = jnp.tanh(jnp.dot(wa2, w1_ref[...], preferred_element_type=jnp.float32)
                   + b1_ref[...])                          # (T*S, HIDDEN)
    logits = jnp.sum(hdn * w2_ref[...], axis=-1, keepdims=True) + b2_ref[...]
    logits = logits.reshape(T, S, 1)
    if need_mask:
        row_mask = jax.lax.broadcasted_iota(jnp.int32, (T, S, 1), 1) < seq_valid
        logits = jnp.where(row_mask, logits, -1e30)        # mask padded rows
    m2 = jnp.max(logits, axis=1, keepdims=True)
    e2 = jnp.exp(logits - m2)
    aw = e2 * pl.reciprocal(jnp.sum(e2, axis=1, keepdims=True), approx=True)

    out_ref[...] = jnp.sum(word_att * aw, axis=1)          # (T, dim_v)


def new_encoder(x, params, num_heads):
    """Apply NewEncoder to a batch of items.  x: (N, S, D) -> (N, dim_v)."""
    wq, wk, wv, w1, b1, w2, b2 = params
    dim_k = wq.shape[1]
    dim_v = wv.shape[1]
    wqkv = jnp.concatenate([wq, wk, wv], axis=1)           # fused projection weight

    n_items, seq, dim_in = x.shape
    s_pad = _round_up(seq, 8)
    t = _choose_block_items(n_items)
    n_pad = _round_up(n_items, t)
    x_p = jnp.pad(x, ((0, n_pad - n_items), (0, s_pad - seq), (0, 0)))

    out = pl.pallas_call(
        functools.partial(_new_encoder_kernel, num_heads=num_heads,
                          seq_valid=seq, dim_k=dim_k, dim_v=dim_v),
        out_shape=jax.ShapeDtypeStruct((n_pad, dim_v), jnp.float32),
        grid=(n_pad // t,),
        in_specs=[
            pl.BlockSpec((t, s_pad, dim_in), lambda i: (i, 0, 0)),
            # Weights are grid-invariant (constant index_map): fetched once,
            # resident in VMEM across the whole grid.
            pl.BlockSpec(wqkv.shape, lambda i: (0, 0)),
            pl.BlockSpec(w1.shape, lambda i: (0, 0)),
            pl.BlockSpec(b1.shape, lambda i: (0, 0)),
            pl.BlockSpec(w2.shape, lambda i: (0, 0)),
            pl.BlockSpec(b2.shape, lambda i: (0, 0)),
        ],
        out_specs=pl.BlockSpec((t, dim_v), lambda i: (i, 0)),
        compiler_params=pltpu.CompilerParams(
            dimension_semantics=("parallel",)),
    )(x_p, wqkv, w1, b1, w2, b2)
    return out[:n_items]


# ----------------------------------------------------------------------------
# UserEncoder forward (glue in JAX, hot path in the Pallas kernel above)
# ----------------------------------------------------------------------------
def user_encoder_forward(params, his_tit, imp_tit, his_abs, imp_abs, num_heads):
    ne_params = params["new_encoder"]
    ue_params = params["user_encoder"]
    wt, wa = params["wt"], params["wa"]

    B, H, S, Dq = his_tit.shape
    I = imp_tit.shape[1]
    dim_v = ne_params[2].shape[1]

    # Single fused launch over all news items (his/imp x tit/abs).
    all_news = jnp.concatenate([
        his_tit.reshape(B * H, S, Dq),
        his_abs.reshape(B * H, S, Dq),
        imp_tit.reshape(B * I, S, Dq),
        imp_abs.reshape(B * I, S, Dq),
    ], axis=0)
    enc = new_encoder(all_news, ne_params, num_heads)      # (2BH+2BI, V)

    o = 0
    tit_emb = enc[o:o + B * H].reshape(B, H, dim_v); o += B * H
    abs_emb = enc[o:o + B * H].reshape(B, H, dim_v); o += B * H
    imp_t = enc[o:o + B * I].reshape(B, I, dim_v); o += B * I
    imp_a = enc[o:o + B * I].reshape(B, I, dim_v)

    user_emb = wt * tit_emb + wa * abs_emb                 # (B, H, V)
    user = new_encoder(user_emb, ue_params, num_heads)     # (B, V)

    imp = wt * imp_t + wa * imp_a                          # (B, I, V)
    return jnp.einsum("bv,biv->bi", user, imp)             # (B, I)


# ----------------------------------------------------------------------------
# Pure-JAX reference (for correctness check)
# ----------------------------------------------------------------------------
def _ref_new_encoder(x, params, num_heads):
    wq, wk, wv, w1, b1, w2, b2 = params
    B, n, _ = x.shape
    dk = wq.shape[1] // num_heads
    dv = wv.shape[1] // num_heads
    q = (x @ wq).reshape(B, n, num_heads, dk).transpose(0, 2, 1, 3)
    k = (x @ wk).reshape(B, n, num_heads, dk).transpose(0, 2, 1, 3)
    v = (x @ wv).reshape(B, n, num_heads, dv).transpose(0, 2, 1, 3)
    dist = jnp.einsum("bhqd,bhkd->bhqk", q, k) / jnp.sqrt(jnp.float32(dk))
    dist = jax.nn.softmax(dist, axis=-1)
    att = jnp.einsum("bhqk,bhkd->bhqd", dist, v)
    att = att.transpose(0, 2, 1, 3).reshape(B, n, -1)
    h = jnp.tanh(att @ w1 + b1)
    logits = (h @ w2.T + b2)[..., 0]
    aw = jax.nn.softmax(logits, axis=1)
    return jnp.sum(att * aw[..., None], axis=1)


def _ref_forward(params, his_tit, imp_tit, his_abs, imp_abs, num_heads):
    ne, ue = params["new_encoder"], params["user_encoder"]
    wt, wa = params["wt"], params["wa"]
    dim_v = ne[2].shape[1]

    def enc(x4):
        Bx, M, s, d = x4.shape
        return _ref_new_encoder(x4.reshape(Bx * M, s, d), ne, num_heads).reshape(Bx, M, dim_v)

    tit_emb, abs_emb = enc(his_tit), enc(his_abs)
    user = _ref_new_encoder(wt * tit_emb + wa * abs_emb, ue, num_heads)
    imp = wt * enc(imp_tit) + wa * enc(imp_abs)
    return jnp.einsum("bv,biv->bi", user, imp)


# ----------------------------------------------------------------------------
# Parameter init + main
# ----------------------------------------------------------------------------
def _init_new_encoder_params(key, dim_in, dim_k, dim_v, hidden):
    ks = jax.random.split(key, 7)
    wq = 0.1 * jax.random.normal(ks[0], (dim_in, dim_k), jnp.float32)
    wk = 0.1 * jax.random.normal(ks[1], (dim_in, dim_k), jnp.float32)
    wv = 0.1 * jax.random.normal(ks[2], (dim_in, dim_v), jnp.float32)
    w1 = 0.1 * jax.random.normal(ks[3], (dim_v, hidden), jnp.float32)
    b1 = 0.1 * jax.random.normal(ks[4], (1, hidden), jnp.float32)
    w2 = 0.1 * jax.random.normal(ks[5], (1, hidden), jnp.float32)   # row vector of Linear(hidden,1)
    b2 = 0.1 * jax.random.normal(ks[6], (1, 1), jnp.float32)
    return (wq, wk, wv, w1, b1, w2, b2)


if __name__ == "__main__":
    # config: Q=16, K=16, V=16, NUM_HEADS=2, HIDDEN_SIZE=32 (DROUPT -> identity at eval)
    Q = K = V = 16
    NUM_HEADS = 2
    HIDDEN = 32
    B, H_HIST, I_IMP, SEQ = 2, 3, 2, 8

    key = jax.random.PRNGKey(0)
    k_ne, k_ue, k_w, k_in = jax.random.split(key, 4)

    params = {
        "new_encoder": _init_new_encoder_params(k_ne, Q, K, V, HIDDEN),
        "user_encoder": _init_new_encoder_params(k_ue, V, V, V, HIDDEN),
        "wt": jax.random.uniform(jax.random.fold_in(k_w, 0), (1,), jnp.float32),
        "wa": jax.random.uniform(jax.random.fold_in(k_w, 1), (1,), jnp.float32),
    }

    ki = jax.random.split(k_in, 4)
    his_tit = jax.random.normal(ki[0], (B, H_HIST, SEQ, Q), jnp.float32)
    imp_tit = jax.random.normal(ki[1], (B, I_IMP, SEQ, Q), jnp.float32)
    his_abs = jax.random.normal(ki[2], (B, H_HIST, SEQ, Q), jnp.float32)
    imp_abs = jax.random.normal(ki[3], (B, I_IMP, SEQ, Q), jnp.float32)

    score = user_encoder_forward(params, his_tit, imp_tit, his_abs, imp_abs, NUM_HEADS)
    score = jax.block_until_ready(score)

    ref = _ref_forward(params, his_tit, imp_tit, his_abs, imp_abs, NUM_HEADS)
    assert score.shape == (B, I_IMP)
    # Tolerance accounts for pl.reciprocal(approx=True) in the two softmax
    # denominators of both stacked encoders (hardware approximate reciprocal).
    assert jnp.allclose(score, ref, atol=1e-2, rtol=2e-2), (score, ref)

    print("KERNEL_OK")
</pallas_src>

<mosaic_0001>
module attributes {stable_mosaic.version = 11 : i64} {
  func.func @_new_encoder_kernel(%arg0: i32, %arg1: memref<16x8x16xf32, #tpu.memory_space<vmem>>, %arg2: memref<16x48xf32, #tpu.memory_space<vmem>>, %arg3: memref<16x32xf32, #tpu.memory_space<vmem>>, %arg4: memref<1x32xf32, #tpu.memory_space<vmem>>, %arg5: memref<1x32xf32, #tpu.memory_space<vmem>>, %arg6: memref<1x1xf32, #tpu.memory_space<vmem>>, %arg7: memref<16x16xf32, #tpu.memory_space<vmem>>) attributes {dimension_semantics = [#tpu.dimension_semantics<parallel>], iteration_bounds = array<i64: 2>, scalar_prefetch = 0 : i64, scratch_operands = 0 : i64, tpu.core_type = #tpu.core_type<tc>, window_params = [{transform_indices = @transform_0, window_bounds = array<i64: 16, 8, 16>}, {pipeline_mode = #tpu.pipeline_mode<synchronous>, transform_indices = @transform_1, window_bounds = array<i64: 16, 48>}, {pipeline_mode = #tpu.pipeline_mode<synchronous>, transform_indices = @transform_2, window_bounds = array<i64: 16, 32>}, {pipeline_mode = #tpu.pipeline_mode<synchronous>, transform_indices = @transform_3, window_bounds = array<i64: 1, 32>}, {pipeline_mode = #tpu.pipeline_mode<synchronous>, transform_indices = @transform_4, window_bounds = array<i64: 1, 32>}, {pipeline_mode = #tpu.pipeline_mode<synchronous>, transform_indices = @transform_5, window_bounds = array<i64: 1, 1>}, {transform_indices = @transform_6, window_bounds = array<i64: 16, 16>}]} {
    %c0 = arith.constant 0 : index
    %c0_0 = arith.constant 0 : index
    %c0_1 = arith.constant 0 : index
    %0 = vector.load %arg1[%c0, %c0_0, %c0_1] : memref<16x8x16xf32, #tpu.memory_space<vmem>>, vector<16x8x16xf32>
    %1 = vector.shape_cast %0 : vector<16x8x16xf32> to vector<128x16xf32>
    %c0_2 = arith.constant 0 : index
    %c0_3 = arith.constant 0 : index
    %2 = vector.load %arg2[%c0_2, %c0_3] : memref<16x48xf32, #tpu.memory_space<vmem>>, vector<16x48xf32>
    %cst = arith.constant dense<0.000000e+00> : vector<128x48xf32>
    %3 = tpu.matmul %1, %2, %cst {dimension_numbers = #tpu.dot_dimension_numbers<[1], [0], [0], [1], [0, 0, 1, 1], [], []>} : vector<128x16xf32>, vector<16x48xf32>, vector<128x48xf32> -> vector<128x48xf32>
    %4 = vector.extract_strided_slice %3 {offsets = [0, 0], sizes = [128, 16], strides = [1, 1]} : vector<128x48xf32> to vector<128x16xf32>
    %5 = vector.shape_cast %4 : vector<128x16xf32> to vector<16x8x16xf32>
    %6 = vector.extract_strided_slice %3 {offsets = [0, 16], sizes = [128, 16], strides = [1, 1]} : vector<128x48xf32> to vector<128x16xf32>
    %7 = vector.shape_cast %6 : vector<128x16xf32> to vector<16x8x16xf32>
    %8 = vector.extract_strided_slice %3 {offsets = [0, 32], sizes = [128, 16], strides = [1, 1]} : vector<128x48xf32> to vector<128x16xf32>
    %9 = vector.shape_cast %8 : vector<128x16xf32> to vector<16x8x16xf32>
    %10 = vector.extract_strided_slice %5 {offsets = [0, 0, 0], sizes = [16, 8, 8], strides = [1, 1, 1]} : vector<16x8x16xf32> to vector<16x8x8xf32>
    %11 = vector.extract_strided_slice %7 {offsets = [0, 0, 0], sizes = [16, 8, 8], strides = [1, 1, 1]} : vector<16x8x16xf32> to vector<16x8x8xf32>
    %12 = vector.extract_strided_slice %9 {offsets = [0, 0, 0], sizes = [16, 8, 8], strides = [1, 1, 1]} : vector<16x8x16xf32> to vector<16x8x8xf32>
    "tpu.trace_start"() <{level = 10 : i32, message = "tqd,tkd->tqk"}> : () -> ()
    %cst_4 = arith.constant dense<0.000000e+00> : vector<16x8x8xf32>
    %13 = tpu.matmul %10, %11, %cst_4 {dimension_numbers = #tpu.dot_dimension_numbers<[2], [2], [1], [1], [0, 0, 0, 1, 1, 1], [0], [0]>} : vector<16x8x8xf32>, vector<16x8x8xf32>, vector<16x8x8xf32> -> vector<16x8x8xf32>
    "tpu.trace_stop"() : () -> ()
    %cst_5 = arith.constant 0.353553385 : f32
    %14 = vector.broadcast %cst_5 : f32 to vector<16x8x8xf32>
    %15 = arith.mulf %13, %14 : vector<16x8x8xf32>
    %cst_6 = arith.constant dense<0xFF800000> : vector<16x8xf32>
    %16 = vector.multi_reduction <maximumf>, %15, %cst_6 [2] : vector<16x8x8xf32> to vector<16x8xf32>
    %17 = vector.shape_cast %16 : vector<16x8xf32> to vector<16x8x1xf32>
    %18 = vector.broadcast %17 : vector<16x8x1xf32> to vector<16x8x8xf32>
    %19 = arith.subf %15, %18 : vector<16x8x8xf32>
    %20 = math.exp %19 : vector<16x8x8xf32>
    %cst_7 = arith.constant dense<0.000000e+00> : vector<16x8xf32>
    %21 = vector.multi_reduction <add>, %20, %cst_7 [2] : vector<16x8x8xf32> to vector<16x8xf32>
    %22 = vector.shape_cast %21 : vector<16x8xf32> to vector<16x8x1xf32>
    %23 = tpu.reciprocal %22 {approx = true} : vector<16x8x1xf32> -> vector<16x8x1xf32>
    %24 = vector.broadcast %23 : vector<16x8x1xf32> to vector<16x8x8xf32>
    %25 = arith.mulf %20, %24 : vector<16x8x8xf32>
    "tpu.trace_start"() <{level = 10 : i32, message = "tqk,tkd->tqd"}> : () -> ()
    %cst_8 = arith.constant dense<0.000000e+00> : vector<16x8x8xf32>
    %26 = tpu.matmul %25, %12, %cst_8 {dimension_numbers = #tpu.dot_dimension_numbers<[2], [1], [1], [2], [0, 0, 0, 1, 1, 2], [0], [0]>} : vector<16x8x8xf32>, vector<16x8x8xf32>, vector<16x8x8xf32> -> vector<16x8x8xf32>
    "tpu.trace_stop"() : () -> ()
    %27 = vector.extract_strided_slice %5 {offsets = [0, 0, 8], sizes = [16, 8, 8], strides = [1, 1, 1]} : vector<16x8x16xf32> to vector<16x8x8xf32>
    %28 = vector.extract_strided_slice %7 {offsets = [0, 0, 8], sizes = [16, 8, 8], strides = [1, 1, 1]} : vector<16x8x16xf32> to vector<16x8x8xf32>
    %29 = vector.extract_strided_slice %9 {offsets = [0, 0, 8], sizes = [16, 8, 8], strides = [1, 1, 1]} : vector<16x8x16xf32> to vector<16x8x8xf32>
    "tpu.trace_start"() <{level = 10 : i32, message = "tqd,tkd->tqk"}> : () -> ()
    %cst_9 = arith.constant dense<0.000000e+00> : vector<16x8x8xf32>
    %30 = tpu.matmul %27, %28, %cst_9 {dimension_numbers = #tpu.dot_dimension_numbers<[2], [2], [1], [1], [0, 0, 0, 1, 1, 1], [0], [0]>} : vector<16x8x8xf32>, vector<16x8x8xf32>, vector<16x8x8xf32> -> vector<16x8x8xf32>
    "tpu.trace_stop"() : () -> ()
    %cst_10 = arith.constant 0.353553385 : f32
    %31 = vector.broadcast %cst_10 : f32 to vector<16x8x8xf32>
    %32 = arith.mulf %30, %31 : vector<16x8x8xf32>
    %cst_11 = arith.constant dense<0xFF800000> : vector<16x8xf32>
    %33 = vector.multi_reduction <maximumf>, %32, %cst_11 [2] : vector<16x8x8xf32> to vector<16x8xf32>
    %34 = vector.shape_cast %33 : vector<16x8xf32> to vector<16x8x1xf32>
    %35 = vector.broadcast %34 : vector<16x8x1xf32> to vector<16x8x8xf32>
    %36 = arith.subf %32, %35 : vector<16x8x8xf32>
    %37 = math.exp %36 : vector<16x8x8xf32>
    %cst_12 = arith.constant dense<0.000000e+00> : vector<16x8xf32>
    %38 = vector.multi_reduction <add>, %37, %cst_12 [2] : vector<16x8x8xf32> to vector<16x8xf32>
    %39 = vector.shape_cast %38 : vector<16x8xf32> to vector<16x8x1xf32>
    %40 = tpu.reciprocal %39 {approx = true} : vector<16x8x1xf32> -> vector<16x8x1xf32>
    %41 = vector.broadcast %40 : vector<16x8x1xf32> to vector<16x8x8xf32>
    %42 = arith.mulf %37, %41 : vector<16x8x8xf32>
    "tpu.trace_start"() <{level = 10 : i32, message = "tqk,tkd->tqd"}> : () -> ()
    %cst_13 = arith.constant dense<0.000000e+00> : vector<16x8x8xf32>
    %43 = tpu.matmul %42, %29, %cst_13 {dimension_numbers = #tpu.dot_dimension_numbers<[2], [1], [1], [2], [0, 0, 0, 1, 1, 2], [0], [0]>} : vector<16x8x8xf32>, vector<16x8x8xf32>, vector<16x8x8xf32> -> vector<16x8x8xf32>
    "tpu.trace_stop"() : () -> ()
    %44 = tpu.concatenate %26, %43 in 2 : vector<16x8x8xf32>, vector<16x8x8xf32> -> vector<16x8x16xf32>
    %45 = vector.shape_cast %44 : vector<16x8x16xf32> to vector<128x16xf32>
    %c0_14 = arith.constant 0 : index
    %c0_15 = arith.constant 0 : index
    %46 = vector.load %arg3[%c0_14, %c0_15] : memref<16x32xf32, #tpu.memory_space<vmem>>, vector<16x32xf32>
    %cst_16 = arith.constant dense<0.000000e+00> : vector<128x32xf32>
    %47 = tpu.matmul %45, %46, %cst_16 {dimension_numbers = #tpu.dot_dimension_numbers<[1], [0], [0], [1], [0, 0, 1, 1], [], []>} : vector<128x16xf32>, vector<16x32xf32>, vector<128x32xf32> -> vector<128x32xf32>
    %c0_17 = arith.constant 0 : index
    %c0_18 = arith.constant 0 : index
    %48 = vector.load %arg4[%c0_17, %c0_18] : memref<1x32xf32, #tpu.memory_space<vmem>>, vector<1x32xf32>
    %49 = vector.broadcast %48 : vector<1x32xf32> to vector<128x32xf32>
    %50 = arith.addf %47, %49 : vector<128x32xf32>
    %51 = math.tanh %50 : vector<128x32xf32>
    %c0_19 = arith.constant 0 : index
    %c0_20 = arith.constant 0 : index
    %52 = vector.load %arg5[%c0_19, %c0_20] : memref<1x32xf32, #tpu.memory_space<vmem>>, vector<1x32xf32>
    %53 = vector.broadcast %52 : vector<1x32xf32> to vector<128x32xf32>
    %54 = arith.mulf %51, %53 : vector<128x32xf32>
    %cst_21 = arith.constant dense<0.000000e+00> : vector<128xf32>
    %55 = vector.multi_reduction <add>, %54, %cst_21 [1] : vector<128x32xf32> to vector<128xf32>
    %56 = vector.shape_cast %55 : vector<128xf32> to vector<128x1xf32>
    %c0_22 = arith.constant 0 : index
    %c0_23 = arith.constant 0 : index
    %57 = vector.load %arg6[%c0_22, %c0_23] : memref<1x1xf32, #tpu.memory_space<vmem>>, vector<1x1xf32>
    %58 = vector.broadcast %57 : vector<1x1xf32> to vector<128x1xf32>
    %59 = arith.addf %56, %58 : vector<128x1xf32>
    %60 = vector.shape_cast %59 : vector<128x1xf32> to vector<16x8x1xf32>
    %cst_24 = arith.constant dense<0xFF800000> : vector<16x1xf32>
    %61 = vector.multi_reduction <maximumf>, %60, %cst_24 [1] : vector<16x8x1xf32> to vector<16x1xf32>
    %62 = vector.shape_cast %61 : vector<16x1xf32> to vector<16x1x1xf32>
    %63 = vector.broadcast %62 : vector<16x1x1xf32> to vector<16x8x1xf32>
    %64 = arith.subf %60, %63 : vector<16x8x1xf32>
    %65 = math.exp %64 : vector<16x8x1xf32>
    %cst_25 = arith.constant dense<0.000000e+00> : vector<16x1xf32>
    %66 = vector.multi_reduction <add>, %65, %cst_25 [1] : vector<16x8x1xf32> to vector<16x1xf32>
    %67 = vector.shape_cast %66 : vector<16x1xf32> to vector<16x1x1xf32>
    %68 = tpu.reciprocal %67 {approx = true} : vector<16x1x1xf32> -> vector<16x1x1xf32>
    %69 = vector.broadcast %68 : vector<16x1x1xf32> to vector<16x8x1xf32>
    %70 = arith.mulf %65, %69 : vector<16x8x1xf32>
    %71 = vector.broadcast %70 : vector<16x8x1xf32> to vector<16x8x16xf32>
    %72 = arith.mulf %44, %71 : vector<16x8x16xf32>
    %cst_26 = arith.constant dense<0.000000e+00> : vector<16x16xf32>
    %73 = vector.multi_reduction <add>, %72, %cst_26 [1] : vector<16x8x16xf32> to vector<16x16xf32>
    %c0_27 = arith.constant 0 : index
    %c0_28 = arith.constant 0 : index
    %74 = vector.load %arg7[%c0_27, %c0_28] : memref<16x16xf32, #tpu.memory_space<vmem>>, vector<16x16xf32>
    tpu.vector_store %arg7[%c0_27, %c0_28], %73 {strides = array<i32>} : memref<16x16xf32, #tpu.memory_space<vmem>>, vector<16x16xf32>,
    return
  }
  func.func @transform_0(%arg0: i32) -> (i32, i32, i32) {
    %c0_i32 = arith.constant 0 : i32
    %c0_i32_0 = arith.constant 0 : i32
    %c0_i32_1 = arith.constant 0 : i32
    return %arg0, %c0_i32, %c0_i32_0 : i32, i32, i32
  }
  func.func @transform_1(%arg0: i32) -> (i32, i32) {
    %c0_i32 = arith.constant 0 : i32
    %c0_i32_0 = arith.constant 0 : i32
    %c0_i32_1 = arith.constant 0 : i32
    return %c0_i32, %c0_i32_0 : i32, i32
  }
  func.func @transform_2(%arg0: i32) -> (i32, i32) {
    %c0_i32 = arith.constant 0 : i32
    %c0_i32_0 = arith.constant 0 : i32
    %c0_i32_1 = arith.constant 0 : i32
    return %c0_i32, %c0_i32_0 : i32, i32
  }
  func.func @transform_3(%arg0: i32) -> (i32, i32) {
    %c0_i32 = arith.constant 0 : i32
    %c0_i32_0 = arith.constant 0 : i32
    %c0_i32_1 = arith.constant 0 : i32
    return %c0_i32, %c0_i32_0 : i32, i32
  }
  func.func @transform_4(%arg0: i32) -> (i32, i32) {
    %c0_i32 = arith.constant 0 : i32
    %c0_i32_0 = arith.constant 0 : i32
    %c0_i32_1 = arith.constant 0 : i32
    return %c0_i32, %c0_i32_0 : i32, i32
  }
  func.func @transform_5(%arg0: i32) -> (i32, i32) {
    %c0_i32 = arith.constant 0 : i32
    %c0_i32_0 = arith.constant 0 : i32
    %c0_i32_1 = arith.constant 0 : i32
    return %c0_i32, %c0_i32_0 : i32, i32
  }
  func.func @transform_6(%arg0: i32) -> (i32, i32) {
    %c0_i32 = arith.constant 0 : i32
    %c0_i32_0 = arith.constant 0 : i32
    return %arg0, %c0_i32 : i32, i32
  }
}

</mosaic_0001>

<llo_original>
// kernel: tpu_custom_call.1
$region0: #{tpu_custom_call.1}
  #allocation0 [shape = 'u32[]', space=smem, size = 0x4, offset = 0x4, fixed_abs, tag = 'smem constant byte address 0x4 - core index']
  #allocation1 [shape = 'u32[144,128]{1,0:T(1,128)}', space=vmem, size = 0x12000, scoped, tag = 'internal scratch']
  #allocation2 [shape = 'f32[1,1]{1,0:T(1,128)S(1)}', space=vmem, size = 0x200, scoped, tag = 'scoped memory for tpu_custom_call.1']
  %s0 = inlined_call_operand.vmem [shape: f32[32,8,16], index: 0, kind: input, shape index: {}]
  %s1 = inlined_call_operand.vmem [shape: f32[16,48], index: 1, kind: input, shape index: {}]
  %s2 = inlined_call_operand.vmem [shape: f32[16,32], index: 2, kind: input, shape index: {}]
  %s3 = inlined_call_operand.vmem [shape: f32[1,32], index: 3, kind: input, shape index: {}]
  %s4 = inlined_call_operand.vmem [shape: f32[1,32], index: 4, kind: input, shape index: {}]
  %s5 = inlined_call_operand.<no memory space> [shape: f32[1,1], index: 5, kind: input, shape index: {}]
  %s6 = inlined_call_operand.vmem [shape: f32[32,16], index: 6, kind: output, shape index: {}]
  %s7 = sld [smem:[#allocation0]]
  $region57: #{tpu_custom_call.1} parent=0
    _
  %s9 = ssub.s32 1, %s7
  %s10 = scalar_select 0, %s9, %s7
  %v11 = vstv %s5
  %12 = vst [vmem:[#allocation2] sm:$0x1] %v11
  loop: start=0, step=1, limit=4
  $region2: #{tpu_custom_call.1} parent=0 // loop_pre_header
    _
  $region3: #{tpu_custom_call.1} parent=0 // loop_header
    %s14 = sphi 0, %s18
    %p15 = scmp.ge.s32.totalorder %s14, 4
    %s24 = sphi 0, %s26
    %s27 = sphi 0, %s24
    %s28 = sphi 0, %s27
    %s44 = sphi 0, %s28
    %s48 = sphi 0, %s48
    %s50 = sphi 0, %s48
    %s51 = sphi 0, %s50
    %s65 = sphi 0, %s51
    %s69 = sphi 0, %s69
    %s71 = sphi 0, %s69
    %s72 = sphi 0, %s71
    %s86 = sphi 0, %s72
    %s90 = sphi 0, %s90
    %s92 = sphi 0, %s90
    %s93 = sphi 0, %s92
    %s107 = sphi 0, %s93
    %s111 = sphi 0, %s111
    %s113 = sphi 0, %s111
    %s114 = sphi 0, %s113
    %s128 = sphi 0, %s114
    %s132 = sphi 0, %s132
    %s134 = sphi 0, %s132
    %s135 = sphi 0, %s134
    %s149 = sphi 0, %s135
    %s155 = sphi 0, %s157
    %s158 = sphi 0, %s155
    %s159 = sphi 0, %s158
    %s175 = sphi 0, %s159
  $region4: #{tpu_custom_call.1} parent=0 // loop_header_branch
    %17 = sbr.rel (%p15) target = $region8
  $region5: #{tpu_custom_call.1} parent=0 // loop_body
    %s19 = ssub.s32 %s14, 1
    %s20 = ssub.s32 %s14, 2
    %s21 = sadd.s32 %s14, 1
    %s22 = ssub.s32 %s14, %s21
    %p23 = scmp.eq.s32.totalorder %s22, 0
    %s25 = sadd.s32 %s24, 1
    %s26 = scalar_select %p23, %s24, %s25
    %p29 = pneg %p23
    %p30 = scmp.eq.s32.totalorder %s14, 1
    %p31 = por %p29, %p30
    %p32 = scmp.ne.s32.totalorder %s24, %s27
    %p33 = scmp.eq.s32.totalorder %s14, 0
    %p34 = por %p32, %p33
    %p35 = scmp.ne.s32.totalorder %s24, %s27
    %p36 = scmp.eq.s32.totalorder %s19, 1
    %p37 = por %p35, %p36
    %p38 = scmp.ne.s32.totalorder %s27, %s28
    %p39 = scmp.eq.s32.totalorder %s19, 0
    %p40 = por %p38, %p39
    %p41 = scmp.ne.s32.totalorder %s27, %s28
    %p42 = scmp.eq.s32.totalorder %s20, 1
    %p43 = por %p41, %p42
    %p45 = scmp.ne.s32.totalorder %s28, %s44
    %p46 = scmp.eq.s32.totalorder %s20, 0
    %p47 = por %p45, %p46
    %s49 = sadd.s32 %s48, 1
    %p52 = scmp.eq.s32.totalorder %s14, 1
    %p53 = scmp.ne.s32.totalorder %s48, %s50
    %p54 = scmp.eq.s32.totalorder %s14, 0
    %p55 = por %p53, %p54
    %p56 = scmp.ne.s32.totalorder %s48, %s50
    %p57 = scmp.eq.s32.totalorder %s19, 1
    %p58 = por %p56, %p57
    %p59 = scmp.ne.s32.totalorder %s50, %s51
    %p60 = scmp.eq.s32.totalorder %s19, 0
    %p61 = por %p59, %p60
    %p62 = scmp.ne.s32.totalorder %s50, %s51
    %p63 = scmp.eq.s32.totalorder %s20, 1
    %p64 = por %p62, %p63
    %p66 = scmp.ne.s32.totalorder %s51, %s65
    %p67 = scmp.eq.s32.totalorder %s20, 0
    %p68 = por %p66, %p67
    %s70 = sadd.s32 %s69, 1
    %p73 = scmp.eq.s32.totalorder %s14, 1
    %p74 = scmp.ne.s32.totalorder %s69, %s71
    %p75 = scmp.eq.s32.totalorder %s14, 0
    %p76 = por %p74, %p75
    %p77 = scmp.ne.s32.totalorder %s69, %s71
    %p78 = scmp.eq.s32.totalorder %s19, 1
    %p79 = por %p77, %p78
    %p80 = scmp.ne.s32.totalorder %s71, %s72
    %p81 = scmp.eq.s32.totalorder %s19, 0
    %p82 = por %p80, %p81
    %p83 = scmp.ne.s32.totalorder %s71, %s72
    %p84 = scmp.eq.s32.totalorder %s20, 1
    %p85 = por %p83, %p84
    %p87 = scmp.ne.s32.totalorder %s72, %s86
    %p88 = scmp.eq.s32.totalorder %s20, 0
    %p89 = por %p87, %p88
    %s91 = sadd.s32 %s90, 1
    %p94 = scmp.eq.s32.totalorder %s14, 1
    %p95 = scmp.ne.s32.totalorder %s90, %s92
    %p96 = scmp.eq.s32.totalorder %s14, 0
    %p97 = por %p95, %p96
    %p98 = scmp.ne.s32.totalorder %s90, %s92
    %p99 = scmp.eq.s32.totalorder %s19, 1
    %p100 = por %p98, %p99
    %p101 = scmp.ne.s32.totalorder %s92, %s93
    %p102 = scmp.eq.s32.totalorder %s19, 0
    %p103 = por %p101, %p102
    %p104 = scmp.ne.s32.totalorder %s92, %s93
    %p105 = scmp.eq.s32.totalorder %s20, 1
    %p106 = por %p104, %p105
    %p108 = scmp.ne.s32.totalorder %s93, %s107
    %p109 = scmp.eq.s32.totalorder %s20, 0
    %p110 = por %p108, %p109
    %s112 = sadd.s32 %s111, 1
    %p115 = scmp.eq.s32.totalorder %s14, 1
    %p116 = scmp.ne.s32.totalorder %s111, %s113
    %p117 = scmp.eq.s32.totalorder %s14, 0
    %p118 = por %p116, %p117
    %p119 = scmp.ne.s32.totalorder %s111, %s113
    %p120 = scmp.eq.s32.totalorder %s19, 1
    %p121 = por %p119, %p120
    %p122 = scmp.ne.s32.totalorder %s113, %s114
    %p123 = scmp.eq.s32.totalorder %s19, 0
    %p124 = por %p122, %p123
    %p125 = scmp.ne.s32.totalorder %s113, %s114
    %p126 = scmp.eq.s32.totalorder %s20, 1
    %p127 = por %p125, %p126
    %p129 = scmp.ne.s32.totalorder %s114, %s128
    %p130 = scmp.eq.s32.totalorder %s20, 0
    %p131 = por %p129, %p130
    %s133 = sadd.s32 %s132, 1
    %p136 = scmp.eq.s32.totalorder %s14, 1
    %p137 = scmp.ne.s32.totalorder %s132, %s134
    %p138 = scmp.eq.s32.totalorder %s14, 0
    %p139 = por %p137, %p138
    %p140 = scmp.ne.s32.totalorder %s132, %s134
    %p141 = scmp.eq.s32.totalorder %s19, 1
    %p142 = por %p140, %p141
    %p143 = scmp.ne.s32.totalorder %s134, %s135
    %p144 = scmp.eq.s32.totalorder %s19, 0
    %p145 = por %p143, %p144
    %p146 = scmp.ne.s32.totalorder %s134, %s135
    %p147 = scmp.eq.s32.totalorder %s20, 1
    %p148 = por %p146, %p147
    %p150 = scmp.ne.s32.totalorder %s135, %s149
    %p151 = scmp.eq.s32.totalorder %s20, 0
    %p152 = por %p150, %p151
    %s153 = ssub.s32 %s14, %s21
    %p154 = scmp.eq.s32.totalorder %s153, 0
    %s156 = sadd.s32 %s155, 1
    %s157 = scalar_select %p154, %s155, %s156
    %p160 = pneg %p154
    %p161 = scmp.eq.s32.totalorder %s14, 1
    %p162 = por %p160, %p161
    %p163 = scmp.ne.s32.totalorder %s155, %s158
    %p164 = scmp.eq.s32.totalorder %s14, 0
    %p165 = por %p163, %p164
    %p166 = scmp.ne.s32.totalorder %s155, %s158
    %p167 = scmp.eq.s32.totalorder %s19, 1
    %p168 = por %p166, %p167
    %p169 = scmp.ne.s32.totalorder %s158, %s159
    %p170 = scmp.eq.s32.totalorder %s19, 0
    %p171 = por %p169, %p170
    %p172 = scmp.ne.s32.totalorder %s158, %s159
    %p173 = scmp.eq.s32.totalorder %s20, 1
    %p174 = por %p172, %p173
    %p176 = scmp.ne.s32.totalorder %s159, %s175
    %p177 = scmp.eq.s32.totalorder %s20, 0
    %p178 = por %p176, %p177
    %p179 = scmp.le.s32.totalorder 1, %s14
    %p180 = scmp.lt.s32.totalorder %s14, 3
    %p181 = pnand %p179, %p180
    %p182 = pneg %p181
    // Predicated region
    $region9: #{tpu_custom_call.1} parent=5 // pred_check
      _
    $region10: #{tpu_custom_call.1} parent=5 // pred_check_branch
      %184 = sbr.rel (%p181) target = $region12
    $region11: #{tpu_custom_call.1} parent=5 // pred_region
      %s185 = ssub.s32 %s14, 1
      // Predicated region
      $region13: #{tpu_custom_call.1} parent=11 // pred_check
        %p186 = pneg %p61
      $region14: #{tpu_custom_call.1} parent=11 // pred_check_branch
        %188 = sbr.rel (%p186) target = $region16
      $region15: #{tpu_custom_call.1} parent=11 // pred_region
        _
      $region16: #{tpu_custom_call.1} parent=11 // pred_fallthru
        _
      // Predicated region
      $region17: #{tpu_custom_call.1} parent=11 // pred_check
        %p189 = pneg %p82
      $region18: #{tpu_custom_call.1} parent=11 // pred_check_branch
        %191 = sbr.rel (%p189) target = $region20
      $region19: #{tpu_custom_call.1} parent=11 // pred_region
        _
      $region20: #{tpu_custom_call.1} parent=11 // pred_fallthru
        _
      // Predicated region
      $region21: #{tpu_custom_call.1} parent=11 // pred_check
        %p192 = pneg %p103
      $region22: #{tpu_custom_call.1} parent=11 // pred_check_branch
        %194 = sbr.rel (%p192) target = $region24
      $region23: #{tpu_custom_call.1} parent=11 // pred_region
        _
      $region24: #{tpu_custom_call.1} parent=11 // pred_fallthru
        _
      // Predicated region
      $region25: #{tpu_custom_call.1} parent=11 // pred_check
        %p195 = pneg %p124
      $region26: #{tpu_custom_call.1} parent=11 // pred_check_branch
        %197 = sbr.rel (%p195) target = $region28
      $region27: #{tpu_custom_call.1} parent=11 // pred_region
        _
      $region28: #{tpu_custom_call.1} parent=11 // pred_fallthru
        _
      // Predicated region
      $region29: #{tpu_custom_call.1} parent=11 // pred_check
        %p198 = pneg %p145
      $region30: #{tpu_custom_call.1} parent=11 // pred_check_branch
        %200 = sbr.rel (%p198) target = $region32
      $region31: #{tpu_custom_call.1} parent=11 // pred_region
        _
      $region32: #{tpu_custom_call.1} parent=11 // pred_fallthru
        _
    $region12: #{tpu_custom_call.1} parent=5 // pred_fallthru
      _
    %p201 = scmp.lt.s32.totalorder %s14, 2
    // Predicated region
    $region33: #{tpu_custom_call.1} parent=5 // pred_check
      %p202 = pneg %p201
    $region34: #{tpu_custom_call.1} parent=5 // pred_check_branch
      %204 = sbr.rel (%p202) target = $region36
    $region35: #{tpu_custom_call.1} parent=5 // pred_region
      // Predicated region
      $region37: #{tpu_custom_call.1} parent=35 // pred_check
        %p205 = pneg %p34
      $region38: #{tpu_custom_call.1} parent=35 // pred_check_branch
        %207 = sbr.rel (%p205) target = $region40
      $region39: #{tpu_custom_call.1} parent=35 // pred_region
        %s208 = smul.u32 16, %s14
        %p209 = scmp.lt.s32.totalorder %s208, 31
        %s210 = scalar_select %p209, %s208, 31
        %s211 = smul.addr %s210, 8
        %s212 = scalar_lea.vmem %s0, %s211
        %s213 = smul.u32 16, %s14
      $region40: #{tpu_custom_call.1} parent=35 // pred_fallthru
        _
    $region36: #{tpu_custom_call.1} parent=5 // pred_fallthru
      _
    %p214 = scmp.le.s32.totalorder 1, %s14
    %p215 = scmp.lt.s32.totalorder %s14, 3
    %p216 = pnand %p214, %p215
    %p217 = pneg %p216
    // Predicated region
    $region41: #{tpu_custom_call.1} parent=5 // pred_check
      _
    $region42: #{tpu_custom_call.1} parent=5 // pred_check_branch
      %219 = sbr.rel (%p216) target = $region44
    $region43: #{tpu_custom_call.1} parent=5 // pred_region
      %s220 = ssub.s32 %s14, 1
      %s221 = smul.u32 16, %s19
      %p222 = scmp.lt.s32.totalorder %s221, 31
      %s223 = scalar_select %p222, %s221, 31
      %s224 = smul.addr %s223, 8
      %s225 = scalar_lea.vmem %s0, %s224
      %p226 = pneg %p40
      %p227 = pneg %p37
      %p228 = pneg %p61
      %p229 = pneg %p58
      %p230 = pneg %p82
      %p231 = pneg %p79
      %p232 = pneg %p103
      %p233 = pneg %p100
      %p234 = pneg %p124
      %p235 = pneg %p121
      %p236 = pneg %p145
      %p237 = pneg %p142
      %p238 = pneg %p171
      %p239 = pneg %p168
      %s240 = smul.u32 2, %s19
      %p241 = scmp.lt.s32.totalorder %s240, 3
      %s242 = scalar_select %p241, %s240, 3
      %s243 = smul.addr %s242, 8
      %s244 = scalar_lea.vmem %s6, %s243
      %s245 = smul.u32 16, %s19
      %p246 = scmp.lt.s32.totalorder %s245, 31
      %s247 = scalar_select %p246, %s245, 31
      %s248 = smul.addr %s247, 8
      %s249 = scalar_lea.vmem %s0, %s248
      %s250 = smul.u32 16, %s19
      %s251 = smul.u32 2, %s19
      %p252 = scmp.lt.s32.totalorder %s251, 3
      %s253 = scalar_select %p252, %s251, 3
      %s254 = smul.addr %s253, 8
      %s255 = scalar_lea.vmem %s6, %s254
      %s256 = smul.u32 2, %s19
      %v257 = vld [vmem:[%s249] sm:$0xff]
      %v258 = vld [vmem:[%s249 + $0x8] sm:$0xff]
      %v259 = vld [vmem:[%s249 + $0x10] sm:$0xff]
      %v260 = vld [vmem:[%s249 + $0x18] sm:$0xff]
      %v261 = vld [vmem:[%s249 + $0x20] sm:$0xff]
      %v262 = vld [vmem:[%s249 + $0x28] sm:$0xff]
      %v263 = vld [vmem:[%s249 + $0x30] sm:$0xff]
      %v264 = vld [vmem:[%s249 + $0x38] sm:$0xff]
      %v265 = vld [vmem:[%s249 + $0x40] sm:$0xff]
      %v266 = vld [vmem:[%s249 + $0x48] sm:$0xff]
      %v267 = vld [vmem:[%s249 + $0x50] sm:$0xff]
      %v268 = vld [vmem:[%s249 + $0x58] sm:$0xff]
      %v269 = vld [vmem:[%s249 + $0x60] sm:$0xff]
      %v270 = vld [vmem:[%s249 + $0x68] sm:$0xff]
      %v271 = vld [vmem:[%s249 + $0x70] sm:$0xff]
      %v272 = vld [vmem:[%s249 + $0x78] sm:$0xff]
      %v273 = vld [vmem:[%s1] sm:$0xff]
      %v274 = vld [vmem:[%s1 + $0x8] sm:$0xff]
      %vm275 = vcmask 130048
      %v277 = vsel %vm275, %v257, 0
      %v280 = vsel %vm275, %v258, 0
      %v283 = vsel %vm275, %v259, 0
      %v286 = vsel %vm275, %v260, 0
      %v289 = vsel %vm275, %v261, 0
      %v292 = vsel %vm275, %v262, 0
      %v295 = vsel %vm275, %v263, 0
      %v298 = vsel %vm275, %v264, 0
      %v301 = vsel %vm275, %v265, 0
      %v304 = vsel %vm275, %v266, 0
      %v307 = vsel %vm275, %v267, 0
      %v310 = vsel %vm275, %v268, 0
      %v313 = vsel %vm275, %v269, 0
      %v316 = vsel %vm275, %v270, 0
      %v319 = vsel %vm275, %v271, 0
      %v322 = vsel %vm275, %v272, 0
      %324 = vmatprep.subr.mxu0 0.0
      %325 = vmatpush1.msra.mxu0 %v273
      %326 = vmatprep.subr.mxu0 0.0
      %327 = vmatpush1.msra.mxu0 %v274
      %328 = vmatprep.subr.mxu0 0.0
      %329 = vmatpush1.msra.mxu0 0.0
      %330 = vmatprep.subr.mxu0 0.0
      %331 = vmatpush1.msra.mxu0 0.0
      %332 = vmatprep.subr.mxu0 0.0
      %333 = vmatpush1.msra.mxu0 0.0
      %334 = vmatprep.subr.mxu0 0.0
      %335 = vmatpush1.msra.mxu0 0.0
      %336 = vmatprep.subr.mxu0 0.0
      %337 = vmatpush1.msra.mxu0 0.0
      %338 = vmatprep.subr.mxu0 0.0
      %339 = vmatpush1.msra.mxu0 0.0
      %340 = vmatprep.subr.mxu0 0.0
      %341 = vmatpush1.msra.mxu0 0.0
      %342 = vmatprep.subr.mxu0 0.0
      %343 = vmatpush1.msra.mxu0 0.0
      %344 = vmatprep.subr.mxu0 0.0
      %345 = vmatpush1.msra.mxu0 0.0
      %346 = vmatprep.subr.mxu0 0.0
      %347 = vmatpush1.msra.mxu0 0.0
      %348 = vmatprep.subr.mxu0 0.0
      %349 = vmatpush1.msra.mxu0 0.0
      %350 = vmatprep.subr.mxu0 0.0
      %351 = vmatpush1.msra.mxu0 0.0
      %352 = vmatprep.subr.mxu0 0.0
      %353 = vmatpush1.msra.mxu0 0.0
      %354 = vmatprep.subr.mxu0 0.0
      %355 = vmatpush1.msra.mxu0 0.0
      %356 = vmatprep.subr.mxu0 0.0
      %357 = vmatpush1.msra.mxu0 0.0
      %358 = vmatprep.subr.mxu0 0.0
      %359 = vmatpush1.msra.mxu0 0.0
      %360 = vmatprep.subr.mxu0 0.0
      %361 = vmatpush1.msra.mxu0 0.0
      %362 = vmatprep.subr.mxu0 0.0
      %363 = vmatpush1.msra.mxu0 0.0
      %364 = vmatprep.subr.mxu0 0.0
      %365 = vmatpush1.msra.mxu0 0.0
      %366 = vmatprep.subr.mxu0 0.0
      %367 = vmatpush1.msra.mxu0 0.0
      %368 = vmatprep.subr.mxu0 0.0
      %369 = vmatpush1.msra.mxu0 0.0
      %370 = vmatprep.subr.mxu0 0.0
      %371 = vmatpush1.msra.mxu0 0.0
      %372 = vmatprep.subr.mxu0 0.0
      %373 = vmatpush1.msra.mxu0 0.0
      %374 = vmatprep.subr.mxu0 0.0
      %375 = vmatpush1.msra.mxu0 0.0
      %376 = vmatprep.subr.mxu0 0.0
      %377 = vmatpush1.msra.mxu0 0.0
      %378 = vmatprep.subr.mxu0 0.0
      %379 = vmatpush1.msra.mxu0 0.0
      %380 = vmatprep.subr.mxu0 0.0
      %381 = vmatpush1.msra.mxu0 0.0
      %382 = vmatprep.subr.mxu0 0.0
      %383 = vmatpush1.msra.mxu0 0.0
      %384 = vmatprep.subr.mxu0 0.0
      %385 = vmatpush1.msra.mxu0 0.0
      %386 = vmatprep.subr.mxu0 0.0
      %387 = vmatpush1.msra.mxu0 0.0
      %388 = vmatprep.mubr.f32.mxu0 0.0
      %389 = vmatmul.mubr.f32.gmra.mrb[0].mxu0 %v277
      %v390 = vpop.f32.mrb[0].mxu0
      %v391 = vadd.f32 0.0, %v390
      %v392 = vpop.f32.mrb[0].mxu0
      %393 = vmatprep.mubr.f32.mxu0 0.0
      %394 = vmatmul.mubr.f32.gmra.mrb[0].mxu0 %v280
      %v395 = vpop.f32.mrb[0].mxu0
      %v396 = vadd.f32 0.0, %v395
      %v397 = vpop.f32.mrb[0].mxu0
      %398 = vmatprep.mubr.f32.mxu0 0.0
      %399 = vmatmul.mubr.f32.gmra.mrb[0].mxu0 %v283
      %v400 = vpop.f32.mrb[0].mxu0
      %v401 = vadd.f32 0.0, %v400
      %v402 = vpop.f32.mrb[0].mxu0
      %403 = vmatprep.mubr.f32.mxu0 0.0
      %404 = vmatmul.mubr.f32.gmra.mrb[0].mxu0 %v286
      %v405 = vpop.f32.mrb[0].mxu0
      %v406 = vadd.f32 0.0, %v405
      %v407 = vpop.f32.mrb[0].mxu0
      %408 = vmatprep.mubr.f32.mxu0 0.0
      %409 = vmatmul.mubr.f32.gmra.mrb[0].mxu0 %v289
      %v410 = vpop.f32.mrb[0].mxu0
      %v411 = vadd.f32 0.0, %v410
      %v412 = vpop.f32.mrb[0].mxu0
      %413 = vmatprep.mubr.f32.mxu0 0.0
      %414 = vmatmul.mubr.f32.gmra.mrb[0].mxu0 %v292
      %v415 = vpop.f32.mrb[0].mxu0
      %v416 = vadd.f32 0.0, %v415
      %v417 = vpop.f32.mrb[0].mxu0
      %418 = vmatprep.mubr.f32.mxu0 0.0
      %419 = vmatmul.mubr.f32.gmra.mrb[0].mxu0 %v295
      %v420 = vpop.f32.mrb[0].mxu0
      %v421 = vadd.f32 0.0, %v420
      %v422 = vpop.f32.mrb[0].mxu0
      %423 = vmatprep.mubr.f32.mxu0 0.0
      %424 = vmatmul.mubr.f32.gmra.mrb[0].mxu0 %v298
      %v425 = vpop.f32.mrb[0].mxu0
      %v426 = vadd.f32 0.0, %v425
      %v427 = vpop.f32.mrb[0].mxu0
      %428 = vmatprep.mubr.f32.mxu0 0.0
      %429 = vmatmul.mubr.f32.gmra.mrb[0].mxu0 %v301
      %v430 = vpop.f32.mrb[0].mxu0
      %v431 = vadd.f32 0.0, %v430
      %v432 = vpop.f32.mrb[0].mxu0
      %433 = vmatprep.mubr.f32.mxu0 0.0
      %434 = vmatmul.mubr.f32.gmra.mrb[0].mxu0 %v304
      %v435 = vpop.f32.mrb[0].mxu0
      %v436 = vadd.f32 0.0, %v435
      %v437 = vpop.f32.mrb[0].mxu0
      %438 = vmatprep.mubr.f32.mxu0 0.0
      %439 = vmatmul.mubr.f32.gmra.mrb[0].mxu0 %v307
      %v440 = vpop.f32.mrb[0].mxu0
      %v441 = vadd.f32 0.0, %v440
      %v442 = vpop.f32.mrb[0].mxu0
      %443 = vmatprep.mubr.f32.mxu0 0.0
      %444 = vmatmul.mubr.f32.gmra.mrb[0].mxu0 %v310
      %v445 = vpop.f32.mrb[0].mxu0
      %v446 = vadd.f32 0.0, %v445
      %v447 = vpop.f32.mrb[0].mxu0
      %448 = vmatprep.mubr.f32.mxu0 0.0
      %449 = vmatmul.mubr.f32.gmra.mrb[0].mxu0 %v313
      %v450 = vpop.f32.mrb[0].mxu0
      %v451 = vadd.f32 0.0, %v450
      %v452 = vpop.f32.mrb[0].mxu0
      %453 = vmatprep.mubr.f32.mxu0 0.0
      %454 = vmatmul.mubr.f32.gmra.mrb[0].mxu0 %v316
      %v455 = vpop.f32.mrb[0].mxu0
      %v456 = vadd.f32 0.0, %v455
      %v457 = vpop.f32.mrb[0].mxu0
      %458 = vmatprep.mubr.f32.mxu0 0.0
      %459 = vmatmul.mubr.f32.gmra.mrb[0].mxu0 %v319
      %v460 = vpop.f32.mrb[0].mxu0
      %v461 = vadd.f32 0.0, %v460
      %v462 = vpop.f32.mrb[0].mxu0
      %463 = vmatprep.mubr.f32.mxu0 0.0
      %464 = vmatmul.mubr.f32.gmra.mrb[0].mxu0 %v322
      %v465 = vpop.f32.mrb[0].mxu0
      %v466 = vadd.f32 0.0, %v465
      %v467 = vpop.f32.mrb[0].mxu0
      %468 = vdwg.mxu0
      %470 = vrot.lane.b32.xlu0 %v391, 112
      %v471 = vpop.permute.xlu0 %470
      %vm472 = vcmask 64512
      %v473 = vsel %vm472, %v391, 0
      %v475 = vsel %vm472, %v471, 0
      %477 = vmatprep.subr.mxu0 0.0
      %478 = vmatpush1.xpose.msra.mxu0 %v475
      %479 = vmatprep.subr.mxu0 0.0
      %480 = vmatpush1.xpose.msra.mxu0 0.0
      %481 = vmatprep.subr.mxu0 0.0
      %482 = vmatpush1.xpose.msra.mxu0 0.0
      %483 = vmatprep.subr.mxu0 0.0
      %484 = vmatpush1.xpose.msra.mxu0 0.0
      %485 = vmatprep.subr.mxu0 0.0
      %486 = vmatpush1.xpose.msra.mxu0 0.0
      %487 = vmatprep.subr.mxu0 0.0
      %488 = vmatpush1.xpose.msra.mxu0 0.0
      %489 = vmatprep.subr.mxu0 0.0
      %490 = vmatpush1.xpose.msra.mxu0 0.0
      %491 = vmatprep.subr.mxu0 0.0
      %492 = vmatpush1.xpose.msra.mxu0 0.0
      %493 = vmatprep.subr.mxu0 0.0
      %494 = vmatpush1.xpose.msra.mxu0 0.0
      %495 = vmatprep.subr.mxu0 0.0
      %496 = vmatpush1.xpose.msra.mxu0 0.0
      %497 = vmatprep.subr.mxu0 0.0
      %498 = vmatpush1.xpose.msra.mxu0 0.0
      %499 = vmatprep.subr.mxu0 0.0
      %500 = vmatpush1.xpose.msra.mxu0 0.0
      %501 = vmatprep.subr.mxu0 0.0
      %502 = vmatpush1.xpose.msra.mxu0 0.0
      %503 = vmatprep.subr.mxu0 0.0
      %504 = vmatpush1.xpose.msra.mxu0 0.0
      %505 = vmatprep.subr.mxu0 0.0
      %506 = vmatpush1.xpose.msra.mxu0 0.0
      %507 = vmatprep.subr.mxu0 0.0
      %508 = vmatpush1.xpose.msra.mxu0 0.0
      %509 = vmatprep.subr.mxu0 0.0
      %510 = vmatpush1.xpose.msra.mxu0 0.0
      %511 = vmatprep.subr.mxu0 0.0
      %512 = vmatpush1.xpose.msra.mxu0 0.0
      %513 = vmatprep.subr.mxu0 0.0
      %514 = vmatpush1.xpose.msra.mxu0 0.0
      %515 = vmatprep.subr.mxu0 0.0
      %516 = vmatpush1.xpose.msra.mxu0 0.0
      %517 = vmatprep.subr.mxu0 0.0
      %518 = vmatpush1.xpose.msra.mxu0 0.0
      %519 = vmatprep.subr.mxu0 0.0
      %520 = vmatpush1.xpose.msra.mxu0 0.0
      %521 = vmatprep.subr.mxu0 0.0
      %522 = vmatpush1.xpose.msra.mxu0 0.0
      %523 = vmatprep.subr.mxu0 0.0
      %524 = vmatpush1.xpose.msra.mxu0 0.0
      %525 = vmatprep.subr.mxu0 0.0
      %526 = vmatpush1.xpose.msra.mxu0 0.0
      %527 = vmatprep.subr.mxu0 0.0
      %528 = vmatpush1.xpose.msra.mxu0 0.0
      %529 = vmatprep.subr.mxu0 0.0
      %530 = vmatpush1.xpose.msra.mxu0 0.0
      %531 = vmatprep.subr.mxu0 0.0
      %532 = vmatpush1.xpose.msra.mxu0 0.0
      %533 = vmatprep.subr.mxu0 0.0
      %534 = vmatpush1.xpose.msra.mxu0 0.0
      %535 = vmatprep.subr.mxu0 0.0
      %536 = vmatpush1.xpose.msra.mxu0 0.0
      %537 = vmatprep.subr.mxu0 0.0
      %538 = vmatpush1.xpose.msra.mxu0 0.0
      %539 = vmatprep.subr.mxu0 0.0
      %540 = vmatpush1.xpose.msra.mxu0 0.0
      %541 = vmatprep.mubr.f32.mxu0 0.0
      %542 = vmatmul.mubr.f32.gmra.mrb[0].mxu0 %v473
      %v543 = vpop.f32.mrb[0].mxu0
      %v544 = vadd.f32 0.0, %v543
      %v545 = vpop.f32.mrb[0].mxu0
      %546 = vdwg.mxu0
      %548 = vrot.lane.b32.xlu0 %v396, 112
      %v549 = vpop.permute.xlu0 %548
      %v550 = vsel %vm472, %v396, 0
      %v552 = vsel %vm472, %v549, 0
      %554 = vmatprep.subr.mxu0 0.0
      %555 = vmatpush1.xpose.msra.mxu0 %v552
      %556 = vmatprep.subr.mxu0 0.0
      %557 = vmatpush1.xpose.msra.mxu0 0.0
      %558 = vmatprep.subr.mxu0 0.0
      %559 = vmatpush1.xpose.msra.mxu0 0.0
      %560 = vmatprep.subr.mxu0 0.0
      %561 = vmatpush1.xpose.msra.mxu0 0.0
      %562 = vmatprep.subr.mxu0 0.0
      %563 = vmatpush1.xpose.msra.mxu0 0.0
      %564 = vmatprep.subr.mxu0 0.0
      %565 = vmatpush1.xpose.msra.mxu0 0.0
      %566 = vmatprep.subr.mxu0 0.0
      %567 = vmatpush1.xpose.msra.mxu0 0.0
      %568 = vmatprep.subr.mxu0 0.0
      %569 = vmatpush1.xpose.msra.mxu0 0.0
      %570 = vmatprep.subr.mxu0 0.0
      %571 = vmatpush1.xpose.msra.mxu0 0.0
      %572 = vmatprep.subr.mxu0 0.0
      %573 = vmatpush1.xpose.msra.mxu0 0.0
      %574 = vmatprep.subr.mxu0 0.0
      %575 = vmatpush1.xpose.msra.mxu0 0.0
      %576 = vmatprep.subr.mxu0 0.0
      %577 = vmatpush1.xpose.msra.mxu0 0.0
      %578 = vmatprep.subr.mxu0 0.0
      %579 = vmatpush1.xpose.msra.mxu0 0.0
      %580 = vmatprep.subr.mxu0 0.0
      %581 = vmatpush1.xpose.msra.mxu0 0.0
      %582 = vmatprep.subr.mxu0 0.0
      %583 = vmatpush1.xpose.msra.mxu0 0.0
      %584 = vmatprep.subr.mxu0 0.0
      %585 = vmatpush1.xpose.msra.mxu0 0.0
      %586 = vmatprep.subr.mxu0 0.0
      %587 = vmatpush1.xpose.msra.mxu0 0.0
      %588 = vmatprep.subr.mxu0 0.0
      %589 = vmatpush1.xpose.msra.mxu0 0.0
      %590 = vmatprep.subr.mxu0 0.0
      %591 = vmatpush1.xpose.msra.mxu0 0.0
      %592 = vmatprep.subr.mxu0 0.0
      %593 = vmatpush1.xpose.msra.mxu0 0.0
      %594 = vmatprep.subr.mxu0 0.0
      %595 = vmatpush1.xpose.msra.mxu0 0.0
      %596 = vmatprep.subr.mxu0 0.0
      %597 = vmatpush1.xpose.msra.mxu0 0.0
      %598 = vmatprep.subr.mxu0 0.0
      %599 = vmatpush1.xpose.msra.mxu0 0.0
      %600 = vmatprep.subr.mxu0 0.0
      %601 = vmatpush1.xpose.msra.mxu0 0.0
      %602 = vmatprep.subr.mxu0 0.0
      %603 = vmatpush1.xpose.msra.mxu0 0.0
      %604 = vmatprep.subr.mxu0 0.0
      %605 = vmatpush1.xpose.msra.mxu0 0.0
      %606 = vmatprep.subr.mxu0 0.0
      %607 = vmatpush1.xpose.msra.mxu0 0.0
      %608 = vmatprep.subr.mxu0 0.0
      %609 = vmatpush1.xpose.msra.mxu0 0.0
      %610 = vmatprep.subr.mxu0 0.0
      %611 = vmatpush1.xpose.msra.mxu0 0.0
      %612 = vmatprep.subr.mxu0 0.0
      %613 = vmatpush1.xpose.msra.mxu0 0.0
      %614 = vmatprep.subr.mxu0 0.0
      %615 = vmatpush1.xpose.msra.mxu0 0.0
      %616 = vmatprep.subr.mxu0 0.0
      %617 = vmatpush1.xpose.msra.mxu0 0.0
      %618 = vmatprep.mubr.f32.mxu0 0.0
      %619 = vmatmul.mubr.f32.gmra.mrb[0].mxu0 %v550
      %v620 = vpop.f32.mrb[0].mxu0
      %v621 = vadd.f32 0.0, %v620
      %v622 = vpop.f32.mrb[0].mxu0
      %623 = vdwg.mxu0
      %625 = vrot.lane.b32.xlu0 %v401, 112
      %v626 = vpop.permute.xlu0 %625
      %v627 = vsel %vm472, %v401, 0
      %v629 = vsel %vm472, %v626, 0
      %631 = vmatprep.subr.mxu0 0.0
      %632 = vmatpush1.xpose.msra.mxu0 %v629
      %633 = vmatprep.subr.mxu0 0.0
      %634 = vmatpush1.xpose.msra.mxu0 0.0
      %635 = vmatprep.subr.mxu0 0.0
      %636 = vmatpush1.xpose.msra.mxu0 0.0
      %637 = vmatprep.subr.mxu0 0.0
      %638 = vmatpush1.xpose.msra.mxu0 0.0
      %639 = vmatprep.subr.mxu0 0.0
      %640 = vmatpush1.xpose.msra.mxu0 0.0
      %641 = vmatprep.subr.mxu0 0.0
      %642 = vmatpush1.xpose.msra.mxu0 0.0
      %643 = vmatprep.subr.mxu0 0.0
      %644 = vmatpush1.xpose.msra.mxu0 0.0
      %645 = vmatprep.subr.mxu0 0.0
      %646 = vmatpush1.xpose.msra.mxu0 0.0
      %647 = vmatprep.subr.mxu0 0.0
      %648 = vmatpush1.xpose.msra.mxu0 0.0
      %649 = vmatprep.subr.mxu0 0.0
      %650 = vmatpush1.xpose.msra.mxu0 0.0
      %651 = vmatprep.subr.mxu0 0.0
      %652 = vmatpush1.xpose.msra.mxu0 0.0
      %653 = vmatprep.subr.mxu0 0.0
      %654 = vmatpush1.xpose.msra.mxu0 0.0
      %655 = vmatprep.subr.mxu0 0.0
      %656 = vmatpush1.xpose.msra.mxu0 0.0
      %657 = vmatprep.subr.mxu0 0.0
      %658 = vmatpush1.xpose.msra.mxu0 0.0
      %659 = vmatprep.subr.mxu0 0.0
      %660 = vmatpush1.xpose.msra.mxu0 0.0
      %661 = vmatprep.subr.mxu0 0.0
      %662 = vmatpush1.xpose.msra.mxu0 0.0
      %663 = vmatprep.subr.mxu0 0.0
      %664 = vmatpush1.xpose.msra.mxu0 0.0
      %665 = vmatprep.subr.mxu0 0.0
      %666 = vmatpush1.xpose.msra.mxu0 0.0
      %667 = vmatprep.subr.mxu0 0.0
      %668 = vmatpush1.xpose.msra.mxu0 0.0
      %669 = vmatprep.subr.mxu0 0.0
      %670 = vmatpush1.xpose.msra.mxu0 0.0
      %671 = vmatprep.subr.mxu0 0.0
      %672 = vmatpush1.xpose.msra.mxu0 0.0
      %673 = vmatprep.subr.mxu0 0.0
      %674 = vmatpush1.xpose.msra.mxu0 0.0
      %675 = vmatprep.subr.mxu0 0.0
      %676 = vmatpush1.xpose.msra.mxu0 0.0
      %677 = vmatprep.subr.mxu0 0.0
      %678 = vmatpush1.xpose.msra.mxu0 0.0
      %679 = vmatprep.subr.mxu0 0.0
      %680 = vmatpush1.xpose.msra.mxu0 0.0
      %681 = vmatprep.subr.mxu0 0.0
      %682 = vmatpush1.xpose.msra.mxu0 0.0
      %683 = vmatprep.subr.mxu0 0.0
      %684 = vmatpush1.xpose.msra.mxu0 0.0
      %685 = vmatprep.subr.mxu0 0.0
      %686 = vmatpush1.xpose.msra.mxu0 0.0
      %687 = vmatprep.subr.mxu0 0.0
      %688 = vmatpush1.xpose.msra.mxu0 0.0
      %689 = vmatprep.subr.mxu0 0.0
      %690 = vmatpush1.xpose.msra.mxu0 0.0
      %691 = vmatprep.subr.mxu0 0.0
      %692 = vmatpush1.xpose.msra.mxu0 0.0
      %693 = vmatprep.subr.mxu0 0.0
      %694 = vmatpush1.xpose.msra.mxu0 0.0
      %695 = vmatprep.mubr.f32.mxu0 0.0
      %696 = vmatmul.mubr.f32.gmra.mrb[0].mxu0 %v627
      %v697 = vpop.f32.mrb[0].mxu0
      %v698 = vadd.f32 0.0, %v697
      %v699 = vpop.f32.mrb[0].mxu0
      %700 = vdwg.mxu0
      %702 = vrot.lane.b32.xlu0 %v406, 112
      %v703 = vpop.permute.xlu0 %702
      %v704 = vsel %vm472, %v406, 0
      %v706 = vsel %vm472, %v703, 0
      %708 = vmatprep.subr.mxu0 0.0
      %709 = vmatpush1.xpose.msra.mxu0 %v706
      %710 = vmatprep.subr.mxu0 0.0
      %711 = vmatpush1.xpose.msra.mxu0 0.0
      %712 = vmatprep.subr.mxu0 0.0
      %713 = vmatpush1.xpose.msra.mxu0 0.0
      %714 = vmatprep.subr.mxu0 0.0
      %715 = vmatpush1.xpose.msra.mxu0 0.0
      %716 = vmatprep.subr.mxu0 0.0
      %717 = vmatpush1.xpose.msra.mxu0 0.0
      %718 = vmatprep.subr.mxu0 0.0
      %719 = vmatpush1.xpose.msra.mxu0 0.0
      %720 = vmatprep.subr.mxu0 0.0
      %721 = vmatpush1.xpose.msra.mxu0 0.0
      %722 = vmatprep.subr.mxu0 0.0
      %723 = vmatpush1.xpose.msra.mxu0 0.0
      %724 = vmatprep.subr.mxu0 0.0
      %725 = vmatpush1.xpose.msra.mxu0 0.0
      %726 = vmatprep.subr.mxu0 0.0
      %727 = vmatpush1.xpose.msra.mxu0 0.0
      %728 = vmatprep.subr.mxu0 0.0
      %729 = vmatpush1.xpose.msra.mxu0 0.0
      %730 = vmatprep.subr.mxu0 0.0
      %731 = vmatpush1.xpose.msra.mxu0 0.0
      %732 = vmatprep.subr.mxu0 0.0
      %733 = vmatpush1.xpose.msra.mxu0 0.0
      %734 = vmatprep.subr.mxu0 0.0
      %735 = vmatpush1.xpose.msra.mxu0 0.0
      %736 = vmatprep.subr.mxu0 0.0
      %737 = vmatpush1.xpose.msra.mxu0 0.0
      %738 = vmatprep.subr.mxu0 0.0
      %739 = vmatpush1.xpose.msra.mxu0 0.0
      %740 = vmatprep.subr.mxu0 0.0
      %741 = vmatpush1.xpose.msra.mxu0 0.0
      %742 = vmatprep.subr.mxu0 0.0
      %743 = vmatpush1.xpose.msra.mxu0 0.0
      %744 = vmatprep.subr.mxu0 0.0
      %745 = vmatpush1.xpose.msra.mxu0 0.0
      %746 = vmatprep.subr.mxu0 0.0
      %747 = vmatpush1.xpose.msra.mxu0 0.0
      %748 = vmatprep.subr.mxu0 0.0
      %749 = vmatpush1.xpose.msra.mxu0 0.0
      %750 = vmatprep.subr.mxu0 0.0
      %751 = vmatpush1.xpose.msra.mxu0 0.0
      %752 = vmatprep.subr.mxu0 0.0
      %753 = vmatpush1.xpose.msra.mxu0 0.0
      %754 = vmatprep.subr.mxu0 0.0
      %755 = vmatpush1.xpose.msra.mxu0 0.0
      %756 = vmatprep.subr.mxu0 0.0
      %757 = vmatpush1.xpose.msra.mxu0 0.0
      %758 = vmatprep.subr.mxu0 0.0
      %759 = vmatpush1.xpose.msra.mxu0 0.0
      %760 = vmatprep.subr.mxu0 0.0
      %761 = vmatpush1.xpose.msra.mxu0 0.0
      %762 = vmatprep.subr.mxu0 0.0
      %763 = vmatpush1.xpose.msra.mxu0 0.0
      %764 = vmatprep.subr.mxu0 0.0
      %765 = vmatpush1.xpose.msra.mxu0 0.0
      %766 = vmatprep.subr.mxu0 0.0
      %767 = vmatpush1.xpose.msra.mxu0 0.0
      %768 = vmatprep.subr.mxu0 0.0
      %769 = vmatpush1.xpose.msra.mxu0 0.0
      %770 = vmatprep.subr.mxu0 0.0
      %771 = vmatpush1.xpose.msra.mxu0 0.0
      %772 = vmatprep.mubr.f32.mxu0 0.0
      %773 = vmatmul.mubr.f32.gmra.mrb[0].mxu0 %v704
      %v774 = vpop.f32.mrb[0].mxu0
      %v775 = vadd.f32 0.0, %v774
      %v776 = vpop.f32.mrb[0].mxu0
      %777 = vdwg.mxu0
      %779 = vrot.lane.b32.xlu0 %v411, 112
      %v780 = vpop.permute.xlu0 %779
      %v781 = vsel %vm472, %v411, 0
      %v783 = vsel %vm472, %v780, 0
      %785 = vmatprep.subr.mxu0 0.0
      %786 = vmatpush1.xpose.msra.mxu0 %v783
      %787 = vmatprep.subr.mxu0 0.0
      %788 = vmatpush1.xpose.msra.mxu0 0.0
      %789 = vmatprep.subr.mxu0 0.0
      %790 = vmatpush1.xpose.msra.mxu0 0.0
      %791 = vmatprep.subr.mxu0 0.0
      %792 = vmatpush1.xpose.msra.mxu0 0.0
      %793 = vmatprep.subr.mxu0 0.0
      %794 = vmatpush1.xpose.msra.mxu0 0.0
      %795 = vmatprep.subr.mxu0 0.0
      %796 = vmatpush1.xpose.msra.mxu0 0.0
      %797 = vmatprep.subr.mxu0 0.0
      %798 = vmatpush1.xpose.msra.mxu0 0.0
      %799 = vmatprep.subr.mxu0 0.0
      %800 = vmatpush1.xpose.msra.mxu0 0.0
      %801 = vmatprep.subr.mxu0 0.0
      %802 = vmatpush1.xpose.msra.mxu0 0.0
      %803 = vmatprep.subr.mxu0 0.0
      %804 = vmatpush1.xpose.msra.mxu0 0.0
      %805 = vmatprep.subr.mxu0 0.0
      %806 = vmatpush1.xpose.msra.mxu0 0.0
      %807 = vmatprep.subr.mxu0 0.0
      %808 = vmatpush1.xpose.msra.mxu0 0.0
      %809 = vmatprep.subr.mxu0 0.0
      %810 = vmatpush1.xpose.msra.mxu0 0.0
      %811 = vmatprep.subr.mxu0 0.0
      %812 = vmatpush1.xpose.msra.mxu0 0.0
      %813 = vmatprep.subr.mxu0 0.0
      %814 = vmatpush1.xpose.msra.mxu0 0.0
      %815 = vmatprep.subr.mxu0 0.0
      %816 = vmatpush1.xpose.msra.mxu0 0.0
      %817 = vmatprep.subr.mxu0 0.0
      %818 = vmatpush1.xpose.msra.mxu0 0.0
      %819 = vmatprep.subr.mxu0 0.0
      %820 = vmatpush1.xpose.msra.mxu0 0.0
      %821 = vmatprep.subr.mxu0 0.0
      %822 = vmatpush1.xpose.msra.mxu0 0.0
      %823 = vmatprep.subr.mxu0 0.0
      %824 = vmatpush1.xpose.msra.mxu0 0.0
      %825 = vmatprep.subr.mxu0 0.0
      %826 = vmatpush1.xpose.msra.mxu0 0.0
      %827 = vmatprep.subr.mxu0 0.0
      %828 = vmatpush1.xpose.msra.mxu0 0.0
      %829 = vmatprep.subr.mxu0 0.0
      %830 = vmatpush1.xpose.msra.mxu0 0.0
      %831 = vmatprep.subr.mxu0 0.0
      %832 = vmatpush1.xpose.msra.mxu0 0.0
      %833 = vmatprep.subr.mxu0 0.0
      %834 = vmatpush1.xpose.msra.mxu0 0.0
      %835 = vmatprep.subr.mxu0 0.0
      %836 = vmatpush1.xpose.msra.mxu0 0.0
      %837 = vmatprep.subr.mxu0 0.0
      %838 = vmatpush1.xpose.msra.mxu0 0.0
      %839 = vmatprep.subr.mxu0 0.0
      %840 = vmatpush1.xpose.msra.mxu0 0.0
      %841 = vmatprep.subr.mxu0 0.0
      %842 = vmatpush1.xpose.msra.mxu0 0.0
      %843 = vmatprep.subr.mxu0 0.0
      %844 = vmatpush1.xpose.msra.mxu0 0.0
      %845 = vmatprep.subr.mxu0 0.0
      %846 = vmatpush1.xpose.msra.mxu0 0.0
      %847 = vmatprep.subr.mxu0 0.0
      %848 = vmatpush1.xpose.msra.mxu0 0.0
      %849 = vmatprep.mubr.f32.mxu0 0.0
      %850 = vmatmul.mubr.f32.gmra.mrb[0].mxu0 %v781
      %v851 = vpop.f32.mrb[0].mxu0
      %v852 = vadd.f32 0.0, %v851
      %v853 = vpop.f32.mrb[0].mxu0
      %854 = vdwg.mxu0
      %856 = vrot.lane.b32.xlu0 %v416, 112
      %v857 = vpop.permute.xlu0 %856
      %v858 = vsel %vm472, %v416, 0
      %v860 = vsel %vm472, %v857, 0
      %862 = vmatprep.subr.mxu0 0.0
      %863 = vmatpush1.xpose.msra.mxu0 %v860
      %864 = vmatprep.subr.mxu0 0.0
      %865 = vmatpush1.xpose.msra.mxu0 0.0
      %866 = vmatprep.subr.mxu0 0.0
      %867 = vmatpush1.xpose.msra.mxu0 0.0
      %868 = vmatprep.subr.mxu0 0.0
      %869 = vmatpush1.xpose.msra.mxu0 0.0
      %870 = vmatprep.subr.mxu0 0.0
      %871 = vmatpush1.xpose.msra.mxu0 0.0
      %872 = vmatprep.subr.mxu0 0.0
      %873 = vmatpush1.xpose.msra.mxu0 0.0
      %874 = vmatprep.subr.mxu0 0.0
      %875 = vmatpush1.xpose.msra.mxu0 0.0
      %876 = vmatprep.subr.mxu0 0.0
      %877 = vmatpush1.xpose.msra.mxu0 0.0
      %878 = vmatprep.subr.mxu0 0.0
      %879 = vmatpush1.xpose.msra.mxu0 0.0
      %880 = vmatprep.subr.mxu0 0.0
      %881 = vmatpush1.xpose.msra.mxu0 0.0
      %882 = vmatprep.subr.mxu0 0.0
      %883 = vmatpush1.xpose.msra.mxu0 0.0
      %884 = vmatprep.subr.mxu0 0.0
      %885 = vmatpush1.xpose.msra.mxu0 0.0
      %886 = vmatprep.subr.mxu0 0.0
      %887 = vmatpush1.xpose.msra.mxu0 0.0
      %888 = vmatprep.subr.mxu0 0.0
      %889 = vmatpush1.xpose.msra.mxu0 0.0
      %890 = vmatprep.subr.mxu0 0.0
      %891 = vmatpush1.xpose.msra.mxu0 0.0
      %892 = vmatprep.subr.mxu0 0.0
      %893 = vmatpush1.xpose.msra.mxu0 0.0
      %894 = vmatprep.subr.mxu0 0.0
      %895 = vmatpush1.xpose.msra.mxu0 0.0
      %896 = vmatprep.subr.mxu0 0.0
      %897 = vmatpush1.xpose.msra.mxu0 0.0
      %898 = vmatprep.subr.mxu0 0.0
      %899 = vmatpush1.xpose.msra.mxu0 0.0
      %900 = vmatprep.subr.mxu0 0.0
      %901 = vmatpush1.xpose.msra.mxu0 0.0
      %902 = vmatprep.subr.mxu0 0.0
      %903 = vmatpush1.xpose.msra.mxu0 0.0
      %904 = vmatprep.subr.mxu0 0.0
      %905 = vmatpush1.xpose.msra.mxu0 0.0
      %906 = vmatprep.subr.mxu0 0.0
      %907 = vmatpush1.xpose.msra.mxu0 0.0
      %908 = vmatprep.subr.mxu0 0.0
      %909 = vmatpush1.xpose.msra.mxu0 0.0
      %910 = vmatprep.subr.mxu0 0.0
      %911 = vmatpush1.xpose.msra.mxu0 0.0
      %912 = vmatprep.subr.mxu0 0.0
      %913 = vmatpush1.xpose.msra.mxu0 0.0
      %914 = vmatprep.subr.mxu0 0.0
      %915 = vmatpush1.xpose.msra.mxu0 0.0
      %916 = vmatprep.subr.mxu0 0.0
      %917 = vmatpush1.xpose.msra.mxu0 0.0
      %918 = vmatprep.subr.mxu0 0.0
      %919 = vmatpush1.xpose.msra.mxu0 0.0
      %920 = vmatprep.subr.mxu0 0.0
      %921 = vmatpush1.xpose.msra.mxu0 0.0
      %922 = vmatprep.subr.mxu0 0.0
      %923 = vmatpush1.xpose.msra.mxu0 0.0
      %924 = vmatprep.subr.mxu0 0.0
      %925 = vmatpush1.xpose.msra.mxu0 0.0
      %926 = vmatprep.mubr.f32.mxu0 0.0
      %927 = vmatmul.mubr.f32.gmra.mrb[0].mxu0 %v858
      %v928 = vpop.f32.mrb[0].mxu0
      %v929 = vadd.f32 0.0, %v928
      %v930 = vpop.f32.mrb[0].mxu0
      %931 = vdwg.mxu0
      %933 = vrot.lane.b32.xlu0 %v421, 112
      %v934 = vpop.permute.xlu0 %933
      %v935 = vsel %vm472, %v421, 0
      %v937 = vsel %vm472, %v934, 0
      %939 = vmatprep.subr.mxu0 0.0
      %940 = vmatpush1.xpose.msra.mxu0 %v937
      %941 = vmatprep.subr.mxu0 0.0
      %942 = vmatpush1.xpose.msra.mxu0 0.0
      %943 = vmatprep.subr.mxu0 0.0
      %944 = vmatpush1.xpose.msra.mxu0 0.0
      %945 = vmatprep.subr.mxu0 0.0
      %946 = vmatpush1.xpose.msra.mxu0 0.0
      %947 = vmatprep.subr.mxu0 0.0
      %948 = vmatpush1.xpose.msra.mxu0 0.0
      %949 = vmatprep.subr.mxu0 0.0
      %950 = vmatpush1.xpose.msra.mxu0 0.0
      %951 = vmatprep.subr.mxu0 0.0
      %952 = vmatpush1.xpose.msra.mxu0 0.0
      %953 = vmatprep.subr.mxu0 0.0
      %954 = vmatpush1.xpose.msra.mxu0 0.0
      %955 = vmatprep.subr.mxu0 0.0
      %956 = vmatpush1.xpose.msra.mxu0 0.0
      %957 = vmatprep.subr.mxu0 0.0
      %958 = vmatpush1.xpose.msra.mxu0 0.0
      %959 = vmatprep.subr.mxu0 0.0
      %960 = vmatpush1.xpose.msra.mxu0 0.0
      %961 = vmatprep.subr.mxu0 0.0
      %962 = vmatpush1.xpose.msra.mxu0 0.0
      %963 = vmatprep.subr.mxu0 0.0
      %964 = vmatpush1.xpose.msra.mxu0 0.0
      %965 = vmatprep.subr.mxu0 0.0
      %966 = vmatpush1.xpose.msra.mxu0 0.0
      %967 = vmatprep.subr.mxu0 0.0
      %968 = vmatpush1.xpose.msra.mxu0 0.0
      %969 = vmatprep.subr.mxu0 0.0
      %970 = vmatpush1.xpose.msra.mxu0 0.0
      %971 = vmatprep.subr.mxu0 0.0
      %972 = vmatpush1.xpose.msra.mxu0 0.0
      %973 = vmatprep.subr.mxu0 0.0
      %974 = vmatpush1.xpose.msra.mxu0 0.0
      %975 = vmatprep.subr.mxu0 0.0
      %976 = vmatpush1.xpose.msra.mxu0 0.0
      %977 = vmatprep.subr.mxu0 0.0
      %978 = vmatpush1.xpose.msra.mxu0 0.0
      %979 = vmatprep.subr.mxu0 0.0
      %980 = vmatpush1.xpose.msra.mxu0 0.0
      %981 = vmatprep.subr.mxu0 0.0
      %982 = vmatpush1.xpose.msra.mxu0 0.0
      %983 = vmatprep.subr.mxu0 0.0
      %984 = vmatpush1.xpose.msra.mxu0 0.0
      %985 = vmatprep.subr.mxu0 0.0
      %986 = vmatpush1.xpose.msra.mxu0 0.0
      %987 = vmatprep.subr.mxu0 0.0
      %988 = vmatpush1.xpose.msra.mxu0 0.0
      %989 = vmatprep.subr.mxu0 0.0
      %990 = vmatpush1.xpose.msra.mxu0 0.0
      %991 = vmatprep.subr.mxu0 0.0
      %992 = vmatpush1.xpose.msra.mxu0 0.0
      %993 = vmatprep.subr.mxu0 0.0
      %994 = vmatpush1.xpose.msra.mxu0 0.0
      %995 = vmatprep.subr.mxu0 0.0
      %996 = vmatpush1.xpose.msra.mxu0 0.0
      %997 = vmatprep.subr.mxu0 0.0
      %998 = vmatpush1.xpose.msra.mxu0 0.0
      %999 = vmatprep.subr.mxu0 0.0
      %1000 = vmatpush1.xpose.msra.mxu0 0.0
      %1001 = vmatprep.subr.mxu0 0.0
      %1002 = vmatpush1.xpose.msra.mxu0 0.0
      %1003 = vmatprep.mubr.f32.mxu0 0.0
      %1004 = vmatmul.mubr.f32.gmra.mrb[0].mxu0 %v935
      %v1005 = vpop.f32.mrb[0].mxu0
      %v1006 = vadd.f32 0.0, %v1005
      %v1007 = vpop.f32.mrb[0].mxu0
      %1008 = vdwg.mxu0
      %1010 = vrot.lane.b32.xlu0 %v426, 112
      %v1011 = vpop.permute.xlu0 %1010
      %v1012 = vsel %vm472, %v426, 0
      %v1014 = vsel %vm472, %v1011, 0
      %1016 = vmatprep.subr.mxu0 0.0
      %1017 = vmatpush1.xpose.msra.mxu0 %v1014
      %1018 = vmatprep.subr.mxu0 0.0
      %1019 = vmatpush1.xpose.msra.mxu0 0.0
      %1020 = vmatprep.subr.mxu0 0.0
      %1021 = vmatpush1.xpose.msra.mxu0 0.0
      %1022 = vmatprep.subr.mxu0 0.0
      %1023 = vmatpush1.xpose.msra.mxu0 0.0
      %1024 = vmatprep.subr.mxu0 0.0
      %1025 = vmatpush1.xpose.msra.mxu0 0.0
      %1026 = vmatprep.subr.mxu0 0.0
      %1027 = vmatpush1.xpose.msra.mxu0 0.0
      %1028 = vmatprep.subr.mxu0 0.0
      %1029 = vmatpush1.xpose.msra.mxu0 0.0
      %1030 = vmatprep.subr.mxu0 0.0
      %1031 = vmatpush1.xpose.msra.mxu0 0.0
      %1032 = vmatprep.subr.mxu0 0.0
      %1033 = vmatpush1.xpose.msra.mxu0 0.0
      %1034 = vmatprep.subr.mxu0 0.0
      %1035 = vmatpush1.xpose.msra.mxu0 0.0
      %1036 = vmatprep.subr.mxu0 0.0
      %1037 = vmatpush1.xpose.msra.mxu0 0.0
      %1038 = vmatprep.subr.mxu0 0.0
      %1039 = vmatpush1.xpose.msra.mxu0 0.0
      %1040 = vmatprep.subr.mxu0 0.0
      %1041 = vmatpush1.xpose.msra.mxu0 0.0
      %1042 = vmatprep.subr.mxu0 0.0
      %1043 = vmatpush1.xpose.msra.mxu0 0.0
      %1044 = vmatprep.subr.mxu0 0.0
      %1045 = vmatpush1.xpose.msra.mxu0 0.0
      %1046 = vmatprep.subr.mxu0 0.0
      %1047 = vmatpush1.xpose.msra.mxu0 0.0
      %1048 = vmatprep.subr.mxu0 0.0
      %1049 = vmatpush1.xpose.msra.mxu0 0.0
      %1050 = vmatprep.subr.mxu0 0.0
      %1051 = vmatpush1.xpose.msra.mxu0 0.0
      %1052 = vmatprep.subr.mxu0 0.0
      %1053 = vmatpush1.xpose.msra.mxu0 0.0
      %1054 = vmatprep.subr.mxu0 0.0
      %1055 = vmatpush1.xpose.msra.mxu0 0.0
      %1056 = vmatprep.subr.mxu0 0.0
      %1057 = vmatpush1.xpose.msra.mxu0 0.0
      %1058 = vmatprep.subr.mxu0 0.0
      %1059 = vmatpush1.xpose.msra.mxu0 0.0
      %1060 = vmatprep.subr.mxu0 0.0
      %1061 = vmatpush1.xpose.msra.mxu0 0.0
      %1062 = vmatprep.subr.mxu0 0.0
      %1063 = vmatpush1.xpose.msra.mxu0 0.0
      %1064 = vmatprep.subr.mxu0 0.0
      %1065 = vmatpush1.xpose.msra.mxu0 0.0
      %1066 = vmatprep.subr.mxu0 0.0
      %1067 = vmatpush1.xpose.msra.mxu0 0.0
      %1068 = vmatprep.subr.mxu0 0.0
      %1069 = vmatpush1.xpose.msra.mxu0 0.0
      %1070 = vmatprep.subr.mxu0 0.0
      %1071 = vmatpush1.xpose.msra.mxu0 0.0
      %1072 = vmatprep.subr.mxu0 0.0
      %1073 = vmatpush1.xpose.msra.mxu0 0.0
      %1074 = vmatprep.subr.mxu0 0.0
      %1075 = vmatpush1.xpose.msra.mxu0 0.0
      %1076 = vmatprep.subr.mxu0 0.0
      %1077 = vmatpush1.xpose.msra.mxu0 0.0
      %1078 = vmatprep.subr.mxu0 0.0
      %1079 = vmatpush1.xpose.msra.mxu0 0.0
      %1080 = vmatprep.mubr.f32.mxu0 0.0
      %1081 = vmatmul.mubr.f32.gmra.mrb[0].mxu0 %v1012
      %v1082 = vpop.f32.mrb[0].mxu0
      %v1083 = vadd.f32 0.0, %v1082
      %v1084 = vpop.f32.mrb[0].mxu0
      %1085 = vdwg.mxu0
      %1087 = vrot.lane.b32.xlu0 %v431, 112
      %v1088 = vpop.permute.xlu0 %1087
      %v1089 = vsel %vm472, %v431, 0
      %v1091 = vsel %vm472, %v1088, 0
      %1093 = vmatprep.subr.mxu0 0.0
      %1094 = vmatpush1.xpose.msra.mxu0 %v1091
      %1095 = vmatprep.subr.mxu0 0.0
      %1096 = vmatpush1.xpose.msra.mxu0 0.0
      %1097 = vmatprep.subr.mxu0 0.0
      %1098 = vmatpush1.xpose.msra.mxu0 0.0
      %1099 = vmatprep.subr.mxu0 0.0
      %1100 = vmatpush1.xpose.msra.mxu0 0.0
      %1101 = vmatprep.subr.mxu0 0.0
      %1102 = vmatpush1.xpose.msra.mxu0 0.0
      %1103 = vmatprep.subr.mxu0 0.0
      %1104 = vmatpush1.xpose.msra.mxu0 0.0
      %1105 = vmatprep.subr.mxu0 0.0
      %1106 = vmatpush1.xpose.msra.mxu0 0.0
      %1107 = vmatprep.subr.mxu0 0.0
      %1108 = vmatpush1.xpose.msra.mxu0 0.0
      %1109 = vmatprep.subr.mxu0 0.0
      %1110 = vmatpush1.xpose.msra.mxu0 0.0
      %1111 = vmatprep.subr.mxu0 0.0
      %1112 = vmatpush1.xpose.msra.mxu0 0.0
      %1113 = vmatprep.subr.mxu0 0.0
      %1114 = vmatpush1.xpose.msra.mxu0 0.0
      %1115 = vmatprep.subr.mxu0 0.0
      %1116 = vmatpush1.xpose.msra.mxu0 0.0
      %1117 = vmatprep.subr.mxu0 0.0
      %1118 = vmatpush1.xpose.msra.mxu0 0.0
      %1119 = vmatprep.subr.mxu0 0.0
      %1120 = vmatpush1.xpose.msra.mxu0 0.0
      %1121 = vmatprep.subr.mxu0 0.0
      %1122 = vmatpush1.xpose.msra.mxu0 0.0
      %1123 = vmatprep.subr.mxu0 0.0
      %1124 = vmatpush1.xpose.msra.mxu0 0.0
      %1125 = vmatprep.subr.mxu0 0.0
      %1126 = vmatpush1.xpose.msra.mxu0 0.0
      %1127 = vmatprep.subr.mxu0 0.0
      %1128 = vmatpush1.xpose.msra.mxu0 0.0
      %1129 = vmatprep.subr.mxu0 0.0
      %1130 = vmatpush1.xpose.msra.mxu0 0.0
      %1131 = vmatprep.subr.mxu0 0.0
      %1132 = vmatpush1.xpose.msra.mxu0 0.0
      %1133 = vmatprep.subr.mxu0 0.0
      %1134 = vmatpush1.xpose.msra.mxu0 0.0
      %1135 = vmatprep.subr.mxu0 0.0
      %1136 = vmatpush1.xpose.msra.mxu0 0.0
      %1137 = vmatprep.subr.mxu0 0.0
      %1138 = vmatpush1.xpose.msra.mxu0 0.0
      %1139 = vmatprep.subr.mxu0 0.0
      %1140 = vmatpush1.xpose.msra.mxu0 0.0
      %1141 = vmatprep.subr.mxu0 0.0
      %1142 = vmatpush1.xpose.msra.mxu0 0.0
      %1143 = vmatprep.subr.mxu0 0.0
      %1144 = vmatpush1.xpose.msra.mxu0 0.0
      %1145 = vmatprep.subr.mxu0 0.0
      %1146 = vmatpush1.xpose.msra.mxu0 0.0
      %1147 = vmatprep.subr.mxu0 0.0
      %1148 = vmatpush1.xpose.msra.mxu0 0.0
      %1149 = vmatprep.subr.mxu0 0.0
      %1150 = vmatpush1.xpose.msra.mxu0 0.0
      %1151 = vmatprep.subr.mxu0 0.0
      %1152 = vmatpush1.xpose.msra.mxu0 0.0
      %1153 = vmatprep.subr.mxu0 0.0
      %1154 = vmatpush1.xpose.msra.mxu0 0.0
      %1155 = vmatprep.subr.mxu0 0.0
      %1156 = vmatpush1.xpose.msra.mxu0 0.0
      %1157 = vmatprep.mubr.f32.mxu0 0.0
      %1158 = vmatmul.mubr.f32.gmra.mrb[0].mxu0 %v1089
      %v1159 = vpop.f32.mrb[0].mxu0
      %v1160 = vadd.f32 0.0, %v1159
      %v1161 = vpop.f32.mrb[0].mxu0
      %1162 = vdwg.mxu0
      %1164 = vrot.lane.b32.xlu0 %v436, 112
      %v1165 = vpop.permute.xlu0 %1164
      %v1166 = vsel %vm472, %v436, 0
      %v1168 = vsel %vm472, %v1165, 0
      %1170 = vmatprep.subr.mxu0 0.0
      %1171 = vmatpush1.xpose.msra.mxu0 %v1168
      %1172 = vmatprep.subr.mxu0 0.0
      %1173 = vmatpush1.xpose.msra.mxu0 0.0
      %1174 = vmatprep.subr.mxu0 0.0
      %1175 = vmatpush1.xpose.msra.mxu0 0.0
      %1176 = vmatprep.subr.mxu0 0.0
      %1177 = vmatpush1.xpose.msra.mxu0 0.0
      %1178 = vmatprep.subr.mxu0 0.0
      %1179 = vmatpush1.xpose.msra.mxu0 0.0
      %1180 = vmatprep.subr.mxu0 0.0
      %1181 = vmatpush1.xpose.msra.mxu0 0.0
      %1182 = vmatprep.subr.mxu0 0.0
      %1183 = vmatpush1.xpose.msra.mxu0 0.0
      %1184 = vmatprep.subr.mxu0 0.0
      %1185 = vmatpush1.xpose.msra.mxu0 0.0
      %1186 = vmatprep.subr.mxu0 0.0
      %1187 = vmatpush1.xpose.msra.mxu0 0.0
      %1188 = vmatprep.subr.mxu0 0.0
      %1189 = vmatpush1.xpose.msra.mxu0 0.0
      %1190 = vmatprep.subr.mxu0 0.0
      %1191 = vmatpush1.xpose.msra.mxu0 0.0
      %1192 = vmatprep.subr.mxu0 0.0
      %1193 = vmatpush1.xpose.msra.mxu0 0.0
      %1194 = vmatprep.subr.mxu0 0.0
      %1195 = vmatpush1.xpose.msra.mxu0 0.0
      %1196 = vmatprep.subr.mxu0 0.0
      %1197 = vmatpush1.xpose.msra.mxu0 0.0
      %1198 = vmatprep.subr.mxu0 0.0
      %1199 = vmatpush1.xpose.msra.mxu0 0.0
      %1200 = vmatprep.subr.mxu0 0.0
      %1201 = vmatpush1.xpose.msra.mxu0 0.0
      %1202 = vmatprep.subr.mxu0 0.0
      %1203 = vmatpush1.xpose.msra.mxu0 0.0
      %1204 = vmatprep.subr.mxu0 0.0
      %1205 = vmatpush1.xpose.msra.mxu0 0.0
      %1206 = vmatprep.subr.mxu0 0.0
      %1207 = vmatpush1.xpose.msra.mxu0 0.0
      %1208 = vmatprep.subr.mxu0 0.0
      %1209 = vmatpush1.xpose.msra.mxu0 0.0
      %1210 = vmatprep.subr.mxu0 0.0
      %1211 = vmatpush1.xpose.msra.mxu0 0.0
      %1212 = vmatprep.subr.mxu0 0.0
      %1213 = vmatpush1.xpose.msra.mxu0 0.0
      %1214 = vmatprep.subr.mxu0 0.0
      %1215 = vmatpush1.xpose.msra.mxu0 0.0
      %1216 = vmatprep.subr.mxu0 0.0
      %1217 = vmatpush1.xpose.msra.mxu0 0.0
      %1218 = vmatprep.subr.mxu0 0.0
      %1219 = vmatpush1.xpose.msra.mxu0 0.0
      %1220 = vmatprep.subr.mxu0 0.0
      %1221 = vmatpush1.xpose.msra.mxu0 0.0
      %1222 = vmatprep.subr.mxu0 0.0
      %1223 = vmatpush1.xpose.msra.mxu0 0.0
      %1224 = vmatprep.subr.mxu0 0.0
      %1225 = vmatpush1.xpose.msra.mxu0 0.0
      %1226 = vmatprep.subr.mxu0 0.0
      %1227 = vmatpush1.xpose.msra.mxu0 0.0
      %1228 = vmatprep.subr.mxu0 0.0
      %1229 = vmatpush1.xpose.msra.mxu0 0.0
      %1230 = vmatprep.subr.mxu0 0.0
      %1231 = vmatpush1.xpose.msra.mxu0 0.0
      %1232 = vmatprep.subr.mxu0 0.0
      %1233 = vmatpush1.xpose.msra.mxu0 0.0
      %1234 = vmatprep.mubr.f32.mxu0 0.0
      %1235 = vmatmul.mubr.f32.gmra.mrb[0].mxu0 %v1166
      %v1236 = vpop.f32.mrb[0].mxu0
      %v1237 = vadd.f32 0.0, %v1236
      %v1238 = vpop.f32.mrb[0].mxu0
      %1239 = vdwg.mxu0
      %1241 = vrot.lane.b32.xlu0 %v441, 112
      %v1242 = vpop.permute.xlu0 %1241
      %v1243 = vsel %vm472, %v441, 0
      %v1245 = vsel %vm472, %v1242, 0
      %1247 = vmatprep.subr.mxu0 0.0
      %1248 = vmatpush1.xpose.msra.mxu0 %v1245
      %1249 = vmatprep.subr.mxu0 0.0
      %1250 = vmatpush1.xpose.msra.mxu0 0.0
      %1251 = vmatprep.subr.mxu0 0.0
      %1252 = vmatpush1.xpose.msra.mxu0 0.0
      %1253 = vmatprep.subr.mxu0 0.0
      %1254 = vmatpush1.xpose.msra.mxu0 0.0
      %1255 = vmatprep.subr.mxu0 0.0
      %1256 = vmatpush1.xpose.msra.mxu0 0.0
      %1257 = vmatprep.subr.mxu0 0.0
      %1258 = vmatpush1.xpose.msra.mxu0 0.0
      %1259 = vmatprep.subr.mxu0 0.0
      %1260 = vmatpush1.xpose.msra.mxu0 0.0
      %1261 = vmatprep.subr.mxu0 0.0
      %1262 = vmatpush1.xpose.msra.mxu0 0.0
      %1263 = vmatprep.subr.mxu0 0.0
      %1264 = vmatpush1.xpose.msra.mxu0 0.0
      %1265 = vmatprep.subr.mxu0 0.0
      %1266 = vmatpush1.xpose.msra.mxu0 0.0
      %1267 = vmatprep.subr.mxu0 0.0
      %1268 = vmatpush1.xpose.msra.mxu0 0.0
      %1269 = vmatprep.subr.mxu0 0.0
      %1270 = vmatpush1.xpose.msra.mxu0 0.0
      %1271 = vmatprep.subr.mxu0 0.0
      %1272 = vmatpush1.xpose.msra.mxu0 0.0
      %1273 = vmatprep.subr.mxu0 0.0
      %1274 = vmatpush1.xpose.msra.mxu0 0.0
      %1275 = vmatprep.subr.mxu0 0.0
      %1276 = vmatpush1.xpose.msra.mxu0 0.0
      %1277 = vmatprep.subr.mxu0 0.0
      %1278 = vmatpush1.xpose.msra.mxu0 0.0
      %1279 = vmatprep.subr.mxu0 0.0
      %1280 = vmatpush1.xpose.msra.mxu0 0.0
      %1281 = vmatprep.subr.mxu0 0.0
      %1282 = vmatpush1.xpose.msra.mxu0 0.0
      %1283 = vmatprep.subr.mxu0 0.0
      %1284 = vmatpush1.xpose.msra.mxu0 0.0
      %1285 = vmatprep.subr.mxu0 0.0
      %1286 = vmatpush1.xpose.msra.mxu0 0.0
      %1287 = vmatprep.subr.mxu0 0.0
      %1288 = vmatpush1.xpose.msra.mxu0 0.0
      %1289 = vmatprep.subr.mxu0 0.0
      %1290 = vmatpush1.xpose.msra.mxu0 0.0
      %1291 = vmatprep.subr.mxu0 0.0
      %1292 = vmatpush1.xpose.msra.mxu0 0.0
      %1293 = vmatprep.subr.mxu0 0.0
      %1294 = vmatpush1.xpose.msra.mxu0 0.0
      %1295 = vmatprep.subr.mxu0 0.0
      %1296 = vmatpush1.xpose.msra.mxu0 0.0
      %1297 = vmatprep.subr.mxu0 0.0
      %1298 = vmatpush1.xpose.msra.mxu0 0.0
      %1299 = vmatprep.subr.mxu0 0.0
      %1300 = vmatpush1.xpose.msra.mxu0 0.0
      %1301 = vmatprep.subr.mxu0 0.0
      %1302 = vmatpush1.xpose.msra.mxu0 0.0
      %1303 = vmatprep.subr.mxu0 0.0
      %1304 = vmatpush1.xpose.msra.mxu0 0.0
      %1305 = vmatprep.subr.mxu0 0.0
      %1306 = vmatpush1.xpose.msra.mxu0 0.0
      %1307 = vmatprep.subr.mxu0 0.0
      %1308 = vmatpush1.xpose.msra.mxu0 0.0
      %1309 = vmatprep.subr.mxu0 0.0
      %1310 = vmatpush1.xpose.msra.mxu0 0.0
      %1311 = vmatprep.mubr.f32.mxu0 0.0
      %1312 = vmatmul.mubr.f32.gmra.mrb[0].mxu0 %v1243
      %v1313 = vpop.f32.mrb[0].mxu0
      %v1314 = vadd.f32 0.0, %v1313
      %v1315 = vpop.f32.mrb[0].mxu0
      %1316 = vdwg.mxu0
      %1318 = vrot.lane.b32.xlu0 %v446, 112
      %v1319 = vpop.permute.xlu0 %1318
      %v1320 = vsel %vm472, %v446, 0
      %v1322 = vsel %vm472, %v1319, 0
      %1324 = vmatprep.subr.mxu0 0.0
      %1325 = vmatpush1.xpose.msra.mxu0 %v1322
      %1326 = vmatprep.subr.mxu0 0.0
      %1327 = vmatpush1.xpose.msra.mxu0 0.0
      %1328 = vmatprep.subr.mxu0 0.0
      %1329 = vmatpush1.xpose.msra.mxu0 0.0
      %1330 = vmatprep.subr.mxu0 0.0
      %1331 = vmatpush1.xpose.msra.mxu0 0.0
      %1332 = vmatprep.subr.mxu0 0.0
      %1333 = vmatpush1.xpose.msra.mxu0 0.0
      %1334 = vmatprep.subr.mxu0 0.0
      %1335 = vmatpush1.xpose.msra.mxu0 0.0
      %1336 = vmatprep.subr.mxu0 0.0
      %1337 = vmatpush1.xpose.msra.mxu0 0.0
      %1338 = vmatprep.subr.mxu0 0.0
      %1339 = vmatpush1.xpose.msra.mxu0 0.0
      %1340 = vmatprep.subr.mxu0 0.0
      %1341 = vmatpush1.xpose.msra.mxu0 0.0
      %1342 = vmatprep.subr.mxu0 0.0
      %1343 = vmatpush1.xpose.msra.mxu0 0.0
      %1344 = vmatprep.subr.mxu0 0.0
      %1345 = vmatpush1.xpose.msra.mxu0 0.0
      %1346 = vmatprep.subr.mxu0 0.0
      %1347 = vmatpush1.xpose.msra.mxu0 0.0
      %1348 = vmatprep.subr.mxu0 0.0
      %1349 = vmatpush1.xpose.msra.mxu0 0.0
      %1350 = vmatprep.subr.mxu0 0.0
      %1351 = vmatpush1.xpose.msra.mxu0 0.0
      %1352 = vmatprep.subr.mxu0 0.0
      %1353 = vmatpush1.xpose.msra.mxu0 0.0
      %1354 = vmatprep.subr.mxu0 0.0
      %1355 = vmatpush1.xpose.msra.mxu0 0.0
      %1356 = vmatprep.subr.mxu0 0.0
      %1357 = vmatpush1.xpose.msra.mxu0 0.0
      %1358 = vmatprep.subr.mxu0 0.0
      %1359 = vmatpush1.xpose.msra.mxu0 0.0
      %1360 = vmatprep.subr.mxu0 0.0
      %1361 = vmatpush1.xpose.msra.mxu0 0.0
      %1362 = vmatprep.subr.mxu0 0.0
      %1363 = vmatpush1.xpose.msra.mxu0 0.0
      %1364 = vmatprep.subr.mxu0 0.0
      %1365 = vmatpush1.xpose.msra.mxu0 0.0
      %1366 = vmatprep.subr.mxu0 0.0
      %1367 = vmatpush1.xpose.msra.mxu0 0.0
      %1368 = vmatprep.subr.mxu0 0.0
      %1369 = vmatpush1.xpose.msra.mxu0 0.0
      %1370 = vmatprep.subr.mxu0 0.0
      %1371 = vmatpush1.xpose.msra.mxu0 0.0
      %1372 = vmatprep.subr.mxu0 0.0
      %1373 = vmatpush1.xpose.msra.mxu0 0.0
      %1374 = vmatprep.subr.mxu0 0.0
      %1375 = vmatpush1.xpose.msra.mxu0 0.0
      %1376 = vmatprep.subr.mxu0 0.0
      %1377 = vmatpush1.xpose.msra.mxu0 0.0
      %1378 = vmatprep.subr.mxu0 0.0
      %1379 = vmatpush1.xpose.msra.mxu0 0.0
      %1380 = vmatprep.subr.mxu0 0.0
      %1381 = vmatpush1.xpose.msra.mxu0 0.0
      %1382 = vmatprep.subr.mxu0 0.0
      %1383 = vmatpush1.xpose.msra.mxu0 0.0
      %1384 = vmatprep.subr.mxu0 0.0
      %1385 = vmatpush1.xpose.msra.mxu0 0.0
      %1386 = vmatprep.subr.mxu0 0.0
      %1387 = vmatpush1.xpose.msra.mxu0 0.0
      %1388 = vmatprep.mubr.f32.mxu0 0.0
      %1389 = vmatmul.mubr.f32.gmra.mrb[0].mxu0 %v1320
      %v1390 = vpop.f32.mrb[0].mxu0
      %v1391 = vadd.f32 0.0, %v1390
      %v1392 = vpop.f32.mrb[0].mxu0
      %1393 = vdwg.mxu0
      %1395 = vrot.lane.b32.xlu0 %v451, 112
      %v1396 = vpop.permute.xlu0 %1395
      %v1397 = vsel %vm472, %v451, 0
      %v1399 = vsel %vm472, %v1396, 0
      %1401 = vmatprep.subr.mxu0 0.0
      %1402 = vmatpush1.xpose.msra.mxu0 %v1399
      %1403 = vmatprep.subr.mxu0 0.0
      %1404 = vmatpush1.xpose.msra.mxu0 0.0
      %1405 = vmatprep.subr.mxu0 0.0
      %1406 = vmatpush1.xpose.msra.mxu0 0.0
      %1407 = vmatprep.subr.mxu0 0.0
      %1408 = vmatpush1.xpose.msra.mxu0 0.0
      %1409 = vmatprep.subr.mxu0 0.0
      %1410 = vmatpush1.xpose.msra.mxu0 0.0
      %1411 = vmatprep.subr.mxu0 0.0
      %1412 = vmatpush1.xpose.msra.mxu0 0.0
      %1413 = vmatprep.subr.mxu0 0.0
      %1414 = vmatpush1.xpose.msra.mxu0 0.0
      %1415 = vmatprep.subr.mxu0 0.0
      %1416 = vmatpush1.xpose.msra.mxu0 0.0
      %1417 = vmatprep.subr.mxu0 0.0
      %1418 = vmatpush1.xpose.msra.mxu0 0.0
      %1419 = vmatprep.subr.mxu0 0.0
      %1420 = vmatpush1.xpose.msra.mxu0 0.0
      %1421 = vmatprep.subr.mxu0 0.0
      %1422 = vmatpush1.xpose.msra.mxu0 0.0
      %1423 = vmatprep.subr.mxu0 0.0
      %1424 = vmatpush1.xpose.msra.mxu0 0.0
      %1425 = vmatprep.subr.mxu0 0.0
      %1426 = vmatpush1.xpose.msra.mxu0 0.0
      %1427 = vmatprep.subr.mxu0 0.0
      %1428 = vmatpush1.xpose.msra.mxu0 0.0
      %1429 = vmatprep.subr.mxu0 0.0
      %1430 = vmatpush1.xpose.msra.mxu0 0.0
      %1431 = vmatprep.subr.mxu0 0.0
      %1432 = vmatpush1.xpose.msra.mxu0 0.0
      %1433 = vmatprep.subr.mxu0 0.0
      %1434 = vmatpush1.xpose.msra.mxu0 0.0
      %1435 = vmatprep.subr.mxu0 0.0
      %1436 = vmatpush1.xpose.msra.mxu0 0.0
      %1437 = vmatprep.subr.mxu0 0.0
      %1438 = vmatpush1.xpose.msra.mxu0 0.0
      %1439 = vmatprep.subr.mxu0 0.0
      %1440 = vmatpush1.xpose.msra.mxu0 0.0
      %1441 = vmatprep.subr.mxu0 0.0
      %1442 = vmatpush1.xpose.msra.mxu0 0.0
      %1443 = vmatprep.subr.mxu0 0.0
      %1444 = vmatpush1.xpose.msra.mxu0 0.0
      %1445 = vmatprep.subr.mxu0 0.0
      %1446 = vmatpush1.xpose.msra.mxu0 0.0
      %1447 = vmatprep.subr.mxu0 0.0
      %1448 = vmatpush1.xpose.msra.mxu0 0.0
      %1449 = vmatprep.subr.mxu0 0.0
      %1450 = vmatpush1.xpose.msra.mxu0 0.0
      %1451 = vmatprep.subr.mxu0 0.0
      %1452 = vmatpush1.xpose.msra.mxu0 0.0
      %1453 = vmatprep.subr.mxu0 0.0
      %1454 = vmatpush1.xpose.msra.mxu0 0.0
      %1455 = vmatprep.subr.mxu0 0.0
      %1456 = vmatpush1.xpose.msra.mxu0 0.0
      %1457 = vmatprep.subr.mxu0 0.0
      %1458 = vmatpush1.xpose.msra.mxu0 0.0
      %1459 = vmatprep.subr.mxu0 0.0
      %1460 = vmatpush1.xpose.msra.mxu0 0.0
      %1461 = vmatprep.subr.mxu0 0.0
      %1462 = vmatpush1.xpose.msra.mxu0 0.0
      %1463 = vmatprep.subr.mxu0 0.0
      %1464 = vmatpush1.xpose.msra.mxu0 0.0
      %1465 = vmatprep.mubr.f32.mxu0 0.0
      %1466 = vmatmul.mubr.f32.gmra.mrb[0].mxu0 %v1397
      %v1467 = vpop.f32.mrb[0].mxu0
      %v1468 = vadd.f32 0.0, %v1467
      %v1469 = vpop.f32.mrb[0].mxu0
      %1470 = vdwg.mxu0
      %1472 = vrot.lane.b32.xlu0 %v456, 112
      %v1473 = vpop.permute.xlu0 %1472
      %v1474 = vsel %vm472, %v456, 0
      %v1476 = vsel %vm472, %v1473, 0
      %1478 = vmatprep.subr.mxu0 0.0
      %1479 = vmatpush1.xpose.msra.mxu0 %v1476
      %1480 = vmatprep.subr.mxu0 0.0
      %1481 = vmatpush1.xpose.msra.mxu0 0.0
      %1482 = vmatprep.subr.mxu0 0.0
      %1483 = vmatpush1.xpose.msra.mxu0 0.0
      %1484 = vmatprep.subr.mxu0 0.0
      %1485 = vmatpush1.xpose.msra.mxu0 0.0
      %1486 = vmatprep.subr.mxu0 0.0
      %1487 = vmatpush1.xpose.msra.mxu0 0.0
      %1488 = vmatprep.subr.mxu0 0.0
      %1489 = vmatpush1.xpose.msra.mxu0 0.0
      %1490 = vmatprep.subr.mxu0 0.0
      %1491 = vmatpush1.xpose.msra.mxu0 0.0
      %1492 = vmatprep.subr.mxu0 0.0
      %1493 = vmatpush1.xpose.msra.mxu0 0.0
      %1494 = vmatprep.subr.mxu0 0.0
      %1495 = vmatpush1.xpose.msra.mxu0 0.0
      %1496 = vmatprep.subr.mxu0 0.0
      %1497 = vmatpush1.xpose.msra.mxu0 0.0
      %1498 = vmatprep.subr.mxu0 0.0
      %1499 = vmatpush1.xpose.msra.mxu0 0.0
      %1500 = vmatprep.subr.mxu0 0.0
      %1501 = vmatpush1.xpose.msra.mxu0 0.0
      %1502 = vmatprep.subr.mxu0 0.0
      %1503 = vmatpush1.xpose.msra.mxu0 0.0
      %1504 = vmatprep.subr.mxu0 0.0
      %1505 = vmatpush1.xpose.msra.mxu0 0.0
      %1506 = vmatprep.subr.mxu0 0.0
      %1507 = vmatpush1.xpose.msra.mxu0 0.0
      %1508 = vmatprep.subr.mxu0 0.0
      %1509 = vmatpush1.xpose.msra.mxu0 0.0
      %1510 = vmatprep.subr.mxu0 0.0
      %1511 = vmatpush1.xpose.msra.mxu0 0.0
      %1512 = vmatprep.subr.mxu0 0.0
      %1513 = vmatpush1.xpose.msra.mxu0 0.0
      %1514 = vmatprep.subr.mxu0 0.0
      %1515 = vmatpush1.xpose.msra.mxu0 0.0
      %1516 = vmatprep.subr.mxu0 0.0
      %1517 = vmatpush1.xpose.msra.mxu0 0.0
      %1518 = vmatprep.subr.mxu0 0.0
      %1519 = vmatpush1.xpose.msra.mxu0 0.0
      %1520 = vmatprep.subr.mxu0 0.0
      %1521 = vmatpush1.xpose.msra.mxu0 0.0
      %1522 = vmatprep.subr.mxu0 0.0
      %1523 = vmatpush1.xpose.msra.mxu0 0.0
      %1524 = vmatprep.subr.mxu0 0.0
      %1525 = vmatpush1.xpose.msra.mxu0 0.0
      %1526 = vmatprep.subr.mxu0 0.0
      %1527 = vmatpush1.xpose.msra.mxu0 0.0
      %1528 = vmatprep.subr.mxu0 0.0
      %1529 = vmatpush1.xpose.msra.mxu0 0.0
      %1530 = vmatprep.subr.mxu0 0.0
      %1531 = vmatpush1.xpose.msra.mxu0 0.0
      %1532 = vmatprep.subr.mxu0 0.0
      %1533 = vmatpush1.xpose.msra.mxu0 0.0
      %1534 = vmatprep.subr.mxu0 0.0
      %1535 = vmatpush1.xpose.msra.mxu0 0.0
      %1536 = vmatprep.subr.mxu0 0.0
      %1537 = vmatpush1.xpose.msra.mxu0 0.0
      %1538 = vmatprep.subr.mxu0 0.0
      %1539 = vmatpush1.xpose.msra.mxu0 0.0
      %1540 = vmatprep.subr.mxu0 0.0
      %1541 = vmatpush1.xpose.msra.mxu0 0.0
      %1542 = vmatprep.mubr.f32.mxu0 0.0
      %1543 = vmatmul.mubr.f32.gmra.mrb[0].mxu0 %v1474
      %v1544 = vpop.f32.mrb[0].mxu0
      %v1545 = vadd.f32 0.0, %v1544
      %v1546 = vpop.f32.mrb[0].mxu0
      %1547 = vdwg.mxu0
      %1549 = vrot.lane.b32.xlu0 %v461, 112
      %v1550 = vpop.permute.xlu0 %1549
      %v1551 = vsel %vm472, %v461, 0
      %v1553 = vsel %vm472, %v1550, 0
      %1555 = vmatprep.subr.mxu0 0.0
      %1556 = vmatpush1.xpose.msra.mxu0 %v1553
      %1557 = vmatprep.subr.mxu0 0.0
      %1558 = vmatpush1.xpose.msra.mxu0 0.0
      %1559 = vmatprep.subr.mxu0 0.0
      %1560 = vmatpush1.xpose.msra.mxu0 0.0
      %1561 = vmatprep.subr.mxu0 0.0
      %1562 = vmatpush1.xpose.msra.mxu0 0.0
      %1563 = vmatprep.subr.mxu0 0.0
      %1564 = vmatpush1.xpose.msra.mxu0 0.0
      %1565 = vmatprep.subr.mxu0 0.0
      %1566 = vmatpush1.xpose.msra.mxu0 0.0
      %1567 = vmatprep.subr.mxu0 0.0
      %1568 = vmatpush1.xpose.msra.mxu0 0.0
      %1569 = vmatprep.subr.mxu0 0.0
      %1570 = vmatpush1.xpose.msra.mxu0 0.0
      %1571 = vmatprep.subr.mxu0 0.0
      %1572 = vmatpush1.xpose.msra.mxu0 0.0
      %1573 = vmatprep.subr.mxu0 0.0
      %1574 = vmatpush1.xpose.msra.mxu0 0.0
      %1575 = vmatprep.subr.mxu0 0.0
      %1576 = vmatpush1.xpose.msra.mxu0 0.0
      %1577 = vmatprep.subr.mxu0 0.0
      %1578 = vmatpush1.xpose.msra.mxu0 0.0
      %1579 = vmatprep.subr.mxu0 0.0
      %1580 = vmatpush1.xpose.msra.mxu0 0.0
      %1581 = vmatprep.subr.mxu0 0.0
      %1582 = vmatpush1.xpose.msra.mxu0 0.0
      %1583 = vmatprep.subr.mxu0 0.0
      %1584 = vmatpush1.xpose.msra.mxu0 0.0
      %1585 = vmatprep.subr.mxu0 0.0
      %1586 = vmatpush1.xpose.msra.mxu0 0.0
      %1587 = vmatprep.subr.mxu0 0.0
      %1588 = vmatpush1.xpose.msra.mxu0 0.0
      %1589 = vmatprep.subr.mxu0 0.0
      %1590 = vmatpush1.xpose.msra.mxu0 0.0
      %1591 = vmatprep.subr.mxu0 0.0
      %1592 = vmatpush1.xpose.msra.mxu0 0.0
      %1593 = vmatprep.subr.mxu0 0.0
      %1594 = vmatpush1.xpose.msra.mxu0 0.0
      %1595 = vmatprep.subr.mxu0 0.0
      %1596 = vmatpush1.xpose.msra.mxu0 0.0
      %1597 = vmatprep.subr.mxu0 0.0
      %1598 = vmatpush1.xpose.msra.mxu0 0.0
      %1599 = vmatprep.subr.mxu0 0.0
      %1600 = vmatpush1.xpose.msra.mxu0 0.0
      %1601 = vmatprep.subr.mxu0 0.0
      %1602 = vmatpush1.xpose.msra.mxu0 0.0
      %1603 = vmatprep.subr.mxu0 0.0
      %1604 = vmatpush1.xpose.msra.mxu0 0.0
      %1605 = vmatprep.subr.mxu0 0.0
      %1606 = vmatpush1.xpose.msra.mxu0 0.0
      %1607 = vmatprep.subr.mxu0 0.0
      %1608 = vmatpush1.xpose.msra.mxu0 0.0
      %1609 = vmatprep.subr.mxu0 0.0
      %1610 = vmatpush1.xpose.msra.mxu0 0.0
      %1611 = vmatprep.subr.mxu0 0.0
      %1612 = vmatpush1.xpose.msra.mxu0 0.0
      %1613 = vmatprep.subr.mxu0 0.0
      %1614 = vmatpush1.xpose.msra.mxu0 0.0
      %1615 = vmatprep.subr.mxu0 0.0
      %1616 = vmatpush1.xpose.msra.mxu0 0.0
      %1617 = vmatprep.subr.mxu0 0.0
      %1618 = vmatpush1.xpose.msra.mxu0 0.0
      %1619 = vmatprep.mubr.f32.mxu0 0.0
      %1620 = vmatmul.mubr.f32.gmra.mrb[0].mxu0 %v1551
      %v1621 = vpop.f32.mrb[0].mxu0
      %v1622 = vadd.f32 0.0, %v1621
      %v1623 = vpop.f32.mrb[0].mxu0
      %1624 = vdwg.mxu0
      %1626 = vrot.lane.b32.xlu0 %v466, 112
      %v1627 = vpop.permute.xlu0 %1626
      %v1628 = vsel %vm472, %v466, 0
      %v1630 = vsel %vm472, %v1627, 0
      %1632 = vmatprep.subr.mxu0 0.0
      %1633 = vmatpush1.xpose.msra.mxu0 %v1630
      %1634 = vmatprep.subr.mxu0 0.0
      %1635 = vmatpush1.xpose.msra.mxu0 0.0
      %1636 = vmatprep.subr.mxu0 0.0
      %1637 = vmatpush1.xpose.msra.mxu0 0.0
      %1638 = vmatprep.subr.mxu0 0.0
      %1639 = vmatpush1.xpose.msra.mxu0 0.0
      %1640 = vmatprep.subr.mxu0 0.0
      %1641 = vmatpush1.xpose.msra.mxu0 0.0
      %1642 = vmatprep.subr.mxu0 0.0
      %1643 = vmatpush1.xpose.msra.mxu0 0.0
      %1644 = vmatprep.subr.mxu0 0.0
      %1645 = vmatpush1.xpose.msra.mxu0 0.0
      %1646 = vmatprep.subr.mxu0 0.0
      %1647 = vmatpush1.xpose.msra.mxu0 0.0
      %1648 = vmatprep.subr.mxu0 0.0
      %1649 = vmatpush1.xpose.msra.mxu0 0.0
      %1650 = vmatprep.subr.mxu0 0.0
      %1651 = vmatpush1.xpose.msra.mxu0 0.0
      %1652 = vmatprep.subr.mxu0 0.0
      %1653 = vmatpush1.xpose.msra.mxu0 0.0
      %1654 = vmatprep.subr.mxu0 0.0
      %1655 = vmatpush1.xpose.msra.mxu0 0.0
      %1656 = vmatprep.subr.mxu0 0.0
      %1657 = vmatpush1.xpose.msra.mxu0 0.0
      %1658 = vmatprep.subr.mxu0 0.0
      %1659 = vmatpush1.xpose.msra.mxu0 0.0
      %1660 = vmatprep.subr.mxu0 0.0
      %1661 = vmatpush1.xpose.msra.mxu0 0.0
      %1662 = vmatprep.subr.mxu0 0.0
      %1663 = vmatpush1.xpose.msra.mxu0 0.0
      %1664 = vmatprep.subr.mxu0 0.0
      %1665 = vmatpush1.xpose.msra.mxu0 0.0
      %1666 = vmatprep.subr.mxu0 0.0
      %1667 = vmatpush1.xpose.msra.mxu0 0.0
      %1668 = vmatprep.subr.mxu0 0.0
      %1669 = vmatpush1.xpose.msra.mxu0 0.0
      %1670 = vmatprep.subr.mxu0 0.0
      %1671 = vmatpush1.xpose.msra.mxu0 0.0
      %1672 = vmatprep.subr.mxu0 0.0
      %1673 = vmatpush1.xpose.msra.mxu0 0.0
      %1674 = vmatprep.subr.mxu0 0.0
      %1675 = vmatpush1.xpose.msra.mxu0 0.0
      %1676 = vmatprep.subr.mxu0 0.0
      %1677 = vmatpush1.xpose.msra.mxu0 0.0
      %1678 = vmatprep.subr.mxu0 0.0
      %1679 = vmatpush1.xpose.msra.mxu0 0.0
      %1680 = vmatprep.subr.mxu0 0.0
      %1681 = vmatpush1.xpose.msra.mxu0 0.0
      %1682 = vmatprep.subr.mxu0 0.0
      %1683 = vmatpush1.xpose.msra.mxu0 0.0
      %1684 = vmatprep.subr.mxu0 0.0
      %1685 = vmatpush1.xpose.msra.mxu0 0.0
      %1686 = vmatprep.subr.mxu0 0.0
      %1687 = vmatpush1.xpose.msra.mxu0 0.0
      %1688 = vmatprep.subr.mxu0 0.0
      %1689 = vmatpush1.xpose.msra.mxu0 0.0
      %1690 = vmatprep.subr.mxu0 0.0
      %1691 = vmatpush1.xpose.msra.mxu0 0.0
      %1692 = vmatprep.subr.mxu0 0.0
      %1693 = vmatpush1.xpose.msra.mxu0 0.0
      %1694 = vmatprep.subr.mxu0 0.0
      %1695 = vmatpush1.xpose.msra.mxu0 0.0
      %1696 = vmatprep.mubr.f32.mxu0 0.0
      %1697 = vmatmul.mubr.f32.gmra.mrb[0].mxu0 %v1628
      %v1698 = vpop.f32.mrb[0].mxu0
      %v1699 = vadd.f32 0.0, %v1698
      %v1700 = vpop.f32.mrb[0].mxu0
      %1701 = vdwg.mxu0
      %v1702 = vmul.f32 %v544, 0.35355338
      %v1703 = vmul.f32 %v621, 0.35355338
      %v1704 = vmul.f32 %v698, 0.35355338
      %v1705 = vmul.f32 %v775, 0.35355338
      %v1706 = vmul.f32 %v852, 0.35355338
      %v1707 = vmul.f32 %v929, 0.35355338
      %v1708 = vmul.f32 %v1006, 0.35355338
      %v1709 = vmul.f32 %v1083, 0.35355338
      %v1710 = vmul.f32 %v1160, 0.35355338
      %v1711 = vmul.f32 %v1237, 0.35355338
      %v1712 = vmul.f32 %v1314, 0.35355338
      %v1713 = vmul.f32 %v1391, 0.35355338
      %v1714 = vmul.f32 %v1468, 0.35355338
      %v1715 = vmul.f32 %v1545, 0.35355338
      %v1716 = vmul.f32 %v1622, 0.35355338
      %v1717 = vmul.f32 %v1699, 0.35355338
      %v1718 = vsel %vm472, %v1702, -inf
      %1719 = vmax.xlane.f32.xlu0 %v1718
      %v1720 = vpop.xlane.xlu0 %1719
      %v1721 = vsel %vm472, %v1703, -inf
      %1722 = vmax.xlane.f32.xlu0 %v1721
      %v1723 = vpop.xlane.xlu0 %1722
      %v1724 = vsel %vm472, %v1704, -inf
      %1725 = vmax.xlane.f32.xlu0 %v1724
      %v1726 = vpop.xlane.xlu0 %1725
      %v1727 = vsel %vm472, %v1705, -inf
      %1728 = vmax.xlane.f32.xlu0 %v1727
      %v1729 = vpop.xlane.xlu0 %1728
      %v1730 = vsel %vm472, %v1706, -inf
      %1731 = vmax.xlane.f32.xlu0 %v1730
      %v1732 = vpop.xlane.xlu0 %1731
      %v1733 = vsel %vm472, %v1707, -inf
      %1734 = vmax.xlane.f32.xlu0 %v1733
      %v1735 = vpop.xlane.xlu0 %1734
      %v1736 = vsel %vm472, %v1708, -inf
      %1737 = vmax.xlane.f32.xlu0 %v1736
      %v1738 = vpop.xlane.xlu0 %1737
      %v1739 = vsel %vm472, %v1709, -inf
      %1740 = vmax.xlane.f32.xlu0 %v1739
      %v1741 = vpop.xlane.xlu0 %1740
      %v1742 = vsel %vm472, %v1710, -inf
      %1743 = vmax.xlane.f32.xlu0 %v1742
      %v1744 = vpop.xlane.xlu0 %1743
      %v1745 = vsel %vm472, %v1711, -inf
      %1746 = vmax.xlane.f32.xlu0 %v1745
      %v1747 = vpop.xlane.xlu0 %1746
      %v1748 = vsel %vm472, %v1712, -inf
      %1749 = vmax.xlane.f32.xlu0 %v1748
      %v1750 = vpop.xlane.xlu0 %1749
      %v1751 = vsel %vm472, %v1713, -inf
      %1752 = vmax.xlane.f32.xlu0 %v1751
      %v1753 = vpop.xlane.xlu0 %1752
      %v1754 = vsel %vm472, %v1714, -inf
      %1755 = vmax.xlane.f32.xlu0 %v1754
      %v1756 = vpop.xlane.xlu0 %1755
      %v1757 = vsel %vm472, %v1715, -inf
      %1758 = vmax.xlane.f32.xlu0 %v1757
      %v1759 = vpop.xlane.xlu0 %1758
      %v1760 = vsel %vm472, %v1716, -inf
      %1761 = vmax.xlane.f32.xlu0 %v1760
      %v1762 = vpop.xlane.xlu0 %1761
      %v1763 = vsel %vm472, %v1717, -inf
      %1764 = vmax.xlane.f32.xlu0 %v1763
      %v1765 = vpop.xlane.xlu0 %1764
      %v1766 = vsub.f32 %v1702, %v1720
      %v1767 = vsub.f32 %v1703, %v1723
      %v1768 = vsub.f32 %v1704, %v1726
      %v1769 = vsub.f32 %v1705, %v1729
      %v1770 = vsub.f32 %v1706, %v1732
      %v1771 = vsub.f32 %v1707, %v1735
      %v1772 = vsub.f32 %v1708, %v1738
      %v1773 = vsub.f32 %v1709, %v1741
      %v1774 = vsub.f32 %v1710, %v1744
      %v1775 = vsub.f32 %v1711, %v1747
      %v1776 = vsub.f32 %v1712, %v1750
      %v1777 = vsub.f32 %v1713, %v1753
      %v1778 = vsub.f32 %v1714, %v1756
      %v1779 = vsub.f32 %v1715, %v1759
      %v1780 = vsub.f32 %v1716, %v1762
      %v1781 = vsub.f32 %v1717, %v1765
      %v1782 = vmul.f32 %v1766, 1.442695
      %v1783 = vpow.pop %v1782
      %v1784 = vmul.f32 %v1767, 1.442695
      %v1785 = vpow.pop %v1784
      %v1786 = vmul.f32 %v1768, 1.442695
      %v1787 = vpow.pop %v1786
      %v1788 = vmul.f32 %v1769, 1.442695
      %v1789 = vpow.pop %v1788
      %v1790 = vmul.f32 %v1770, 1.442695
      %v1791 = vpow.pop %v1790
      %v1792 = vmul.f32 %v1771, 1.442695
      %v1793 = vpow.pop %v1792
      %v1794 = vmul.f32 %v1772, 1.442695
      %v1795 = vpow.pop %v1794
      %v1796 = vmul.f32 %v1773, 1.442695
      %v1797 = vpow.pop %v1796
      %v1798 = vmul.f32 %v1774, 1.442695
      %v1799 = vpow.pop %v1798
      %v1800 = vmul.f32 %v1775, 1.442695
      %v1801 = vpow.pop %v1800
      %v1802 = vmul.f32 %v1776, 1.442695
      %v1803 = vpow.pop %v1802
      %v1804 = vmul.f32 %v1777, 1.442695
      %v1805 = vpow.pop %v1804
      %v1806 = vmul.f32 %v1778, 1.442695
      %v1807 = vpow.pop %v1806
      %v1808 = vmul.f32 %v1779, 1.442695
      %v1809 = vpow.pop %v1808
      %v1810 = vmul.f32 %v1780, 1.442695
      %v1811 = vpow.pop %v1810
      %v1812 = vmul.f32 %v1781, 1.442695
      %v1813 = vpow.pop %v1812
      %v1814 = vsel %vm472, %v1783, 0.0
      %1815 = vadd.xlane.f32.xlu0 %v1814
      %v1816 = vpop.xlane.xlu0 %1815
      %v1817 = vsel %vm472, %v1785, 0.0
      %1818 = vadd.xlane.f32.xlu0 %v1817
      %v1819 = vpop.xlane.xlu0 %1818
      %v1820 = vsel %vm472, %v1787, 0.0
      %1821 = vadd.xlane.f32.xlu0 %v1820
      %v1822 = vpop.xlane.xlu0 %1821
      %v1823 = vsel %vm472, %v1789, 0.0
      %1824 = vadd.xlane.f32.xlu0 %v1823
      %v1825 = vpop.xlane.xlu0 %1824
      %v1826 = vsel %vm472, %v1791, 0.0
      %1827 = vadd.xlane.f32.xlu0 %v1826
      %v1828 = vpop.xlane.xlu0 %1827
      %v1829 = vsel %vm472, %v1793, 0.0
      %1830 = vadd.xlane.f32.xlu0 %v1829
      %v1831 = vpop.xlane.xlu0 %1830
      %v1832 = vsel %vm472, %v1795, 0.0
      %1833 = vadd.xlane.f32.xlu0 %v1832
      %v1834 = vpop.xlane.xlu0 %1833
      %v1835 = vsel %vm472, %v1797, 0.0
      %1836 = vadd.xlane.f32.xlu0 %v1835
      %v1837 = vpop.xlane.xlu0 %1836
      %v1838 = vsel %vm472, %v1799, 0.0
      %1839 = vadd.xlane.f32.xlu0 %v1838
      %v1840 = vpop.xlane.xlu0 %1839
      %v1841 = vsel %vm472, %v1801, 0.0
      %1842 = vadd.xlane.f32.xlu0 %v1841
      %v1843 = vpop.xlane.xlu0 %1842
      %v1844 = vsel %vm472, %v1803, 0.0
      %1845 = vadd.xlane.f32.xlu0 %v1844
      %v1846 = vpop.xlane.xlu0 %1845
      %v1847 = vsel %vm472, %v1805, 0.0
      %1848 = vadd.xlane.f32.xlu0 %v1847
      %v1849 = vpop.xlane.xlu0 %1848
      %v1850 = vsel %vm472, %v1807, 0.0
      %1851 = vadd.xlane.f32.xlu0 %v1850
      %v1852 = vpop.xlane.xlu0 %1851
      %v1853 = vsel %vm472, %v1809, 0.0
      %1854 = vadd.xlane.f32.xlu0 %v1853
      %v1855 = vpop.xlane.xlu0 %1854
      %v1856 = vsel %vm472, %v1811, 0.0
      %1857 = vadd.xlane.f32.xlu0 %v1856
      %v1858 = vpop.xlane.xlu0 %1857
      %v1859 = vsel %vm472, %v1813, 0.0
      %1860 = vadd.xlane.f32.xlu0 %v1859
      %v1861 = vpop.xlane.xlu0 %1860
      %v1862 = vrcp.pop %v1816
      %v1863 = vrcp.pop %v1819
      %v1864 = vrcp.pop %v1822
      %v1865 = vrcp.pop %v1825
      %v1866 = vrcp.pop %v1828
      %v1867 = vrcp.pop %v1831
      %v1868 = vrcp.pop %v1834
      %v1869 = vrcp.pop %v1837
      %v1870 = vrcp.pop %v1840
      %v1871 = vrcp.pop %v1843
      %v1872 = vrcp.pop %v1846
      %v1873 = vrcp.pop %v1849
      %v1874 = vrcp.pop %v1852
      %v1875 = vrcp.pop %v1855
      %v1876 = vrcp.pop %v1858
      %v1877 = vrcp.pop %v1861
      %v1878 = vmul.f32 %v1783, %v1862
      %v1879 = vmul.f32 %v1785, %v1863
      %v1880 = vmul.f32 %v1787, %v1864
      %v1881 = vmul.f32 %v1789, %v1865
      %v1882 = vmul.f32 %v1791, %v1866
      %v1883 = vmul.f32 %v1793, %v1867
      %v1884 = vmul.f32 %v1795, %v1868
      %v1885 = vmul.f32 %v1797, %v1869
      %v1886 = vmul.f32 %v1799, %v1870
      %v1887 = vmul.f32 %v1801, %v1871
      %v1888 = vmul.f32 %v1803, %v1872
      %v1889 = vmul.f32 %v1805, %v1873
      %v1890 = vmul.f32 %v1807, %v1874
      %v1891 = vmul.f32 %v1809, %v1875
      %v1892 = vmul.f32 %v1811, %v1876
      %v1893 = vmul.f32 %v1813, %v1877
      %1894 = vrot.lane.b32.xlu0 %v391, 96
      %v1895 = vpop.permute.xlu0 %1894
      %v1898 = vsel %vm472, %v1878, 0
      %1900 = vmatprep.subr.mxu0 0.0
      %1901 = vmatpush1.msra.mxu0 %v1895
      %1902 = vmatprep.subr.mxu0 0.0
      %1903 = vmatpush1.msra.mxu0 0.0
      %1904 = vmatprep.subr.mxu0 0.0
      %1905 = vmatpush1.msra.mxu0 0.0
      %1906 = vmatprep.subr.mxu0 0.0
      %1907 = vmatpush1.msra.mxu0 0.0
      %1908 = vmatprep.subr.mxu0 0.0
      %1909 = vmatpush1.msra.mxu0 0.0
      %1910 = vmatprep.subr.mxu0 0.0
      %1911 = vmatpush1.msra.mxu0 0.0
      %1912 = vmatprep.subr.mxu0 0.0
      %1913 = vmatpush1.msra.mxu0 0.0
      %1914 = vmatprep.subr.mxu0 0.0
      %1915 = vmatpush1.msra.mxu0 0.0
      %1916 = vmatprep.subr.mxu0 0.0
      %1917 = vmatpush1.msra.mxu0 0.0
      %1918 = vmatprep.subr.mxu0 0.0
      %1919 = vmatpush1.msra.mxu0 0.0
      %1920 = vmatprep.subr.mxu0 0.0
      %1921 = vmatpush1.msra.mxu0 0.0
      %1922 = vmatprep.subr.mxu0 0.0
      %1923 = vmatpush1.msra.mxu0 0.0
      %1924 = vmatprep.subr.mxu0 0.0
      %1925 = vmatpush1.msra.mxu0 0.0
      %1926 = vmatprep.subr.mxu0 0.0
      %1927 = vmatpush1.msra.mxu0 0.0
      %1928 = vmatprep.subr.mxu0 0.0
      %1929 = vmatpush1.msra.mxu0 0.0
      %1930 = vmatprep.subr.mxu0 0.0
      %1931 = vmatpush1.msra.mxu0 0.0
      %1932 = vmatprep.subr.mxu0 0.0
      %1933 = vmatpush1.msra.mxu0 0.0
      %1934 = vmatprep.subr.mxu0 0.0
      %1935 = vmatpush1.msra.mxu0 0.0
      %1936 = vmatprep.subr.mxu0 0.0
      %1937 = vmatpush1.msra.mxu0 0.0
      %1938 = vmatprep.subr.mxu0 0.0
      %1939 = vmatpush1.msra.mxu0 0.0
      %1940 = vmatprep.subr.mxu0 0.0
      %1941 = vmatpush1.msra.mxu0 0.0
      %1942 = vmatprep.subr.mxu0 0.0
      %1943 = vmatpush1.msra.mxu0 0.0
      %1944 = vmatprep.subr.mxu0 0.0
      %1945 = vmatpush1.msra.mxu0 0.0
      %1946 = vmatprep.subr.mxu0 0.0
      %1947 = vmatpush1.msra.mxu0 0.0
      %1948 = vmatprep.subr.mxu0 0.0
      %1949 = vmatpush1.msra.mxu0 0.0
      %1950 = vmatprep.subr.mxu0 0.0
      %1951 = vmatpush1.msra.mxu0 0.0
      %1952 = vmatprep.subr.mxu0 0.0
      %1953 = vmatpush1.msra.mxu0 0.0
      %1954 = vmatprep.subr.mxu0 0.0
      %1955 = vmatpush1.msra.mxu0 0.0
      %1956 = vmatprep.subr.mxu0 0.0
      %1957 = vmatpush1.msra.mxu0 0.0
      %1958 = vmatprep.subr.mxu0 0.0
      %1959 = vmatpush1.msra.mxu0 0.0
      %1960 = vmatprep.subr.mxu0 0.0
      %1961 = vmatpush1.msra.mxu0 0.0
      %1962 = vmatprep.subr.mxu0 0.0
      %1963 = vmatpush1.msra.mxu0 0.0
      %1964 = vmatprep.mubr.f32.mxu0 0.0
      %1965 = vmatmul.mubr.f32.gmra.mrb[0].mxu0 %v1898
      %v1966 = vpop.f32.mrb[0].mxu0
      %v1967 = vadd.f32 0.0, %v1966
      %v1968 = vpop.f32.mrb[0].mxu0
      %1969 = vdwg.mxu0
      %1970 = vrot.lane.b32.xlu0 %v396, 96
      %v1971 = vpop.permute.xlu0 %1970
      %v1974 = vsel %vm472, %v1879, 0
      %1976 = vmatprep.subr.mxu0 0.0
      %1977 = vmatpush1.msra.mxu0 %v1971
      %1978 = vmatprep.subr.mxu0 0.0
      %1979 = vmatpush1.msra.mxu0 0.0
      %1980 = vmatprep.subr.mxu0 0.0
      %1981 = vmatpush1.msra.mxu0 0.0
      %1982 = vmatprep.subr.mxu0 0.0
      %1983 = vmatpush1.msra.mxu0 0.0
      %1984 = vmatprep.subr.mxu0 0.0
      %1985 = vmatpush1.msra.mxu0 0.0
      %1986 = vmatprep.subr.mxu0 0.0
      %1987 = vmatpush1.msra.mxu0 0.0
      %1988 = vmatprep.subr.mxu0 0.0
      %1989 = vmatpush1.msra.mxu0 0.0
      %1990 = vmatprep.subr.mxu0 0.0
      %1991 = vmatpush1.msra.mxu0 0.0
      %1992 = vmatprep.subr.mxu0 0.0
      %1993 = vmatpush1.msra.mxu0 0.0
      %1994 = vmatprep.subr.mxu0 0.0
      %1995 = vmatpush1.msra.mxu0 0.0
      %1996 = vmatprep.subr.mxu0 0.0
      %1997 = vmatpush1.msra.mxu0 0.0
      %1998 = vmatprep.subr.mxu0 0.0
      %1999 = vmatpush1.msra.mxu0 0.0
      %2000 = vmatprep.subr.mxu0 0.0
      %2001 = vmatpush1.msra.mxu0 0.0
      %2002 = vmatprep.subr.mxu0 0.0
      %2003 = vmatpush1.msra.mxu0 0.0
      %2004 = vmatprep.subr.mxu0 0.0
      %2005 = vmatpush1.msra.mxu0 0.0
      %2006 = vmatprep.subr.mxu0 0.0
      %2007 = vmatpush1.msra.mxu0 0.0
      %2008 = vmatprep.subr.mxu0 0.0
      %2009 = vmatpush1.msra.mxu0 0.0
      %2010 = vmatprep.subr.mxu0 0.0
      %2011 = vmatpush1.msra.mxu0 0.0
      %2012 = vmatprep.subr.mxu0 0.0
      %2013 = vmatpush1.msra.mxu0 0.0
      %2014 = vmatprep.subr.mxu0 0.0
      %2015 = vmatpush1.msra.mxu0 0.0
      %2016 = vmatprep.subr.mxu0 0.0
      %2017 = vmatpush1.msra.mxu0 0.0
      %2018 = vmatprep.subr.mxu0 0.0
      %2019 = vmatpush1.msra.mxu0 0.0
      %2020 = vmatprep.subr.mxu0 0.0
      %2021 = vmatpush1.msra.mxu0 0.0
      %2022 = vmatprep.subr.mxu0 0.0
      %2023 = vmatpush1.msra.mxu0 0.0
      %2024 = vmatprep.subr.mxu0 0.0
      %2025 = vmatpush1.msra.mxu0 0.0
      %2026 = vmatprep.subr.mxu0 0.0
      %2027 = vmatpush1.msra.mxu0 0.0
      %2028 = vmatprep.subr.mxu0 0.0
      %2029 = vmatpush1.msra.mxu0 0.0
      %2030 = vmatprep.subr.mxu0 0.0
      %2031 = vmatpush1.msra.mxu0 0.0
      %2032 = vmatprep.subr.mxu0 0.0
      %2033 = vmatpush1.msra.mxu0 0.0
      %2034 = vmatprep.subr.mxu0 0.0
      %2035 = vmatpush1.msra.mxu0 0.0
      %2036 = vmatprep.subr.mxu0 0.0
      %2037 = vmatpush1.msra.mxu0 0.0
      %2038 = vmatprep.subr.mxu0 0.0
      %2039 = vmatpush1.msra.mxu0 0.0
      %2040 = vmatprep.mubr.f32.mxu0 0.0
      %2041 = vmatmul.mubr.f32.gmra.mrb[0].mxu0 %v1974
      %v2042 = vpop.f32.mrb[0].mxu0
      %v2043 = vadd.f32 0.0, %v2042
      %v2044 = vpop.f32.mrb[0].mxu0
      %2045 = vdwg.mxu0
      %2046 = vrot.lane.b32.xlu0 %v401, 96
      %v2047 = vpop.permute.xlu0 %2046
      %v2050 = vsel %vm472, %v1880, 0
      %2052 = vmatprep.subr.mxu0 0.0
      %2053 = vmatpush1.msra.mxu0 %v2047
      %2054 = vmatprep.subr.mxu0 0.0
      %2055 = vmatpush1.msra.mxu0 0.0
      %2056 = vmatprep.subr.mxu0 0.0
      %2057 = vmatpush1.msra.mxu0 0.0
      %2058 = vmatprep.subr.mxu0 0.0
      %2059 = vmatpush1.msra.mxu0 0.0
      %2060 = vmatprep.subr.mxu0 0.0
      %2061 = vmatpush1.msra.mxu0 0.0
      %2062 = vmatprep.subr.mxu0 0.0
      %2063 = vmatpush1.msra.mxu0 0.0
      %2064 = vmatprep.subr.mxu0 0.0
      %2065 = vmatpush1.msra.mxu0 0.0
      %2066 = vmatprep.subr.mxu0 0.0
      %2067 = vmatpush1.msra.mxu0 0.0
      %2068 = vmatprep.subr.mxu0 0.0
      %2069 = vmatpush1.msra.mxu0 0.0
      %2070 = vmatprep.subr.mxu0 0.0
      %2071 = vmatpush1.msra.mxu0 0.0
      %2072 = vmatprep.subr.mxu0 0.0
      %2073 = vmatpush1.msra.mxu0 0.0
      %2074 = vmatprep.subr.mxu0 0.0
      %2075 = vmatpush1.msra.mxu0 0.0
      %2076 = vmatprep.subr.mxu0 0.0
      %2077 = vmatpush1.msra.mxu0 0.0
      %2078 = vmatprep.subr.mxu0 0.0
      %2079 = vmatpush1.msra.mxu0 0.0
      %2080 = vmatprep.subr.mxu0 0.0
      %2081 = vmatpush1.msra.mxu0 0.0
      %2082 = vmatprep.subr.mxu0 0.0
      %2083 = vmatpush1.msra.mxu0 0.0
      %2084 = vmatprep.subr.mxu0 0.0
      %2085 = vmatpush1.msra.mxu0 0.0
      %2086 = vmatprep.subr.mxu0 0.0
      %2087 = vmatpush1.msra.mxu0 0.0
      %2088 = vmatprep.subr.mxu0 0.0
      %2089 = vmatpush1.msra.mxu0 0.0
      %2090 = vmatprep.subr.mxu0 0.0
      %2091 = vmatpush1.msra.mxu0 0.0
      %2092 = vmatprep.subr.mxu0 0.0
      %2093 = vmatpush1.msra.mxu0 0.0
      %2094 = vmatprep.subr.mxu0 0.0
      %2095 = vmatpush1.msra.mxu0 0.0
      %2096 = vmatprep.subr.mxu0 0.0
      %2097 = vmatpush1.msra.mxu0 0.0
      %2098 = vmatprep.subr.mxu0 0.0
      %2099 = vmatpush1.msra.mxu0 0.0
      %2100 = vmatprep.subr.mxu0 0.0
      %2101 = vmatpush1.msra.mxu0 0.0
      %2102 = vmatprep.subr.mxu0 0.0
      %2103 = vmatpush1.msra.mxu0 0.0
      %2104 = vmatprep.subr.mxu0 0.0
      %2105 = vmatpush1.msra.mxu0 0.0
      %2106 = vmatprep.subr.mxu0 0.0
      %2107 = vmatpush1.msra.mxu0 0.0
      %2108 = vmatprep.subr.mxu0 0.0
      %2109 = vmatpush1.msra.mxu0 0.0
      %2110 = vmatprep.subr.mxu0 0.0
      %2111 = vmatpush1.msra.mxu0 0.0
      %2112 = vmatprep.subr.mxu0 0.0
      %2113 = vmatpush1.msra.mxu0 0.0
      %2114 = vmatprep.subr.mxu0 0.0
      %2115 = vmatpush1.msra.mxu0 0.0
      %2116 = vmatprep.mubr.f32.mxu0 0.0
      %2117 = vmatmul.mubr.f32.gmra.mrb[0].mxu0 %v2050
      %v2118 = vpop.f32.mrb[0].mxu0
      %v2119 = vadd.f32 0.0, %v2118
      %v2120 = vpop.f32.mrb[0].mxu0
      %2121 = vdwg.mxu0
      %2122 = vrot.lane.b32.xlu0 %v406, 96
      %v2123 = vpop.permute.xlu0 %2122
      %v2126 = vsel %vm472, %v1881, 0
      %2128 = vmatprep.subr.mxu0 0.0
      %2129 = vmatpush1.msra.mxu0 %v2123
      %2130 = vmatprep.subr.mxu0 0.0
      %2131 = vmatpush1.msra.mxu0 0.0
      %2132 = vmatprep.subr.mxu0 0.0
      %2133 = vmatpush1.msra.mxu0 0.0
      %2134 = vmatprep.subr.mxu0 0.0
      %2135 = vmatpush1.msra.mxu0 0.0
      %2136 = vmatprep.subr.mxu0 0.0
      %2137 = vmatpush1.msra.mxu0 0.0
      %2138 = vmatprep.subr.mxu0 0.0
      %2139 = vmatpush1.msra.mxu0 0.0
      %2140 = vmatprep.subr.mxu0 0.0
      %2141 = vmatpush1.msra.mxu0 0.0
      %2142 = vmatprep.subr.mxu0 0.0
      %2143 = vmatpush1.msra.mxu0 0.0
      %2144 = vmatprep.subr.mxu0 0.0
      %2145 = vmatpush1.msra.mxu0 0.0
      %2146 = vmatprep.subr.mxu0 0.0
      %2147 = vmatpush1.msra.mxu0 0.0
      %2148 = vmatprep.subr.mxu0 0.0
      %2149 = vmatpush1.msra.mxu0 0.0
      %2150 = vmatprep.subr.mxu0 0.0
      %2151 = vmatpush1.msra.mxu0 0.0
      %2152 = vmatprep.subr.mxu0 0.0
      %2153 = vmatpush1.msra.mxu0 0.0
      %2154 = vmatprep.subr.mxu0 0.0
      %2155 = vmatpush1.msra.mxu0 0.0
      %2156 = vmatprep.subr.mxu0 0.0
      %2157 = vmatpush1.msra.mxu0 0.0
      %2158 = vmatprep.subr.mxu0 0.0
      %2159 = vmatpush1.msra.mxu0 0.0
      %2160 = vmatprep.subr.mxu0 0.0
      %2161 = vmatpush1.msra.mxu0 0.0
      %2162 = vmatprep.subr.mxu0 0.0
      %2163 = vmatpush1.msra.mxu0 0.0
      %2164 = vmatprep.subr.mxu0 0.0
      %2165 = vmatpush1.msra.mxu0 0.0
      %2166 = vmatprep.subr.mxu0 0.0
      %2167 = vmatpush1.msra.mxu0 0.0
      %2168 = vmatprep.subr.mxu0 0.0
      %2169 = vmatpush1.msra.mxu0 0.0
      %2170 = vmatprep.subr.mxu0 0.0
      %2171 = vmatpush1.msra.mxu0 0.0
      %2172 = vmatprep.subr.mxu0 0.0
      %2173 = vmatpush1.msra.mxu0 0.0
      %2174 = vmatprep.subr.mxu0 0.0
      %2175 = vmatpush1.msra.mxu0 0.0
      %2176 = vmatprep.subr.mxu0 0.0
      %2177 = vmatpush1.msra.mxu0 0.0
      %2178 = vmatprep.subr.mxu0 0.0
      %2179 = vmatpush1.msra.mxu0 0.0
      %2180 = vmatprep.subr.mxu0 0.0
      %2181 = vmatpush1.msra.mxu0 0.0
      %2182 = vmatprep.subr.mxu0 0.0
      %2183 = vmatpush1.msra.mxu0 0.0
      %2184 = vmatprep.subr.mxu0 0.0
      %2185 = vmatpush1.msra.mxu0 0.0
      %2186 = vmatprep.subr.mxu0 0.0
      %2187 = vmatpush1.msra.mxu0 0.0
      %2188 = vmatprep.subr.mxu0 0.0
      %2189 = vmatpush1.msra.mxu0 0.0
      %2190 = vmatprep.subr.mxu0 0.0
      %2191 = vmatpush1.msra.mxu0 0.0
      %2192 = vmatprep.mubr.f32.mxu0 0.0
      %2193 = vmatmul.mubr.f32.gmra.mrb[0].mxu0 %v2126
      %v2194 = vpop.f32.mrb[0].mxu0
      %v2195 = vadd.f32 0.0, %v2194
      %v2196 = vpop.f32.mrb[0].mxu0
      %2197 = vdwg.mxu0
      %2198 = vrot.lane.b32.xlu0 %v411, 96
      %v2199 = vpop.permute.xlu0 %2198
      %v2202 = vsel %vm472, %v1882, 0
      %2204 = vmatprep.subr.mxu0 0.0
      %2205 = vmatpush1.msra.mxu0 %v2199
      %2206 = vmatprep.subr.mxu0 0.0
      %2207 = vmatpush1.msra.mxu0 0.0
      %2208 = vmatprep.subr.mxu0 0.0
      %2209 = vmatpush1.msra.mxu0 0.0
      %2210 = vmatprep.subr.mxu0 0.0
      %2211 = vmatpush1.msra.mxu0 0.0
      %2212 = vmatprep.subr.mxu0 0.0
      %2213 = vmatpush1.msra.mxu0 0.0
      %2214 = vmatprep.subr.mxu0 0.0
      %2215 = vmatpush1.msra.mxu0 0.0
      %2216 = vmatprep.subr.mxu0 0.0
      %2217 = vmatpush1.msra.mxu0 0.0
      %2218 = vmatprep.subr.mxu0 0.0
      %2219 = vmatpush1.msra.mxu0 0.0
      %2220 = vmatprep.subr.mxu0 0.0
      %2221 = vmatpush1.msra.mxu0 0.0
      %2222 = vmatprep.subr.mxu0 0.0
      %2223 = vmatpush1.msra.mxu0 0.0
      %2224 = vmatprep.subr.mxu0 0.0
      %2225 = vmatpush1.msra.mxu0 0.0
      %2226 = vmatprep.subr.mxu0 0.0
      %2227 = vmatpush1.msra.mxu0 0.0
      %2228 = vmatprep.subr.mxu0 0.0
      %2229 = vmatpush1.msra.mxu0 0.0
      %2230 = vmatprep.subr.mxu0 0.0
      %2231 = vmatpush1.msra.mxu0 0.0
      %2232 = vmatprep.subr.mxu0 0.0
      %2233 = vmatpush1.msra.mxu0 0.0
      %2234 = vmatprep.subr.mxu0 0.0
      %2235 = vmatpush1.msra.mxu0 0.0
      %2236 = vmatprep.subr.mxu0 0.0
      %2237 = vmatpush1.msra.mxu0 0.0
      %2238 = vmatprep.subr.mxu0 0.0
      %2239 = vmatpush1.msra.mxu0 0.0
      %2240 = vmatprep.subr.mxu0 0.0
      %2241 = vmatpush1.msra.mxu0 0.0
      %2242 = vmatprep.subr.mxu0 0.0
      %2243 = vmatpush1.msra.mxu0 0.0
      %2244 = vmatprep.subr.mxu0 0.0
      %2245 = vmatpush1.msra.mxu0 0.0
      %2246 = vmatprep.subr.mxu0 0.0
      %2247 = vmatpush1.msra.mxu0 0.0
      %2248 = vmatprep.subr.mxu0 0.0
      %2249 = vmatpush1.msra.mxu0 0.0
      %2250 = vmatprep.subr.mxu0 0.0
      %2251 = vmatpush1.msra.mxu0 0.0
      %2252 = vmatprep.subr.mxu0 0.0
      %2253 = vmatpush1.msra.mxu0 0.0
      %2254 = vmatprep.subr.mxu0 0.0
      %2255 = vmatpush1.msra.mxu0 0.0
      %2256 = vmatprep.subr.mxu0 0.0
      %2257 = vmatpush1.msra.mxu0 0.0
      %2258 = vmatprep.subr.mxu0 0.0
      %2259 = vmatpush1.msra.mxu0 0.0
      %2260 = vmatprep.subr.mxu0 0.0
      %2261 = vmatpush1.msra.mxu0 0.0
      %2262 = vmatprep.subr.mxu0 0.0
      %2263 = vmatpush1.msra.mxu0 0.0
      %2264 = vmatprep.subr.mxu0 0.0
      %2265 = vmatpush1.msra.mxu0 0.0
      %2266 = vmatprep.subr.mxu0 0.0
      %2267 = vmatpush1.msra.mxu0 0.0
      %2268 = vmatprep.mubr.f32.mxu0 0.0
      %2269 = vmatmul.mubr.f32.gmra.mrb[0].mxu0 %v2202
      %v2270 = vpop.f32.mrb[0].mxu0
      %v2271 = vadd.f32 0.0, %v2270
      %v2272 = vpop.f32.mrb[0].mxu0
      %2273 = vdwg.mxu0
      %2274 = vrot.lane.b32.xlu0 %v416, 96
      %v2275 = vpop.permute.xlu0 %2274
      %v2278 = vsel %vm472, %v1883, 0
      %2280 = vmatprep.subr.mxu0 0.0
      %2281 = vmatpush1.msra.mxu0 %v2275
      %2282 = vmatprep.subr.mxu0 0.0
      %2283 = vmatpush1.msra.mxu0 0.0
      %2284 = vmatprep.subr.mxu0 0.0
      %2285 = vmatpush1.msra.mxu0 0.0
      %2286 = vmatprep.subr.mxu0 0.0
      %2287 = vmatpush1.msra.mxu0 0.0
      %2288 = vmatprep.subr.mxu0 0.0
      %2289 = vmatpush1.msra.mxu0 0.0
      %2290 = vmatprep.subr.mxu0 0.0
      %2291 = vmatpush1.msra.mxu0 0.0
      %2292 = vmatprep.subr.mxu0 0.0
      %2293 = vmatpush1.msra.mxu0 0.0
      %2294 = vmatprep.subr.mxu0 0.0
      %2295 = vmatpush1.msra.mxu0 0.0
      %2296 = vmatprep.subr.mxu0 0.0
      %2297 = vmatpush1.msra.mxu0 0.0
      %2298 = vmatprep.subr.mxu0 0.0
      %2299 = vmatpush1.msra.mxu0 0.0
      %2300 = vmatprep.subr.mxu0 0.0
      %2301 = vmatpush1.msra.mxu0 0.0
      %2302 = vmatprep.subr.mxu0 0.0
      %2303 = vmatpush1.msra.mxu0 0.0
      %2304 = vmatprep.subr.mxu0 0.0
      %2305 = vmatpush1.msra.mxu0 0.0
      %2306 = vmatprep.subr.mxu0 0.0
      %2307 = vmatpush1.msra.mxu0 0.0
      %2308 = vmatprep.subr.mxu0 0.0
      %2309 = vmatpush1.msra.mxu0 0.0
      %2310 = vmatprep.subr.mxu0 0.0
      %2311 = vmatpush1.msra.mxu0 0.0
      %2312 = vmatprep.subr.mxu0 0.0
      %2313 = vmatpush1.msra.mxu0 0.0
      %2314 = vmatprep.subr.mxu0 0.0
      %2315 = vmatpush1.msra.mxu0 0.0
      %2316 = vmatprep.subr.mxu0 0.0
      %2317 = vmatpush1.msra.mxu0 0.0
      %2318 = vmatprep.subr.mxu0 0.0
      %2319 = vmatpush1.msra.mxu0 0.0
      %2320 = vmatprep.subr.mxu0 0.0
      %2321 = vmatpush1.msra.mxu0 0.0
      %2322 = vmatprep.subr.mxu0 0.0
      %2323 = vmatpush1.msra.mxu0 0.0
      %2324 = vmatprep.subr.mxu0 0.0
      %2325 = vmatpush1.msra.mxu0 0.0
      %2326 = vmatprep.subr.mxu0 0.0
      %2327 = vmatpush1.msra.mxu0 0.0
      %2328 = vmatprep.subr.mxu0 0.0
      %2329 = vmatpush1.msra.mxu0 0.0
      %2330 = vmatprep.subr.mxu0 0.0
      %2331 = vmatpush1.msra.mxu0 0.0
      %2332 = vmatprep.subr.mxu0 0.0
      %2333 = vmatpush1.msra.mxu0 0.0
      %2334 = vmatprep.subr.mxu0 0.0
      %2335 = vmatpush1.msra.mxu0 0.0
      %2336 = vmatprep.subr.mxu0 0.0
      %2337 = vmatpush1.msra.mxu0 0.0
      %2338 = vmatprep.subr.mxu0 0.0
      %2339 = vmatpush1.msra.mxu0 0.0
      %2340 = vmatprep.subr.mxu0 0.0
      %2341 = vmatpush1.msra.mxu0 0.0
      %2342 = vmatprep.subr.mxu0 0.0
      %2343 = vmatpush1.msra.mxu0 0.0
      %2344 = vmatprep.mubr.f32.mxu0 0.0
      %2345 = vmatmul.mubr.f32.gmra.mrb[0].mxu0 %v2278
      %v2346 = vpop.f32.mrb[0].mxu0
      %v2347 = vadd.f32 0.0, %v2346
      %v2348 = vpop.f32.mrb[0].mxu0
      %2349 = vdwg.mxu0
      %2350 = vrot.lane.b32.xlu0 %v421, 96
      %v2351 = vpop.permute.xlu0 %2350
      %v2354 = vsel %vm472, %v1884, 0
      %2356 = vmatprep.subr.mxu0 0.0
      %2357 = vmatpush1.msra.mxu0 %v2351
      %2358 = vmatprep.subr.mxu0 0.0
      %2359 = vmatpush1.msra.mxu0 0.0
      %2360 = vmatprep.subr.mxu0 0.0
      %2361 = vmatpush1.msra.mxu0 0.0
      %2362 = vmatprep.subr.mxu0 0.0
      %2363 = vmatpush1.msra.mxu0 0.0
      %2364 = vmatprep.subr.mxu0 0.0
      %2365 = vmatpush1.msra.mxu0 0.0
      %2366 = vmatprep.subr.mxu0 0.0
      %2367 = vmatpush1.msra.mxu0 0.0
      %2368 = vmatprep.subr.mxu0 0.0
      %2369 = vmatpush1.msra.mxu0 0.0
      %2370 = vmatprep.subr.mxu0 0.0
      %2371 = vmatpush1.msra.mxu0 0.0
      %2372 = vmatprep.subr.mxu0 0.0
      %2373 = vmatpush1.msra.mxu0 0.0
      %2374 = vmatprep.subr.mxu0 0.0
      %2375 = vmatpush1.msra.mxu0 0.0
      %2376 = vmatprep.subr.mxu0 0.0
      %2377 = vmatpush1.msra.mxu0 0.0
      %2378 = vmatprep.subr.mxu0 0.0
      %2379 = vmatpush1.msra.mxu0 0.0
      %2380 = vmatprep.subr.mxu0 0.0
      %2381 = vmatpush1.msra.mxu0 0.0
      %2382 = vmatprep.subr.mxu0 0.0
      %2383 = vmatpush1.msra.mxu0 0.0
      %2384 = vmatprep.subr.mxu0 0.0
      %2385 = vmatpush1.msra.mxu0 0.0
      %2386 = vmatprep.subr.mxu0 0.0
      %2387 = vmatpush1.msra.mxu0 0.0
      %2388 = vmatprep.subr.mxu0 0.0
      %2389 = vmatpush1.msra.mxu0 0.0
      %2390 = vmatprep.subr.mxu0 0.0
      %2391 = vmatpush1.msra.mxu0 0.0
      %2392 = vmatprep.subr.mxu0 0.0
      %2393 = vmatpush1.msra.mxu0 0.0
      %2394 = vmatprep.subr.mxu0 0.0
      %2395 = vmatpush1.msra.mxu0 0.0
      %2396 = vmatprep.subr.mxu0 0.0
      %2397 = vmatpush1.msra.mxu0 0.0
      %2398 = vmatprep.subr.mxu0 0.0
      %2399 = vmatpush1.msra.mxu0 0.0
      %2400 = vmatprep.subr.mxu0 0.0
      %2401 = vmatpush1.msra.mxu0 0.0
      %2402 = vmatprep.subr.mxu0 0.0
      %2403 = vmatpush1.msra.mxu0 0.0
      %2404 = vmatprep.subr.mxu0 0.0
      %2405 = vmatpush1.msra.mxu0 0.0
      %2406 = vmatprep.subr.mxu0 0.0
      %2407 = vmatpush1.msra.mxu0 0.0
      %2408 = vmatprep.subr.mxu0 0.0
      %2409 = vmatpush1.msra.mxu0 0.0
      %2410 = vmatprep.subr.mxu0 0.0
      %2411 = vmatpush1.msra.mxu0 0.0
      %2412 = vmatprep.subr.mxu0 0.0
      %2413 = vmatpush1.msra.mxu0 0.0
      %2414 = vmatprep.subr.mxu0 0.0
      %2415 = vmatpush1.msra.mxu0 0.0
      %2416 = vmatprep.subr.mxu0 0.0
      %2417 = vmatpush1.msra.mxu0 0.0
      %2418 = vmatprep.subr.mxu0 0.0
      %2419 = vmatpush1.msra.mxu0 0.0
      %2420 = vmatprep.mubr.f32.mxu0 0.0
      %2421 = vmatmul.mubr.f32.gmra.mrb[0].mxu0 %v2354
      %v2422 = vpop.f32.mrb[0].mxu0
      %v2423 = vadd.f32 0.0, %v2422
      %v2424 = vpop.f32.mrb[0].mxu0
      %2425 = vdwg.mxu0
      %2426 = vrot.lane.b32.xlu0 %v426, 96
      %v2427 = vpop.permute.xlu0 %2426
      %v2430 = vsel %vm472, %v1885, 0
      %2432 = vmatprep.subr.mxu0 0.0
      %2433 = vmatpush1.msra.mxu0 %v2427
      %2434 = vmatprep.subr.mxu0 0.0
      %2435 = vmatpush1.msra.mxu0 0.0
      %2436 = vmatprep.subr.mxu0 0.0
      %2437 = vmatpush1.msra.mxu0 0.0
      %2438 = vmatprep.subr.mxu0 0.0
      %2439 = vmatpush1.msra.mxu0 0.0
      %2440 = vmatprep.subr.mxu0 0.0
      %2441 = vmatpush1.msra.mxu0 0.0
      %2442 = vmatprep.subr.mxu0 0.0
      %2443 = vmatpush1.msra.mxu0 0.0
      %2444 = vmatprep.subr.mxu0 0.0
      %2445 = vmatpush1.msra.mxu0 0.0
      %2446 = vmatprep.subr.mxu0 0.0
      %2447 = vmatpush1.msra.mxu0 0.0
      %2448 = vmatprep.subr.mxu0 0.0
      %2449 = vmatpush1.msra.mxu0 0.0
      %2450 = vmatprep.subr.mxu0 0.0
      %2451 = vmatpush1.msra.mxu0 0.0
      %2452 = vmatprep.subr.mxu0 0.0
      %2453 = vmatpush1.msra.mxu0 0.0
      %2454 = vmatprep.subr.mxu0 0.0
      %2455 = vmatpush1.msra.mxu0 0.0
      %2456 = vmatprep.subr.mxu0 0.0
      %2457 = vmatpush1.msra.mxu0 0.0
      %2458 = vmatprep.subr.mxu0 0.0
      %2459 = vmatpush1.msra.mxu0 0.0
      %2460 = vmatprep.subr.mxu0 0.0
      %2461 = vmatpush1.msra.mxu0 0.0
      %2462 = vmatprep.subr.mxu0 0.0
      %2463 = vmatpush1.msra.mxu0 0.0
      %2464 = vmatprep.subr.mxu0 0.0
      %2465 = vmatpush1.msra.mxu0 0.0
      %2466 = vmatprep.subr.mxu0 0.0
      %2467 = vmatpush1.msra.mxu0 0.0
      %2468 = vmatprep.subr.mxu0 0.0
      %2469 = vmatpush1.msra.mxu0 0.0
      %2470 = vmatprep.subr.mxu0 0.0
      %2471 = vmatpush1.msra.mxu0 0.0
      %2472 = vmatprep.subr.mxu0 0.0
      %2473 = vmatpush1.msra.mxu0 0.0
      %2474 = vmatprep.subr.mxu0 0.0
      %2475 = vmatpush1.msra.mxu0 0.0
      %2476 = vmatprep.subr.mxu0 0.0
      %2477 = vmatpush1.msra.mxu0 0.0
      %2478 = vmatprep.subr.mxu0 0.0
      %2479 = vmatpush1.msra.mxu0 0.0
      %2480 = vmatprep.subr.mxu0 0.0
      %2481 = vmatpush1.msra.mxu0 0.0
      %2482 = vmatprep.subr.mxu0 0.0
      %2483 = vmatpush1.msra.mxu0 0.0
      %2484 = vmatprep.subr.mxu0 0.0
      %2485 = vmatpush1.msra.mxu0 0.0
      %2486 = vmatprep.subr.mxu0 0.0
      %2487 = vmatpush1.msra.mxu0 0.0
      %2488 = vmatprep.subr.mxu0 0.0
      %2489 = vmatpush1.msra.mxu0 0.0
      %2490 = vmatprep.subr.mxu0 0.0
      %2491 = vmatpush1.msra.mxu0 0.0
      %2492 = vmatprep.subr.mxu0 0.0
      %2493 = vmatpush1.msra.mxu0 0.0
      %2494 = vmatprep.subr.mxu0 0.0
      %2495 = vmatpush1.msra.mxu0 0.0
      %2496 = vmatprep.mubr.f32.mxu0 0.0
      %2497 = vmatmul.mubr.f32.gmra.mrb[0].mxu0 %v2430
      %v2498 = vpop.f32.mrb[0].mxu0
      %v2499 = vadd.f32 0.0, %v2498
      %v2500 = vpop.f32.mrb[0].mxu0
      %2501 = vdwg.mxu0
      %2502 = vrot.lane.b32.xlu0 %v431, 96
      %v2503 = vpop.permute.xlu0 %2502
      %v2506 = vsel %vm472, %v1886, 0
      %2508 = vmatprep.subr.mxu0 0.0
      %2509 = vmatpush1.msra.mxu0 %v2503
      %2510 = vmatprep.subr.mxu0 0.0
      %2511 = vmatpush1.msra.mxu0 0.0
      %2512 = vmatprep.subr.mxu0 0.0
      %2513 = vmatpush1.msra.mxu0 0.0
      %2514 = vmatprep.subr.mxu0 0.0
      %2515 = vmatpush1.msra.mxu0 0.0
      %2516 = vmatprep.subr.mxu0 0.0
      %2517 = vmatpush1.msra.mxu0 0.0
      %2518 = vmatprep.subr.mxu0 0.0
      %2519 = vmatpush1.msra.mxu0 0.0
      %2520 = vmatprep.subr.mxu0 0.0
      %2521 = vmatpush1.msra.mxu0 0.0
      %2522 = vmatprep.subr.mxu0 0.0
      %2523 = vmatpush1.msra.mxu0 0.0
      %2524 = vmatprep.subr.mxu0 0.0
      %2525 = vmatpush1.msra.mxu0 0.0
      %2526 = vmatprep.subr.mxu0 0.0
      %2527 = vmatpush1.msra.mxu0 0.0
      %2528 = vmatprep.subr.mxu0 0.0
      %2529 = vmatpush1.msra.mxu0 0.0
      %2530 = vmatprep.subr.mxu0 0.0
      %2531 = vmatpush1.msra.mxu0 0.0
      %2532 = vmatprep.subr.mxu0 0.0
      %2533 = vmatpush1.msra.mxu0 0.0
      %2534 = vmatprep.subr.mxu0 0.0
      %2535 = vmatpush1.msra.mxu0 0.0
      %2536 = vmatprep.subr.mxu0 0.0
      %2537 = vmatpush1.msra.mxu0 0.0
      %2538 = vmatprep.subr.mxu0 0.0
      %2539 = vmatpush1.msra.mxu0 0.0
      %2540 = vmatprep.subr.mxu0 0.0
      %2541 = vmatpush1.msra.mxu0 0.0
      %2542 = vmatprep.subr.mxu0 0.0
      %2543 = vmatpush1.msra.mxu0 0.0
      %2544 = vmatprep.subr.mxu0 0.0
      %2545 = vmatpush1.msra.mxu0 0.0
      %2546 = vmatprep.subr.mxu0 0.0
      %2547 = vmatpush1.msra.mxu0 0.0
      %2548 = vmatprep.subr.mxu0 0.0
      %2549 = vmatpush1.msra.mxu0 0.0
      %2550 = vmatprep.subr.mxu0 0.0
      %2551 = vmatpush1.msra.mxu0 0.0
      %2552 = vmatprep.subr.mxu0 0.0
      %2553 = vmatpush1.msra.mxu0 0.0
      %2554 = vmatprep.subr.mxu0 0.0
      %2555 = vmatpush1.msra.mxu0 0.0
      %2556 = vmatprep.subr.mxu0 0.0
      %2557 = vmatpush1.msra.mxu0 0.0
      %2558 = vmatprep.subr.mxu0 0.0
      %2559 = vmatpush1.msra.mxu0 0.0
      %2560 = vmatprep.subr.mxu0 0.0
      %2561 = vmatpush1.msra.mxu0 0.0
      %2562 = vmatprep.subr.mxu0 0.0
      %2563 = vmatpush1.msra.mxu0 0.0
      %2564 = vmatprep.subr.mxu0 0.0
      %2565 = vmatpush1.msra.mxu0 0.0
      %2566 = vmatprep.subr.mxu0 0.0
      %2567 = vmatpush1.msra.mxu0 0.0
      %2568 = vmatprep.subr.mxu0 0.0
      %2569 = vmatpush1.msra.mxu0 0.0
      %2570 = vmatprep.subr.mxu0 0.0
      %2571 = vmatpush1.msra.mxu0 0.0
      %2572 = vmatprep.mubr.f32.mxu0 0.0
      %2573 = vmatmul.mubr.f32.gmra.mrb[0].mxu0 %v2506
      %v2574 = vpop.f32.mrb[0].mxu0
      %v2575 = vadd.f32 0.0, %v2574
      %v2576 = vpop.f32.mrb[0].mxu0
      %2577 = vdwg.mxu0
      %2578 = vrot.lane.b32.xlu0 %v436, 96
      %v2579 = vpop.permute.xlu0 %2578
      %v2582 = vsel %vm472, %v1887, 0
      %2584 = vmatprep.subr.mxu0 0.0
      %2585 = vmatpush1.msra.mxu0 %v2579
      %2586 = vmatprep.subr.mxu0 0.0
      %2587 = vmatpush1.msra.mxu0 0.0
      %2588 = vmatprep.subr.mxu0 0.0
      %2589 = vmatpush1.msra.mxu0 0.0
      %2590 = vmatprep.subr.mxu0 0.0
      %2591 = vmatpush1.msra.mxu0 0.0
      %2592 = vmatprep.subr.mxu0 0.0
      %2593 = vmatpush1.msra.mxu0 0.0
      %2594 = vmatprep.subr.mxu0 0.0
      %2595 = vmatpush1.msra.mxu0 0.0
      %2596 = vmatprep.subr.mxu0 0.0
      %2597 = vmatpush1.msra.mxu0 0.0
      %2598 = vmatprep.subr.mxu0 0.0
      %2599 = vmatpush1.msra.mxu0 0.0
      %2600 = vmatprep.subr.mxu0 0.0
      %2601 = vmatpush1.msra.mxu0 0.0
      %2602 = vmatprep.subr.mxu0 0.0
      %2603 = vmatpush1.msra.mxu0 0.0
      %2604 = vmatprep.subr.mxu0 0.0
      %2605 = vmatpush1.msra.mxu0 0.0
      %2606 = vmatprep.subr.mxu0 0.0
      %2607 = vmatpush1.msra.mxu0 0.0
      %2608 = vmatprep.subr.mxu0 0.0
      %2609 = vmatpush1.msra.mxu0 0.0
      %2610 = vmatprep.subr.mxu0 0.0
      %2611 = vmatpush1.msra.mxu0 0.0
      %2612 = vmatprep.subr.mxu0 0.0
      %2613 = vmatpush1.msra.mxu0 0.0
      %2614 = vmatprep.subr.mxu0 0.0
      %2615 = vmatpush1.msra.mxu0 0.0
      %2616 = vmatprep.subr.mxu0 0.0
      %2617 = vmatpush1.msra.mxu0 0.0
      %2618 = vmatprep.subr.mxu0 0.0
      %2619 = vmatpush1.msra.mxu0 0.0
      %2620 = vmatprep.subr.mxu0 0.0
      %2621 = vmatpush1.msra.mxu0 0.0
      %2622 = vmatprep.subr.mxu0 0.0
      %2623 = vmatpush1.msra.mxu0 0.0
      %2624 = vmatprep.subr.mxu0 0.0
      %2625 = vmatpush1.msra.mxu0 0.0
      %2626 = vmatprep.subr.mxu0 0.0
      %2627 = vmatpush1.msra.mxu0 0.0
      %2628 = vmatprep.subr.mxu0 0.0
      %2629 = vmatpush1.msra.mxu0 0.0
      %2630 = vmatprep.subr.mxu0 0.0
      %2631 = vmatpush1.msra.mxu0 0.0
      %2632 = vmatprep.subr.mxu0 0.0
      %2633 = vmatpush1.msra.mxu0 0.0
      %2634 = vmatprep.subr.mxu0 0.0
      %2635 = vmatpush1.msra.mxu0 0.0
      %2636 = vmatprep.subr.mxu0 0.0
      %2637 = vmatpush1.msra.mxu0 0.0
      %2638 = vmatprep.subr.mxu0 0.0
      %2639 = vmatpush1.msra.mxu0 0.0
      %2640 = vmatprep.subr.mxu0 0.0
      %2641 = vmatpush1.msra.mxu0 0.0
      %2642 = vmatprep.subr.mxu0 0.0
      %2643 = vmatpush1.msra.mxu0 0.0
      %2644 = vmatprep.subr.mxu0 0.0
      %2645 = vmatpush1.msra.mxu0 0.0
      %2646 = vmatprep.subr.mxu0 0.0
      %2647 = vmatpush1.msra.mxu0 0.0
      %2648 = vmatprep.mubr.f32.mxu0 0.0
      %2649 = vmatmul.mubr.f32.gmra.mrb[0].mxu0 %v2582
      %v2650 = vpop.f32.mrb[0].mxu0
      %v2651 = vadd.f32 0.0, %v2650
      %v2652 = vpop.f32.mrb[0].mxu0
      %2653 = vdwg.mxu0
      %2654 = vrot.lane.b32.xlu0 %v441, 96
      %v2655 = vpop.permute.xlu0 %2654
      %v2658 = vsel %vm472, %v1888, 0
      %2660 = vmatprep.subr.mxu0 0.0
      %2661 = vmatpush1.msra.mxu0 %v2655
      %2662 = vmatprep.subr.mxu0 0.0
      %2663 = vmatpush1.msra.mxu0 0.0
      %2664 = vmatprep.subr.mxu0 0.0
      %2665 = vmatpush1.msra.mxu0 0.0
      %2666 = vmatprep.subr.mxu0 0.0
      %2667 = vmatpush1.msra.mxu0 0.0
      %2668 = vmatprep.subr.mxu0 0.0
      %2669 = vmatpush1.msra.mxu0 0.0
      %2670 = vmatprep.subr.mxu0 0.0
      %2671 = vmatpush1.msra.mxu0 0.0
      %2672 = vmatprep.subr.mxu0 0.0
      %2673 = vmatpush1.msra.mxu0 0.0
      %2674 = vmatprep.subr.mxu0 0.0
      %2675 = vmatpush1.msra.mxu0 0.0
      %2676 = vmatprep.subr.mxu0 0.0
      %2677 = vmatpush1.msra.mxu0 0.0
      %2678 = vmatprep.subr.mxu0 0.0
      %2679 = vmatpush1.msra.mxu0 0.0
      %2680 = vmatprep.subr.mxu0 0.0
      %2681 = vmatpush1.msra.mxu0 0.0
      %2682 = vmatprep.subr.mxu0 0.0
      %2683 = vmatpush1.msra.mxu0 0.0
      %2684 = vmatprep.subr.mxu0 0.0
      %2685 = vmatpush1.msra.mxu0 0.0
      %2686 = vmatprep.subr.mxu0 0.0
      %2687 = vmatpush1.msra.mxu0 0.0
      %2688 = vmatprep.subr.mxu0 0.0
      %2689 = vmatpush1.msra.mxu0 0.0
      %2690 = vmatprep.subr.mxu0 0.0
      %2691 = vmatpush1.msra.mxu0 0.0
      %2692 = vmatprep.subr.mxu0 0.0
      %2693 = vmatpush1.msra.mxu0 0.0
      %2694 = vmatprep.subr.mxu0 0.0
      %2695 = vmatpush1.msra.mxu0 0.0
      %2696 = vmatprep.subr.mxu0 0.0
      %2697 = vmatpush1.msra.mxu0 0.0
      %2698 = vmatprep.subr.mxu0 0.0
      %2699 = vmatpush1.msra.mxu0 0.0
      %2700 = vmatprep.subr.mxu0 0.0
      %2701 = vmatpush1.msra.mxu0 0.0
      %2702 = vmatprep.subr.mxu0 0.0
      %2703 = vmatpush1.msra.mxu0 0.0
      %2704 = vmatprep.subr.mxu0 0.0
      %2705 = vmatpush1.msra.mxu0 0.0
      %2706 = vmatprep.subr.mxu0 0.0
      %2707 = vmatpush1.msra.mxu0 0.0
      %2708 = vmatprep.subr.mxu0 0.0
      %2709 = vmatpush1.msra.mxu0 0.0
      %2710 = vmatprep.subr.mxu0 0.0
      %2711 = vmatpush1.msra.mxu0 0.0
      %2712 = vmatprep.subr.mxu0 0.0
      %2713 = vmatpush1.msra.mxu0 0.0
      %2714 = vmatprep.subr.mxu0 0.0
      %2715 = vmatpush1.msra.mxu0 0.0
      %2716 = vmatprep.subr.mxu0 0.0
      %2717 = vmatpush1.msra.mxu0 0.0
      %2718 = vmatprep.subr.mxu0 0.0
      %2719 = vmatpush1.msra.mxu0 0.0
      %2720 = vmatprep.subr.mxu0 0.0
      %2721 = vmatpush1.msra.mxu0 0.0
      %2722 = vmatprep.subr.mxu0 0.0
      %2723 = vmatpush1.msra.mxu0 0.0
      %2724 = vmatprep.mubr.f32.mxu0 0.0
      %2725 = vmatmul.mubr.f32.gmra.mrb[0].mxu0 %v2658
      %v2726 = vpop.f32.mrb[0].mxu0
      %v2727 = vadd.f32 0.0, %v2726
      %v2728 = vpop.f32.mrb[0].mxu0
      %2729 = vdwg.mxu0
      %2730 = vrot.lane.b32.xlu0 %v446, 96
      %v2731 = vpop.permute.xlu0 %2730
      %v2734 = vsel %vm472, %v1889, 0
      %2736 = vmatprep.subr.mxu0 0.0
      %2737 = vmatpush1.msra.mxu0 %v2731
      %2738 = vmatprep.subr.mxu0 0.0
      %2739 = vmatpush1.msra.mxu0 0.0
      %2740 = vmatprep.subr.mxu0 0.0
      %2741 = vmatpush1.msra.mxu0 0.0
      %2742 = vmatprep.subr.mxu0 0.0
      %2743 = vmatpush1.msra.mxu0 0.0
      %2744 = vmatprep.subr.mxu0 0.0
      %2745 = vmatpush1.msra.mxu0 0.0
      %2746 = vmatprep.subr.mxu0 0.0
      %2747 = vmatpush1.msra.mxu0 0.0
      %2748 = vmatprep.subr.mxu0 0.0
      %2749 = vmatpush1.msra.mxu0 0.0
      %2750 = vmatprep.subr.mxu0 0.0
      %2751 = vmatpush1.msra.mxu0 0.0
      %2752 = vmatprep.subr.mxu0 0.0
      %2753 = vmatpush1.msra.mxu0 0.0
      %2754 = vmatprep.subr.mxu0 0.0
      %2755 = vmatpush1.msra.mxu0 0.0
      %2756 = vmatprep.subr.mxu0 0.0
      %2757 = vmatpush1.msra.mxu0 0.0
      %2758 = vmatprep.subr.mxu0 0.0
      %2759 = vmatpush1.msra.mxu0 0.0
      %2760 = vmatprep.subr.mxu0 0.0
      %2761 = vmatpush1.msra.mxu0 0.0
      %2762 = vmatprep.subr.mxu0 0.0
      %2763 = vmatpush1.msra.mxu0 0.0
      %2764 = vmatprep.subr.mxu0 0.0
      %2765 = vmatpush1.msra.mxu0 0.0
      %2766 = vmatprep.subr.mxu0 0.0
      %2767 = vmatpush1.msra.mxu0 0.0
      %2768 = vmatprep.subr.mxu0 0.0
      %2769 = vmatpush1.msra.mxu0 0.0
      %2770 = vmatprep.subr.mxu0 0.0
      %2771 = vmatpush1.msra.mxu0 0.0
      %2772 = vmatprep.subr.mxu0 0.0
      %2773 = vmatpush1.msra.mxu0 0.0
      %2774 = vmatprep.subr.mxu0 0.0
      %2775 = vmatpush1.msra.mxu0 0.0
      %2776 = vmatprep.subr.mxu0 0.0
      %2777 = vmatpush1.msra.mxu0 0.0
      %2778 = vmatprep.subr.mxu0 0.0
      %2779 = vmatpush1.msra.mxu0 0.0
      %2780 = vmatprep.subr.mxu0 0.0
      %2781 = vmatpush1.msra.mxu0 0.0
      %2782 = vmatprep.subr.mxu0 0.0
      %2783 = vmatpush1.msra.mxu0 0.0
      %2784 = vmatprep.subr.mxu0 0.0
      %2785 = vmatpush1.msra.mxu0 0.0
      %2786 = vmatprep.subr.mxu0 0.0
      %2787 = vmatpush1.msra.mxu0 0.0
      %2788 = vmatprep.subr.mxu0 0.0
      %2789 = vmatpush1.msra.mxu0 0.0
      %2790 = vmatprep.subr.mxu0 0.0
      %2791 = vmatpush1.msra.mxu0 0.0
      %2792 = vmatprep.subr.mxu0 0.0
      %2793 = vmatpush1.msra.mxu0 0.0
      %2794 = vmatprep.subr.mxu0 0.0
      %2795 = vmatpush1.msra.mxu0 0.0
      %2796 = vmatprep.subr.mxu0 0.0
      %2797 = vmatpush1.msra.mxu0 0.0
      %2798 = vmatprep.subr.mxu0 0.0
      %2799 = vmatpush1.msra.mxu0 0.0
      %2800 = vmatprep.mubr.f32.mxu0 0.0
      %2801 = vmatmul.mubr.f32.gmra.mrb[0].mxu0 %v2734
      %v2802 = vpop.f32.mrb[0].mxu0
      %v2803 = vadd.f32 0.0, %v2802
      %v2804 = vpop.f32.mrb[0].mxu0
      %2805 = vdwg.mxu0
      %2806 = vrot.lane.b32.xlu0 %v451, 96
      %v2807 = vpop.permute.xlu0 %2806
      %v2810 = vsel %vm472, %v1890, 0
      %2812 = vmatprep.subr.mxu0 0.0
      %2813 = vmatpush1.msra.mxu0 %v2807
      %2814 = vmatprep.subr.mxu0 0.0
      %2815 = vmatpush1.msra.mxu0 0.0
      %2816 = vmatprep.subr.mxu0 0.0
      %2817 = vmatpush1.msra.mxu0 0.0
      %2818 = vmatprep.subr.mxu0 0.0
      %2819 = vmatpush1.msra.mxu0 0.0
      %2820 = vmatprep.subr.mxu0 0.0
      %2821 = vmatpush1.msra.mxu0 0.0
      %2822 = vmatprep.subr.mxu0 0.0
      %2823 = vmatpush1.msra.mxu0 0.0
      %2824 = vmatprep.subr.mxu0 0.0
      %2825 = vmatpush1.msra.mxu0 0.0
      %2826 = vmatprep.subr.mxu0 0.0
      %2827 = vmatpush1.msra.mxu0 0.0
      %2828 = vmatprep.subr.mxu0 0.0
      %2829 = vmatpush1.msra.mxu0 0.0
      %2830 = vmatprep.subr.mxu0 0.0
      %2831 = vmatpush1.msra.mxu0 0.0
      %2832 = vmatprep.subr.mxu0 0.0
      %2833 = vmatpush1.msra.mxu0 0.0
      %2834 = vmatprep.subr.mxu0 0.0
      %2835 = vmatpush1.msra.mxu0 0.0
      %2836 = vmatprep.subr.mxu0 0.0
      %2837 = vmatpush1.msra.mxu0 0.0
      %2838 = vmatprep.subr.mxu0 0.0
      %2839 = vmatpush1.msra.mxu0 0.0
      %2840 = vmatprep.subr.mxu0 0.0
      %2841 = vmatpush1.msra.mxu0 0.0
      %2842 = vmatprep.subr.mxu0 0.0
      %2843 = vmatpush1.msra.mxu0 0.0
      %2844 = vmatprep.subr.mxu0 0.0
      %2845 = vmatpush1.msra.mxu0 0.0
      %2846 = vmatprep.subr.mxu0 0.0
      %2847 = vmatpush1.msra.mxu0 0.0
      %2848 = vmatprep.subr.mxu0 0.0
      %2849 = vmatpush1.msra.mxu0 0.0
      %2850 = vmatprep.subr.mxu0 0.0
      %2851 = vmatpush1.msra.mxu0 0.0
      %2852 = vmatprep.subr.mxu0 0.0
      %2853 = vmatpush1.msra.mxu0 0.0
      %2854 = vmatprep.subr.mxu0 0.0
      %2855 = vmatpush1.msra.mxu0 0.0
      %2856 = vmatprep.subr.mxu0 0.0
      %2857 = vmatpush1.msra.mxu0 0.0
      %2858 = vmatprep.subr.mxu0 0.0
      %2859 = vmatpush1.msra.mxu0 0.0
      %2860 = vmatprep.subr.mxu0 0.0
      %2861 = vmatpush1.msra.mxu0 0.0
      %2862 = vmatprep.subr.mxu0 0.0
      %2863 = vmatpush1.msra.mxu0 0.0
      %2864 = vmatprep.subr.mxu0 0.0
      %2865 = vmatpush1.msra.mxu0 0.0
      %2866 = vmatprep.subr.mxu0 0.0
      %2867 = vmatpush1.msra.mxu0 0.0
      %2868 = vmatprep.subr.mxu0 0.0
      %2869 = vmatpush1.msra.mxu0 0.0
      %2870 = vmatprep.subr.mxu0 0.0
      %2871 = vmatpush1.msra.mxu0 0.0
      %2872 = vmatprep.subr.mxu0 0.0
      %2873 = vmatpush1.msra.mxu0 0.0
      %2874 = vmatprep.subr.mxu0 0.0
      %2875 = vmatpush1.msra.mxu0 0.0
      %2876 = vmatprep.mubr.f32.mxu0 0.0
      %2877 = vmatmul.mubr.f32.gmra.mrb[0].mxu0 %v2810
      %v2878 = vpop.f32.mrb[0].mxu0
      %v2879 = vadd.f32 0.0, %v2878
      %v2880 = vpop.f32.mrb[0].mxu0
      %2881 = vdwg.mxu0
      %2882 = vrot.lane.b32.xlu0 %v456, 96
      %v2883 = vpop.permute.xlu0 %2882
      %v2886 = vsel %vm472, %v1891, 0
      %2888 = vmatprep.subr.mxu0 0.0
      %2889 = vmatpush1.msra.mxu0 %v2883
      %2890 = vmatprep.subr.mxu0 0.0
      %2891 = vmatpush1.msra.mxu0 0.0
      %2892 = vmatprep.subr.mxu0 0.0
      %2893 = vmatpush1.msra.mxu0 0.0
      %2894 = vmatprep.subr.mxu0 0.0
      %2895 = vmatpush1.msra.mxu0 0.0
      %2896 = vmatprep.subr.mxu0 0.0
      %2897 = vmatpush1.msra.mxu0 0.0
      %2898 = vmatprep.subr.mxu0 0.0
      %2899 = vmatpush1.msra.mxu0 0.0
      %2900 = vmatprep.subr.mxu0 0.0
      %2901 = vmatpush1.msra.mxu0 0.0
      %2902 = vmatprep.subr.mxu0 0.0
      %2903 = vmatpush1.msra.mxu0 0.0
      %2904 = vmatprep.subr.mxu0 0.0
      %2905 = vmatpush1.msra.mxu0 0.0
      %2906 = vmatprep.subr.mxu0 0.0
      %2907 = vmatpush1.msra.mxu0 0.0
      %2908 = vmatprep.subr.mxu0 0.0
      %2909 = vmatpush1.msra.mxu0 0.0
      %2910 = vmatprep.subr.mxu0 0.0
      %2911 = vmatpush1.msra.mxu0 0.0
      %2912 = vmatprep.subr.mxu0 0.0
      %2913 = vmatpush1.msra.mxu0 0.0
      %2914 = vmatprep.subr.mxu0 0.0
      %2915 = vmatpush1.msra.mxu0 0.0
      %2916 = vmatprep.subr.mxu0 0.0
      %2917 = vmatpush1.msra.mxu0 0.0
      %2918 = vmatprep.subr.mxu0 0.0
      %2919 = vmatpush1.msra.mxu0 0.0
      %2920 = vmatprep.subr.mxu0 0.0
      %2921 = vmatpush1.msra.mxu0 0.0
      %2922 = vmatprep.subr.mxu0 0.0
      %2923 = vmatpush1.msra.mxu0 0.0
      %2924 = vmatprep.subr.mxu0 0.0
      %2925 = vmatpush1.msra.mxu0 0.0
      %2926 = vmatprep.subr.mxu0 0.0
      %2927 = vmatpush1.msra.mxu0 0.0
      %2928 = vmatprep.subr.mxu0 0.0
      %2929 = vmatpush1.msra.mxu0 0.0
      %2930 = vmatprep.subr.mxu0 0.0
      %2931 = vmatpush1.msra.mxu0 0.0
      %2932 = vmatprep.subr.mxu0 0.0
      %2933 = vmatpush1.msra.mxu0 0.0
      %2934 = vmatprep.subr.mxu0 0.0
      %2935 = vmatpush1.msra.mxu0 0.0
      %2936 = vmatprep.subr.mxu0 0.0
      %2937 = vmatpush1.msra.mxu0 0.0
      %2938 = vmatprep.subr.mxu0 0.0
      %2939 = vmatpush1.msra.mxu0 0.0
      %2940 = vmatprep.subr.mxu0 0.0
      %2941 = vmatpush1.msra.mxu0 0.0
      %2942 = vmatprep.subr.mxu0 0.0
      %2943 = vmatpush1.msra.mxu0 0.0
      %2944 = vmatprep.subr.mxu0 0.0
      %2945 = vmatpush1.msra.mxu0 0.0
      %2946 = vmatprep.subr.mxu0 0.0
      %2947 = vmatpush1.msra.mxu0 0.0
      %2948 = vmatprep.subr.mxu0 0.0
      %2949 = vmatpush1.msra.mxu0 0.0
      %2950 = vmatprep.subr.mxu0 0.0
      %2951 = vmatpush1.msra.mxu0 0.0
      %2952 = vmatprep.mubr.f32.mxu0 0.0
      %2953 = vmatmul.mubr.f32.gmra.mrb[0].mxu0 %v2886
      %v2954 = vpop.f32.mrb[0].mxu0
      %v2955 = vadd.f32 0.0, %v2954
      %v2956 = vpop.f32.mrb[0].mxu0
      %2957 = vdwg.mxu0
      %2958 = vrot.lane.b32.xlu0 %v461, 96
      %v2959 = vpop.permute.xlu0 %2958
      %v2962 = vsel %vm472, %v1892, 0
      %2964 = vmatprep.subr.mxu0 0.0
      %2965 = vmatpush1.msra.mxu0 %v2959
      %2966 = vmatprep.subr.mxu0 0.0
      %2967 = vmatpush1.msra.mxu0 0.0
      %2968 = vmatprep.subr.mxu0 0.0
      %2969 = vmatpush1.msra.mxu0 0.0
      %2970 = vmatprep.subr.mxu0 0.0
      %2971 = vmatpush1.msra.mxu0 0.0
      %2972 = vmatprep.subr.mxu0 0.0
      %2973 = vmatpush1.msra.mxu0 0.0
      %2974 = vmatprep.subr.mxu0 0.0
      %2975 = vmatpush1.msra.mxu0 0.0
      %2976 = vmatprep.subr.mxu0 0.0
      %2977 = vmatpush1.msra.mxu0 0.0
      %2978 = vmatprep.subr.mxu0 0.0
      %2979 = vmatpush1.msra.mxu0 0.0
      %2980 = vmatprep.subr.mxu0 0.0
      %2981 = vmatpush1.msra.mxu0 0.0
      %2982 = vmatprep.subr.mxu0 0.0
      %2983 = vmatpush1.msra.mxu0 0.0
      %2984 = vmatprep.subr.mxu0 0.0
      %2985 = vmatpush1.msra.mxu0 0.0
      %2986 = vmatprep.subr.mxu0 0.0
      %2987 = vmatpush1.msra.mxu0 0.0
      %2988 = vmatprep.subr.mxu0 0.0
      %2989 = vmatpush1.msra.mxu0 0.0
      %2990 = vmatprep.subr.mxu0 0.0
      %2991 = vmatpush1.msra.mxu0 0.0
      %2992 = vmatprep.subr.mxu0 0.0
      %2993 = vmatpush1.msra.mxu0 0.0
      %2994 = vmatprep.subr.mxu0 0.0
      %2995 = vmatpush1.msra.mxu0 0.0
      %2996 = vmatprep.subr.mxu0 0.0
      %2997 = vmatpush1.msra.mxu0 0.0
      %2998 = vmatprep.subr.mxu0 0.0
      %2999 = vmatpush1.msra.mxu0 0.0
      %3000 = vmatprep.subr.mxu0 0.0
      %3001 = vmatpush1.msra.mxu0 0.0
      %3002 = vmatprep.subr.mxu0 0.0
      %3003 = vmatpush1.msra.mxu0 0.0
      %3004 = vmatprep.subr.mxu0 0.0
      %3005 = vmatpush1.msra.mxu0 0.0
      %3006 = vmatprep.subr.mxu0 0.0
      %3007 = vmatpush1.msra.mxu0 0.0
      %3008 = vmatprep.subr.mxu0 0.0
      %3009 = vmatpush1.msra.mxu0 0.0
      %3010 = vmatprep.subr.mxu0 0.0
      %3011 = vmatpush1.msra.mxu0 0.0
      %3012 = vmatprep.subr.mxu0 0.0
      %3013 = vmatpush1.msra.mxu0 0.0
      %3014 = vmatprep.subr.mxu0 0.0
      %3015 = vmatpush1.msra.mxu0 0.0
      %3016 = vmatprep.subr.mxu0 0.0
      %3017 = vmatpush1.msra.mxu0 0.0
      %3018 = vmatprep.subr.mxu0 0.0
      %3019 = vmatpush1.msra.mxu0 0.0
      %3020 = vmatprep.subr.mxu0 0.0
      %3021 = vmatpush1.msra.mxu0 0.0
      %3022 = vmatprep.subr.mxu0 0.0
      %3023 = vmatpush1.msra.mxu0 0.0
      %3024 = vmatprep.subr.mxu0 0.0
      %3025 = vmatpush1.msra.mxu0 0.0
      %3026 = vmatprep.subr.mxu0 0.0
      %3027 = vmatpush1.msra.mxu0 0.0
      %3028 = vmatprep.mubr.f32.mxu0 0.0
      %3029 = vmatmul.mubr.f32.gmra.mrb[0].mxu0 %v2962
      %v3030 = vpop.f32.mrb[0].mxu0
      %v3031 = vadd.f32 0.0, %v3030
      %v3032 = vpop.f32.mrb[0].mxu0
      %3033 = vdwg.mxu0
      %3034 = vrot.lane.b32.xlu0 %v466, 96
      %v3035 = vpop.permute.xlu0 %3034
      %v3038 = vsel %vm472, %v1893, 0
      %3040 = vmatprep.subr.mxu0 0.0
      %3041 = vmatpush1.msra.mxu0 %v3035
      %3042 = vmatprep.subr.mxu0 0.0
      %3043 = vmatpush1.msra.mxu0 0.0
      %3044 = vmatprep.subr.mxu0 0.0
      %3045 = vmatpush1.msra.mxu0 0.0
      %3046 = vmatprep.subr.mxu0 0.0
      %3047 = vmatpush1.msra.mxu0 0.0
      %3048 = vmatprep.subr.mxu0 0.0
      %3049 = vmatpush1.msra.mxu0 0.0
      %3050 = vmatprep.subr.mxu0 0.0
      %3051 = vmatpush1.msra.mxu0 0.0
      %3052 = vmatprep.subr.mxu0 0.0
      %3053 = vmatpush1.msra.mxu0 0.0
      %3054 = vmatprep.subr.mxu0 0.0
      %3055 = vmatpush1.msra.mxu0 0.0
      %3056 = vmatprep.subr.mxu0 0.0
      %3057 = vmatpush1.msra.mxu0 0.0
      %3058 = vmatprep.subr.mxu0 0.0
      %3059 = vmatpush1.msra.mxu0 0.0
      %3060 = vmatprep.subr.mxu0 0.0
      %3061 = vmatpush1.msra.mxu0 0.0
      %3062 = vmatprep.subr.mxu0 0.0
      %3063 = vmatpush1.msra.mxu0 0.0
      %3064 = vmatprep.subr.mxu0 0.0
      %3065 = vmatpush1.msra.mxu0 0.0
      %3066 = vmatprep.subr.mxu0 0.0
      %3067 = vmatpush1.msra.mxu0 0.0
      %3068 = vmatprep.subr.mxu0 0.0
      %3069 = vmatpush1.msra.mxu0 0.0
      %3070 = vmatprep.subr.mxu0 0.0
      %3071 = vmatpush1.msra.mxu0 0.0
      %3072 = vmatprep.subr.mxu0 0.0
      %3073 = vmatpush1.msra.mxu0 0.0
      %3074 = vmatprep.subr.mxu0 0.0
      %3075 = vmatpush1.msra.mxu0 0.0
      %3076 = vmatprep.subr.mxu0 0.0
      %3077 = vmatpush1.msra.mxu0 0.0
      %3078 = vmatprep.subr.mxu0 0.0
      %3079 = vmatpush1.msra.mxu0 0.0
      %3080 = vmatprep.subr.mxu0 0.0
      %3081 = vmatpush1.msra.mxu0 0.0
      %3082 = vmatprep.subr.mxu0 0.0
      %3083 = vmatpush1.msra.mxu0 0.0
      %3084 = vmatprep.subr.mxu0 0.0
      %3085 = vmatpush1.msra.mxu0 0.0
      %3086 = vmatprep.subr.mxu0 0.0
      %3087 = vmatpush1.msra.mxu0 0.0
      %3088 = vmatprep.subr.mxu0 0.0
      %3089 = vmatpush1.msra.mxu0 0.0
      %3090 = vmatprep.subr.mxu0 0.0
      %3091 = vmatpush1.msra.mxu0 0.0
      %3092 = vmatprep.subr.mxu0 0.0
      %3093 = vmatpush1.msra.mxu0 0.0
      %3094 = vmatprep.subr.mxu0 0.0
      %3095 = vmatpush1.msra.mxu0 0.0
      %3096 = vmatprep.subr.mxu0 0.0
      %3097 = vmatpush1.msra.mxu0 0.0
      %3098 = vmatprep.subr.mxu0 0.0
      %3099 = vmatpush1.msra.mxu0 0.0
      %3100 = vmatprep.subr.mxu0 0.0
      %3101 = vmatpush1.msra.mxu0 0.0
      %3102 = vmatprep.subr.mxu0 0.0
      %3103 = vmatpush1.msra.mxu0 0.0
      %3104 = vmatprep.mubr.f32.mxu0 0.0
      %3105 = vmatmul.mubr.f32.gmra.mrb[0].mxu0 %v3038
      %v3106 = vpop.f32.mrb[0].mxu0
      %v3107 = vadd.f32 0.0, %v3106
      %v3108 = vpop.f32.mrb[0].mxu0
      %3109 = vdwg.mxu0
      %3110 = vrot.lane.b32.xlu0 %v391, 120
      %v3111 = vpop.permute.xlu0 %3110
      %3112 = vrot.lane.b32.xlu0 %v391, 104
      %v3113 = vpop.permute.xlu0 %3112
      %v3114 = vsel %vm472, %v3111, 0
      %v3116 = vsel %vm472, %v3113, 0
      %3118 = vmatprep.subr.mxu0 0.0
      %3119 = vmatpush1.xpose.msra.mxu0 %v3116
      %3120 = vmatprep.subr.mxu0 0.0
      %3121 = vmatpush1.xpose.msra.mxu0 0.0
      %3122 = vmatprep.subr.mxu0 0.0
      %3123 = vmatpush1.xpose.msra.mxu0 0.0
      %3124 = vmatprep.subr.mxu0 0.0
      %3125 = vmatpush1.xpose.msra.mxu0 0.0
      %3126 = vmatprep.subr.mxu0 0.0
      %3127 = vmatpush1.xpose.msra.mxu0 0.0
      %3128 = vmatprep.subr.mxu0 0.0
      %3129 = vmatpush1.xpose.msra.mxu0 0.0
      %3130 = vmatprep.subr.mxu0 0.0
      %3131 = vmatpush1.xpose.msra.mxu0 0.0
      %3132 = vmatprep.subr.mxu0 0.0
      %3133 = vmatpush1.xpose.msra.mxu0 0.0
      %3134 = vmatprep.subr.mxu0 0.0
      %3135 = vmatpush1.xpose.msra.mxu0 0.0
      %3136 = vmatprep.subr.mxu0 0.0
      %3137 = vmatpush1.xpose.msra.mxu0 0.0
      %3138 = vmatprep.subr.mxu0 0.0
      %3139 = vmatpush1.xpose.msra.mxu0 0.0
      %3140 = vmatprep.subr.mxu0 0.0
      %3141 = vmatpush1.xpose.msra.mxu0 0.0
      %3142 = vmatprep.subr.mxu0 0.0
      %3143 = vmatpush1.xpose.msra.mxu0 0.0
      %3144 = vmatprep.subr.mxu0 0.0
      %3145 = vmatpush1.xpose.msra.mxu0 0.0
      %3146 = vmatprep.subr.mxu0 0.0
      %3147 = vmatpush1.xpose.msra.mxu0 0.0
      %3148 = vmatprep.subr.mxu0 0.0
      %3149 = vmatpush1.xpose.msra.mxu0 0.0
      %3150 = vmatprep.subr.mxu0 0.0
      %3151 = vmatpush1.xpose.msra.mxu0 0.0
      %3152 = vmatprep.subr.mxu0 0.0
      %3153 = vmatpush1.xpose.msra.mxu0 0.0
      %3154 = vmatprep.subr.mxu0 0.0
      %3155 = vmatpush1.xpose.msra.mxu0 0.0
      %3156 = vmatprep.subr.mxu0 0.0
      %3157 = vmatpush1.xpose.msra.mxu0 0.0
      %3158 = vmatprep.subr.mxu0 0.0
      %3159 = vmatpush1.xpose.msra.mxu0 0.0
      %3160 = vmatprep.subr.mxu0 0.0
      %3161 = vmatpush1.xpose.msra.mxu0 0.0
      %3162 = vmatprep.subr.mxu0 0.0
      %3163 = vmatpush1.xpose.msra.mxu0 0.0
      %3164 = vmatprep.subr.mxu0 0.0
      %3165 = vmatpush1.xpose.msra.mxu0 0.0
      %3166 = vmatprep.subr.mxu0 0.0
      %3167 = vmatpush1.xpose.msra.mxu0 0.0
      %3168 = vmatprep.subr.mxu0 0.0
      %3169 = vmatpush1.xpose.msra.mxu0 0.0
      %3170 = vmatprep.subr.mxu0 0.0
      %3171 = vmatpush1.xpose.msra.mxu0 0.0
      %3172 = vmatprep.subr.mxu0 0.0
      %3173 = vmatpush1.xpose.msra.mxu0 0.0
      %3174 = vmatprep.subr.mxu0 0.0
      %3175 = vmatpush1.xpose.msra.mxu0 0.0
      %3176 = vmatprep.subr.mxu0 0.0
      %3177 = vmatpush1.xpose.msra.mxu0 0.0
      %3178 = vmatprep.subr.mxu0 0.0
      %3179 = vmatpush1.xpose.msra.mxu0 0.0
      %3180 = vmatprep.subr.mxu0 0.0
      %3181 = vmatpush1.xpose.msra.mxu0 0.0
      %3182 = vmatprep.mubr.f32.mxu0 0.0
      %3183 = vmatmul.mubr.f32.gmra.mrb[0].mxu0 %v3114
      %v3184 = vpop.f32.mrb[0].mxu0
      %v3185 = vadd.f32 0.0, %v3184
      %v3186 = vpop.f32.mrb[0].mxu0
      %3187 = vdwg.mxu0
      %3188 = vrot.lane.b32.xlu0 %v396, 120
      %v3189 = vpop.permute.xlu0 %3188
      %3190 = vrot.lane.b32.xlu0 %v396, 104
      %v3191 = vpop.permute.xlu0 %3190
      %v3192 = vsel %vm472, %v3189, 0
      %v3194 = vsel %vm472, %v3191, 0
      %3196 = vmatprep.subr.mxu0 0.0
      %3197 = vmatpush1.xpose.msra.mxu0 %v3194
      %3198 = vmatprep.subr.mxu0 0.0
      %3199 = vmatpush1.xpose.msra.mxu0 0.0
      %3200 = vmatprep.subr.mxu0 0.0
      %3201 = vmatpush1.xpose.msra.mxu0 0.0
      %3202 = vmatprep.subr.mxu0 0.0
      %3203 = vmatpush1.xpose.msra.mxu0 0.0
      %3204 = vmatprep.subr.mxu0 0.0
      %3205 = vmatpush1.xpose.msra.mxu0 0.0
      %3206 = vmatprep.subr.mxu0 0.0
      %3207 = vmatpush1.xpose.msra.mxu0 0.0
      %3208 = vmatprep.subr.mxu0 0.0
      %3209 = vmatpush1.xpose.msra.mxu0 0.0
      %3210 = vmatprep.subr.mxu0 0.0
      %3211 = vmatpush1.xpose.msra.mxu0 0.0
      %3212 = vmatprep.subr.mxu0 0.0
      %3213 = vmatpush1.xpose.msra.mxu0 0.0
      %3214 = vmatprep.subr.mxu0 0.0
      %3215 = vmatpush1.xpose.msra.mxu0 0.0
      %3216 = vmatprep.subr.mxu0 0.0
      %3217 = vmatpush1.xpose.msra.mxu0 0.0
      %3218 = vmatprep.subr.mxu0 0.0
      %3219 = vmatpush1.xpose.msra.mxu0 0.0
      %3220 = vmatprep.subr.mxu0 0.0
      %3221 = vmatpush1.xpose.msra.mxu0 0.0
      %3222 = vmatprep.subr.mxu0 0.0
      %3223 = vmatpush1.xpose.msra.mxu0 0.0
      %3224 = vmatprep.subr.mxu0 0.0
      %3225 = vmatpush1.xpose.msra.mxu0 0.0
      %3226 = vmatprep.subr.mxu0 0.0
      %3227 = vmatpush1.xpose.msra.mxu0 0.0
      %3228 = vmatprep.subr.mxu0 0.0
      %3229 = vmatpush1.xpose.msra.mxu0 0.0
      %3230 = vmatprep.subr.mxu0 0.0
      %3231 = vmatpush1.xpose.msra.mxu0 0.0
      %3232 = vmatprep.subr.mxu0 0.0
      %3233 = vmatpush1.xpose.msra.mxu0 0.0
      %3234 = vmatprep.subr.mxu0 0.0
      %3235 = vmatpush1.xpose.msra.mxu0 0.0
      %3236 = vmatprep.subr.mxu0 0.0
      %3237 = vmatpush1.xpose.msra.mxu0 0.0
      %3238 = vmatprep.subr.mxu0 0.0
      %3239 = vmatpush1.xpose.msra.mxu0 0.0
      %3240 = vmatprep.subr.mxu0 0.0
      %3241 = vmatpush1.xpose.msra.mxu0 0.0
      %3242 = vmatprep.subr.mxu0 0.0
      %3243 = vmatpush1.xpose.msra.mxu0 0.0
      %3244 = vmatprep.subr.mxu0 0.0
      %3245 = vmatpush1.xpose.msra.mxu0 0.0
      %3246 = vmatprep.subr.mxu0 0.0
      %3247 = vmatpush1.xpose.msra.mxu0 0.0
      %3248 = vmatprep.subr.mxu0 0.0
      %3249 = vmatpush1.xpose.msra.mxu0 0.0
      %3250 = vmatprep.subr.mxu0 0.0
      %3251 = vmatpush1.xpose.msra.mxu0 0.0
      %3252 = vmatprep.subr.mxu0 0.0
      %3253 = vmatpush1.xpose.msra.mxu0 0.0
      %3254 = vmatprep.subr.mxu0 0.0
      %3255 = vmatpush1.xpose.msra.mxu0 0.0
      %3256 = vmatprep.subr.mxu0 0.0
      %3257 = vmatpush1.xpose.msra.mxu0 0.0
      %3258 = vmatprep.subr.mxu0 0.0
      %3259 = vmatpush1.xpose.msra.mxu0 0.0
      %3260 = vmatprep.mubr.f32.mxu0 0.0
      %3261 = vmatmul.mubr.f32.gmra.mrb[0].mxu0 %v3192
      %v3262 = vpop.f32.mrb[0].mxu0
      %v3263 = vadd.f32 0.0, %v3262
      %v3264 = vpop.f32.mrb[0].mxu0
      %3265 = vdwg.mxu0
      %3266 = vrot.lane.b32.xlu0 %v401, 120
      %v3267 = vpop.permute.xlu0 %3266
      %3268 = vrot.lane.b32.xlu0 %v401, 104
      %v3269 = vpop.permute.xlu0 %3268
      %v3270 = vsel %vm472, %v3267, 0
      %v3272 = vsel %vm472, %v3269, 0
      %3274 = vmatprep.subr.mxu0 0.0
      %3275 = vmatpush1.xpose.msra.mxu0 %v3272
      %3276 = vmatprep.subr.mxu0 0.0
      %3277 = vmatpush1.xpose.msra.mxu0 0.0
      %3278 = vmatprep.subr.mxu0 0.0
      %3279 = vmatpush1.xpose.msra.mxu0 0.0
      %3280 = vmatprep.subr.mxu0 0.0
      %3281 = vmatpush1.xpose.msra.mxu0 0.0
      %3282 = vmatprep.subr.mxu0 0.0
      %3283 = vmatpush1.xpose.msra.mxu0 0.0
      %3284 = vmatprep.subr.mxu0 0.0
      %3285 = vmatpush1.xpose.msra.mxu0 0.0
      %3286 = vmatprep.subr.mxu0 0.0
      %3287 = vmatpush1.xpose.msra.mxu0 0.0
      %3288 = vmatprep.subr.mxu0 0.0
      %3289 = vmatpush1.xpose.msra.mxu0 0.0
      %3290 = vmatprep.subr.mxu0 0.0
      %3291 = vmatpush1.xpose.msra.mxu0 0.0
      %3292 = vmatprep.subr.mxu0 0.0
      %3293 = vmatpush1.xpose.msra.mxu0 0.0
      %3294 = vmatprep.subr.mxu0 0.0
      %3295 = vmatpush1.xpose.msra.mxu0 0.0
      %3296 = vmatprep.subr.mxu0 0.0
      %3297 = vmatpush1.xpose.msra.mxu0 0.0
      %3298 = vmatprep.subr.mxu0 0.0
      %3299 = vmatpush1.xpose.msra.mxu0 0.0
      %3300 = vmatprep.subr.mxu0 0.0
      %3301 = vmatpush1.xpose.msra.mxu0 0.0
      %3302 = vmatprep.subr.mxu0 0.0
      %3303 = vmatpush1.xpose.msra.mxu0 0.0
      %3304 = vmatprep.subr.mxu0 0.0
      %3305 = vmatpush1.xpose.msra.mxu0 0.0
      %3306 = vmatprep.subr.mxu0 0.0
      %3307 = vmatpush1.xpose.msra.mxu0 0.0
      %3308 = vmatprep.subr.mxu0 0.0
      %3309 = vmatpush1.xpose.msra.mxu0 0.0
      %3310 = vmatprep.subr.mxu0 0.0
      %3311 = vmatpush1.xpose.msra.mxu0 0.0
      %3312 = vmatprep.subr.mxu0 0.0
      %3313 = vmatpush1.xpose.msra.mxu0 0.0
      %3314 = vmatprep.subr.mxu0 0.0
      %3315 = vmatpush1.xpose.msra.mxu0 0.0
      %3316 = vmatprep.subr.mxu0 0.0
      %3317 = vmatpush1.xpose.msra.mxu0 0.0
      %3318 = vmatprep.subr.mxu0 0.0
      %3319 = vmatpush1.xpose.msra.mxu0 0.0
      %3320 = vmatprep.subr.mxu0 0.0
      %3321 = vmatpush1.xpose.msra.mxu0 0.0
      %3322 = vmatprep.subr.mxu0 0.0
      %3323 = vmatpush1.xpose.msra.mxu0 0.0
      %3324 = vmatprep.subr.mxu0 0.0
      %3325 = vmatpush1.xpose.msra.mxu0 0.0
      %3326 = vmatprep.subr.mxu0 0.0
      %3327 = vmatpush1.xpose.msra.mxu0 0.0
      %3328 = vmatprep.subr.mxu0 0.0
      %3329 = vmatpush1.xpose.msra.mxu0 0.0
      %3330 = vmatprep.subr.mxu0 0.0
      %3331 = vmatpush1.xpose.msra.mxu0 0.0
      %3332 = vmatprep.subr.mxu0 0.0
      %3333 = vmatpush1.xpose.msra.mxu0 0.0
      %3334 = vmatprep.subr.mxu0 0.0
      %3335 = vmatpush1.xpose.msra.mxu0 0.0
      %3336 = vmatprep.subr.mxu0 0.0
      %3337 = vmatpush1.xpose.msra.mxu0 0.0
      %3338 = vmatprep.mubr.f32.mxu0 0.0
      %3339 = vmatmul.mubr.f32.gmra.mrb[0].mxu0 %v3270
      %v3340 = vpop.f32.mrb[0].mxu0
      %v3341 = vadd.f32 0.0, %v3340
      %v3342 = vpop.f32.mrb[0].mxu0
      %3343 = vdwg.mxu0
      %3344 = vrot.lane.b32.xlu0 %v406, 120
      %v3345 = vpop.permute.xlu0 %3344
      %3346 = vrot.lane.b32.xlu0 %v406, 104
      %v3347 = vpop.permute.xlu0 %3346
      %v3348 = vsel %vm472, %v3345, 0
      %v3350 = vsel %vm472, %v3347, 0
      %3352 = vmatprep.subr.mxu0 0.0
      %3353 = vmatpush1.xpose.msra.mxu0 %v3350
      %3354 = vmatprep.subr.mxu0 0.0
      %3355 = vmatpush1.xpose.msra.mxu0 0.0
      %3356 = vmatprep.subr.mxu0 0.0
      %3357 = vmatpush1.xpose.msra.mxu0 0.0
      %3358 = vmatprep.subr.mxu0 0.0
      %3359 = vmatpush1.xpose.msra.mxu0 0.0
      %3360 = vmatprep.subr.mxu0 0.0
      %3361 = vmatpush1.xpose.msra.mxu0 0.0
      %3362 = vmatprep.subr.mxu0 0.0
      %3363 = vmatpush1.xpose.msra.mxu0 0.0
      %3364 = vmatprep.subr.mxu0 0.0
      %3365 = vmatpush1.xpose.msra.mxu0 0.0
      %3366 = vmatprep.subr.mxu0 0.0
      %3367 = vmatpush1.xpose.msra.mxu0 0.0
      %3368 = vmatprep.subr.mxu0 0.0
      %3369 = vmatpush1.xpose.msra.mxu0 0.0
      %3370 = vmatprep.subr.mxu0 0.0
      %3371 = vmatpush1.xpose.msra.mxu0 0.0
      %3372 = vmatprep.subr.mxu0 0.0
      %3373 = vmatpush1.xpose.msra.mxu0 0.0
      %3374 = vmatprep.subr.mxu0 0.0
      %3375 = vmatpush1.xpose.msra.mxu0 0.0
      %3376 = vmatprep.subr.mxu0 0.0
      %3377 = vmatpush1.xpose.msra.mxu0 0.0
      %3378 = vmatprep.subr.mxu0 0.0
      %3379 = vmatpush1.xpose.msra.mxu0 0.0
      %3380 = vmatprep.subr.mxu0 0.0
      %3381 = vmatpush1.xpose.msra.mxu0 0.0
      %3382 = vmatprep.subr.mxu0 0.0
      %3383 = vmatpush1.xpose.msra.mxu0 0.0
      %3384 = vmatprep.subr.mxu0 0.0
      %3385 = vmatpush1.xpose.msra.mxu0 0.0
      %3386 = vmatprep.subr.mxu0 0.0
      %3387 = vmatpush1.xpose.msra.mxu0 0.0
      %3388 = vmatprep.subr.mxu0 0.0
      %3389 = vmatpush1.xpose.msra.mxu0 0.0
      %3390 = vmatprep.subr.mxu0 0.0
      %3391 = vmatpush1.xpose.msra.mxu0 0.0
      %3392 = vmatprep.subr.mxu0 0.0
      %3393 = vmatpush1.xpose.msra.mxu0 0.0
      %3394 = vmatprep.subr.mxu0 0.0
      %3395 = vmatpush1.xpose.msra.mxu0 0.0
      %3396 = vmatprep.subr.mxu0 0.0
      %3397 = vmatpush1.xpose.msra.mxu0 0.0
      %3398 = vmatprep.subr.mxu0 0.0
      %3399 = vmatpush1.xpose.msra.mxu0 0.0
      %3400 = vmatprep.subr.mxu0 0.0
      %3401 = vmatpush1.xpose.msra.mxu0 0.0
      %3402 = vmatprep.subr.mxu0 0.0
      %3403 = vmatpush1.xpose.msra.mxu0 0.0
      %3404 = vmatprep.subr.mxu0 0.0
      %3405 = vmatpush1.xpose.msra.mxu0 0.0
      %3406 = vmatprep.subr.mxu0 0.0
      %3407 = vmatpush1.xpose.msra.mxu0 0.0
      %3408 = vmatprep.subr.mxu0 0.0
      %3409 = vmatpush1.xpose.msra.mxu0 0.0
      %3410 = vmatprep.subr.mxu0 0.0
      %3411 = vmatpush1.xpose.msra.mxu0 0.0
      %3412 = vmatprep.subr.mxu0 0.0
      %3413 = vmatpush1.xpose.msra.mxu0 0.0
      %3414 = vmatprep.subr.mxu0 0.0
      %3415 = vmatpush1.xpose.msra.mxu0 0.0
      %3416 = vmatprep.mubr.f32.mxu0 0.0
      %3417 = vmatmul.mubr.f32.gmra.mrb[0].mxu0 %v3348
      %v3418 = vpop.f32.mrb[0].mxu0
      %v3419 = vadd.f32 0.0, %v3418
      %v3420 = vpop.f32.mrb[0].mxu0
      %3421 = vdwg.mxu0
      %3422 = vrot.lane.b32.xlu0 %v411, 120
      %v3423 = vpop.permute.xlu0 %3422
      %3424 = vrot.lane.b32.xlu0 %v411, 104
      %v3425 = vpop.permute.xlu0 %3424
      %v3426 = vsel %vm472, %v3423, 0
      %v3428 = vsel %vm472, %v3425, 0
      %3430 = vmatprep.subr.mxu0 0.0
      %3431 = vmatpush1.xpose.msra.mxu0 %v3428
      %3432 = vmatprep.subr.mxu0 0.0
      %3433 = vmatpush1.xpose.msra.mxu0 0.0
      %3434 = vmatprep.subr.mxu0 0.0
      %3435 = vmatpush1.xpose.msra.mxu0 0.0
      %3436 = vmatprep.subr.mxu0 0.0
      %3437 = vmatpush1.xpose.msra.mxu0 0.0
      %3438 = vmatprep.subr.mxu0 0.0
      %3439 = vmatpush1.xpose.msra.mxu0 0.0
      %3440 = vmatprep.subr.mxu0 0.0
      %3441 = vmatpush1.xpose.msra.mxu0 0.0
      %3442 = vmatprep.subr.mxu0 0.0
      %3443 = vmatpush1.xpose.msra.mxu0 0.0
      %3444 = vmatprep.subr.mxu0 0.0
      %3445 = vmatpush1.xpose.msra.mxu0 0.0
      %3446 = vmatprep.subr.mxu0 0.0
      %3447 = vmatpush1.xpose.msra.mxu0 0.0
      %3448 = vmatprep.subr.mxu0 0.0
      %3449 = vmatpush1.xpose.msra.mxu0 0.0
      %3450 = vmatprep.subr.mxu0 0.0
      %3451 = vmatpush1.xpose.msra.mxu0 0.0
      %3452 = vmatprep.subr.mxu0 0.0
      %3453 = vmatpush1.xpose.msra.mxu0 0.0
      %3454 = vmatprep.subr.mxu0 0.0
      %3455 = vmatpush1.xpose.msra.mxu0 0.0
      %3456 = vmatprep.subr.mxu0 0.0
      %3457 = vmatpush1.xpose.msra.mxu0 0.0
      %3458 = vmatprep.subr.mxu0 0.0
      %3459 = vmatpush1.xpose.msra.mxu0 0.0
      %3460 = vmatprep.subr.mxu0 0.0
      %3461 = vmatpush1.xpose.msra.mxu0 0.0
      %3462 = vmatprep.subr.mxu0 0.0
      %3463 = vmatpush1.xpose.msra.mxu0 0.0
      %3464 = vmatprep.subr.mxu0 0.0
      %3465 = vmatpush1.xpose.msra.mxu0 0.0
      %3466 = vmatprep.subr.mxu0 0.0
      %3467 = vmatpush1.xpose.msra.mxu0 0.0
      %3468 = vmatprep.subr.mxu0 0.0
      %3469 = vmatpush1.xpose.msra.mxu0 0.0
      %3470 = vmatprep.subr.mxu0 0.0
      %3471 = vmatpush1.xpose.msra.mxu0 0.0
      %3472 = vmatprep.subr.mxu0 0.0
      %3473 = vmatpush1.xpose.msra.mxu0 0.0
      %3474 = vmatprep.subr.mxu0 0.0
      %3475 = vmatpush1.xpose.msra.mxu0 0.0
      %3476 = vmatprep.subr.mxu0 0.0
      %3477 = vmatpush1.xpose.msra.mxu0 0.0
      %3478 = vmatprep.subr.mxu0 0.0
      %3479 = vmatpush1.xpose.msra.mxu0 0.0
      %3480 = vmatprep.subr.mxu0 0.0
      %3481 = vmatpush1.xpose.msra.mxu0 0.0
      %3482 = vmatprep.subr.mxu0 0.0
      %3483 = vmatpush1.xpose.msra.mxu0 0.0
      %3484 = vmatprep.subr.mxu0 0.0
      %3485 = vmatpush1.xpose.msra.mxu0 0.0
      %3486 = vmatprep.subr.mxu0 0.0
      %3487 = vmatpush1.xpose.msra.mxu0 0.0
      %3488 = vmatprep.subr.mxu0 0.0
      %3489 = vmatpush1.xpose.msra.mxu0 0.0
      %3490 = vmatprep.subr.mxu0 0.0
      %3491 = vmatpush1.xpose.msra.mxu0 0.0
      %3492 = vmatprep.subr.mxu0 0.0
      %3493 = vmatpush1.xpose.msra.mxu0 0.0
      %3494 = vmatprep.mubr.f32.mxu0 0.0
      %3495 = vmatmul.mubr.f32.gmra.mrb[0].mxu0 %v3426
      %v3496 = vpop.f32.mrb[0].mxu0
      %v3497 = vadd.f32 0.0, %v3496
      %v3498 = vpop.f32.mrb[0].mxu0
      %3499 = vdwg.mxu0
      %3500 = vrot.lane.b32.xlu0 %v416, 120
      %v3501 = vpop.permute.xlu0 %3500
      %3502 = vrot.lane.b32.xlu0 %v416, 104
      %v3503 = vpop.permute.xlu0 %3502
      %v3504 = vsel %vm472, %v3501, 0
      %v3506 = vsel %vm472, %v3503, 0
      %3508 = vmatprep.subr.mxu0 0.0
      %3509 = vmatpush1.xpose.msra.mxu0 %v3506
      %3510 = vmatprep.subr.mxu0 0.0
      %3511 = vmatpush1.xpose.msra.mxu0 0.0
      %3512 = vmatprep.subr.mxu0 0.0
      %3513 = vmatpush1.xpose.msra.mxu0 0.0
      %3514 = vmatprep.subr.mxu0 0.0
      %3515 = vmatpush1.xpose.msra.mxu0 0.0
      %3516 = vmatprep.subr.mxu0 0.0
      %3517 = vmatpush1.xpose.msra.mxu0 0.0
      %3518 = vmatprep.subr.mxu0 0.0
      %3519 = vmatpush1.xpose.msra.mxu0 0.0
      %3520 = vmatprep.subr.mxu0 0.0
      %3521 = vmatpush1.xpose.msra.mxu0 0.0
      %3522 = vmatprep.subr.mxu0 0.0
      %3523 = vmatpush1.xpose.msra.mxu0 0.0
      %3524 = vmatprep.subr.mxu0 0.0
      %3525 = vmatpush1.xpose.msra.mxu0 0.0
      %3526 = vmatprep.subr.mxu0 0.0
      %3527 = vmatpush1.xpose.msra.mxu0 0.0
      %3528 = vmatprep.subr.mxu0 0.0
      %3529 = vmatpush1.xpose.msra.mxu0 0.0
      %3530 = vmatprep.subr.mxu0 0.0
      %3531 = vmatpush1.xpose.msra.mxu0 0.0
      %3532 = vmatprep.subr.mxu0 0.0
      %3533 = vmatpush1.xpose.msra.mxu0 0.0
      %3534 = vmatprep.subr.mxu0 0.0
      %3535 = vmatpush1.xpose.msra.mxu0 0.0
      %3536 = vmatprep.subr.mxu0 0.0
      %3537 = vmatpush1.xpose.msra.mxu0 0.0
      %3538 = vmatprep.subr.mxu0 0.0
      %3539 = vmatpush1.xpose.msra.mxu0 0.0
      %3540 = vmatprep.subr.mxu0 0.0
      %3541 = vmatpush1.xpose.msra.mxu0 0.0
      %3542 = vmatprep.subr.mxu0 0.0
      %3543 = vmatpush1.xpose.msra.mxu0 0.0
      %3544 = vmatprep.subr.mxu0 0.0
      %3545 = vmatpush1.xpose.msra.mxu0 0.0
      %3546 = vmatprep.subr.mxu0 0.0
      %3547 = vmatpush1.xpose.msra.mxu0 0.0
      %3548 = vmatprep.subr.mxu0 0.0
      %3549 = vmatpush1.xpose.msra.mxu0 0.0
      %3550 = vmatprep.subr.mxu0 0.0
      %3551 = vmatpush1.xpose.msra.mxu0 0.0
      %3552 = vmatprep.subr.mxu0 0.0
      %3553 = vmatpush1.xpose.msra.mxu0 0.0
      %3554 = vmatprep.subr.mxu0 0.0
      %3555 = vmatpush1.xpose.msra.mxu0 0.0
      %3556 = vmatprep.subr.mxu0 0.0
      %3557 = vmatpush1.xpose.msra.mxu0 0.0
      %3558 = vmatprep.subr.mxu0 0.0
      %3559 = vmatpush1.xpose.msra.mxu0 0.0
      %3560 = vmatprep.subr.mxu0 0.0
      %3561 = vmatpush1.xpose.msra.mxu0 0.0
      %3562 = vmatprep.subr.mxu0 0.0
      %3563 = vmatpush1.xpose.msra.mxu0 0.0
      %3564 = vmatprep.subr.mxu0 0.0
      %3565 = vmatpush1.xpose.msra.mxu0 0.0
      %3566 = vmatprep.subr.mxu0 0.0
      %3567 = vmatpush1.xpose.msra.mxu0 0.0
      %3568 = vmatprep.subr.mxu0 0.0
      %3569 = vmatpush1.xpose.msra.mxu0 0.0
      %3570 = vmatprep.subr.mxu0 0.0
      %3571 = vmatpush1.xpose.msra.mxu0 0.0
      %3572 = vmatprep.mubr.f32.mxu0 0.0
      %3573 = vmatmul.mubr.f32.gmra.mrb[0].mxu0 %v3504
      %v3574 = vpop.f32.mrb[0].mxu0
      %v3575 = vadd.f32 0.0, %v3574
      %v3576 = vpop.f32.mrb[0].mxu0
      %3577 = vdwg.mxu0
      %3578 = vrot.lane.b32.xlu0 %v421, 120
      %v3579 = vpop.permute.xlu0 %3578
      %3580 = vrot.lane.b32.xlu0 %v421, 104
      %v3581 = vpop.permute.xlu0 %3580
      %v3582 = vsel %vm472, %v3579, 0
      %v3584 = vsel %vm472, %v3581, 0
      %3586 = vmatprep.subr.mxu0 0.0
      %3587 = vmatpush1.xpose.msra.mxu0 %v3584
      %3588 = vmatprep.subr.mxu0 0.0
      %3589 = vmatpush1.xpose.msra.mxu0 0.0
      %3590 = vmatprep.subr.mxu0 0.0
      %3591 = vmatpush1.xpose.msra.mxu0 0.0
      %3592 = vmatprep.subr.mxu0 0.0
      %3593 = vmatpush1.xpose.msra.mxu0 0.0
      %3594 = vmatprep.subr.mxu0 0.0
      %3595 = vmatpush1.xpose.msra.mxu0 0.0
      %3596 = vmatprep.subr.mxu0 0.0
      %3597 = vmatpush1.xpose.msra.mxu0 0.0
      %3598 = vmatprep.subr.mxu0 0.0
      %3599 = vmatpush1.xpose.msra.mxu0 0.0
      %3600 = vmatprep.subr.mxu0 0.0
      %3601 = vmatpush1.xpose.msra.mxu0 0.0
      %3602 = vmatprep.subr.mxu0 0.0
      %3603 = vmatpush1.xpose.msra.mxu0 0.0
      %3604 = vmatprep.subr.mxu0 0.0
      %3605 = vmatpush1.xpose.msra.mxu0 0.0
      %3606 = vmatprep.subr.mxu0 0.0
      %3607 = vmatpush1.xpose.msra.mxu0 0.0
      %3608 = vmatprep.subr.mxu0 0.0
      %3609 = vmatpush1.xpose.msra.mxu0 0.0
      %3610 = vmatprep.subr.mxu0 0.0
      %3611 = vmatpush1.xpose.msra.mxu0 0.0
      %3612 = vmatprep.subr.mxu0 0.0
      %3613 = vmatpush1.xpose.msra.mxu0 0.0
      %3614 = vmatprep.subr.mxu0 0.0
      %3615 = vmatpush1.xpose.msra.mxu0 0.0
      %3616 = vmatprep.subr.mxu0 0.0
      %3617 = vmatpush1.xpose.msra.mxu0 0.0
      %3618 = vmatprep.subr.mxu0 0.0
      %3619 = vmatpush1.xpose.msra.mxu0 0.0
      %3620 = vmatprep.subr.mxu0 0.0
      %3621 = vmatpush1.xpose.msra.mxu0 0.0
      %3622 = vmatprep.subr.mxu0 0.0
      %3623 = vmatpush1.xpose.msra.mxu0 0.0
      %3624 = vmatprep.subr.mxu0 0.0
      %3625 = vmatpush1.xpose.msra.mxu0 0.0
      %3626 = vmatprep.subr.mxu0 0.0
      %3627 = vmatpush1.xpose.msra.mxu0 0.0
      %3628 = vmatprep.subr.mxu0 0.0
      %3629 = vmatpush1.xpose.msra.mxu0 0.0
      %3630 = vmatprep.subr.mxu0 0.0
      %3631 = vmatpush1.xpose.msra.mxu0 0.0
      %3632 = vmatprep.subr.mxu0 0.0
      %3633 = vmatpush1.xpose.msra.mxu0 0.0
      %3634 = vmatprep.subr.mxu0 0.0
      %3635 = vmatpush1.xpose.msra.mxu0 0.0
      %3636 = vmatprep.subr.mxu0 0.0
      %3637 = vmatpush1.xpose.msra.mxu0 0.0
      %3638 = vmatprep.subr.mxu0 0.0
      %3639 = vmatpush1.xpose.msra.mxu0 0.0
      %3640 = vmatprep.subr.mxu0 0.0
      %3641 = vmatpush1.xpose.msra.mxu0 0.0
      %3642 = vmatprep.subr.mxu0 0.0
      %3643 = vmatpush1.xpose.msra.mxu0 0.0
      %3644 = vmatprep.subr.mxu0 0.0
      %3645 = vmatpush1.xpose.msra.mxu0 0.0
      %3646 = vmatprep.subr.mxu0 0.0
      %3647 = vmatpush1.xpose.msra.mxu0 0.0
      %3648 = vmatprep.subr.mxu0 0.0
      %3649 = vmatpush1.xpose.msra.mxu0 0.0
      %3650 = vmatprep.mubr.f32.mxu0 0.0
      %3651 = vmatmul.mubr.f32.gmra.mrb[0].mxu0 %v3582
      %v3652 = vpop.f32.mrb[0].mxu0
      %v3653 = vadd.f32 0.0, %v3652
      %v3654 = vpop.f32.mrb[0].mxu0
      %3655 = vdwg.mxu0
      %3656 = vrot.lane.b32.xlu0 %v426, 120
      %v3657 = vpop.permute.xlu0 %3656
      %3658 = vrot.lane.b32.xlu0 %v426, 104
      %v3659 = vpop.permute.xlu0 %3658
      %v3660 = vsel %vm472, %v3657, 0
      %v3662 = vsel %vm472, %v3659, 0
      %3664 = vmatprep.subr.mxu0 0.0
      %3665 = vmatpush1.xpose.msra.mxu0 %v3662
      %3666 = vmatprep.subr.mxu0 0.0
      %3667 = vmatpush1.xpose.msra.mxu0 0.0
      %3668 = vmatprep.subr.mxu0 0.0
      %3669 = vmatpush1.xpose.msra.mxu0 0.0
      %3670 = vmatprep.subr.mxu0 0.0
      %3671 = vmatpush1.xpose.msra.mxu0 0.0
      %3672 = vmatprep.subr.mxu0 0.0
      %3673 = vmatpush1.xpose.msra.mxu0 0.0
      %3674 = vmatprep.subr.mxu0 0.0
      %3675 = vmatpush1.xpose.msra.mxu0 0.0
      %3676 = vmatprep.subr.mxu0 0.0
      %3677 = vmatpush1.xpose.msra.mxu0 0.0
      %3678 = vmatprep.subr.mxu0 0.0
      %3679 = vmatpush1.xpose.msra.mxu0 0.0
      %3680 = vmatprep.subr.mxu0 0.0
      %3681 = vmatpush1.xpose.msra.mxu0 0.0
      %3682 = vmatprep.subr.mxu0 0.0
      %3683 = vmatpush1.xpose.msra.mxu0 0.0
      %3684 = vmatprep.subr.mxu0 0.0
      %3685 = vmatpush1.xpose.msra.mxu0 0.0
      %3686 = vmatprep.subr.mxu0 0.0
      %3687 = vmatpush1.xpose.msra.mxu0 0.0
      %3688 = vmatprep.subr.mxu0 0.0
      %3689 = vmatpush1.xpose.msra.mxu0 0.0
      %3690 = vmatprep.subr.mxu0 0.0
      %3691 = vmatpush1.xpose.msra.mxu0 0.0
      %3692 = vmatprep.subr.mxu0 0.0
      %3693 = vmatpush1.xpose.msra.mxu0 0.0
      %3694 = vmatprep.subr.mxu0 0.0
      %3695 = vmatpush1.xpose.msra.mxu0 0.0
      %3696 = vmatprep.subr.mxu0 0.0
      %3697 = vmatpush1.xpose.msra.mxu0 0.0
      %3698 = vmatprep.subr.mxu0 0.0
      %3699 = vmatpush1.xpose.msra.mxu0 0.0
      %3700 = vmatprep.subr.mxu0 0.0
      %3701 = vmatpush1.xpose.msra.mxu0 0.0
      %3702 = vmatprep.subr.mxu0 0.0
      %3703 = vmatpush1.xpose.msra.mxu0 0.0
      %3704 = vmatprep.subr.mxu0 0.0
      %3705 = vmatpush1.xpose.msra.mxu0 0.0
      %3706 = vmatprep.subr.mxu0 0.0
      %3707 = vmatpush1.xpose.msra.mxu0 0.0
      %3708 = vmatprep.subr.mxu0 0.0
      %3709 = vmatpush1.xpose.msra.mxu0 0.0
      %3710 = vmatprep.subr.mxu0 0.0
      %3711 = vmatpush1.xpose.msra.mxu0 0.0
      %3712 = vmatprep.subr.mxu0 0.0
      %3713 = vmatpush1.xpose.msra.mxu0 0.0
      %3714 = vmatprep.subr.mxu0 0.0
      %3715 = vmatpush1.xpose.msra.mxu0 0.0
      %3716 = vmatprep.subr.mxu0 0.0
      %3717 = vmatpush1.xpose.msra.mxu0 0.0
      %3718 = vmatprep.subr.mxu0 0.0
      %3719 = vmatpush1.xpose.msra.mxu0 0.0
      %3720 = vmatprep.subr.mxu0 0.0
      %3721 = vmatpush1.xpose.msra.mxu0 0.0
      %3722 = vmatprep.subr.mxu0 0.0
      %3723 = vmatpush1.xpose.msra.mxu0 0.0
      %3724 = vmatprep.subr.mxu0 0.0
      %3725 = vmatpush1.xpose.msra.mxu0 0.0
      %3726 = vmatprep.subr.mxu0 0.0
      %3727 = vmatpush1.xpose.msra.mxu0 0.0
      %3728 = vmatprep.mubr.f32.mxu0 0.0
      %3729 = vmatmul.mubr.f32.gmra.mrb[0].mxu0 %v3660
      %v3730 = vpop.f32.mrb[0].mxu0
      %v3731 = vadd.f32 0.0, %v3730
      %v3732 = vpop.f32.mrb[0].mxu0
      %3733 = vdwg.mxu0
      %3734 = vrot.lane.b32.xlu0 %v431, 120
      %v3735 = vpop.permute.xlu0 %3734
      %3736 = vrot.lane.b32.xlu0 %v431, 104
      %v3737 = vpop.permute.xlu0 %3736
      %v3738 = vsel %vm472, %v3735, 0
      %v3740 = vsel %vm472, %v3737, 0
      %3742 = vmatprep.subr.mxu0 0.0
      %3743 = vmatpush1.xpose.msra.mxu0 %v3740
      %3744 = vmatprep.subr.mxu0 0.0
      %3745 = vmatpush1.xpose.msra.mxu0 0.0
      %3746 = vmatprep.subr.mxu0 0.0
      %3747 = vmatpush1.xpose.msra.mxu0 0.0
      %3748 = vmatprep.subr.mxu0 0.0
      %3749 = vmatpush1.xpose.msra.mxu0 0.0
      %3750 = vmatprep.subr.mxu0 0.0
      %3751 = vmatpush1.xpose.msra.mxu0 0.0
      %3752 = vmatprep.subr.mxu0 0.0
      %3753 = vmatpush1.xpose.msra.mxu0 0.0
      %3754 = vmatprep.subr.mxu0 0.0
      %3755 = vmatpush1.xpose.msra.mxu0 0.0
      %3756 = vmatprep.subr.mxu0 0.0
      %3757 = vmatpush1.xpose.msra.mxu0 0.0
      %3758 = vmatprep.subr.mxu0 0.0
      %3759 = vmatpush1.xpose.msra.mxu0 0.0
      %3760 = vmatprep.subr.mxu0 0.0
      %3761 = vmatpush1.xpose.msra.mxu0 0.0
      %3762 = vmatprep.subr.mxu0 0.0
      %3763 = vmatpush1.xpose.msra.mxu0 0.0
      %3764 = vmatprep.subr.mxu0 0.0
      %3765 = vmatpush1.xpose.msra.mxu0 0.0
      %3766 = vmatprep.subr.mxu0 0.0
      %3767 = vmatpush1.xpose.msra.mxu0 0.0
      %3768 = vmatprep.subr.mxu0 0.0
      %3769 = vmatpush1.xpose.msra.mxu0 0.0
      %3770 = vmatprep.subr.mxu0 0.0
      %3771 = vmatpush1.xpose.msra.mxu0 0.0
      %3772 = vmatprep.subr.mxu0 0.0
      %3773 = vmatpush1.xpose.msra.mxu0 0.0
      %3774 = vmatprep.subr.mxu0 0.0
      %3775 = vmatpush1.xpose.msra.mxu0 0.0
      %3776 = vmatprep.subr.mxu0 0.0
      %3777 = vmatpush1.xpose.msra.mxu0 0.0
      %3778 = vmatprep.subr.mxu0 0.0
      %3779 = vmatpush1.xpose.msra.mxu0 0.0
      %3780 = vmatprep.subr.mxu0 0.0
      %3781 = vmatpush1.xpose.msra.mxu0 0.0
      %3782 = vmatprep.subr.mxu0 0.0
      %3783 = vmatpush1.xpose.msra.mxu0 0.0
      %3784 = vmatprep.subr.mxu0 0.0
      %3785 = vmatpush1.xpose.msra.mxu0 0.0
      %3786 = vmatprep.subr.mxu0 0.0
      %3787 = vmatpush1.xpose.msra.mxu0 0.0
      %3788 = vmatprep.subr.mxu0 0.0
      %3789 = vmatpush1.xpose.msra.mxu0 0.0
      %3790 = vmatprep.subr.mxu0 0.0
      %3791 = vmatpush1.xpose.msra.mxu0 0.0
      %3792 = vmatprep.subr.mxu0 0.0
      %3793 = vmatpush1.xpose.msra.mxu0 0.0
      %3794 = vmatprep.subr.mxu0 0.0
      %3795 = vmatpush1.xpose.msra.mxu0 0.0
      %3796 = vmatprep.subr.mxu0 0.0
      %3797 = vmatpush1.xpose.msra.mxu0 0.0
      %3798 = vmatprep.subr.mxu0 0.0
      %3799 = vmatpush1.xpose.msra.mxu0 0.0
      %3800 = vmatprep.subr.mxu0 0.0
      %3801 = vmatpush1.xpose.msra.mxu0 0.0
      %3802 = vmatprep.subr.mxu0 0.0
      %3803 = vmatpush1.xpose.msra.mxu0 0.0
      %3804 = vmatprep.subr.mxu0 0.0
      %3805 = vmatpush1.xpose.msra.mxu0 0.0
      %3806 = vmatprep.mubr.f32.mxu0 0.0
      %3807 = vmatmul.mubr.f32.gmra.mrb[0].mxu0 %v3738
      %v3808 = vpop.f32.mrb[0].mxu0
      %v3809 = vadd.f32 0.0, %v3808
      %v3810 = vpop.f32.mrb[0].mxu0
      %3811 = vdwg.mxu0
      %3812 = vrot.lane.b32.xlu0 %v436, 120
      %v3813 = vpop.permute.xlu0 %3812
      %3814 = vrot.lane.b32.xlu0 %v436, 104
      %v3815 = vpop.permute.xlu0 %3814
      %v3816 = vsel %vm472, %v3813, 0
      %v3818 = vsel %vm472, %v3815, 0
      %3820 = vmatprep.subr.mxu0 0.0
      %3821 = vmatpush1.xpose.msra.mxu0 %v3818
      %3822 = vmatprep.subr.mxu0 0.0
      %3823 = vmatpush1.xpose.msra.mxu0 0.0
      %3824 = vmatprep.subr.mxu0 0.0
      %3825 = vmatpush1.xpose.msra.mxu0 0.0
      %3826 = vmatprep.subr.mxu0 0.0
      %3827 = vmatpush1.xpose.msra.mxu0 0.0
      %3828 = vmatprep.subr.mxu0 0.0
      %3829 = vmatpush1.xpose.msra.mxu0 0.0
      %3830 = vmatprep.subr.mxu0 0.0
      %3831 = vmatpush1.xpose.msra.mxu0 0.0
      %3832 = vmatprep.subr.mxu0 0.0
      %3833 = vmatpush1.xpose.msra.mxu0 0.0
      %3834 = vmatprep.subr.mxu0 0.0
      %3835 = vmatpush1.xpose.msra.mxu0 0.0
      %3836 = vmatprep.subr.mxu0 0.0
      %3837 = vmatpush1.xpose.msra.mxu0 0.0
      %3838 = vmatprep.subr.mxu0 0.0
      %3839 = vmatpush1.xpose.msra.mxu0 0.0
      %3840 = vmatprep.subr.mxu0 0.0
      %3841 = vmatpush1.xpose.msra.mxu0 0.0
      %3842 = vmatprep.subr.mxu0 0.0
      %3843 = vmatpush1.xpose.msra.mxu0 0.0
      %3844 = vmatprep.subr.mxu0 0.0
      %3845 = vmatpush1.xpose.msra.mxu0 0.0
      %3846 = vmatprep.subr.mxu0 0.0
      %3847 = vmatpush1.xpose.msra.mxu0 0.0
      %3848 = vmatprep.subr.mxu0 0.0
      %3849 = vmatpush1.xpose.msra.mxu0 0.0
      %3850 = vmatprep.subr.mxu0 0.0
      %3851 = vmatpush1.xpose.msra.mxu0 0.0
      %3852 = vmatprep.subr.mxu0 0.0
      %3853 = vmatpush1.xpose.msra.mxu0 0.0
      %3854 = vmatprep.subr.mxu0 0.0
      %3855 = vmatpush1.xpose.msra.mxu0 0.0
      %3856 = vmatprep.subr.mxu0 0.0
      %3857 = vmatpush1.xpose.msra.mxu0 0.0
      %3858 = vmatprep.subr.mxu0 0.0
      %3859 = vmatpush1.xpose.msra.mxu0 0.0
      %3860 = vmatprep.subr.mxu0 0.0
      %3861 = vmatpush1.xpose.msra.mxu0 0.0
      %3862 = vmatprep.subr.mxu0 0.0
      %3863 = vmatpush1.xpose.msra.mxu0 0.0
      %3864 = vmatprep.subr.mxu0 0.0
      %3865 = vmatpush1.xpose.msra.mxu0 0.0
      %3866 = vmatprep.subr.mxu0 0.0
      %3867 = vmatpush1.xpose.msra.mxu0 0.0
      %3868 = vmatprep.subr.mxu0 0.0
      %3869 = vmatpush1.xpose.msra.mxu0 0.0
      %3870 = vmatprep.subr.mxu0 0.0
      %3871 = vmatpush1.xpose.msra.mxu0 0.0
      %3872 = vmatprep.subr.mxu0 0.0
      %3873 = vmatpush1.xpose.msra.mxu0 0.0
      %3874 = vmatprep.subr.mxu0 0.0
      %3875 = vmatpush1.xpose.msra.mxu0 0.0
      %3876 = vmatprep.subr.mxu0 0.0
      %3877 = vmatpush1.xpose.msra.mxu0 0.0
      %3878 = vmatprep.subr.mxu0 0.0
      %3879 = vmatpush1.xpose.msra.mxu0 0.0
      %3880 = vmatprep.subr.mxu0 0.0
      %3881 = vmatpush1.xpose.msra.mxu0 0.0
      %3882 = vmatprep.subr.mxu0 0.0
      %3883 = vmatpush1.xpose.msra.mxu0 0.0
      %3884 = vmatprep.mubr.f32.mxu0 0.0
      %3885 = vmatmul.mubr.f32.gmra.mrb[0].mxu0 %v3816
      %v3886 = vpop.f32.mrb[0].mxu0
      %v3887 = vadd.f32 0.0, %v3886
      %v3888 = vpop.f32.mrb[0].mxu0
      %3889 = vdwg.mxu0
      %3890 = vrot.lane.b32.xlu0 %v441, 120
      %v3891 = vpop.permute.xlu0 %3890
      %3892 = vrot.lane.b32.xlu0 %v441, 104
      %v3893 = vpop.permute.xlu0 %3892
      %v3894 = vsel %vm472, %v3891, 0
      %v3896 = vsel %vm472, %v3893, 0
      %3898 = vmatprep.subr.mxu0 0.0
      %3899 = vmatpush1.xpose.msra.mxu0 %v3896
      %3900 = vmatprep.subr.mxu0 0.0
      %3901 = vmatpush1.xpose.msra.mxu0 0.0
      %3902 = vmatprep.subr.mxu0 0.0
      %3903 = vmatpush1.xpose.msra.mxu0 0.0
      %3904 = vmatprep.subr.mxu0 0.0
      %3905 = vmatpush1.xpose.msra.mxu0 0.0
      %3906 = vmatprep.subr.mxu0 0.0
      %3907 = vmatpush1.xpose.msra.mxu0 0.0
      %3908 = vmatprep.subr.mxu0 0.0
      %3909 = vmatpush1.xpose.msra.mxu0 0.0
      %3910 = vmatprep.subr.mxu0 0.0
      %3911 = vmatpush1.xpose.msra.mxu0 0.0
      %3912 = vmatprep.subr.mxu0 0.0
      %3913 = vmatpush1.xpose.msra.mxu0 0.0
      %3914 = vmatprep.subr.mxu0 0.0
      %3915 = vmatpush1.xpose.msra.mxu0 0.0
      %3916 = vmatprep.subr.mxu0 0.0
      %3917 = vmatpush1.xpose.msra.mxu0 0.0
      %3918 = vmatprep.subr.mxu0 0.0
      %3919 = vmatpush1.xpose.msra.mxu0 0.0
      %3920 = vmatprep.subr.mxu0 0.0
      %3921 = vmatpush1.xpose.msra.mxu0 0.0
      %3922 = vmatprep.subr.mxu0 0.0
      %3923 = vmatpush1.xpose.msra.mxu0 0.0
      %3924 = vmatprep.subr.mxu0 0.0
      %3925 = vmatpush1.xpose.msra.mxu0 0.0
      %3926 = vmatprep.subr.mxu0 0.0
      %3927 = vmatpush1.xpose.msra.mxu0 0.0
      %3928 = vmatprep.subr.mxu0 0.0
      %3929 = vmatpush1.xpose.msra.mxu0 0.0
      %3930 = vmatprep.subr.mxu0 0.0
      %3931 = vmatpush1.xpose.msra.mxu0 0.0
      %3932 = vmatprep.subr.mxu0 0.0
      %3933 = vmatpush1.xpose.msra.mxu0 0.0
      %3934 = vmatprep.subr.mxu0 0.0
      %3935 = vmatpush1.xpose.msra.mxu0 0.0
      %3936 = vmatprep.subr.mxu0 0.0
      %3937 = vmatpush1.xpose.msra.mxu0 0.0
      %3938 = vmatprep.subr.mxu0 0.0
      %3939 = vmatpush1.xpose.msra.mxu0 0.0
      %3940 = vmatprep.subr.mxu0 0.0
      %3941 = vmatpush1.xpose.msra.mxu0 0.0
      %3942 = vmatprep.subr.mxu0 0.0
      %3943 = vmatpush1.xpose.msra.mxu0 0.0
      %3944 = vmatprep.subr.mxu0 0.0
      %3945 = vmatpush1.xpose.msra.mxu0 0.0
      %3946 = vmatprep.subr.mxu0 0.0
      %3947 = vmatpush1.xpose.msra.mxu0 0.0
      %3948 = vmatprep.subr.mxu0 0.0
      %3949 = vmatpush1.xpose.msra.mxu0 0.0
      %3950 = vmatprep.subr.mxu0 0.0
      %3951 = vmatpush1.xpose.msra.mxu0 0.0
      %3952 = vmatprep.subr.mxu0 0.0
      %3953 = vmatpush1.xpose.msra.mxu0 0.0
      %3954 = vmatprep.subr.mxu0 0.0
      %3955 = vmatpush1.xpose.msra.mxu0 0.0
      %3956 = vmatprep.subr.mxu0 0.0
      %3957 = vmatpush1.xpose.msra.mxu0 0.0
      %3958 = vmatprep.subr.mxu0 0.0
      %3959 = vmatpush1.xpose.msra.mxu0 0.0
      %3960 = vmatprep.subr.mxu0 0.0
      %3961 = vmatpush1.xpose.msra.mxu0 0.0
      %3962 = vmatprep.mubr.f32.mxu0 0.0
      %3963 = vmatmul.mubr.f32.gmra.mrb[0].mxu0 %v3894
      %v3964 = vpop.f32.mrb[0].mxu0
      %v3965 = vadd.f32 0.0, %v3964
      %v3966 = vpop.f32.mrb[0].mxu0
      %3967 = vdwg.mxu0
      %3968 = vrot.lane.b32.xlu0 %v446, 120
      %v3969 = vpop.permute.xlu0 %3968
      %3970 = vrot.lane.b32.xlu0 %v446, 104
      %v3971 = vpop.permute.xlu0 %3970
      %v3972 = vsel %vm472, %v3969, 0
      %v3974 = vsel %vm472, %v3971, 0
      %3976 = vmatprep.subr.mxu0 0.0
      %3977 = vmatpush1.xpose.msra.mxu0 %v3974
      %3978 = vmatprep.subr.mxu0 0.0
      %3979 = vmatpush1.xpose.msra.mxu0 0.0
      %3980 = vmatprep.subr.mxu0 0.0
      %3981 = vmatpush1.xpose.msra.mxu0 0.0
      %3982 = vmatprep.subr.mxu0 0.0
      %3983 = vmatpush1.xpose.msra.mxu0 0.0
      %3984 = vmatprep.subr.mxu0 0.0
      %3985 = vmatpush1.xpose.msra.mxu0 0.0
      %3986 = vmatprep.subr.mxu0 0.0
      %3987 = vmatpush1.xpose.msra.mxu0 0.0
      %3988 = vmatprep.subr.mxu0 0.0
      %3989 = vmatpush1.xpose.msra.mxu0 0.0
      %3990 = vmatprep.subr.mxu0 0.0
      %3991 = vmatpush1.xpose.msra.mxu0 0.0
      %3992 = vmatprep.subr.mxu0 0.0
      %3993 = vmatpush1.xpose.msra.mxu0 0.0
      %3994 = vmatprep.subr.mxu0 0.0
      %3995 = vmatpush1.xpose.msra.mxu0 0.0
      %3996 = vmatprep.subr.mxu0 0.0
      %3997 = vmatpush1.xpose.msra.mxu0 0.0
      %3998 = vmatprep.subr.mxu0 0.0
      %3999 = vmatpush1.xpose.msra.mxu0 0.0
      %4000 = vmatprep.subr.mxu0 0.0
      %4001 = vmatpush1.xpose.msra.mxu0 0.0
      %4002 = vmatprep.subr.mxu0 0.0
      %4003 = vmatpush1.xpose.msra.mxu0 0.0
      %4004 = vmatprep.subr.mxu0 0.0
      %4005 = vmatpush1.xpose.msra.mxu0 0.0
      %4006 = vmatprep.subr.mxu0 0.0
      %4007 = vmatpush1.xpose.msra.mxu0 0.0
      %4008 = vmatprep.subr.mxu0 0.0
      %4009 = vmatpush1.xpose.msra.mxu0 0.0
      %4010 = vmatprep.subr.mxu0 0.0
      %4011 = vmatpush1.xpose.msra.mxu0 0.0
      %4012 = vmatprep.subr.mxu0 0.0
      %4013 = vmatpush1.xpose.msra.mxu0 0.0
      %4014 = vmatprep.subr.mxu0 0.0
      %4015 = vmatpush1.xpose.msra.mxu0 0.0
      %4016 = vmatprep.subr.mxu0 0.0
      %4017 = vmatpush1.xpose.msra.mxu0 0.0
      %4018 = vmatprep.subr.mxu0 0.0
      %4019 = vmatpush1.xpose.msra.mxu0 0.0
      %4020 = vmatprep.subr.mxu0 0.0
      %4021 = vmatpush1.xpose.msra.mxu0 0.0
      %4022 = vmatprep.subr.mxu0 0.0
      %4023 = vmatpush1.xpose.msra.mxu0 0.0
      %4024 = vmatprep.subr.mxu0 0.0
      %4025 = vmatpush1.xpose.msra.mxu0 0.0
      %4026 = vmatprep.subr.mxu0 0.0
      %4027 = vmatpush1.xpose.msra.mxu0 0.0
      %4028 = vmatprep.subr.mxu0 0.0
      %4029 = vmatpush1.xpose.msra.mxu0 0.0
      %4030 = vmatprep.subr.mxu0 0.0
      %4031 = vmatpush1.xpose.msra.mxu0 0.0
      %4032 = vmatprep.subr.mxu0 0.0
      %4033 = vmatpush1.xpose.msra.mxu0 0.0
      %4034 = vmatprep.subr.mxu0 0.0
      %4035 = vmatpush1.xpose.msra.mxu0 0.0
      %4036 = vmatprep.subr.mxu0 0.0
      %4037 = vmatpush1.xpose.msra.mxu0 0.0
      %4038 = vmatprep.subr.mxu0 0.0
      %4039 = vmatpush1.xpose.msra.mxu0 0.0
      %4040 = vmatprep.mubr.f32.mxu0 0.0
      %4041 = vmatmul.mubr.f32.gmra.mrb[0].mxu0 %v3972
      %v4042 = vpop.f32.mrb[0].mxu0
      %v4043 = vadd.f32 0.0, %v4042
      %v4044 = vpop.f32.mrb[0].mxu0
      %4045 = vdwg.mxu0
      %4046 = vrot.lane.b32.xlu0 %v451, 120
      %v4047 = vpop.permute.xlu0 %4046
      %4048 = vrot.lane.b32.xlu0 %v451, 104
      %v4049 = vpop.permute.xlu0 %4048
      %v4050 = vsel %vm472, %v4047, 0
      %v4052 = vsel %vm472, %v4049, 0
      %4054 = vmatprep.subr.mxu0 0.0
      %4055 = vmatpush1.xpose.msra.mxu0 %v4052
      %4056 = vmatprep.subr.mxu0 0.0
      %4057 = vmatpush1.xpose.msra.mxu0 0.0
      %4058 = vmatprep.subr.mxu0 0.0
      %4059 = vmatpush1.xpose.msra.mxu0 0.0
      %4060 = vmatprep.subr.mxu0 0.0
      %4061 = vmatpush1.xpose.msra.mxu0 0.0
      %4062 = vmatprep.subr.mxu0 0.0
      %4063 = vmatpush1.xpose.msra.mxu0 0.0
      %4064 = vmatprep.subr.mxu0 0.0
      %4065 = vmatpush1.xpose.msra.mxu0 0.0
      %4066 = vmatprep.subr.mxu0 0.0
      %4067 = vmatpush1.xpose.msra.mxu0 0.0
      %4068 = vmatprep.subr.mxu0 0.0
      %4069 = vmatpush1.xpose.msra.mxu0 0.0
      %4070 = vmatprep.subr.mxu0 0.0
      %4071 = vmatpush1.xpose.msra.mxu0 0.0
      %4072 = vmatprep.subr.mxu0 0.0
      %4073 = vmatpush1.xpose.msra.mxu0 0.0
      %4074 = vmatprep.subr.mxu0 0.0
      %4075 = vmatpush1.xpose.msra.mxu0 0.0
      %4076 = vmatprep.subr.mxu0 0.0
      %4077 = vmatpush1.xpose.msra.mxu0 0.0
      %4078 = vmatprep.subr.mxu0 0.0
      %4079 = vmatpush1.xpose.msra.mxu0 0.0
      %4080 = vmatprep.subr.mxu0 0.0
      %4081 = vmatpush1.xpose.msra.mxu0 0.0
      %4082 = vmatprep.subr.mxu0 0.0
      %4083 = vmatpush1.xpose.msra.mxu0 0.0
      %4084 = vmatprep.subr.mxu0 0.0
      %4085 = vmatpush1.xpose.msra.mxu0 0.0
      %4086 = vmatprep.subr.mxu0 0.0
      %4087 = vmatpush1.xpose.msra.mxu0 0.0
      %4088 = vmatprep.subr.mxu0 0.0
      %4089 = vmatpush1.xpose.msra.mxu0 0.0
      %4090 = vmatprep.subr.mxu0 0.0
      %4091 = vmatpush1.xpose.msra.mxu0 0.0
      %4092 = vmatprep.subr.mxu0 0.0
      %4093 = vmatpush1.xpose.msra.mxu0 0.0
      %4094 = vmatprep.subr.mxu0 0.0
      %4095 = vmatpush1.xpose.msra.mxu0 0.0
      %4096 = vmatprep.subr.mxu0 0.0
      %4097 = vmatpush1.xpose.msra.mxu0 0.0
      %4098 = vmatprep.subr.mxu0 0.0
      %4099 = vmatpush1.xpose.msra.mxu0 0.0
      %4100 = vmatprep.subr.mxu0 0.0
      %4101 = vmatpush1.xpose.msra.mxu0 0.0
      %4102 = vmatprep.subr.mxu0 0.0
      %4103 = vmatpush1.xpose.msra.mxu0 0.0
      %4104 = vmatprep.subr.mxu0 0.0
      %4105 = vmatpush1.xpose.msra.mxu0 0.0
      %4106 = vmatprep.subr.mxu0 0.0
      %4107 = vmatpush1.xpose.msra.mxu0 0.0
      %4108 = vmatprep.subr.mxu0 0.0
      %4109 = vmatpush1.xpose.msra.mxu0 0.0
      %4110 = vmatprep.subr.mxu0 0.0
      %4111 = vmatpush1.xpose.msra.mxu0 0.0
      %4112 = vmatprep.subr.mxu0 0.0
      %4113 = vmatpush1.xpose.msra.mxu0 0.0
      %4114 = vmatprep.subr.mxu0 0.0
      %4115 = vmatpush1.xpose.msra.mxu0 0.0
      %4116 = vmatprep.subr.mxu0 0.0
      %4117 = vmatpush1.xpose.msra.mxu0 0.0
      %4118 = vmatprep.mubr.f32.mxu0 0.0
      %4119 = vmatmul.mubr.f32.gmra.mrb[0].mxu0 %v4050
      %v4120 = vpop.f32.mrb[0].mxu0
      %v4121 = vadd.f32 0.0, %v4120
      %v4122 = vpop.f32.mrb[0].mxu0
      %4123 = vdwg.mxu0
      %4124 = vrot.lane.b32.xlu0 %v456, 120
      %v4125 = vpop.permute.xlu0 %4124
      %4126 = vrot.lane.b32.xlu0 %v456, 104
      %v4127 = vpop.permute.xlu0 %4126
      %v4128 = vsel %vm472, %v4125, 0
      %v4130 = vsel %vm472, %v4127, 0
      %4132 = vmatprep.subr.mxu0 0.0
      %4133 = vmatpush1.xpose.msra.mxu0 %v4130
      %4134 = vmatprep.subr.mxu0 0.0
      %4135 = vmatpush1.xpose.msra.mxu0 0.0
      %4136 = vmatprep.subr.mxu0 0.0
      %4137 = vmatpush1.xpose.msra.mxu0 0.0
      %4138 = vmatprep.subr.mxu0 0.0
      %4139 = vmatpush1.xpose.msra.mxu0 0.0
      %4140 = vmatprep.subr.mxu0 0.0
      %4141 = vmatpush1.xpose.msra.mxu0 0.0
      %4142 = vmatprep.subr.mxu0 0.0
      %4143 = vmatpush1.xpose.msra.mxu0 0.0
      %4144 = vmatprep.subr.mxu0 0.0
      %4145 = vmatpush1.xpose.msra.mxu0 0.0
      %4146 = vmatprep.subr.mxu0 0.0
      %4147 = vmatpush1.xpose.msra.mxu0 0.0
      %4148 = vmatprep.subr.mxu0 0.0
      %4149 = vmatpush1.xpose.msra.mxu0 0.0
      %4150 = vmatprep.subr.mxu0 0.0
      %4151 = vmatpush1.xpose.msra.mxu0 0.0
      %4152 = vmatprep.subr.mxu0 0.0
      %4153 = vmatpush1.xpose.msra.mxu0 0.0
      %4154 = vmatprep.subr.mxu0 0.0
      %4155 = vmatpush1.xpose.msra.mxu0 0.0
      %4156 = vmatprep.subr.mxu0 0.0
      %4157 = vmatpush1.xpose.msra.mxu0 0.0
      %4158 = vmatprep.subr.mxu0 0.0
      %4159 = vmatpush1.xpose.msra.mxu0 0.0
      %4160 = vmatprep.subr.mxu0 0.0
      %4161 = vmatpush1.xpose.msra.mxu0 0.0
      %4162 = vmatprep.subr.mxu0 0.0
      %4163 = vmatpush1.xpose.msra.mxu0 0.0
      %4164 = vmatprep.subr.mxu0 0.0
      %4165 = vmatpush1.xpose.msra.mxu0 0.0
      %4166 = vmatprep.subr.mxu0 0.0
      %4167 = vmatpush1.xpose.msra.mxu0 0.0
      %4168 = vmatprep.subr.mxu0 0.0
      %4169 = vmatpush1.xpose.msra.mxu0 0.0
      %4170 = vmatprep.subr.mxu0 0.0
      %4171 = vmatpush1.xpose.msra.mxu0 0.0
      %4172 = vmatprep.subr.mxu0 0.0
      %4173 = vmatpush1.xpose.msra.mxu0 0.0
      %4174 = vmatprep.subr.mxu0 0.0
      %4175 = vmatpush1.xpose.msra.mxu0 0.0
      %4176 = vmatprep.subr.mxu0 0.0
      %4177 = vmatpush1.xpose.msra.mxu0 0.0
      %4178 = vmatprep.subr.mxu0 0.0
      %4179 = vmatpush1.xpose.msra.mxu0 0.0
      %4180 = vmatprep.subr.mxu0 0.0
      %4181 = vmatpush1.xpose.msra.mxu0 0.0
      %4182 = vmatprep.subr.mxu0 0.0
      %4183 = vmatpush1.xpose.msra.mxu0 0.0
      %4184 = vmatprep.subr.mxu0 0.0
      %4185 = vmatpush1.xpose.msra.mxu0 0.0
      %4186 = vmatprep.subr.mxu0 0.0
      %4187 = vmatpush1.xpose.msra.mxu0 0.0
      %4188 = vmatprep.subr.mxu0 0.0
      %4189 = vmatpush1.xpose.msra.mxu0 0.0
      %4190 = vmatprep.subr.mxu0 0.0
      %4191 = vmatpush1.xpose.msra.mxu0 0.0
      %4192 = vmatprep.subr.mxu0 0.0
      %4193 = vmatpush1.xpose.msra.mxu0 0.0
      %4194 = vmatprep.subr.mxu0 0.0
      %4195 = vmatpush1.xpose.msra.mxu0 0.0
      %4196 = vmatprep.mubr.f32.mxu0 0.0
      %4197 = vmatmul.mubr.f32.gmra.mrb[0].mxu0 %v4128
      %v4198 = vpop.f32.mrb[0].mxu0
      %v4199 = vadd.f32 0.0, %v4198
      %v4200 = vpop.f32.mrb[0].mxu0
      %4201 = vdwg.mxu0
      %4202 = vrot.lane.b32.xlu0 %v461, 120
      %v4203 = vpop.permute.xlu0 %4202
      %4204 = vrot.lane.b32.xlu0 %v461, 104
      %v4205 = vpop.permute.xlu0 %4204
      %v4206 = vsel %vm472, %v4203, 0
      %v4208 = vsel %vm472, %v4205, 0
      %4210 = vmatprep.subr.mxu0 0.0
      %4211 = vmatpush1.xpose.msra.mxu0 %v4208
      %4212 = vmatprep.subr.mxu0 0.0
      %4213 = vmatpush1.xpose.msra.mxu0 0.0
      %4214 = vmatprep.subr.mxu0 0.0
      %4215 = vmatpush1.xpose.msra.mxu0 0.0
      %4216 = vmatprep.subr.mxu0 0.0
      %4217 = vmatpush1.xpose.msra.mxu0 0.0
      %4218 = vmatprep.subr.mxu0 0.0
      %4219 = vmatpush1.xpose.msra.mxu0 0.0
      %4220 = vmatprep.subr.mxu0 0.0
      %4221 = vmatpush1.xpose.msra.mxu0 0.0
      %4222 = vmatprep.subr.mxu0 0.0
      %4223 = vmatpush1.xpose.msra.mxu0 0.0
      %4224 = vmatprep.subr.mxu0 0.0
      %4225 = vmatpush1.xpose.msra.mxu0 0.0
      %4226 = vmatprep.subr.mxu0 0.0
      %4227 = vmatpush1.xpose.msra.mxu0 0.0
      %4228 = vmatprep.subr.mxu0 0.0
      %4229 = vmatpush1.xpose.msra.mxu0 0.0
      %4230 = vmatprep.subr.mxu0 0.0
      %4231 = vmatpush1.xpose.msra.mxu0 0.0
      %4232 = vmatprep.subr.mxu0 0.0
      %4233 = vmatpush1.xpose.msra.mxu0 0.0
      %4234 = vmatprep.subr.mxu0 0.0
      %4235 = vmatpush1.xpose.msra.mxu0 0.0
      %4236 = vmatprep.subr.mxu0 0.0
      %4237 = vmatpush1.xpose.msra.mxu0 0.0
      %4238 = vmatprep.subr.mxu0 0.0
      %4239 = vmatpush1.xpose.msra.mxu0 0.0
      %4240 = vmatprep.subr.mxu0 0.0
      %4241 = vmatpush1.xpose.msra.mxu0 0.0
      %4242 = vmatprep.subr.mxu0 0.0
      %4243 = vmatpush1.xpose.msra.mxu0 0.0
      %4244 = vmatprep.subr.mxu0 0.0
      %4245 = vmatpush1.xpose.msra.mxu0 0.0
      %4246 = vmatprep.subr.mxu0 0.0
      %4247 = vmatpush1.xpose.msra.mxu0 0.0
      %4248 = vmatprep.subr.mxu0 0.0
      %4249 = vmatpush1.xpose.msra.mxu0 0.0
      %4250 = vmatprep.subr.mxu0 0.0
      %4251 = vmatpush1.xpose.msra.mxu0 0.0
      %4252 = vmatprep.subr.mxu0 0.0
      %4253 = vmatpush1.xpose.msra.mxu0 0.0
      %4254 = vmatprep.subr.mxu0 0.0
      %4255 = vmatpush1.xpose.msra.mxu0 0.0
      %4256 = vmatprep.subr.mxu0 0.0
      %4257 = vmatpush1.xpose.msra.mxu0 0.0
      %4258 = vmatprep.subr.mxu0 0.0
      %4259 = vmatpush1.xpose.msra.mxu0 0.0
      %4260 = vmatprep.subr.mxu0 0.0
      %4261 = vmatpush1.xpose.msra.mxu0 0.0
      %4262 = vmatprep.subr.mxu0 0.0
      %4263 = vmatpush1.xpose.msra.mxu0 0.0
      %4264 = vmatprep.subr.mxu0 0.0
      %4265 = vmatpush1.xpose.msra.mxu0 0.0
      %4266 = vmatprep.subr.mxu0 0.0
      %4267 = vmatpush1.xpose.msra.mxu0 0.0
      %4268 = vmatprep.subr.mxu0 0.0
      %4269 = vmatpush1.xpose.msra.mxu0 0.0
      %4270 = vmatprep.subr.mxu0 0.0
      %4271 = vmatpush1.xpose.msra.mxu0 0.0
      %4272 = vmatprep.subr.mxu0 0.0
      %4273 = vmatpush1.xpose.msra.mxu0 0.0
      %4274 = vmatprep.mubr.f32.mxu0 0.0
      %4275 = vmatmul.mubr.f32.gmra.mrb[0].mxu0 %v4206
      %v4276 = vpop.f32.mrb[0].mxu0
      %v4277 = vadd.f32 0.0, %v4276
      %v4278 = vpop.f32.mrb[0].mxu0
      %4279 = vdwg.mxu0
      %4280 = vrot.lane.b32.xlu0 %v466, 120
      %v4281 = vpop.permute.xlu0 %4280
      %4282 = vrot.lane.b32.xlu0 %v466, 104
      %v4283 = vpop.permute.xlu0 %4282
      %v4284 = vsel %vm472, %v4281, 0
      %v4286 = vsel %vm472, %v4283, 0
      %4288 = vmatprep.subr.mxu0 0.0
      %4289 = vmatpush1.xpose.msra.mxu0 %v4286
      %4290 = vmatprep.subr.mxu0 0.0
      %4291 = vmatpush1.xpose.msra.mxu0 0.0
      %4292 = vmatprep.subr.mxu0 0.0
      %4293 = vmatpush1.xpose.msra.mxu0 0.0
      %4294 = vmatprep.subr.mxu0 0.0
      %4295 = vmatpush1.xpose.msra.mxu0 0.0
      %4296 = vmatprep.subr.mxu0 0.0
      %4297 = vmatpush1.xpose.msra.mxu0 0.0
      %4298 = vmatprep.subr.mxu0 0.0
      %4299 = vmatpush1.xpose.msra.mxu0 0.0
      %4300 = vmatprep.subr.mxu0 0.0
      %4301 = vmatpush1.xpose.msra.mxu0 0.0
      %4302 = vmatprep.subr.mxu0 0.0
      %4303 = vmatpush1.xpose.msra.mxu0 0.0
      %4304 = vmatprep.subr.mxu0 0.0
      %4305 = vmatpush1.xpose.msra.mxu0 0.0
      %4306 = vmatprep.subr.mxu0 0.0
      %4307 = vmatpush1.xpose.msra.mxu0 0.0
      %4308 = vmatprep.subr.mxu0 0.0
      %4309 = vmatpush1.xpose.msra.mxu0 0.0
      %4310 = vmatprep.subr.mxu0 0.0
      %4311 = vmatpush1.xpose.msra.mxu0 0.0
      %4312 = vmatprep.subr.mxu0 0.0
      %4313 = vmatpush1.xpose.msra.mxu0 0.0
      %4314 = vmatprep.subr.mxu0 0.0
      %4315 = vmatpush1.xpose.msra.mxu0 0.0
      %4316 = vmatprep.subr.mxu0 0.0
      %4317 = vmatpush1.xpose.msra.mxu0 0.0
      %4318 = vmatprep.subr.mxu0 0.0
      %4319 = vmatpush1.xpose.msra.mxu0 0.0
      %4320 = vmatprep.subr.mxu0 0.0
      %4321 = vmatpush1.xpose.msra.mxu0 0.0
      %4322 = vmatprep.subr.mxu0 0.0
      %4323 = vmatpush1.xpose.msra.mxu0 0.0
      %4324 = vmatprep.subr.mxu0 0.0
      %4325 = vmatpush1.xpose.msra.mxu0 0.0
      %4326 = vmatprep.subr.mxu0 0.0
      %4327 = vmatpush1.xpose.msra.mxu0 0.0
      %4328 = vmatprep.subr.mxu0 0.0
      %4329 = vmatpush1.xpose.msra.mxu0 0.0
      %4330 = vmatprep.subr.mxu0 0.0
      %4331 = vmatpush1.xpose.msra.mxu0 0.0
      %4332 = vmatprep.subr.mxu0 0.0
      %4333 = vmatpush1.xpose.msra.mxu0 0.0
      %4334 = vmatprep.subr.mxu0 0.0
      %4335 = vmatpush1.xpose.msra.mxu0 0.0
      %4336 = vmatprep.subr.mxu0 0.0
      %4337 = vmatpush1.xpose.msra.mxu0 0.0
      %4338 = vmatprep.subr.mxu0 0.0
      %4339 = vmatpush1.xpose.msra.mxu0 0.0
      %4340 = vmatprep.subr.mxu0 0.0
      %4341 = vmatpush1.xpose.msra.mxu0 0.0
      %4342 = vmatprep.subr.mxu0 0.0
      %4343 = vmatpush1.xpose.msra.mxu0 0.0
      %4344 = vmatprep.subr.mxu0 0.0
      %4345 = vmatpush1.xpose.msra.mxu0 0.0
      %4346 = vmatprep.subr.mxu0 0.0
      %4347 = vmatpush1.xpose.msra.mxu0 0.0
      %4348 = vmatprep.subr.mxu0 0.0
      %4349 = vmatpush1.xpose.msra.mxu0 0.0
      %4350 = vmatprep.subr.mxu0 0.0
      %4351 = vmatpush1.xpose.msra.mxu0 0.0
      %4352 = vmatprep.mubr.f32.mxu0 0.0
      %4353 = vmatmul.mubr.f32.gmra.mrb[0].mxu0 %v4284
      %v4354 = vpop.f32.mrb[0].mxu0
      %v4355 = vadd.f32 0.0, %v4354
      %v4356 = vpop.f32.mrb[0].mxu0
      %4357 = vdwg.mxu0
      %v4358 = vmul.f32 %v3185, 0.35355338
      %v4359 = vmul.f32 %v3263, 0.35355338
      %v4360 = vmul.f32 %v3341, 0.35355338
      %v4361 = vmul.f32 %v3419, 0.35355338
      %v4362 = vmul.f32 %v3497, 0.35355338
      %v4363 = vmul.f32 %v3575, 0.35355338
      %v4364 = vmul.f32 %v3653, 0.35355338
      %v4365 = vmul.f32 %v3731, 0.35355338
      %v4366 = vmul.f32 %v3809, 0.35355338
      %v4367 = vmul.f32 %v3887, 0.35355338
      %v4368 = vmul.f32 %v3965, 0.35355338
      %v4369 = vmul.f32 %v4043, 0.35355338
      %v4370 = vmul.f32 %v4121, 0.35355338
      %v4371 = vmul.f32 %v4199, 0.35355338
      %v4372 = vmul.f32 %v4277, 0.35355338
      %v4373 = vmul.f32 %v4355, 0.35355338
      %v4374 = vsel %vm472, %v4358, -inf
      %4375 = vmax.xlane.f32.xlu0 %v4374
      %v4376 = vpop.xlane.xlu0 %4375
      %v4377 = vsel %vm472, %v4359, -inf
      %4378 = vmax.xlane.f32.xlu0 %v4377
      %v4379 = vpop.xlane.xlu0 %4378
      %v4380 = vsel %vm472, %v4360, -inf
      %4381 = vmax.xlane.f32.xlu0 %v4380
      %v4382 = vpop.xlane.xlu0 %4381
      %v4383 = vsel %vm472, %v4361, -inf
      %4384 = vmax.xlane.f32.xlu0 %v4383
      %v4385 = vpop.xlane.xlu0 %4384
      %v4386 = vsel %vm472, %v4362, -inf
      %4387 = vmax.xlane.f32.xlu0 %v4386
      %v4388 = vpop.xlane.xlu0 %4387
      %v4389 = vsel %vm472, %v4363, -inf
      %4390 = vmax.xlane.f32.xlu0 %v4389
      %v4391 = vpop.xlane.xlu0 %4390
      %v4392 = vsel %vm472, %v4364, -inf
      %4393 = vmax.xlane.f32.xlu0 %v4392
      %v4394 = vpop.xlane.xlu0 %4393
      %v4395 = vsel %vm472, %v4365, -inf
      %4396 = vmax.xlane.f32.xlu0 %v4395
      %v4397 = vpop.xlane.xlu0 %4396
      %v4398 = vsel %vm472, %v4366, -inf
      %4399 = vmax.xlane.f32.xlu0 %v4398
      %v4400 = vpop.xlane.xlu0 %4399
      %v4401 = vsel %vm472, %v4367, -inf
      %4402 = vmax.xlane.f32.xlu0 %v4401
      %v4403 = vpop.xlane.xlu0 %4402
      %v4404 = vsel %vm472, %v4368, -inf
      %4405 = vmax.xlane.f32.xlu0 %v4404
      %v4406 = vpop.xlane.xlu0 %4405
      %v4407 = vsel %vm472, %v4369, -inf
      %4408 = vmax.xlane.f32.xlu0 %v4407
      %v4409 = vpop.xlane.xlu0 %4408
      %v4410 = vsel %vm472, %v4370, -inf
      %4411 = vmax.xlane.f32.xlu0 %v4410
      %v4412 = vpop.xlane.xlu0 %4411
      %v4413 = vsel %vm472, %v4371, -inf
      %4414 = vmax.xlane.f32.xlu0 %v4413
      %v4415 = vpop.xlane.xlu0 %4414
      %v4416 = vsel %vm472, %v4372, -inf
      %4417 = vmax.xlane.f32.xlu0 %v4416
      %v4418 = vpop.xlane.xlu0 %4417
      %v4419 = vsel %vm472, %v4373, -inf
      %4420 = vmax.xlane.f32.xlu0 %v4419
      %v4421 = vpop.xlane.xlu0 %4420
      %v4422 = vsub.f32 %v4358, %v4376
      %v4423 = vsub.f32 %v4359, %v4379
      %v4424 = vsub.f32 %v4360, %v4382
      %v4425 = vsub.f32 %v4361, %v4385
      %v4426 = vsub.f32 %v4362, %v4388
      %v4427 = vsub.f32 %v4363, %v4391
      %v4428 = vsub.f32 %v4364, %v4394
      %v4429 = vsub.f32 %v4365, %v4397
      %v4430 = vsub.f32 %v4366, %v4400
      %v4431 = vsub.f32 %v4367, %v4403
      %v4432 = vsub.f32 %v4368, %v4406
      %v4433 = vsub.f32 %v4369, %v4409
      %v4434 = vsub.f32 %v4370, %v4412
      %v4435 = vsub.f32 %v4371, %v4415
      %v4436 = vsub.f32 %v4372, %v4418
      %v4437 = vsub.f32 %v4373, %v4421
      %v4438 = vmul.f32 %v4422, 1.442695
      %v4439 = vpow.pop %v4438
      %v4440 = vmul.f32 %v4423, 1.442695
      %v4441 = vpow.pop %v4440
      %v4442 = vmul.f32 %v4424, 1.442695
      %v4443 = vpow.pop %v4442
      %v4444 = vmul.f32 %v4425, 1.442695
      %v4445 = vpow.pop %v4444
      %v4446 = vmul.f32 %v4426, 1.442695
      %v4447 = vpow.pop %v4446
      %v4448 = vmul.f32 %v4427, 1.442695
      %v4449 = vpow.pop %v4448
      %v4450 = vmul.f32 %v4428, 1.442695
      %v4451 = vpow.pop %v4450
      %v4452 = vmul.f32 %v4429, 1.442695
      %v4453 = vpow.pop %v4452
      %v4454 = vmul.f32 %v4430, 1.442695
      %v4455 = vpow.pop %v4454
      %v4456 = vmul.f32 %v4431, 1.442695
      %v4457 = vpow.pop %v4456
      %v4458 = vmul.f32 %v4432, 1.442695
      %v4459 = vpow.pop %v4458
      %v4460 = vmul.f32 %v4433, 1.442695
      %v4461 = vpow.pop %v4460
      %v4462 = vmul.f32 %v4434, 1.442695
      %v4463 = vpow.pop %v4462
      %v4464 = vmul.f32 %v4435, 1.442695
      %v4465 = vpow.pop %v4464
      %v4466 = vmul.f32 %v4436, 1.442695
      %v4467 = vpow.pop %v4466
      %v4468 = vmul.f32 %v4437, 1.442695
      %v4469 = vpow.pop %v4468
      %v4470 = vsel %vm472, %v4439, 0.0
      %4471 = vadd.xlane.f32.xlu0 %v4470
      %v4472 = vpop.xlane.xlu0 %4471
      %v4473 = vsel %vm472, %v4441, 0.0
      %4474 = vadd.xlane.f32.xlu0 %v4473
      %v4475 = vpop.xlane.xlu0 %4474
      %v4476 = vsel %vm472, %v4443, 0.0
      %4477 = vadd.xlane.f32.xlu0 %v4476
      %v4478 = vpop.xlane.xlu0 %4477
      %v4479 = vsel %vm472, %v4445, 0.0
      %4480 = vadd.xlane.f32.xlu0 %v4479
      %v4481 = vpop.xlane.xlu0 %4480
      %v4482 = vsel %vm472, %v4447, 0.0
      %4483 = vadd.xlane.f32.xlu0 %v4482
      %v4484 = vpop.xlane.xlu0 %4483
      %v4485 = vsel %vm472, %v4449, 0.0
      %4486 = vadd.xlane.f32.xlu0 %v4485
      %v4487 = vpop.xlane.xlu0 %4486
      %v4488 = vsel %vm472, %v4451, 0.0
      %4489 = vadd.xlane.f32.xlu0 %v4488
      %v4490 = vpop.xlane.xlu0 %4489
      %v4491 = vsel %vm472, %v4453, 0.0
      %4492 = vadd.xlane.f32.xlu0 %v4491
      %v4493 = vpop.xlane.xlu0 %4492
      %v4494 = vsel %vm472, %v4455, 0.0
      %4495 = vadd.xlane.f32.xlu0 %v4494
      %v4496 = vpop.xlane.xlu0 %4495
      %v4497 = vsel %vm472, %v4457, 0.0
      %4498 = vadd.xlane.f32.xlu0 %v4497
      %v4499 = vpop.xlane.xlu0 %4498
      %v4500 = vsel %vm472, %v4459, 0.0
      %4501 = vadd.xlane.f32.xlu0 %v4500
      %v4502 = vpop.xlane.xlu0 %4501
      %v4503 = vsel %vm472, %v4461, 0.0
      %4504 = vadd.xlane.f32.xlu0 %v4503
      %v4505 = vpop.xlane.xlu0 %4504
      %v4506 = vsel %vm472, %v4463, 0.0
      %4507 = vadd.xlane.f32.xlu0 %v4506
      %v4508 = vpop.xlane.xlu0 %4507
      %v4509 = vsel %vm472, %v4465, 0.0
      %4510 = vadd.xlane.f32.xlu0 %v4509
      %v4511 = vpop.xlane.xlu0 %4510
      %v4512 = vsel %vm472, %v4467, 0.0
      %4513 = vadd.xlane.f32.xlu0 %v4512
      %v4514 = vpop.xlane.xlu0 %4513
      %v4515 = vsel %vm472, %v4469, 0.0
      %4516 = vadd.xlane.f32.xlu0 %v4515
      %v4517 = vpop.xlane.xlu0 %4516
      %v4518 = vrcp.pop %v4472
      %v4519 = vrcp.pop %v4475
      %v4520 = vrcp.pop %v4478
      %v4521 = vrcp.pop %v4481
      %v4522 = vrcp.pop %v4484
      %v4523 = vrcp.pop %v4487
      %v4524 = vrcp.pop %v4490
      %v4525 = vrcp.pop %v4493
      %v4526 = vrcp.pop %v4496
      %v4527 = vrcp.pop %v4499
      %v4528 = vrcp.pop %v4502
      %v4529 = vrcp.pop %v4505
      %v4530 = vrcp.pop %v4508
      %v4531 = vrcp.pop %v4511
      %v4532 = vrcp.pop %v4514
      %v4533 = vrcp.pop %v4517
      %v4534 = vmul.f32 %v4439, %v4518
      %v4535 = vmul.f32 %v4441, %v4519
      %v4536 = vmul.f32 %v4443, %v4520
      %v4537 = vmul.f32 %v4445, %v4521
      %v4538 = vmul.f32 %v4447, %v4522
      %v4539 = vmul.f32 %v4449, %v4523
      %v4540 = vmul.f32 %v4451, %v4524
      %v4541 = vmul.f32 %v4453, %v4525
      %v4542 = vmul.f32 %v4455, %v4526
      %v4543 = vmul.f32 %v4457, %v4527
      %v4544 = vmul.f32 %v4459, %v4528
      %v4545 = vmul.f32 %v4461, %v4529
      %v4546 = vmul.f32 %v4463, %v4530
      %v4547 = vmul.f32 %v4465, %v4531
      %v4548 = vmul.f32 %v4467, %v4532
      %v4549 = vmul.f32 %v4469, %v4533
      %4550 = vrot.lane.b32.xlu0 %v391, 88
      %v4551 = vpop.permute.xlu0 %4550
      %v4554 = vsel %vm472, %v4534, 0
      %4556 = vmatprep.subr.mxu0 0.0
      %4557 = vmatpush1.msra.mxu0 %v4551
      %4558 = vmatprep.subr.mxu0 0.0
      %4559 = vmatpush1.msra.mxu0 0.0
      %4560 = vmatprep.subr.mxu0 0.0
      %4561 = vmatpush1.msra.mxu0 0.0
      %4562 = vmatprep.subr.mxu0 0.0
      %4563 = vmatpush1.msra.mxu0 0.0
      %4564 = vmatprep.subr.mxu0 0.0
      %4565 = vmatpush1.msra.mxu0 0.0
      %4566 = vmatprep.subr.mxu0 0.0
      %4567 = vmatpush1.msra.mxu0 0.0
      %4568 = vmatprep.subr.mxu0 0.0
      %4569 = vmatpush1.msra.mxu0 0.0
      %4570 = vmatprep.subr.mxu0 0.0
      %4571 = vmatpush1.msra.mxu0 0.0
      %4572 = vmatprep.subr.mxu0 0.0
      %4573 = vmatpush1.msra.mxu0 0.0
      %4574 = vmatprep.subr.mxu0 0.0
      %4575 = vmatpush1.msra.mxu0 0.0
      %4576 = vmatprep.subr.mxu0 0.0
      %4577 = vmatpush1.msra.mxu0 0.0
      %4578 = vmatprep.subr.mxu0 0.0
      %4579 = vmatpush1.msra.mxu0 0.0
      %4580 = vmatprep.subr.mxu0 0.0
      %4581 = vmatpush1.msra.mxu0 0.0
      %4582 = vmatprep.subr.mxu0 0.0
      %4583 = vmatpush1.msra.mxu0 0.0
      %4584 = vmatprep.subr.mxu0 0.0
      %4585 = vmatpush1.msra.mxu0 0.0
      %4586 = vmatprep.subr.mxu0 0.0
      %4587 = vmatpush1.msra.mxu0 0.0
      %4588 = vmatprep.subr.mxu0 0.0
      %4589 = vmatpush1.msra.mxu0 0.0
      %4590 = vmatprep.subr.mxu0 0.0
      %4591 = vmatpush1.msra.mxu0 0.0
      %4592 = vmatprep.subr.mxu0 0.0
      %4593 = vmatpush1.msra.mxu0 0.0
      %4594 = vmatprep.subr.mxu0 0.0
      %4595 = vmatpush1.msra.mxu0 0.0
      %4596 = vmatprep.subr.mxu0 0.0
      %4597 = vmatpush1.msra.mxu0 0.0
      %4598 = vmatprep.subr.mxu0 0.0
      %4599 = vmatpush1.msra.mxu0 0.0
      %4600 = vmatprep.subr.mxu0 0.0
      %4601 = vmatpush1.msra.mxu0 0.0
      %4602 = vmatprep.subr.mxu0 0.0
      %4603 = vmatpush1.msra.mxu0 0.0
      %4604 = vmatprep.subr.mxu0 0.0
      %4605 = vmatpush1.msra.mxu0 0.0
      %4606 = vmatprep.subr.mxu0 0.0
      %4607 = vmatpush1.msra.mxu0 0.0
      %4608 = vmatprep.subr.mxu0 0.0
      %4609 = vmatpush1.msra.mxu0 0.0
      %4610 = vmatprep.subr.mxu0 0.0
      %4611 = vmatpush1.msra.mxu0 0.0
      %4612 = vmatprep.subr.mxu0 0.0
      %4613 = vmatpush1.msra.mxu0 0.0
      %4614 = vmatprep.subr.mxu0 0.0
      %4615 = vmatpush1.msra.mxu0 0.0
      %4616 = vmatprep.subr.mxu0 0.0
      %4617 = vmatpush1.msra.mxu0 0.0
      %4618 = vmatprep.subr.mxu0 0.0
      %4619 = vmatpush1.msra.mxu0 0.0
      %4620 = vmatprep.mubr.f32.mxu0 0.0
      %4621 = vmatmul.mubr.f32.gmra.mrb[0].mxu0 %v4554
      %v4622 = vpop.f32.mrb[0].mxu0
      %v4623 = vadd.f32 0.0, %v4622
      %v4624 = vpop.f32.mrb[0].mxu0
      %4625 = vdwg.mxu0
      %4626 = vrot.lane.b32.xlu0 %v396, 88
      %v4627 = vpop.permute.xlu0 %4626
      %v4630 = vsel %vm472, %v4535, 0
      %4632 = vmatprep.subr.mxu0 0.0
      %4633 = vmatpush1.msra.mxu0 %v4627
      %4634 = vmatprep.subr.mxu0 0.0
      %4635 = vmatpush1.msra.mxu0 0.0
      %4636 = vmatprep.subr.mxu0 0.0
      %4637 = vmatpush1.msra.mxu0 0.0
      %4638 = vmatprep.subr.mxu0 0.0
      %4639 = vmatpush1.msra.mxu0 0.0
      %4640 = vmatprep.subr.mxu0 0.0
      %4641 = vmatpush1.msra.mxu0 0.0
      %4642 = vmatprep.subr.mxu0 0.0
      %4643 = vmatpush1.msra.mxu0 0.0
      %4644 = vmatprep.subr.mxu0 0.0
      %4645 = vmatpush1.msra.mxu0 0.0
      %4646 = vmatprep.subr.mxu0 0.0
      %4647 = vmatpush1.msra.mxu0 0.0
      %4648 = vmatprep.subr.mxu0 0.0
      %4649 = vmatpush1.msra.mxu0 0.0
      %4650 = vmatprep.subr.mxu0 0.0
      %4651 = vmatpush1.msra.mxu0 0.0
      %4652 = vmatprep.subr.mxu0 0.0
      %4653 = vmatpush1.msra.mxu0 0.0
      %4654 = vmatprep.subr.mxu0 0.0
      %4655 = vmatpush1.msra.mxu0 0.0
      %4656 = vmatprep.subr.mxu0 0.0
      %4657 = vmatpush1.msra.mxu0 0.0
      %4658 = vmatprep.subr.mxu0 0.0
      %4659 = vmatpush1.msra.mxu0 0.0
      %4660 = vmatprep.subr.mxu0 0.0
      %4661 = vmatpush1.msra.mxu0 0.0
      %4662 = vmatprep.subr.mxu0 0.0
      %4663 = vmatpush1.msra.mxu0 0.0
      %4664 = vmatprep.subr.mxu0 0.0
      %4665 = vmatpush1.msra.mxu0 0.0
      %4666 = vmatprep.subr.mxu0 0.0
      %4667 = vmatpush1.msra.mxu0 0.0
      %4668 = vmatprep.subr.mxu0 0.0
      %4669 = vmatpush1.msra.mxu0 0.0
      %4670 = vmatprep.subr.mxu0 0.0
      %4671 = vmatpush1.msra.mxu0 0.0
      %4672 = vmatprep.subr.mxu0 0.0
      %4673 = vmatpush1.msra.mxu0 0.0
      %4674 = vmatprep.subr.mxu0 0.0
      %4675 = vmatpush1.msra.mxu0 0.0
      %4676 = vmatprep.subr.mxu0 0.0
      %4677 = vmatpush1.msra.mxu0 0.0
      %4678 = vmatprep.subr.mxu0 0.0
      %4679 = vmatpush1.msra.mxu0 0.0
      %4680 = vmatprep.subr.mxu0 0.0
      %4681 = vmatpush1.msra.mxu0 0.0
      %4682 = vmatprep.subr.mxu0 0.0
      %4683 = vmatpush1.msra.mxu0 0.0
      %4684 = vmatprep.subr.mxu0 0.0
      %4685 = vmatpush1.msra.mxu0 0.0
      %4686 = vmatprep.subr.mxu0 0.0
      %4687 = vmatpush1.msra.mxu0 0.0
      %4688 = vmatprep.subr.mxu0 0.0
      %4689 = vmatpush1.msra.mxu0 0.0
      %4690 = vmatprep.subr.mxu0 0.0
      %4691 = vmatpush1.msra.mxu0 0.0
      %4692 = vmatprep.subr.mxu0 0.0
      %4693 = vmatpush1.msra.mxu0 0.0
      %4694 = vmatprep.subr.mxu0 0.0
      %4695 = vmatpush1.msra.mxu0 0.0
      %4696 = vmatprep.mubr.f32.mxu0 0.0
      %4697 = vmatmul.mubr.f32.gmra.mrb[0].mxu0 %v4630
      %v4698 = vpop.f32.mrb[0].mxu0
      %v4699 = vadd.f32 0.0, %v4698
      %v4700 = vpop.f32.mrb[0].mxu0
      %4701 = vdwg.mxu0
      %4702 = vrot.lane.b32.xlu0 %v401, 88
      %v4703 = vpop.permute.xlu0 %4702
      %v4706 = vsel %vm472, %v4536, 0
      %4708 = vmatprep.subr.mxu0 0.0
      %4709 = vmatpush1.msra.mxu0 %v4703
      %4710 = vmatprep.subr.mxu0 0.0
      %4711 = vmatpush1.msra.mxu0 0.0
      %4712 = vmatprep.subr.mxu0 0.0
      %4713 = vmatpush1.msra.mxu0 0.0
      %4714 = vmatprep.subr.mxu0 0.0
      %4715 = vmatpush1.msra.mxu0 0.0
      %4716 = vmatprep.subr.mxu0 0.0
      %4717 = vmatpush1.msra.mxu0 0.0
      %4718 = vmatprep.subr.mxu0 0.0
      %4719 = vmatpush1.msra.mxu0 0.0
      %4720 = vmatprep.subr.mxu0 0.0
      %4721 = vmatpush1.msra.mxu0 0.0
      %4722 = vmatprep.subr.mxu0 0.0
      %4723 = vmatpush1.msra.mxu0 0.0
      %4724 = vmatprep.subr.mxu0 0.0
      %4725 = vmatpush1.msra.mxu0 0.0
      %4726 = vmatprep.subr.mxu0 0.0
      %4727 = vmatpush1.msra.mxu0 0.0
      %4728 = vmatprep.subr.mxu0 0.0
      %4729 = vmatpush1.msra.mxu0 0.0
      %4730 = vmatprep.subr.mxu0 0.0
      %4731 = vmatpush1.msra.mxu0 0.0
      %4732 = vmatprep.subr.mxu0 0.0
      %4733 = vmatpush1.msra.mxu0 0.0
      %4734 = vmatprep.subr.mxu0 0.0
      %4735 = vmatpush1.msra.mxu0 0.0
      %4736 = vmatprep.subr.mxu0 0.0
      %4737 = vmatpush1.msra.mxu0 0.0
      %4738 = vmatprep.subr.mxu0 0.0
      %4739 = vmatpush1.msra.mxu0 0.0
      %4740 = vmatprep.subr.mxu0 0.0
      %4741 = vmatpush1.msra.mxu0 0.0
      %4742 = vmatprep.subr.mxu0 0.0
      %4743 = vmatpush1.msra.mxu0 0.0
      %4744 = vmatprep.subr.mxu0 0.0
      %4745 = vmatpush1.msra.mxu0 0.0
      %4746 = vmatprep.subr.mxu0 0.0
      %4747 = vmatpush1.msra.mxu0 0.0
      %4748 = vmatprep.subr.mxu0 0.0
      %4749 = vmatpush1.msra.mxu0 0.0
      %4750 = vmatprep.subr.mxu0 0.0
      %4751 = vmatpush1.msra.mxu0 0.0
      %4752 = vmatprep.subr.mxu0 0.0
      %4753 = vmatpush1.msra.mxu0 0.0
      %4754 = vmatprep.subr.mxu0 0.0
      %4755 = vmatpush1.msra.mxu0 0.0
      %4756 = vmatprep.subr.mxu0 0.0
      %4757 = vmatpush1.msra.mxu0 0.0
      %4758 = vmatprep.subr.mxu0 0.0
      %4759 = vmatpush1.msra.mxu0 0.0
      %4760 = vmatprep.subr.mxu0 0.0
      %4761 = vmatpush1.msra.mxu0 0.0
      %4762 = vmatprep.subr.mxu0 0.0
      %4763 = vmatpush1.msra.mxu0 0.0
      %4764 = vmatprep.subr.mxu0 0.0
      %4765 = vmatpush1.msra.mxu0 0.0
      %4766 = vmatprep.subr.mxu0 0.0
      %4767 = vmatpush1.msra.mxu0 0.0
      %4768 = vmatprep.subr.mxu0 0.0
      %4769 = vmatpush1.msra.mxu0 0.0
      %4770 = vmatprep.subr.mxu0 0.0
      %4771 = vmatpush1.msra.mxu0 0.0
      %4772 = vmatprep.mubr.f32.mxu0 0.0
      %4773 = vmatmul.mubr.f32.gmra.mrb[0].mxu0 %v4706
      %v4774 = vpop.f32.mrb[0].mxu0
      %v4775 = vadd.f32 0.0, %v4774
      %v4776 = vpop.f32.mrb[0].mxu0
      %4777 = vdwg.mxu0
      %4778 = vrot.lane.b32.xlu0 %v406, 88
      %v4779 = vpop.permute.xlu0 %4778
      %v4782 = vsel %vm472, %v4537, 0
      %4784 = vmatprep.subr.mxu0 0.0
      %4785 = vmatpush1.msra.mxu0 %v4779
      %4786 = vmatprep.subr.mxu0 0.0
      %4787 = vmatpush1.msra.mxu0 0.0
      %4788 = vmatprep.subr.mxu0 0.0
      %4789 = vmatpush1.msra.mxu0 0.0
      %4790 = vmatprep.subr.mxu0 0.0
      %4791 = vmatpush1.msra.mxu0 0.0
      %4792 = vmatprep.subr.mxu0 0.0
      %4793 = vmatpush1.msra.mxu0 0.0
      %4794 = vmatprep.subr.mxu0 0.0
      %4795 = vmatpush1.msra.mxu0 0.0
      %4796 = vmatprep.subr.mxu0 0.0
      %4797 = vmatpush1.msra.mxu0 0.0
      %4798 = vmatprep.subr.mxu0 0.0
      %4799 = vmatpush1.msra.mxu0 0.0
      %4800 = vmatprep.subr.mxu0 0.0
      %4801 = vmatpush1.msra.mxu0 0.0
      %4802 = vmatprep.subr.mxu0 0.0
      %4803 = vmatpush1.msra.mxu0 0.0
      %4804 = vmatprep.subr.mxu0 0.0
      %4805 = vmatpush1.msra.mxu0 0.0
      %4806 = vmatprep.subr.mxu0 0.0
      %4807 = vmatpush1.msra.mxu0 0.0
      %4808 = vmatprep.subr.mxu0 0.0
      %4809 = vmatpush1.msra.mxu0 0.0
      %4810 = vmatprep.subr.mxu0 0.0
      %4811 = vmatpush1.msra.mxu0 0.0
      %4812 = vmatprep.subr.mxu0 0.0
      %4813 = vmatpush1.msra.mxu0 0.0
      %4814 = vmatprep.subr.mxu0 0.0
      %4815 = vmatpush1.msra.mxu0 0.0
      %4816 = vmatprep.subr.mxu0 0.0
      %4817 = vmatpush1.msra.mxu0 0.0
      %4818 = vmatprep.subr.mxu0 0.0
      %4819 = vmatpush1.msra.mxu0 0.0
      %4820 = vmatprep.subr.mxu0 0.0
      %4821 = vmatpush1.msra.mxu0 0.0
      %4822 = vmatprep.subr.mxu0 0.0
      %4823 = vmatpush1.msra.mxu0 0.0
      %4824 = vmatprep.subr.mxu0 0.0
      %4825 = vmatpush1.msra.mxu0 0.0
      %4826 = vmatprep.subr.mxu0 0.0
      %4827 = vmatpush1.msra.mxu0 0.0
      %4828 = vmatprep.subr.mxu0 0.0
      %4829 = vmatpush1.msra.mxu0 0.0
      %4830 = vmatprep.subr.mxu0 0.0
      %4831 = vmatpush1.msra.mxu0 0.0
      %4832 = vmatprep.subr.mxu0 0.0
      %4833 = vmatpush1.msra.mxu0 0.0
      %4834 = vmatprep.subr.mxu0 0.0
      %4835 = vmatpush1.msra.mxu0 0.0
      %4836 = vmatprep.subr.mxu0 0.0
      %4837 = vmatpush1.msra.mxu0 0.0
      %4838 = vmatprep.subr.mxu0 0.0
      %4839 = vmatpush1.msra.mxu0 0.0
      %4840 = vmatprep.subr.mxu0 0.0
      %4841 = vmatpush1.msra.mxu0 0.0
      %4842 = vmatprep.subr.mxu0 0.0
      %4843 = vmatpush1.msra.mxu0 0.0
      %4844 = vmatprep.subr.mxu0 0.0
      %4845 = vmatpush1.msra.mxu0 0.0
      %4846 = vmatprep.subr.mxu0 0.0
      %4847 = vmatpush1.msra.mxu0 0.0
      %4848 = vmatprep.mubr.f32.mxu0 0.0
      %4849 = vmatmul.mubr.f32.gmra.mrb[0].mxu0 %v4782
      %v4850 = vpop.f32.mrb[0].mxu0
      %v4851 = vadd.f32 0.0, %v4850
      %v4852 = vpop.f32.mrb[0].mxu0
      %4853 = vdwg.mxu0
      %4854 = vrot.lane.b32.xlu0 %v411, 88
      %v4855 = vpop.permute.xlu0 %4854
      %v4858 = vsel %vm472, %v4538, 0
      %4860 = vmatprep.subr.mxu0 0.0
      %4861 = vmatpush1.msra.mxu0 %v4855
      %4862 = vmatprep.subr.mxu0 0.0
      %4863 = vmatpush1.msra.mxu0 0.0
      %4864 = vmatprep.subr.mxu0 0.0
      %4865 = vmatpush1.msra.mxu0 0.0
      %4866 = vmatprep.subr.mxu0 0.0
      %4867 = vmatpush1.msra.mxu0 0.0
      %4868 = vmatprep.subr.mxu0 0.0
      %4869 = vmatpush1.msra.mxu0 0.0
      %4870 = vmatprep.subr.mxu0 0.0
      %4871 = vmatpush1.msra.mxu0 0.0
      %4872 = vmatprep.subr.mxu0 0.0
      %4873 = vmatpush1.msra.mxu0 0.0
      %4874 = vmatprep.subr.mxu0 0.0
      %4875 = vmatpush1.msra.mxu0 0.0
      %4876 = vmatprep.subr.mxu0 0.0
      %4877 = vmatpush1.msra.mxu0 0.0
      %4878 = vmatprep.subr.mxu0 0.0
      %4879 = vmatpush1.msra.mxu0 0.0
      %4880 = vmatprep.subr.mxu0 0.0
      %4881 = vmatpush1.msra.mxu0 0.0
      %4882 = vmatprep.subr.mxu0 0.0
      %4883 = vmatpush1.msra.mxu0 0.0
      %4884 = vmatprep.subr.mxu0 0.0
      %4885 = vmatpush1.msra.mxu0 0.0
      %4886 = vmatprep.subr.mxu0 0.0
      %4887 = vmatpush1.msra.mxu0 0.0
      %4888 = vmatprep.subr.mxu0 0.0
      %4889 = vmatpush1.msra.mxu0 0.0
      %4890 = vmatprep.subr.mxu0 0.0
      %4891 = vmatpush1.msra.mxu0 0.0
      %4892 = vmatprep.subr.mxu0 0.0
      %4893 = vmatpush1.msra.mxu0 0.0
      %4894 = vmatprep.subr.mxu0 0.0
      %4895 = vmatpush1.msra.mxu0 0.0
      %4896 = vmatprep.subr.mxu0 0.0
      %4897 = vmatpush1.msra.mxu0 0.0
      %4898 = vmatprep.subr.mxu0 0.0
      %4899 = vmatpush1.msra.mxu0 0.0
      %4900 = vmatprep.subr.mxu0 0.0
      %4901 = vmatpush1.msra.mxu0 0.0
      %4902 = vmatprep.subr.mxu0 0.0
      %4903 = vmatpush1.msra.mxu0 0.0
      %4904 = vmatprep.subr.mxu0 0.0
      %4905 = vmatpush1.msra.mxu0 0.0
      %4906 = vmatprep.subr.mxu0 0.0
      %4907 = vmatpush1.msra.mxu0 0.0
      %4908 = vmatprep.subr.mxu0 0.0
      %4909 = vmatpush1.msra.mxu0 0.0
      %4910 = vmatprep.subr.mxu0 0.0
      %4911 = vmatpush1.msra.mxu0 0.0
      %4912 = vmatprep.subr.mxu0 0.0
      %4913 = vmatpush1.msra.mxu0 0.0
      %4914 = vmatprep.subr.mxu0 0.0
      %4915 = vmatpush1.msra.mxu0 0.0
      %4916 = vmatprep.subr.mxu0 0.0
      %4917 = vmatpush1.msra.mxu0 0.0
      %4918 = vmatprep.subr.mxu0 0.0
      %4919 = vmatpush1.msra.mxu0 0.0
      %4920 = vmatprep.subr.mxu0 0.0
      %4921 = vmatpush1.msra.mxu0 0.0
      %4922 = vmatprep.subr.mxu0 0.0
      %4923 = vmatpush1.msra.mxu0 0.0
      %4924 = vmatprep.mubr.f32.mxu0 0.0
      %4925 = vmatmul.mubr.f32.gmra.mrb[0].mxu0 %v4858
      %v4926 = vpop.f32.mrb[0].mxu0
      %v4927 = vadd.f32 0.0, %v4926
      %v4928 = vpop.f32.mrb[0].mxu0
      %4929 = vdwg.mxu0
      %4930 = vrot.lane.b32.xlu0 %v416, 88
      %v4931 = vpop.permute.xlu0 %4930
      %v4934 = vsel %vm472, %v4539, 0
      %4936 = vmatprep.subr.mxu0 0.0
      %4937 = vmatpush1.msra.mxu0 %v4931
      %4938 = vmatprep.subr.mxu0 0.0
      %4939 = vmatpush1.msra.mxu0 0.0
      %4940 = vmatprep.subr.mxu0 0.0
      %4941 = vmatpush1.msra.mxu0 0.0
      %4942 = vmatprep.subr.mxu0 0.0
      %4943 = vmatpush1.msra.mxu0 0.0
      %4944 = vmatprep.subr.mxu0 0.0
      %4945 = vmatpush1.msra.mxu0 0.0
      %4946 = vmatprep.subr.mxu0 0.0
      %4947 = vmatpush1.msra.mxu0 0.0
      %4948 = vmatprep.subr.mxu0 0.0
      %4949 = vmatpush1.msra.mxu0 0.0
      %4950 = vmatprep.subr.mxu0 0.0
      %4951 = vmatpush1.msra.mxu0 0.0
      %4952 = vmatprep.subr.mxu0 0.0
      %4953 = vmatpush1.msra.mxu0 0.0
      %4954 = vmatprep.subr.mxu0 0.0
      %4955 = vmatpush1.msra.mxu0 0.0
      %4956 = vmatprep.subr.mxu0 0.0
      %4957 = vmatpush1.msra.mxu0 0.0
      %4958 = vmatprep.subr.mxu0 0.0
      %4959 = vmatpush1.msra.mxu0 0.0
      %4960 = vmatprep.subr.mxu0 0.0
      %4961 = vmatpush1.msra.mxu0 0.0
      %4962 = vmatprep.subr.mxu0 0.0
      %4963 = vmatpush1.msra.mxu0 0.0
      %4964 = vmatprep.subr.mxu0 0.0
      %4965 = vmatpush1.msra.mxu0 0.0
      %4966 = vmatprep.subr.mxu0 0.0
      %4967 = vmatpush1.msra.mxu0 0.0
      %4968 = vmatprep.subr.mxu0 0.0
      %4969 = vmatpush1.msra.mxu0 0.0
      %4970 = vmatprep.subr.mxu0 0.0
      %4971 = vmatpush1.msra.mxu0 0.0
      %4972 = vmatprep.subr.mxu0 0.0
      %4973 = vmatpush1.msra.mxu0 0.0
      %4974 = vmatprep.subr.mxu0 0.0
      %4975 = vmatpush1.msra.mxu0 0.0
      %4976 = vmatprep.subr.mxu0 0.0
      %4977 = vmatpush1.msra.mxu0 0.0
      %4978 = vmatprep.subr.mxu0 0.0
      %4979 = vmatpush1.msra.mxu0 0.0
      %4980 = vmatprep.subr.mxu0 0.0
      %4981 = vmatpush1.msra.mxu0 0.0
      %4982 = vmatprep.subr.mxu0 0.0
      %4983 = vmatpush1.msra.mxu0 0.0
      %4984 = vmatprep.subr.mxu0 0.0
      %4985 = vmatpush1.msra.mxu0 0.0
      %4986 = vmatprep.subr.mxu0 0.0
      %4987 = vmatpush1.msra.mxu0 0.0
      %4988 = vmatprep.subr.mxu0 0.0
      %4989 = vmatpush1.msra.mxu0 0.0
      %4990 = vmatprep.subr.mxu0 0.0
      %4991 = vmatpush1.msra.mxu0 0.0
      %4992 = vmatprep.subr.mxu0 0.0
      %4993 = vmatpush1.msra.mxu0 0.0
      %4994 = vmatprep.subr.mxu0 0.0
      %4995 = vmatpush1.msra.mxu0 0.0
      %4996 = vmatprep.subr.mxu0 0.0
      %4997 = vmatpush1.msra.mxu0 0.0
      %4998 = vmatprep.subr.mxu0 0.0
      %4999 = vmatpush1.msra.mxu0 0.0
      %5000 = vmatprep.mubr.f32.mxu0 0.0
      %5001 = vmatmul.mubr.f32.gmra.mrb[0].mxu0 %v4934
      %v5002 = vpop.f32.mrb[0].mxu0
      %v5003 = vadd.f32 0.0, %v5002
      %v5004 = vpop.f32.mrb[0].mxu0
      %5005 = vdwg.mxu0
      %5006 = vrot.lane.b32.xlu0 %v421, 88
      %v5007 = vpop.permute.xlu0 %5006
      %v5010 = vsel %vm472, %v4540, 0
      %5012 = vmatprep.subr.mxu0 0.0
      %5013 = vmatpush1.msra.mxu0 %v5007
      %5014 = vmatprep.subr.mxu0 0.0
      %5015 = vmatpush1.msra.mxu0 0.0
      %5016 = vmatprep.subr.mxu0 0.0
      %5017 = vmatpush1.msra.mxu0 0.0
      %5018 = vmatprep.subr.mxu0 0.0
      %5019 = vmatpush1.msra.mxu0 0.0
      %5020 = vmatprep.subr.mxu0 0.0
      %5021 = vmatpush1.msra.mxu0 0.0
      %5022 = vmatprep.subr.mxu0 0.0
      %5023 = vmatpush1.msra.mxu0 0.0
      %5024 = vmatprep.subr.mxu0 0.0
      %5025 = vmatpush1.msra.mxu0 0.0
      %5026 = vmatprep.subr.mxu0 0.0
      %5027 = vmatpush1.msra.mxu0 0.0
      %5028 = vmatprep.subr.mxu0 0.0
      %5029 = vmatpush1.msra.mxu0 0.0
      %5030 = vmatprep.subr.mxu0 0.0
      %5031 = vmatpush1.msra.mxu0 0.0
      %5032 = vmatprep.subr.mxu0 0.0
      %5033 = vmatpush1.msra.mxu0 0.0
      %5034 = vmatprep.subr.mxu0 0.0
      %5035 = vmatpush1.msra.mxu0 0.0
      %5036 = vmatprep.subr.mxu0 0.0
      %5037 = vmatpush1.msra.mxu0 0.0
      %5038 = vmatprep.subr.mxu0 0.0
      %5039 = vmatpush1.msra.mxu0 0.0
      %5040 = vmatprep.subr.mxu0 0.0
      %5041 = vmatpush1.msra.mxu0 0.0
      %5042 = vmatprep.subr.mxu0 0.0
      %5043 = vmatpush1.msra.mxu0 0.0
      %5044 = vmatprep.subr.mxu0 0.0
      %5045 = vmatpush1.msra.mxu0 0.0
      %5046 = vmatprep.subr.mxu0 0.0
      %5047 = vmatpush1.msra.mxu0 0.0
      %5048 = vmatprep.subr.mxu0 0.0
      %5049 = vmatpush1.msra.mxu0 0.0
      %5050 = vmatprep.subr.mxu0 0.0
      %5051 = vmatpush1.msra.mxu0 0.0
      %5052 = vmatprep.subr.mxu0 0.0
      %5053 = vmatpush1.msra.mxu0 0.0
      %5054 = vmatprep.subr.mxu0 0.0
      %5055 = vmatpush1.msra.mxu0 0.0
      %5056 = vmatprep.subr.mxu0 0.0
      %5057 = vmatpush1.msra.mxu0 0.0
      %5058 = vmatprep.subr.mxu0 0.0
      %5059 = vmatpush1.msra.mxu0 0.0
      %5060 = vmatprep.subr.mxu0 0.0
      %5061 = vmatpush1.msra.mxu0 0.0
      %5062 = vmatprep.subr.mxu0 0.0
      %5063 = vmatpush1.msra.mxu0 0.0
      %5064 = vmatprep.subr.mxu0 0.0
      %5065 = vmatpush1.msra.mxu0 0.0
      %5066 = vmatprep.subr.mxu0 0.0
      %5067 = vmatpush1.msra.mxu0 0.0
      %5068 = vmatprep.subr.mxu0 0.0
      %5069 = vmatpush1.msra.mxu0 0.0
      %5070 = vmatprep.subr.mxu0 0.0
      %5071 = vmatpush1.msra.mxu0 0.0
      %5072 = vmatprep.subr.mxu0 0.0
      %5073 = vmatpush1.msra.mxu0 0.0
      %5074 = vmatprep.subr.mxu0 0.0
      %5075 = vmatpush1.msra.mxu0 0.0
      %5076 = vmatprep.mubr.f32.mxu0 0.0
      %5077 = vmatmul.mubr.f32.gmra.mrb[0].mxu0 %v5010
      %v5078 = vpop.f32.mrb[0].mxu0
      %v5079 = vadd.f32 0.0, %v5078
      %v5080 = vpop.f32.mrb[0].mxu0
      %5081 = vdwg.mxu0
      %5082 = vrot.lane.b32.xlu0 %v426, 88
      %v5083 = vpop.permute.xlu0 %5082
      %v5086 = vsel %vm472, %v4541, 0
      %5088 = vmatprep.subr.mxu0 0.0
      %5089 = vmatpush1.msra.mxu0 %v5083
      %5090 = vmatprep.subr.mxu0 0.0
      %5091 = vmatpush1.msra.mxu0 0.0
      %5092 = vmatprep.subr.mxu0 0.0
      %5093 = vmatpush1.msra.mxu0 0.0
      %5094 = vmatprep.subr.mxu0 0.0
      %5095 = vmatpush1.msra.mxu0 0.0
      %5096 = vmatprep.subr.mxu0 0.0
      %5097 = vmatpush1.msra.mxu0 0.0
      %5098 = vmatprep.subr.mxu0 0.0
      %5099 = vmatpush1.msra.mxu0 0.0
      %5100 = vmatprep.subr.mxu0 0.0
      %5101 = vmatpush1.msra.mxu0 0.0
      %5102 = vmatprep.subr.mxu0 0.0
      %5103 = vmatpush1.msra.mxu0 0.0
      %5104 = vmatprep.subr.mxu0 0.0
      %5105 = vmatpush1.msra.mxu0 0.0
      %5106 = vmatprep.subr.mxu0 0.0
      %5107 = vmatpush1.msra.mxu0 0.0
      %5108 = vmatprep.subr.mxu0 0.0
      %5109 = vmatpush1.msra.mxu0 0.0
      %5110 = vmatprep.subr.mxu0 0.0
      %5111 = vmatpush1.msra.mxu0 0.0
      %5112 = vmatprep.subr.mxu0 0.0
      %5113 = vmatpush1.msra.mxu0 0.0
      %5114 = vmatprep.subr.mxu0 0.0
      %5115 = vmatpush1.msra.mxu0 0.0
      %5116 = vmatprep.subr.mxu0 0.0
      %5117 = vmatpush1.msra.mxu0 0.0
      %5118 = vmatprep.subr.mxu0 0.0
      %5119 = vmatpush1.msra.mxu0 0.0
      %5120 = vmatprep.subr.mxu0 0.0
      %5121 = vmatpush1.msra.mxu0 0.0
      %5122 = vmatprep.subr.mxu0 0.0
      %5123 = vmatpush1.msra.mxu0 0.0
      %5124 = vmatprep.subr.mxu0 0.0
      %5125 = vmatpush1.msra.mxu0 0.0
      %5126 = vmatprep.subr.mxu0 0.0
      %5127 = vmatpush1.msra.mxu0 0.0
      %5128 = vmatprep.subr.mxu0 0.0
      %5129 = vmatpush1.msra.mxu0 0.0
      %5130 = vmatprep.subr.mxu0 0.0
      %5131 = vmatpush1.msra.mxu0 0.0
      %5132 = vmatprep.subr.mxu0 0.0
      %5133 = vmatpush1.msra.mxu0 0.0
      %5134 = vmatprep.subr.mxu0 0.0
      %5135 = vmatpush1.msra.mxu0 0.0
      %5136 = vmatprep.subr.mxu0 0.0
      %5137 = vmatpush1.msra.mxu0 0.0
      %5138 = vmatprep.subr.mxu0 0.0
      %5139 = vmatpush1.msra.mxu0 0.0
      %5140 = vmatprep.subr.mxu0 0.0
      %5141 = vmatpush1.msra.mxu0 0.0
      %5142 = vmatprep.subr.mxu0 0.0
      %5143 = vmatpush1.msra.mxu0 0.0
      %5144 = vmatprep.subr.mxu0 0.0
      %5145 = vmatpush1.msra.mxu0 0.0
      %5146 = vmatprep.subr.mxu0 0.0
      %5147 = vmatpush1.msra.mxu0 0.0
      %5148 = vmatprep.subr.mxu0 0.0
      %5149 = vmatpush1.msra.mxu0 0.0
      %5150 = vmatprep.subr.mxu0 0.0
      %5151 = vmatpush1.msra.mxu0 0.0
      %5152 = vmatprep.mubr.f32.mxu0 0.0
      %5153 = vmatmul.mubr.f32.gmra.mrb[0].mxu0 %v5086
      %v5154 = vpop.f32.mrb[0].mxu0
      %v5155 = vadd.f32 0.0, %v5154
      %v5156 = vpop.f32.mrb[0].mxu0
      %5157 = vdwg.mxu0
      %5158 = vrot.lane.b32.xlu0 %v431, 88
      %v5159 = vpop.permute.xlu0 %5158
      %v5162 = vsel %vm472, %v4542, 0
      %5164 = vmatprep.subr.mxu0 0.0
      %5165 = vmatpush1.msra.mxu0 %v5159
      %5166 = vmatprep.subr.mxu0 0.0
      %5167 = vmatpush1.msra.mxu0 0.0
      %5168 = vmatprep.subr.mxu0 0.0
      %5169 = vmatpush1.msra.mxu0 0.0
      %5170 = vmatprep.subr.mxu0 0.0
      %5171 = vmatpush1.msra.mxu0 0.0
      %5172 = vmatprep.subr.mxu0 0.0
      %5173 = vmatpush1.msra.mxu0 0.0
      %5174 = vmatprep.subr.mxu0 0.0
      %5175 = vmatpush1.msra.mxu0 0.0
      %5176 = vmatprep.subr.mxu0 0.0
      %5177 = vmatpush1.msra.mxu0 0.0
      %5178 = vmatprep.subr.mxu0 0.0
      %5179 = vmatpush1.msra.mxu0 0.0
      %5180 = vmatprep.subr.mxu0 0.0
      %5181 = vmatpush1.msra.mxu0 0.0
      %5182 = vmatprep.subr.mxu0 0.0
      %5183 = vmatpush1.msra.mxu0 0.0
      %5184 = vmatprep.subr.mxu0 0.0
      %5185 = vmatpush1.msra.mxu0 0.0
      %5186 = vmatprep.subr.mxu0 0.0
      %5187 = vmatpush1.msra.mxu0 0.0
      %5188 = vmatprep.subr.mxu0 0.0
      %5189 = vmatpush1.msra.mxu0 0.0
      %5190 = vmatprep.subr.mxu0 0.0
      %5191 = vmatpush1.msra.mxu0 0.0
      %5192 = vmatprep.subr.mxu0 0.0
      %5193 = vmatpush1.msra.mxu0 0.0
      %5194 = vmatprep.subr.mxu0 0.0
      %5195 = vmatpush1.msra.mxu0 0.0
      %5196 = vmatprep.subr.mxu0 0.0
      %5197 = vmatpush1.msra.mxu0 0.0
      %5198 = vmatprep.subr.mxu0 0.0
      %5199 = vmatpush1.msra.mxu0 0.0
      %5200 = vmatprep.subr.mxu0 0.0
      %5201 = vmatpush1.msra.mxu0 0.0
      %5202 = vmatprep.subr.mxu0 0.0
      %5203 = vmatpush1.msra.mxu0 0.0
      %5204 = vmatprep.subr.mxu0 0.0
      %5205 = vmatpush1.msra.mxu0 0.0
      %5206 = vmatprep.subr.mxu0 0.0
      %5207 = vmatpush1.msra.mxu0 0.0
      %5208 = vmatprep.subr.mxu0 0.0
      %5209 = vmatpush1.msra.mxu0 0.0
      %5210 = vmatprep.subr.mxu0 0.0
      %5211 = vmatpush1.msra.mxu0 0.0
      %5212 = vmatprep.subr.mxu0 0.0
      %5213 = vmatpush1.msra.mxu0 0.0
      %5214 = vmatprep.subr.mxu0 0.0
      %5215 = vmatpush1.msra.mxu0 0.0
      %5216 = vmatprep.subr.mxu0 0.0
      %5217 = vmatpush1.msra.mxu0 0.0
      %5218 = vmatprep.subr.mxu0 0.0
      %5219 = vmatpush1.msra.mxu0 0.0
      %5220 = vmatprep.subr.mxu0 0.0
      %5221 = vmatpush1.msra.mxu0 0.0
      %5222 = vmatprep.subr.mxu0 0.0
      %5223 = vmatpush1.msra.mxu0 0.0
      %5224 = vmatprep.subr.mxu0 0.0
      %5225 = vmatpush1.msra.mxu0 0.0
      %5226 = vmatprep.subr.mxu0 0.0
      %5227 = vmatpush1.msra.mxu0 0.0
      %5228 = vmatprep.mubr.f32.mxu0 0.0
      %5229 = vmatmul.mubr.f32.gmra.mrb[0].mxu0 %v5162
      %v5230 = vpop.f32.mrb[0].mxu0
      %v5231 = vadd.f32 0.0, %v5230
      %v5232 = vpop.f32.mrb[0].mxu0
      %5233 = vdwg.mxu0
      %5234 = vrot.lane.b32.xlu0 %v436, 88
      %v5235 = vpop.permute.xlu0 %5234
      %v5238 = vsel %vm472, %v4543, 0
      %5240 = vmatprep.subr.mxu0 0.0
      %5241 = vmatpush1.msra.mxu0 %v5235
      %5242 = vmatprep.subr.mxu0 0.0
      %5243 = vmatpush1.msra.mxu0 0.0
      %5244 = vmatprep.subr.mxu0 0.0
      %5245 = vmatpush1.msra.mxu0 0.0
      %5246 = vmatprep.subr.mxu0 0.0
      %5247 = vmatpush1.msra.mxu0 0.0
      %5248 = vmatprep.subr.mxu0 0.0
      %5249 = vmatpush1.msra.mxu0 0.0
      %5250 = vmatprep.subr.mxu0 0.0
      %5251 = vmatpush1.msra.mxu0 0.0
      %5252 = vmatprep.subr.mxu0 0.0
      %5253 = vmatpush1.msra.mxu0 0.0
      %5254 = vmatprep.subr.mxu0 0.0
      %5255 = vmatpush1.msra.mxu0 0.0
      %5256 = vmatprep.subr.mxu0 0.0
      %5257 = vmatpush1.msra.mxu0 0.0
      %5258 = vmatprep.subr.mxu0 0.0
      %5259 = vmatpush1.msra.mxu0 0.0
      %5260 = vmatprep.subr.mxu0 0.0
      %5261 = vmatpush1.msra.mxu0 0.0
      %5262 = vmatprep.subr.mxu0 0.0
      %5263 = vmatpush1.msra.mxu0 0.0
      %5264 = vmatprep.subr.mxu0 0.0
      %5265 = vmatpush1.msra.mxu0 0.0
      %5266 = vmatprep.subr.mxu0 0.0
      %5267 = vmatpush1.msra.mxu0 0.0
      %5268 = vmatprep.subr.mxu0 0.0
      %5269 = vmatpush1.msra.mxu0 0.0
      %5270 = vmatprep.subr.mxu0 0.0
      %5271 = vmatpush1.msra.mxu0 0.0
      %5272 = vmatprep.subr.mxu0 0.0
      %5273 = vmatpush1.msra.mxu0 0.0
      %5274 = vmatprep.subr.mxu0 0.0
      %5275 = vmatpush1.msra.mxu0 0.0
      %5276 = vmatprep.subr.mxu0 0.0
      %5277 = vmatpush1.msra.mxu0 0.0
      %5278 = vmatprep.subr.mxu0 0.0
      %5279 = vmatpush1.msra.mxu0 0.0
      %5280 = vmatprep.subr.mxu0 0.0
      %5281 = vmatpush1.msra.mxu0 0.0
      %5282 = vmatprep.subr.mxu0 0.0
      %5283 = vmatpush1.msra.mxu0 0.0
      %5284 = vmatprep.subr.mxu0 0.0
      %5285 = vmatpush1.msra.mxu0 0.0
      %5286 = vmatprep.subr.mxu0 0.0
      %5287 = vmatpush1.msra.mxu0 0.0
      %5288 = vmatprep.subr.mxu0 0.0
      %5289 = vmatpush1.msra.mxu0 0.0
      %5290 = vmatprep.subr.mxu0 0.0
      %5291 = vmatpush1.msra.mxu0 0.0
      %5292 = vmatprep.subr.mxu0 0.0
      %5293 = vmatpush1.msra.mxu0 0.0
      %5294 = vmatprep.subr.mxu0 0.0
      %5295 = vmatpush1.msra.mxu0 0.0
      %5296 = vmatprep.subr.mxu0 0.0
      %5297 = vmatpush1.msra.mxu0 0.0
      %5298 = vmatprep.subr.mxu0 0.0
      %5299 = vmatpush1.msra.mxu0 0.0
      %5300 = vmatprep.subr.mxu0 0.0
      %5301 = vmatpush1.msra.mxu0 0.0
      %5302 = vmatprep.subr.mxu0 0.0
      %5303 = vmatpush1.msra.mxu0 0.0
      %5304 = vmatprep.mubr.f32.mxu0 0.0
      %5305 = vmatmul.mubr.f32.gmra.mrb[0].mxu0 %v5238
      %v5306 = vpop.f32.mrb[0].mxu0
      %v5307 = vadd.f32 0.0, %v5306
      %v5308 = vpop.f32.mrb[0].mxu0
      %5309 = vdwg.mxu0
      %5310 = vrot.lane.b32.xlu0 %v441, 88
      %v5311 = vpop.permute.xlu0 %5310
      %v5314 = vsel %vm472, %v4544, 0
      %5316 = vmatprep.subr.mxu0 0.0
      %5317 = vmatpush1.msra.mxu0 %v5311
      %5318 = vmatprep.subr.mxu0 0.0
      %5319 = vmatpush1.msra.mxu0 0.0
      %5320 = vmatprep.subr.mxu0 0.0
      %5321 = vmatpush1.msra.mxu0 0.0
      %5322 = vmatprep.subr.mxu0 0.0
      %5323 = vmatpush1.msra.mxu0 0.0
      %5324 = vmatprep.subr.mxu0 0.0
      %5325 = vmatpush1.msra.mxu0 0.0
      %5326 = vmatprep.subr.mxu0 0.0
      %5327 = vmatpush1.msra.mxu0 0.0
      %5328 = vmatprep.subr.mxu0 0.0
      %5329 = vmatpush1.msra.mxu0 0.0
      %5330 = vmatprep.subr.mxu0 0.0
      %5331 = vmatpush1.msra.mxu0 0.0
      %5332 = vmatprep.subr.mxu0 0.0
      %5333 = vmatpush1.msra.mxu0 0.0
      %5334 = vmatprep.subr.mxu0 0.0
      %5335 = vmatpush1.msra.mxu0 0.0
      %5336 = vmatprep.subr.mxu0 0.0
      %5337 = vmatpush1.msra.mxu0 0.0
      %5338 = vmatprep.subr.mxu0 0.0
      %5339 = vmatpush1.msra.mxu0 0.0
      %5340 = vmatprep.subr.mxu0 0.0
      %5341 = vmatpush1.msra.mxu0 0.0
      %5342 = vmatprep.subr.mxu0 0.0
      %5343 = vmatpush1.msra.mxu0 0.0
      %5344 = vmatprep.subr.mxu0 0.0
      %5345 = vmatpush1.msra.mxu0 0.0
      %5346 = vmatprep.subr.mxu0 0.0
      %5347 = vmatpush1.msra.mxu0 0.0
      %5348 = vmatprep.subr.mxu0 0.0
      %5349 = vmatpush1.msra.mxu0 0.0
      %5350 = vmatprep.subr.mxu0 0.0
      %5351 = vmatpush1.msra.mxu0 0.0
      %5352 = vmatprep.subr.mxu0 0.0
      %5353 = vmatpush1.msra.mxu0 0.0
      %5354 = vmatprep.subr.mxu0 0.0
      %5355 = vmatpush1.msra.mxu0 0.0
      %5356 = vmatprep.subr.mxu0 0.0
      %5357 = vmatpush1.msra.mxu0 0.0
      %5358 = vmatprep.subr.mxu0 0.0
      %5359 = vmatpush1.msra.mxu0 0.0
      %5360 = vmatprep.subr.mxu0 0.0
      %5361 = vmatpush1.msra.mxu0 0.0
      %5362 = vmatprep.subr.mxu0 0.0
      %5363 = vmatpush1.msra.mxu0 0.0
      %5364 = vmatprep.subr.mxu0 0.0
      %5365 = vmatpush1.msra.mxu0 0.0
      %5366 = vmatprep.subr.mxu0 0.0
      %5367 = vmatpush1.msra.mxu0 0.0
      %5368 = vmatprep.subr.mxu0 0.0
      %5369 = vmatpush1.msra.mxu0 0.0
      %5370 = vmatprep.subr.mxu0 0.0
      %5371 = vmatpush1.msra.mxu0 0.0
      %5372 = vmatprep.subr.mxu0 0.0
      %5373 = vmatpush1.msra.mxu0 0.0
      %5374 = vmatprep.subr.mxu0 0.0
      %5375 = vmatpush1.msra.mxu0 0.0
      %5376 = vmatprep.subr.mxu0 0.0
      %5377 = vmatpush1.msra.mxu0 0.0
      %5378 = vmatprep.subr.mxu0 0.0
      %5379 = vmatpush1.msra.mxu0 0.0
      %5380 = vmatprep.mubr.f32.mxu0 0.0
      %5381 = vmatmul.mubr.f32.gmra.mrb[0].mxu0 %v5314
      %v5382 = vpop.f32.mrb[0].mxu0
      %v5383 = vadd.f32 0.0, %v5382
      %v5384 = vpop.f32.mrb[0].mxu0
      %5385 = vdwg.mxu0
      %5386 = vrot.lane.b32.xlu0 %v446, 88
      %v5387 = vpop.permute.xlu0 %5386
      %v5390 = vsel %vm472, %v4545, 0
      %5392 = vmatprep.subr.mxu0 0.0
      %5393 = vmatpush1.msra.mxu0 %v5387
      %5394 = vmatprep.subr.mxu0 0.0
      %5395 = vmatpush1.msra.mxu0 0.0
      %5396 = vmatprep.subr.mxu0 0.0
      %5397 = vmatpush1.msra.mxu0 0.0
      %5398 = vmatprep.subr.mxu0 0.0
      %5399 = vmatpush1.msra.mxu0 0.0
      %5400 = vmatprep.subr.mxu0 0.0
      %5401 = vmatpush1.msra.mxu0 0.0
      %5402 = vmatprep.subr.mxu0 0.0
      %5403 = vmatpush1.msra.mxu0 0.0
      %5404 = vmatprep.subr.mxu0 0.0
      %5405 = vmatpush1.msra.mxu0 0.0
      %5406 = vmatprep.subr.mxu0 0.0
      %5407 = vmatpush1.msra.mxu0 0.0
      %5408 = vmatprep.subr.mxu0 0.0
      %5409 = vmatpush1.msra.mxu0 0.0
      %5410 = vmatprep.subr.mxu0 0.0
      %5411 = vmatpush1.msra.mxu0 0.0
      %5412 = vmatprep.subr.mxu0 0.0
      %5413 = vmatpush1.msra.mxu0 0.0
      %5414 = vmatprep.subr.mxu0 0.0
      %5415 = vmatpush1.msra.mxu0 0.0
      %5416 = vmatprep.subr.mxu0 0.0
      %5417 = vmatpush1.msra.mxu0 0.0
      %5418 = vmatprep.subr.mxu0 0.0
      %5419 = vmatpush1.msra.mxu0 0.0
      %5420 = vmatprep.subr.mxu0 0.0
      %5421 = vmatpush1.msra.mxu0 0.0
      %5422 = vmatprep.subr.mxu0 0.0
      %5423 = vmatpush1.msra.mxu0 0.0
      %5424 = vmatprep.subr.mxu0 0.0
      %5425 = vmatpush1.msra.mxu0 0.0
      %5426 = vmatprep.subr.mxu0 0.0
      %5427 = vmatpush1.msra.mxu0 0.0
      %5428 = vmatprep.subr.mxu0 0.0
      %5429 = vmatpush1.msra.mxu0 0.0
      %5430 = vmatprep.subr.mxu0 0.0
      %5431 = vmatpush1.msra.mxu0 0.0
      %5432 = vmatprep.subr.mxu0 0.0
      %5433 = vmatpush1.msra.mxu0 0.0
      %5434 = vmatprep.subr.mxu0 0.0
      %5435 = vmatpush1.msra.mxu0 0.0
      %5436 = vmatprep.subr.mxu0 0.0
      %5437 = vmatpush1.msra.mxu0 0.0
      %5438 = vmatprep.subr.mxu0 0.0
      %5439 = vmatpush1.msra.mxu0 0.0
      %5440 = vmatprep.subr.mxu0 0.0
      %5441 = vmatpush1.msra.mxu0 0.0
      %5442 = vmatprep.subr.mxu0 0.0
      %5443 = vmatpush1.msra.mxu0 0.0
      %5444 = vmatprep.subr.mxu0 0.0
      %5445 = vmatpush1.msra.mxu0 0.0
      %5446 = vmatprep.subr.mxu0 0.0
      %5447 = vmatpush1.msra.mxu0 0.0
      %5448 = vmatprep.subr.mxu0 0.0
      %5449 = vmatpush1.msra.mxu0 0.0
      %5450 = vmatprep.subr.mxu0 0.0
      %5451 = vmatpush1.msra.mxu0 0.0
      %5452 = vmatprep.subr.mxu0 0.0
      %5453 = vmatpush1.msra.mxu0 0.0
      %5454 = vmatprep.subr.mxu0 0.0
      %5455 = vmatpush1.msra.mxu0 0.0
      %5456 = vmatprep.mubr.f32.mxu0 0.0
      %5457 = vmatmul.mubr.f32.gmra.mrb[0].mxu0 %v5390
      %v5458 = vpop.f32.mrb[0].mxu0
      %v5459 = vadd.f32 0.0, %v5458
      %v5460 = vpop.f32.mrb[0].mxu0
      %5461 = vdwg.mxu0
      %5462 = vrot.lane.b32.xlu0 %v451, 88
      %v5463 = vpop.permute.xlu0 %5462
      %v5466 = vsel %vm472, %v4546, 0
      %5468 = vmatprep.subr.mxu0 0.0
      %5469 = vmatpush1.msra.mxu0 %v5463
      %5470 = vmatprep.subr.mxu0 0.0
      %5471 = vmatpush1.msra.mxu0 0.0
      %5472 = vmatprep.subr.mxu0 0.0
      %5473 = vmatpush1.msra.mxu0 0.0
      %5474 = vmatprep.subr.mxu0 0.0
      %5475 = vmatpush1.msra.mxu0 0.0
      %5476 = vmatprep.subr.mxu0 0.0
      %5477 = vmatpush1.msra.mxu0 0.0
      %5478 = vmatprep.subr.mxu0 0.0
      %5479 = vmatpush1.msra.mxu0 0.0
      %5480 = vmatprep.subr.mxu0 0.0
      %5481 = vmatpush1.msra.mxu0 0.0
      %5482 = vmatprep.subr.mxu0 0.0
      %5483 = vmatpush1.msra.mxu0 0.0
      %5484 = vmatprep.subr.mxu0 0.0
      %5485 = vmatpush1.msra.mxu0 0.0
      %5486 = vmatprep.subr.mxu0 0.0
      %5487 = vmatpush1.msra.mxu0 0.0
      %5488 = vmatprep.subr.mxu0 0.0
      %5489 = vmatpush1.msra.mxu0 0.0
      %5490 = vmatprep.subr.mxu0 0.0
      %5491 = vmatpush1.msra.mxu0 0.0
      %5492 = vmatprep.subr.mxu0 0.0
      %5493 = vmatpush1.msra.mxu0 0.0
      %5494 = vmatprep.subr.mxu0 0.0
      %5495 = vmatpush1.msra.mxu0 0.0
      %5496 = vmatprep.subr.mxu0 0.0
      %5497 = vmatpush1.msra.mxu0 0.0
      %5498 = vmatprep.subr.mxu0 0.0
      %5499 = vmatpush1.msra.mxu0 0.0
      %5500 = vmatprep.subr.mxu0 0.0
      %5501 = vmatpush1.msra.mxu0 0.0
      %5502 = vmatprep.subr.mxu0 0.0
      %5503 = vmatpush1.msra.mxu0 0.0
      %5504 = vmatprep.subr.mxu0 0.0
      %5505 = vmatpush1.msra.mxu0 0.0
      %5506 = vmatprep.subr.mxu0 0.0
      %5507 = vmatpush1.msra.mxu0 0.0
      %5508 = vmatprep.subr.mxu0 0.0
      %5509 = vmatpush1.msra.mxu0 0.0
      %5510 = vmatprep.subr.mxu0 0.0
      %5511 = vmatpush1.msra.mxu0 0.0
      %5512 = vmatprep.subr.mxu0 0.0
      %5513 = vmatpush1.msra.mxu0 0.0
      %5514 = vmatprep.subr.mxu0 0.0
      %5515 = vmatpush1.msra.mxu0 0.0
      %5516 = vmatprep.subr.mxu0 0.0
      %5517 = vmatpush1.msra.mxu0 0.0
      %5518 = vmatprep.subr.mxu0 0.0
      %5519 = vmatpush1.msra.mxu0 0.0
      %5520 = vmatprep.subr.mxu0 0.0
      %5521 = vmatpush1.msra.mxu0 0.0
      %5522 = vmatprep.subr.mxu0 0.0
      %5523 = vmatpush1.msra.mxu0 0.0
      %5524 = vmatprep.subr.mxu0 0.0
      %5525 = vmatpush1.msra.mxu0 0.0
      %5526 = vmatprep.subr.mxu0 0.0
      %5527 = vmatpush1.msra.mxu0 0.0
      %5528 = vmatprep.subr.mxu0 0.0
      %5529 = vmatpush1.msra.mxu0 0.0
      %5530 = vmatprep.subr.mxu0 0.0
      %5531 = vmatpush1.msra.mxu0 0.0
      %5532 = vmatprep.mubr.f32.mxu0 0.0
      %5533 = vmatmul.mubr.f32.gmra.mrb[0].mxu0 %v5466
      %v5534 = vpop.f32.mrb[0].mxu0
      %v5535 = vadd.f32 0.0, %v5534
      %v5536 = vpop.f32.mrb[0].mxu0
      %5537 = vdwg.mxu0
      %5538 = vrot.lane.b32.xlu0 %v456, 88
      %v5539 = vpop.permute.xlu0 %5538
      %v5542 = vsel %vm472, %v4547, 0
      %5544 = vmatprep.subr.mxu0 0.0
      %5545 = vmatpush1.msra.mxu0 %v5539
      %5546 = vmatprep.subr.mxu0 0.0
      %5547 = vmatpush1.msra.mxu0 0.0
      %5548 = vmatprep.subr.mxu0 0.0
      %5549 = vmatpush1.msra.mxu0 0.0
      %5550 = vmatprep.subr.mxu0 0.0
      %5551 = vmatpush1.msra.mxu0 0.0
      %5552 = vmatprep.subr.mxu0 0.0
      %5553 = vmatpush1.msra.mxu0 0.0
      %5554 = vmatprep.subr.mxu0 0.0
      %5555 = vmatpush1.msra.mxu0 0.0
      %5556 = vmatprep.subr.mxu0 0.0
      %5557 = vmatpush1.msra.mxu0 0.0
      %5558 = vmatprep.subr.mxu0 0.0
      %5559 = vmatpush1.msra.mxu0 0.0
      %5560 = vmatprep.subr.mxu0 0.0
      %5561 = vmatpush1.msra.mxu0 0.0
      %5562 = vmatprep.subr.mxu0 0.0
      %5563 = vmatpush1.msra.mxu0 0.0
      %5564 = vmatprep.subr.mxu0 0.0
      %5565 = vmatpush1.msra.mxu0 0.0
      %5566 = vmatprep.subr.mxu0 0.0
      %5567 = vmatpush1.msra.mxu0 0.0
      %5568 = vmatprep.subr.mxu0 0.0
      %5569 = vmatpush1.msra.mxu0 0.0
      %5570 = vmatprep.subr.mxu0 0.0
      %5571 = vmatpush1.msra.mxu0 0.0
      %5572 = vmatprep.subr.mxu0 0.0
      %5573 = vmatpush1.msra.mxu0 0.0
      %5574 = vmatprep.subr.mxu0 0.0
      %5575 = vmatpush1.msra.mxu0 0.0
      %5576 = vmatprep.subr.mxu0 0.0
      %5577 = vmatpush1.msra.mxu0 0.0
      %5578 = vmatprep.subr.mxu0 0.0
      %5579 = vmatpush1.msra.mxu0 0.0
      %5580 = vmatprep.subr.mxu0 0.0
      %5581 = vmatpush1.msra.mxu0 0.0
      %5582 = vmatprep.subr.mxu0 0.0
      %5583 = vmatpush1.msra.mxu0 0.0
      %5584 = vmatprep.subr.mxu0 0.0
      %5585 = vmatpush1.msra.mxu0 0.0
      %5586 = vmatprep.subr.mxu0 0.0
      %5587 = vmatpush1.msra.mxu0 0.0
      %5588 = vmatprep.subr.mxu0 0.0
      %5589 = vmatpush1.msra.mxu0 0.0
      %5590 = vmatprep.subr.mxu0 0.0
      %5591 = vmatpush1.msra.mxu0 0.0
      %5592 = vmatprep.subr.mxu0 0.0
      %5593 = vmatpush1.msra.mxu0 0.0
      %5594 = vmatprep.subr.mxu0 0.0
      %5595 = vmatpush1.msra.mxu0 0.0
      %5596 = vmatprep.subr.mxu0 0.0
      %5597 = vmatpush1.msra.mxu0 0.0
      %5598 = vmatprep.subr.mxu0 0.0
      %5599 = vmatpush1.msra.mxu0 0.0
      %5600 = vmatprep.subr.mxu0 0.0
      %5601 = vmatpush1.msra.mxu0 0.0
      %5602 = vmatprep.subr.mxu0 0.0
      %5603 = vmatpush1.msra.mxu0 0.0
      %5604 = vmatprep.subr.mxu0 0.0
      %5605 = vmatpush1.msra.mxu0 0.0
      %5606 = vmatprep.subr.mxu0 0.0
      %5607 = vmatpush1.msra.mxu0 0.0
      %5608 = vmatprep.mubr.f32.mxu0 0.0
      %5609 = vmatmul.mubr.f32.gmra.mrb[0].mxu0 %v5542
      %v5610 = vpop.f32.mrb[0].mxu0
      %v5611 = vadd.f32 0.0, %v5610
      %v5612 = vpop.f32.mrb[0].mxu0
      %5613 = vdwg.mxu0
      %5614 = vrot.lane.b32.xlu0 %v461, 88
      %v5615 = vpop.permute.xlu0 %5614
      %v5618 = vsel %vm472, %v4548, 0
      %5620 = vmatprep.subr.mxu0 0.0
      %5621 = vmatpush1.msra.mxu0 %v5615
      %5622 = vmatprep.subr.mxu0 0.0
      %5623 = vmatpush1.msra.mxu0 0.0
      %5624 = vmatprep.subr.mxu0 0.0
      %5625 = vmatpush1.msra.mxu0 0.0
      %5626 = vmatprep.subr.mxu0 0.0
      %5627 = vmatpush1.msra.mxu0 0.0
      %5628 = vmatprep.subr.mxu0 0.0
      %5629 = vmatpush1.msra.mxu0 0.0
      %5630 = vmatprep.subr.mxu0 0.0
      %5631 = vmatpush1.msra.mxu0 0.0
      %5632 = vmatprep.subr.mxu0 0.0
      %5633 = vmatpush1.msra.mxu0 0.0
      %5634 = vmatprep.subr.mxu0 0.0
      %5635 = vmatpush1.msra.mxu0 0.0
      %5636 = vmatprep.subr.mxu0 0.0
      %5637 = vmatpush1.msra.mxu0 0.0
      %5638 = vmatprep.subr.mxu0 0.0
      %5639 = vmatpush1.msra.mxu0 0.0
      %5640 = vmatprep.subr.mxu0 0.0
      %5641 = vmatpush1.msra.mxu0 0.0
      %5642 = vmatprep.subr.mxu0 0.0
      %5643 = vmatpush1.msra.mxu0 0.0
      %5644 = vmatprep.subr.mxu0 0.0
      %5645 = vmatpush1.msra.mxu0 0.0
      %5646 = vmatprep.subr.mxu0 0.0
      %5647 = vmatpush1.msra.mxu0 0.0
      %5648 = vmatprep.subr.mxu0 0.0
      %5649 = vmatpush1.msra.mxu0 0.0
      %5650 = vmatprep.subr.mxu0 0.0
      %5651 = vmatpush1.msra.mxu0 0.0
      %5652 = vmatprep.subr.mxu0 0.0
      %5653 = vmatpush1.msra.mxu0 0.0
      %5654 = vmatprep.subr.mxu0 0.0
      %5655 = vmatpush1.msra.mxu0 0.0
      %5656 = vmatprep.subr.mxu0 0.0
      %5657 = vmatpush1.msra.mxu0 0.0
      %5658 = vmatprep.subr.mxu0 0.0
      %5659 = vmatpush1.msra.mxu0 0.0
      %5660 = vmatprep.subr.mxu0 0.0
      %5661 = vmatpush1.msra.mxu0 0.0
      %5662 = vmatprep.subr.mxu0 0.0
      %5663 = vmatpush1.msra.mxu0 0.0
      %5664 = vmatprep.subr.mxu0 0.0
      %5665 = vmatpush1.msra.mxu0 0.0
      %5666 = vmatprep.subr.mxu0 0.0
      %5667 = vmatpush1.msra.mxu0 0.0
      %5668 = vmatprep.subr.mxu0 0.0
      %5669 = vmatpush1.msra.mxu0 0.0
      %5670 = vmatprep.subr.mxu0 0.0
      %5671 = vmatpush1.msra.mxu0 0.0
      %5672 = vmatprep.subr.mxu0 0.0
      %5673 = vmatpush1.msra.mxu0 0.0
      %5674 = vmatprep.subr.mxu0 0.0
      %5675 = vmatpush1.msra.mxu0 0.0
      %5676 = vmatprep.subr.mxu0 0.0
      %5677 = vmatpush1.msra.mxu0 0.0
      %5678 = vmatprep.subr.mxu0 0.0
      %5679 = vmatpush1.msra.mxu0 0.0
      %5680 = vmatprep.subr.mxu0 0.0
      %5681 = vmatpush1.msra.mxu0 0.0
      %5682 = vmatprep.subr.mxu0 0.0
      %5683 = vmatpush1.msra.mxu0 0.0
      %5684 = vmatprep.mubr.f32.mxu0 0.0
      %5685 = vmatmul.mubr.f32.gmra.mrb[0].mxu0 %v5618
      %v5686 = vpop.f32.mrb[0].mxu0
      %v5687 = vadd.f32 0.0, %v5686
      %v5688 = vpop.f32.mrb[0].mxu0
      %5689 = vdwg.mxu0
      %5690 = vrot.lane.b32.xlu0 %v466, 88
      %v5691 = vpop.permute.xlu0 %5690
      %v5694 = vsel %vm472, %v4549, 0
      %5696 = vmatprep.subr.mxu0 0.0
      %5697 = vmatpush1.msra.mxu0 %v5691
      %5698 = vmatprep.subr.mxu0 0.0
      %5699 = vmatpush1.msra.mxu0 0.0
      %5700 = vmatprep.subr.mxu0 0.0
      %5701 = vmatpush1.msra.mxu0 0.0
      %5702 = vmatprep.subr.mxu0 0.0
      %5703 = vmatpush1.msra.mxu0 0.0
      %5704 = vmatprep.subr.mxu0 0.0
      %5705 = vmatpush1.msra.mxu0 0.0
      %5706 = vmatprep.subr.mxu0 0.0
      %5707 = vmatpush1.msra.mxu0 0.0
      %5708 = vmatprep.subr.mxu0 0.0
      %5709 = vmatpush1.msra.mxu0 0.0
      %5710 = vmatprep.subr.mxu0 0.0
      %5711 = vmatpush1.msra.mxu0 0.0
      %5712 = vmatprep.subr.mxu0 0.0
      %5713 = vmatpush1.msra.mxu0 0.0
      %5714 = vmatprep.subr.mxu0 0.0
      %5715 = vmatpush1.msra.mxu0 0.0
      %5716 = vmatprep.subr.mxu0 0.0
      %5717 = vmatpush1.msra.mxu0 0.0
      %5718 = vmatprep.subr.mxu0 0.0
      %5719 = vmatpush1.msra.mxu0 0.0
      %5720 = vmatprep.subr.mxu0 0.0
      %5721 = vmatpush1.msra.mxu0 0.0
      %5722 = vmatprep.subr.mxu0 0.0
      %5723 = vmatpush1.msra.mxu0 0.0
      %5724 = vmatprep.subr.mxu0 0.0
      %5725 = vmatpush1.msra.mxu0 0.0
      %5726 = vmatprep.subr.mxu0 0.0
      %5727 = vmatpush1.msra.mxu0 0.0
      %5728 = vmatprep.subr.mxu0 0.0
      %5729 = vmatpush1.msra.mxu0 0.0
      %5730 = vmatprep.subr.mxu0 0.0
      %5731 = vmatpush1.msra.mxu0 0.0
      %5732 = vmatprep.subr.mxu0 0.0
      %5733 = vmatpush1.msra.mxu0 0.0
      %5734 = vmatprep.subr.mxu0 0.0
      %5735 = vmatpush1.msra.mxu0 0.0
      %5736 = vmatprep.subr.mxu0 0.0
      %5737 = vmatpush1.msra.mxu0 0.0
      %5738 = vmatprep.subr.mxu0 0.0
      %5739 = vmatpush1.msra.mxu0 0.0
      %5740 = vmatprep.subr.mxu0 0.0
      %5741 = vmatpush1.msra.mxu0 0.0
      %5742 = vmatprep.subr.mxu0 0.0
      %5743 = vmatpush1.msra.mxu0 0.0
      %5744 = vmatprep.subr.mxu0 0.0
      %5745 = vmatpush1.msra.mxu0 0.0
      %5746 = vmatprep.subr.mxu0 0.0
      %5747 = vmatpush1.msra.mxu0 0.0
      %5748 = vmatprep.subr.mxu0 0.0
      %5749 = vmatpush1.msra.mxu0 0.0
      %5750 = vmatprep.subr.mxu0 0.0
      %5751 = vmatpush1.msra.mxu0 0.0
      %5752 = vmatprep.subr.mxu0 0.0
      %5753 = vmatpush1.msra.mxu0 0.0
      %5754 = vmatprep.subr.mxu0 0.0
      %5755 = vmatpush1.msra.mxu0 0.0
      %5756 = vmatprep.subr.mxu0 0.0
      %5757 = vmatpush1.msra.mxu0 0.0
      %5758 = vmatprep.subr.mxu0 0.0
      %5759 = vmatpush1.msra.mxu0 0.0
      %5760 = vmatprep.mubr.f32.mxu0 0.0
      %5761 = vmatmul.mubr.f32.gmra.mrb[0].mxu0 %v5694
      %v5762 = vpop.f32.mrb[0].mxu0
      %v5763 = vadd.f32 0.0, %v5762
      %v5764 = vpop.f32.mrb[0].mxu0
      %5765 = vdwg.mxu0
      %5782 = vrot.lane.b32.xlu0 %v4623, 8
      %v5783 = vpop.permute.xlu0 %5782
      %5784 = vrot.lane.b32.xlu0 %v4699, 8
      %v5785 = vpop.permute.xlu0 %5784
      %5786 = vrot.lane.b32.xlu0 %v4775, 8
      %v5787 = vpop.permute.xlu0 %5786
      %5788 = vrot.lane.b32.xlu0 %v4851, 8
      %v5789 = vpop.permute.xlu0 %5788
      %5790 = vrot.lane.b32.xlu0 %v4927, 8
      %v5791 = vpop.permute.xlu0 %5790
      %5792 = vrot.lane.b32.xlu0 %v5003, 8
      %v5793 = vpop.permute.xlu0 %5792
      %5794 = vrot.lane.b32.xlu0 %v5079, 8
      %v5795 = vpop.permute.xlu0 %5794
      %5796 = vrot.lane.b32.xlu0 %v5155, 8
      %v5797 = vpop.permute.xlu0 %5796
      %5798 = vrot.lane.b32.xlu0 %v5231, 8
      %v5799 = vpop.permute.xlu0 %5798
      %5800 = vrot.lane.b32.xlu0 %v5307, 8
      %v5801 = vpop.permute.xlu0 %5800
      %5802 = vrot.lane.b32.xlu0 %v5383, 8
      %v5803 = vpop.permute.xlu0 %5802
      %5804 = vrot.lane.b32.xlu0 %v5459, 8
      %v5805 = vpop.permute.xlu0 %5804
      %5806 = vrot.lane.b32.xlu0 %v5535, 8
      %v5807 = vpop.permute.xlu0 %5806
      %5808 = vrot.lane.b32.xlu0 %v5611, 8
      %v5809 = vpop.permute.xlu0 %5808
      %5810 = vrot.lane.b32.xlu0 %v5687, 8
      %v5811 = vpop.permute.xlu0 %5810
      %5812 = vrot.lane.b32.xlu0 %v5763, 8
      %v5813 = vpop.permute.xlu0 %5812
      %v5830 = vsel %vm472, %v1967, %v5783
      %v5831 = vsel %vm472, %v2043, %v5785
      %v5832 = vsel %vm472, %v2119, %v5787
      %v5833 = vsel %vm472, %v2195, %v5789
      %v5834 = vsel %vm472, %v2271, %v5791
      %v5835 = vsel %vm472, %v2347, %v5793
      %v5836 = vsel %vm472, %v2423, %v5795
      %v5837 = vsel %vm472, %v2499, %v5797
      %v5838 = vsel %vm472, %v2575, %v5799
      %v5839 = vsel %vm472, %v2651, %v5801
      %v5840 = vsel %vm472, %v2727, %v5803
      %v5841 = vsel %vm472, %v2803, %v5805
      %v5842 = vsel %vm472, %v2879, %v5807
      %v5843 = vsel %vm472, %v2955, %v5809
      %v5844 = vsel %vm472, %v3031, %v5811
      %v5845 = vsel %vm472, %v3107, %v5813
      %v5846 = vld [vmem:[%s2] sm:$0xff]
      %v5847 = vld [vmem:[%s2 + $0x8] sm:$0xff]
      %v5848 = vld [vmem:[%s3] sm:$0x1]
      %v5850 = vlaneseq
      %v5851 = vshrl.u32 %v5850, 7
      %v5852 = vsub.s32 0, %v5851
      %v5853 = vrot.slane %v5848, %v5852
      %v5856 = vsel %vm275, %v5830, 0
      %v5859 = vsel %vm275, %v5831, 0
      %v5862 = vsel %vm275, %v5832, 0
      %v5865 = vsel %vm275, %v5833, 0
      %v5868 = vsel %vm275, %v5834, 0
      %v5871 = vsel %vm275, %v5835, 0
      %v5874 = vsel %vm275, %v5836, 0
      %v5877 = vsel %vm275, %v5837, 0
      %v5880 = vsel %vm275, %v5838, 0
      %v5883 = vsel %vm275, %v5839, 0
      %v5886 = vsel %vm275, %v5840, 0
      %v5889 = vsel %vm275, %v5841, 0
      %v5892 = vsel %vm275, %v5842, 0
      %v5895 = vsel %vm275, %v5843, 0
      %v5898 = vsel %vm275, %v5844, 0
      %v5901 = vsel %vm275, %v5845, 0
      %5903 = vmatprep.subr.mxu0 0.0
      %5904 = vmatpush1.msra.mxu0 %v5846
      %5905 = vmatprep.subr.mxu0 0.0
      %5906 = vmatpush1.msra.mxu0 %v5847
      %5907 = vmatprep.subr.mxu0 0.0
      %5908 = vmatpush1.msra.mxu0 0.0
      %5909 = vmatprep.subr.mxu0 0.0
      %5910 = vmatpush1.msra.mxu0 0.0
      %5911 = vmatprep.subr.mxu0 0.0
      %5912 = vmatpush1.msra.mxu0 0.0
      %5913 = vmatprep.subr.mxu0 0.0
      %5914 = vmatpush1.msra.mxu0 0.0
      %5915 = vmatprep.subr.mxu0 0.0
      %5916 = vmatpush1.msra.mxu0 0.0
      %5917 = vmatprep.subr.mxu0 0.0
      %5918 = vmatpush1.msra.mxu0 0.0
      %5919 = vmatprep.subr.mxu0 0.0
      %5920 = vmatpush1.msra.mxu0 0.0
      %5921 = vmatprep.subr.mxu0 0.0
      %5922 = vmatpush1.msra.mxu0 0.0
      %5923 = vmatprep.subr.mxu0 0.0
      %5924 = vmatpush1.msra.mxu0 0.0
      %5925 = vmatprep.subr.mxu0 0.0
      %5926 = vmatpush1.msra.mxu0 0.0
      %5927 = vmatprep.subr.mxu0 0.0
      %5928 = vmatpush1.msra.mxu0 0.0
      %5929 = vmatprep.subr.mxu0 0.0
      %5930 = vmatpush1.msra.mxu0 0.0
      %5931 = vmatprep.subr.mxu0 0.0
      %5932 = vmatpush1.msra.mxu0 0.0
      %5933 = vmatprep.subr.mxu0 0.0
      %5934 = vmatpush1.msra.mxu0 0.0
      %5935 = vmatprep.subr.mxu0 0.0
      %5936 = vmatpush1.msra.mxu0 0.0
      %5937 = vmatprep.subr.mxu0 0.0
      %5938 = vmatpush1.msra.mxu0 0.0
      %5939 = vmatprep.subr.mxu0 0.0
      %5940 = vmatpush1.msra.mxu0 0.0
      %5941 = vmatprep.subr.mxu0 0.0
      %5942 = vmatpush1.msra.mxu0 0.0
      %5943 = vmatprep.subr.mxu0 0.0
      %5944 = vmatpush1.msra.mxu0 0.0
      %5945 = vmatprep.subr.mxu0 0.0
      %5946 = vmatpush1.msra.mxu0 0.0
      %5947 = vmatprep.subr.mxu0 0.0
      %5948 = vmatpush1.msra.mxu0 0.0
      %5949 = vmatprep.subr.mxu0 0.0
      %5950 = vmatpush1.msra.mxu0 0.0
      %5951 = vmatprep.subr.mxu0 0.0
      %5952 = vmatpush1.msra.mxu0 0.0
      %5953 = vmatprep.subr.mxu0 0.0
      %5954 = vmatpush1.msra.mxu0 0.0
      %5955 = vmatprep.subr.mxu0 0.0
      %5956 = vmatpush1.msra.mxu0 0.0
      %5957 = vmatprep.subr.mxu0 0.0
      %5958 = vmatpush1.msra.mxu0 0.0
      %5959 = vmatprep.subr.mxu0 0.0
      %5960 = vmatpush1.msra.mxu0 0.0
      %5961 = vmatprep.subr.mxu0 0.0
      %5962 = vmatpush1.msra.mxu0 0.0
      %5963 = vmatprep.subr.mxu0 0.0
      %5964 = vmatpush1.msra.mxu0 0.0
      %5965 = vmatprep.subr.mxu0 0.0
      %5966 = vmatpush1.msra.mxu0 0.0
      %5967 = vmatprep.mubr.f32.mxu0 0.0
      %5968 = vmatmul.mubr.f32.gmra.mrb[0].mxu0 %v5856
      %v5969 = vpop.f32.mrb[0].mxu0
      %v5970 = vadd.f32 %v5853, %v5969
      %v5971 = vpop.f32.mrb[0].mxu0
      %5972 = vmatprep.mubr.f32.mxu0 0.0
      %5973 = vmatmul.mubr.f32.gmra.mrb[0].mxu0 %v5859
      %v5974 = vpop.f32.mrb[0].mxu0
      %v5975 = vadd.f32 %v5853, %v5974
      %v5976 = vpop.f32.mrb[0].mxu0
      %5977 = vmatprep.mubr.f32.mxu0 0.0
      %5978 = vmatmul.mubr.f32.gmra.mrb[0].mxu0 %v5862
      %v5979 = vpop.f32.mrb[0].mxu0
      %v5980 = vadd.f32 %v5853, %v5979
      %v5981 = vpop.f32.mrb[0].mxu0
      %5982 = vmatprep.mubr.f32.mxu0 0.0
      %5983 = vmatmul.mubr.f32.gmra.mrb[0].mxu0 %v5865
      %v5984 = vpop.f32.mrb[0].mxu0
      %v5985 = vadd.f32 %v5853, %v5984
      %v5986 = vpop.f32.mrb[0].mxu0
      %5987 = vmatprep.mubr.f32.mxu0 0.0
      %5988 = vmatmul.mubr.f32.gmra.mrb[0].mxu0 %v5868
      %v5989 = vpop.f32.mrb[0].mxu0
      %v5990 = vadd.f32 %v5853, %v5989
      %v5991 = vpop.f32.mrb[0].mxu0
      %5992 = vmatprep.mubr.f32.mxu0 0.0
      %5993 = vmatmul.mubr.f32.gmra.mrb[0].mxu0 %v5871
      %v5994 = vpop.f32.mrb[0].mxu0
      %v5995 = vadd.f32 %v5853, %v5994
      %v5996 = vpop.f32.mrb[0].mxu0
      %5997 = vmatprep.mubr.f32.mxu0 0.0
      %5998 = vmatmul.mubr.f32.gmra.mrb[0].mxu0 %v5874
      %v5999 = vpop.f32.mrb[0].mxu0
      %v6000 = vadd.f32 %v5853, %v5999
      %v6001 = vpop.f32.mrb[0].mxu0
      %6002 = vmatprep.mubr.f32.mxu0 0.0
      %6003 = vmatmul.mubr.f32.gmra.mrb[0].mxu0 %v5877
      %v6004 = vpop.f32.mrb[0].mxu0
      %v6005 = vadd.f32 %v5853, %v6004
      %v6006 = vpop.f32.mrb[0].mxu0
      %6007 = vmatprep.mubr.f32.mxu0 0.0
      %6008 = vmatmul.mubr.f32.gmra.mrb[0].mxu0 %v5880
      %v6009 = vpop.f32.mrb[0].mxu0
      %v6010 = vadd.f32 %v5853, %v6009
      %v6011 = vpop.f32.mrb[0].mxu0
      %6012 = vmatprep.mubr.f32.mxu0 0.0
      %6013 = vmatmul.mubr.f32.gmra.mrb[0].mxu0 %v5883
      %v6014 = vpop.f32.mrb[0].mxu0
      %v6015 = vadd.f32 %v5853, %v6014
      %v6016 = vpop.f32.mrb[0].mxu0
      %6017 = vmatprep.mubr.f32.mxu0 0.0
      %6018 = vmatmul.mubr.f32.gmra.mrb[0].mxu0 %v5886
      %v6019 = vpop.f32.mrb[0].mxu0
      %v6020 = vadd.f32 %v5853, %v6019
      %v6021 = vpop.f32.mrb[0].mxu0
      %6022 = vmatprep.mubr.f32.mxu0 0.0
      %6023 = vmatmul.mubr.f32.gmra.mrb[0].mxu0 %v5889
      %v6024 = vpop.f32.mrb[0].mxu0
      %v6025 = vadd.f32 %v5853, %v6024
      %v6026 = vpop.f32.mrb[0].mxu0
      %6027 = vmatprep.mubr.f32.mxu0 0.0
      %6028 = vmatmul.mubr.f32.gmra.mrb[0].mxu0 %v5892
      %v6029 = vpop.f32.mrb[0].mxu0
      %v6030 = vadd.f32 %v5853, %v6029
      %v6031 = vpop.f32.mrb[0].mxu0
      %6032 = vmatprep.mubr.f32.mxu0 0.0
      %6033 = vmatmul.mubr.f32.gmra.mrb[0].mxu0 %v5895
      %v6034 = vpop.f32.mrb[0].mxu0
      %v6035 = vadd.f32 %v5853, %v6034
      %v6036 = vpop.f32.mrb[0].mxu0
      %6037 = vmatprep.mubr.f32.mxu0 0.0
      %6038 = vmatmul.mubr.f32.gmra.mrb[0].mxu0 %v5898
      %v6039 = vpop.f32.mrb[0].mxu0
      %v6040 = vadd.f32 %v5853, %v6039
      %v6041 = vpop.f32.mrb[0].mxu0
      %6042 = vmatprep.mubr.f32.mxu0 0.0
      %6043 = vmatmul.mubr.f32.gmra.mrb[0].mxu0 %v5901
      %v6044 = vpop.f32.mrb[0].mxu0
      %v6045 = vadd.f32 %v5853, %v6044
      %v6046 = vpop.f32.mrb[0].mxu0
      %6047 = vdwg.mxu0
      %v6048 = vtanh.pop %v5970
      %v6049 = vtanh.pop %v5975
      %v6050 = vtanh.pop %v5980
      %v6051 = vtanh.pop %v5985
      %v6052 = vtanh.pop %v5990
      %v6053 = vtanh.pop %v5995
      %v6054 = vtanh.pop %v6000
      %v6055 = vtanh.pop %v6005
      %v6056 = vtanh.pop %v6010
      %v6057 = vtanh.pop %v6015
      %v6058 = vtanh.pop %v6020
      %v6059 = vtanh.pop %v6025
      %v6060 = vtanh.pop %v6030
      %v6061 = vtanh.pop %v6035
      %v6062 = vtanh.pop %v6040
      %v6063 = vtanh.pop %v6045
      %v6064 = vld [vmem:[%s4] sm:$0x1]
      %v6066 = vlaneseq
      %v6067 = vshrl.u32 %v6066, 7
      %v6068 = vsub.s32 0, %v6067
      %v6069 = vrot.slane %v6064, %v6068
      %v6071 = vmul.f32 %v6048, %v6069
      %v6072 = vmul.f32 %v6049, %v6069
      %v6073 = vmul.f32 %v6050, %v6069
      %v6074 = vmul.f32 %v6051, %v6069
      %v6075 = vmul.f32 %v6052, %v6069
      %v6076 = vmul.f32 %v6053, %v6069
      %v6077 = vmul.f32 %v6054, %v6069
      %v6078 = vmul.f32 %v6055, %v6069
      %v6079 = vmul.f32 %v6056, %v6069
      %v6080 = vmul.f32 %v6057, %v6069
      %v6081 = vmul.f32 %v6058, %v6069
      %v6082 = vmul.f32 %v6059, %v6069
      %v6083 = vmul.f32 %v6060, %v6069
      %v6084 = vmul.f32 %v6061, %v6069
      %v6085 = vmul.f32 %v6062, %v6069
      %v6086 = vmul.f32 %v6063, %v6069
      %vm6087 = vcmask 261120
      %v6088 = vsel %vm6087, %v6071, 0.0
      %6089 = vadd.xlane.f32.xlu0 %v6088
      %v6090 = vpop.xlane.xlu0 %6089
      %v6091 = vsel %vm6087, %v6072, 0.0
      %6092 = vadd.xlane.f32.xlu0 %v6091
      %v6093 = vpop.xlane.xlu0 %6092
      %v6094 = vsel %vm6087, %v6073, 0.0
      %6095 = vadd.xlane.f32.xlu0 %v6094
      %v6096 = vpop.xlane.xlu0 %6095
      %v6097 = vsel %vm6087, %v6074, 0.0
      %6098 = vadd.xlane.f32.xlu0 %v6097
      %v6099 = vpop.xlane.xlu0 %6098
      %v6100 = vsel %vm6087, %v6075, 0.0
      %6101 = vadd.xlane.f32.xlu0 %v6100
      %v6102 = vpop.xlane.xlu0 %6101
      %v6103 = vsel %vm6087, %v6076, 0.0
      %6104 = vadd.xlane.f32.xlu0 %v6103
      %v6105 = vpop.xlane.xlu0 %6104
      %v6106 = vsel %vm6087, %v6077, 0.0
      %6107 = vadd.xlane.f32.xlu0 %v6106
      %v6108 = vpop.xlane.xlu0 %6107
      %v6109 = vsel %vm6087, %v6078, 0.0
      %6110 = vadd.xlane.f32.xlu0 %v6109
      %v6111 = vpop.xlane.xlu0 %6110
      %v6112 = vsel %vm6087, %v6079, 0.0
      %6113 = vadd.xlane.f32.xlu0 %v6112
      %v6114 = vpop.xlane.xlu0 %6113
      %v6115 = vsel %vm6087, %v6080, 0.0
      %6116 = vadd.xlane.f32.xlu0 %v6115
      %v6117 = vpop.xlane.xlu0 %6116
      %v6118 = vsel %vm6087, %v6081, 0.0
      %6119 = vadd.xlane.f32.xlu0 %v6118
      %v6120 = vpop.xlane.xlu0 %6119
      %v6121 = vsel %vm6087, %v6082, 0.0
      %6122 = vadd.xlane.f32.xlu0 %v6121
      %v6123 = vpop.xlane.xlu0 %6122
      %v6124 = vsel %vm6087, %v6083, 0.0
      %6125 = vadd.xlane.f32.xlu0 %v6124
      %v6126 = vpop.xlane.xlu0 %6125
      %v6127 = vsel %vm6087, %v6084, 0.0
      %6128 = vadd.xlane.f32.xlu0 %v6127
      %v6129 = vpop.xlane.xlu0 %6128
      %v6130 = vsel %vm6087, %v6085, 0.0
      %6131 = vadd.xlane.f32.xlu0 %v6130
      %v6132 = vpop.xlane.xlu0 %6131
      %v6133 = vsel %vm6087, %v6086, 0.0
      %6134 = vadd.xlane.f32.xlu0 %v6133
      %v6135 = vpop.xlane.xlu0 %6134
      %v6136 = vld [vmem:[#allocation2] sm:$0x1]
      %v6138 = vlaneseq
      %v6139 = vshrl.u32 %v6138, 7
      %v6140 = vsub.s32 0, %v6139
      %v6141 = vrot.slane %v6136, %v6140
      %v6143 = vadd.f32 %v6090, %v6141
      %v6144 = vadd.f32 %v6093, %v6141
      %v6145 = vadd.f32 %v6096, %v6141
      %v6146 = vadd.f32 %v6099, %v6141
      %v6147 = vadd.f32 %v6102, %v6141
      %v6148 = vadd.f32 %v6105, %v6141
      %v6149 = vadd.f32 %v6108, %v6141
      %v6150 = vadd.f32 %v6111, %v6141
      %v6151 = vadd.f32 %v6114, %v6141
      %v6152 = vadd.f32 %v6117, %v6141
      %v6153 = vadd.f32 %v6120, %v6141
      %v6154 = vadd.f32 %v6123, %v6141
      %v6155 = vadd.f32 %v6126, %v6141
      %v6156 = vadd.f32 %v6129, %v6141
      %v6157 = vadd.f32 %v6132, %v6141
      %v6158 = vadd.f32 %v6135, %v6141
      %vm6159 = vcmask 7168
      %v6160 = vsel %vm6159, %v6143, -inf
      %v6161 = vrot.slane %v6160, 4
      %v6162 = vmax.f32 %v6160, %v6161
      %v6163 = vrot.slane %v6162, 2
      %v6164 = vmax.f32 %v6162, %v6163
      %v6165 = vrot.slane %v6164, 1
      %v6166 = vmax.f32 %v6164, %v6165
      %v6167 = vsel %vm6159, %v6144, -inf
      %v6168 = vrot.slane %v6167, 4
      %v6169 = vmax.f32 %v6167, %v6168
      %v6170 = vrot.slane %v6169, 2
      %v6171 = vmax.f32 %v6169, %v6170
      %v6172 = vrot.slane %v6171, 1
      %v6173 = vmax.f32 %v6171, %v6172
      %v6174 = vsel %vm6159, %v6145, -inf
      %v6175 = vrot.slane %v6174, 4
      %v6176 = vmax.f32 %v6174, %v6175
      %v6177 = vrot.slane %v6176, 2
      %v6178 = vmax.f32 %v6176, %v6177
      %v6179 = vrot.slane %v6178, 1
      %v6180 = vmax.f32 %v6178, %v6179
      %v6181 = vsel %vm6159, %v6146, -inf
      %v6182 = vrot.slane %v6181, 4
      %v6183 = vmax.f32 %v6181, %v6182
      %v6184 = vrot.slane %v6183, 2
      %v6185 = vmax.f32 %v6183, %v6184
      %v6186 = vrot.slane %v6185, 1
      %v6187 = vmax.f32 %v6185, %v6186
      %v6188 = vsel %vm6159, %v6147, -inf
      %v6189 = vrot.slane %v6188, 4
      %v6190 = vmax.f32 %v6188, %v6189
      %v6191 = vrot.slane %v6190, 2
      %v6192 = vmax.f32 %v6190, %v6191
      %v6193 = vrot.slane %v6192, 1
      %v6194 = vmax.f32 %v6192, %v6193
      %v6195 = vsel %vm6159, %v6148, -inf
      %v6196 = vrot.slane %v6195, 4
      %v6197 = vmax.f32 %v6195, %v6196
      %v6198 = vrot.slane %v6197, 2
      %v6199 = vmax.f32 %v6197, %v6198
      %v6200 = vrot.slane %v6199, 1
      %v6201 = vmax.f32 %v6199, %v6200
      %v6202 = vsel %vm6159, %v6149, -inf
      %v6203 = vrot.slane %v6202, 4
      %v6204 = vmax.f32 %v6202, %v6203
      %v6205 = vrot.slane %v6204, 2
      %v6206 = vmax.f32 %v6204, %v6205
      %v6207 = vrot.slane %v6206, 1
      %v6208 = vmax.f32 %v6206, %v6207
      %v6209 = vsel %vm6159, %v6150, -inf
      %v6210 = vrot.slane %v6209, 4
      %v6211 = vmax.f32 %v6209, %v6210
      %v6212 = vrot.slane %v6211, 2
      %v6213 = vmax.f32 %v6211, %v6212
      %v6214 = vrot.slane %v6213, 1
      %v6215 = vmax.f32 %v6213, %v6214
      %v6216 = vsel %vm6159, %v6151, -inf
      %v6217 = vrot.slane %v6216, 4
      %v6218 = vmax.f32 %v6216, %v6217
      %v6219 = vrot.slane %v6218, 2
      %v6220 = vmax.f32 %v6218, %v6219
      %v6221 = vrot.slane %v6220, 1
      %v6222 = vmax.f32 %v6220, %v6221
      %v6223 = vsel %vm6159, %v6152, -inf
      %v6224 = vrot.slane %v6223, 4
      %v6225 = vmax.f32 %v6223, %v6224
      %v6226 = vrot.slane %v6225, 2
      %v6227 = vmax.f32 %v6225, %v6226
      %v6228 = vrot.slane %v6227, 1
      %v6229 = vmax.f32 %v6227, %v6228
      %v6230 = vsel %vm6159, %v6153, -inf
      %v6231 = vrot.slane %v6230, 4
      %v6232 = vmax.f32 %v6230, %v6231
      %v6233 = vrot.slane %v6232, 2
      %v6234 = vmax.f32 %v6232, %v6233
      %v6235 = vrot.slane %v6234, 1
      %v6236 = vmax.f32 %v6234, %v6235
      %v6237 = vsel %vm6159, %v6154, -inf
      %v6238 = vrot.slane %v6237, 4
      %v6239 = vmax.f32 %v6237, %v6238
      %v6240 = vrot.slane %v6239, 2
      %v6241 = vmax.f32 %v6239, %v6240
      %v6242 = vrot.slane %v6241, 1
      %v6243 = vmax.f32 %v6241, %v6242
      %v6244 = vsel %vm6159, %v6155, -inf
      %v6245 = vrot.slane %v6244, 4
      %v6246 = vmax.f32 %v6244, %v6245
      %v6247 = vrot.slane %v6246, 2
      %v6248 = vmax.f32 %v6246, %v6247
      %v6249 = vrot.slane %v6248, 1
      %v6250 = vmax.f32 %v6248, %v6249
      %v6251 = vsel %vm6159, %v6156, -inf
      %v6252 = vrot.slane %v6251, 4
      %v6253 = vmax.f32 %v6251, %v6252
      %v6254 = vrot.slane %v6253, 2
      %v6255 = vmax.f32 %v6253, %v6254
      %v6256 = vrot.slane %v6255, 1
      %v6257 = vmax.f32 %v6255, %v6256
      %v6258 = vsel %vm6159, %v6157, -inf
      %v6259 = vrot.slane %v6258, 4
      %v6260 = vmax.f32 %v6258, %v6259
      %v6261 = vrot.slane %v6260, 2
      %v6262 = vmax.f32 %v6260, %v6261
      %v6263 = vrot.slane %v6262, 1
      %v6264 = vmax.f32 %v6262, %v6263
      %v6265 = vsel %vm6159, %v6158, -inf
      %v6266 = vrot.slane %v6265, 4
      %v6267 = vmax.f32 %v6265, %v6266
      %v6268 = vrot.slane %v6267, 2
      %v6269 = vmax.f32 %v6267, %v6268
      %v6270 = vrot.slane %v6269, 1
      %v6271 = vmax.f32 %v6269, %v6270
      %v6272 = vsub.f32 %v6143, %v6166
      %v6273 = vsub.f32 %v6144, %v6173
      %v6274 = vsub.f32 %v6145, %v6180
      %v6275 = vsub.f32 %v6146, %v6187
      %v6276 = vsub.f32 %v6147, %v6194
      %v6277 = vsub.f32 %v6148, %v6201
      %v6278 = vsub.f32 %v6149, %v6208
      %v6279 = vsub.f32 %v6150, %v6215
      %v6280 = vsub.f32 %v6151, %v6222
      %v6281 = vsub.f32 %v6152, %v6229
      %v6282 = vsub.f32 %v6153, %v6236
      %v6283 = vsub.f32 %v6154, %v6243
      %v6284 = vsub.f32 %v6155, %v6250
      %v6285 = vsub.f32 %v6156, %v6257
      %v6286 = vsub.f32 %v6157, %v6264
      %v6287 = vsub.f32 %v6158, %v6271
      %v6288 = vmul.f32 %v6272, 1.442695
      %v6289 = vpow.pop %v6288
      %v6290 = vmul.f32 %v6273, 1.442695
      %v6291 = vpow.pop %v6290
      %v6292 = vmul.f32 %v6274, 1.442695
      %v6293 = vpow.pop %v6292
      %v6294 = vmul.f32 %v6275, 1.442695
      %v6295 = vpow.pop %v6294
      %v6296 = vmul.f32 %v6276, 1.442695
      %v6297 = vpow.pop %v6296
      %v6298 = vmul.f32 %v6277, 1.442695
      %v6299 = vpow.pop %v6298
      %v6300 = vmul.f32 %v6278, 1.442695
      %v6301 = vpow.pop %v6300
      %v6302 = vmul.f32 %v6279, 1.442695
      %v6303 = vpow.pop %v6302
      %v6304 = vmul.f32 %v6280, 1.442695
      %v6305 = vpow.pop %v6304
      %v6306 = vmul.f32 %v6281, 1.442695
      %v6307 = vpow.pop %v6306
      %v6308 = vmul.f32 %v6282, 1.442695
      %v6309 = vpow.pop %v6308
      %v6310 = vmul.f32 %v6283, 1.442695
      %v6311 = vpow.pop %v6310
      %v6312 = vmul.f32 %v6284, 1.442695
      %v6313 = vpow.pop %v6312
      %v6314 = vmul.f32 %v6285, 1.442695
      %v6315 = vpow.pop %v6314
      %v6316 = vmul.f32 %v6286, 1.442695
      %v6317 = vpow.pop %v6316
      %v6318 = vmul.f32 %v6287, 1.442695
      %v6319 = vpow.pop %v6318
      %v6320 = vsel %vm6159, %v6289, 0.0
      %v6321 = vrot.slane %v6320, 4
      %v6322 = vadd.f32 %v6320, %v6321
      %v6323 = vrot.slane %v6322, 2
      %v6324 = vadd.f32 %v6322, %v6323
      %v6325 = vrot.slane %v6324, 1
      %v6326 = vadd.f32 %v6324, %v6325
      %v6327 = vsel %vm6159, %v6291, 0.0
      %v6328 = vrot.slane %v6327, 4
      %v6329 = vadd.f32 %v6327, %v6328
      %v6330 = vrot.slane %v6329, 2
      %v6331 = vadd.f32 %v6329, %v6330
      %v6332 = vrot.slane %v6331, 1
      %v6333 = vadd.f32 %v6331, %v6332
      %v6334 = vsel %vm6159, %v6293, 0.0
      %v6335 = vrot.slane %v6334, 4
      %v6336 = vadd.f32 %v6334, %v6335
      %v6337 = vrot.slane %v6336, 2
      %v6338 = vadd.f32 %v6336, %v6337
      %v6339 = vrot.slane %v6338, 1
      %v6340 = vadd.f32 %v6338, %v6339
      %v6341 = vsel %vm6159, %v6295, 0.0
      %v6342 = vrot.slane %v6341, 4
      %v6343 = vadd.f32 %v6341, %v6342
      %v6344 = vrot.slane %v6343, 2
      %v6345 = vadd.f32 %v6343, %v6344
      %v6346 = vrot.slane %v6345, 1
      %v6347 = vadd.f32 %v6345, %v6346
      %v6348 = vsel %vm6159, %v6297, 0.0
      %v6349 = vrot.slane %v6348, 4
      %v6350 = vadd.f32 %v6348, %v6349
      %v6351 = vrot.slane %v6350, 2
      %v6352 = vadd.f32 %v6350, %v6351
      %v6353 = vrot.slane %v6352, 1
      %v6354 = vadd.f32 %v6352, %v6353
      %v6355 = vsel %vm6159, %v6299, 0.0
      %v6356 = vrot.slane %v6355, 4
      %v6357 = vadd.f32 %v6355, %v6356
      %v6358 = vrot.slane %v6357, 2
      %v6359 = vadd.f32 %v6357, %v6358
      %v6360 = vrot.slane %v6359, 1
      %v6361 = vadd.f32 %v6359, %v6360
      %v6362 = vsel %vm6159, %v6301, 0.0
      %v6363 = vrot.slane %v6362, 4
      %v6364 = vadd.f32 %v6362, %v6363
      %v6365 = vrot.slane %v6364, 2
      %v6366 = vadd.f32 %v6364, %v6365
      %v6367 = vrot.slane %v6366, 1
      %v6368 = vadd.f32 %v6366, %v6367
      %v6369 = vsel %vm6159, %v6303, 0.0
      %v6370 = vrot.slane %v6369, 4
      %v6371 = vadd.f32 %v6369, %v6370
      %v6372 = vrot.slane %v6371, 2
      %v6373 = vadd.f32 %v6371, %v6372
      %v6374 = vrot.slane %v6373, 1
      %v6375 = vadd.f32 %v6373, %v6374
      %v6376 = vsel %vm6159, %v6305, 0.0
      %v6377 = vrot.slane %v6376, 4
      %v6378 = vadd.f32 %v6376, %v6377
      %v6379 = vrot.slane %v6378, 2
      %v6380 = vadd.f32 %v6378, %v6379
      %v6381 = vrot.slane %v6380, 1
      %v6382 = vadd.f32 %v6380, %v6381
      %v6383 = vsel %vm6159, %v6307, 0.0
      %v6384 = vrot.slane %v6383, 4
      %v6385 = vadd.f32 %v6383, %v6384
      %v6386 = vrot.slane %v6385, 2
      %v6387 = vadd.f32 %v6385, %v6386
      %v6388 = vrot.slane %v6387, 1
      %v6389 = vadd.f32 %v6387, %v6388
      %v6390 = vsel %vm6159, %v6309, 0.0
      %v6391 = vrot.slane %v6390, 4
      %v6392 = vadd.f32 %v6390, %v6391
      %v6393 = vrot.slane %v6392, 2
      %v6394 = vadd.f32 %v6392, %v6393
      %v6395 = vrot.slane %v6394, 1
      %v6396 = vadd.f32 %v6394, %v6395
      %v6397 = vsel %vm6159, %v6311, 0.0
      %v6398 = vrot.slane %v6397, 4
      %v6399 = vadd.f32 %v6397, %v6398
      %v6400 = vrot.slane %v6399, 2
      %v6401 = vadd.f32 %v6399, %v6400
      %v6402 = vrot.slane %v6401, 1
      %v6403 = vadd.f32 %v6401, %v6402
      %v6404 = vsel %vm6159, %v6313, 0.0
      %v6405 = vrot.slane %v6404, 4
      %v6406 = vadd.f32 %v6404, %v6405
      %v6407 = vrot.slane %v6406, 2
      %v6408 = vadd.f32 %v6406, %v6407
      %v6409 = vrot.slane %v6408, 1
      %v6410 = vadd.f32 %v6408, %v6409
      %v6411 = vsel %vm6159, %v6315, 0.0
      %v6412 = vrot.slane %v6411, 4
      %v6413 = vadd.f32 %v6411, %v6412
      %v6414 = vrot.slane %v6413, 2
      %v6415 = vadd.f32 %v6413, %v6414
      %v6416 = vrot.slane %v6415, 1
      %v6417 = vadd.f32 %v6415, %v6416
      %v6418 = vsel %vm6159, %v6317, 0.0
      %v6419 = vrot.slane %v6418, 4
      %v6420 = vadd.f32 %v6418, %v6419
      %v6421 = vrot.slane %v6420, 2
      %v6422 = vadd.f32 %v6420, %v6421
      %v6423 = vrot.slane %v6422, 1
      %v6424 = vadd.f32 %v6422, %v6423
      %v6425 = vsel %vm6159, %v6319, 0.0
      %v6426 = vrot.slane %v6425, 4
      %v6427 = vadd.f32 %v6425, %v6426
      %v6428 = vrot.slane %v6427, 2
      %v6429 = vadd.f32 %v6427, %v6428
      %v6430 = vrot.slane %v6429, 1
      %v6431 = vadd.f32 %v6429, %v6430
      %v6432 = vrcp.pop %v6326
      %v6433 = vrcp.pop %v6333
      %v6434 = vrcp.pop %v6340
      %v6435 = vrcp.pop %v6347
      %v6436 = vrcp.pop %v6354
      %v6437 = vrcp.pop %v6361
      %v6438 = vrcp.pop %v6368
      %v6439 = vrcp.pop %v6375
      %v6440 = vrcp.pop %v6382
      %v6441 = vrcp.pop %v6389
      %v6442 = vrcp.pop %v6396
      %v6443 = vrcp.pop %v6403
      %v6444 = vrcp.pop %v6410
      %v6445 = vrcp.pop %v6417
      %v6446 = vrcp.pop %v6424
      %v6447 = vrcp.pop %v6431
      %v6448 = vmul.f32 %v6289, %v6432
      %v6449 = vmul.f32 %v6291, %v6433
      %v6450 = vmul.f32 %v6293, %v6434
      %v6451 = vmul.f32 %v6295, %v6435
      %v6452 = vmul.f32 %v6297, %v6436
      %v6453 = vmul.f32 %v6299, %v6437
      %v6454 = vmul.f32 %v6301, %v6438
      %v6455 = vmul.f32 %v6303, %v6439
      %v6456 = vmul.f32 %v6305, %v6440
      %v6457 = vmul.f32 %v6307, %v6441
      %v6458 = vmul.f32 %v6309, %v6442
      %v6459 = vmul.f32 %v6311, %v6443
      %v6460 = vmul.f32 %v6313, %v6444
      %v6461 = vmul.f32 %v6315, %v6445
      %v6462 = vmul.f32 %v6317, %v6446
      %v6463 = vmul.f32 %v6319, %v6447
      %6465 = vset.pattern.permute.xlu0 0
      %6466 = vperm.xlu0 %6465, %v6448
      %v6467 = vpop.permute.xlu0 %6466
      %6470 = vset.pattern.permute.xlu0 0
      %6471 = vperm.xlu0 %6470, %v6449
      %v6472 = vpop.permute.xlu0 %6471
      %6475 = vset.pattern.permute.xlu0 0
      %6476 = vperm.xlu0 %6475, %v6450
      %v6477 = vpop.permute.xlu0 %6476
      %6480 = vset.pattern.permute.xlu0 0
      %6481 = vperm.xlu0 %6480, %v6451
      %v6482 = vpop.permute.xlu0 %6481
      %6485 = vset.pattern.permute.xlu0 0
      %6486 = vperm.xlu0 %6485, %v6452
      %v6487 = vpop.permute.xlu0 %6486
      %6490 = vset.pattern.permute.xlu0 0
      %6491 = vperm.xlu0 %6490, %v6453
      %v6492 = vpop.permute.xlu0 %6491
      %6495 = vset.pattern.permute.xlu0 0
      %6496 = vperm.xlu0 %6495, %v6454
      %v6497 = vpop.permute.xlu0 %6496
      %6500 = vset.pattern.permute.xlu0 0
      %6501 = vperm.xlu0 %6500, %v6455
      %v6502 = vpop.permute.xlu0 %6501
      %6505 = vset.pattern.permute.xlu0 0
      %6506 = vperm.xlu0 %6505, %v6456
      %v6507 = vpop.permute.xlu0 %6506
      %6510 = vset.pattern.permute.xlu0 0
      %6511 = vperm.xlu0 %6510, %v6457
      %v6512 = vpop.permute.xlu0 %6511
      %6515 = vset.pattern.permute.xlu0 0
      %6516 = vperm.xlu0 %6515, %v6458
      %v6517 = vpop.permute.xlu0 %6516
      %6520 = vset.pattern.permute.xlu0 0
      %6521 = vperm.xlu0 %6520, %v6459
      %v6522 = vpop.permute.xlu0 %6521
      %6525 = vset.pattern.permute.xlu0 0
      %6526 = vperm.xlu0 %6525, %v6460
      %v6527 = vpop.permute.xlu0 %6526
      %6530 = vset.pattern.permute.xlu0 0
      %6531 = vperm.xlu0 %6530, %v6461
      %v6532 = vpop.permute.xlu0 %6531
      %6535 = vset.pattern.permute.xlu0 0
      %6536 = vperm.xlu0 %6535, %v6462
      %v6537 = vpop.permute.xlu0 %6536
      %6540 = vset.pattern.permute.xlu0 0
      %6541 = vperm.xlu0 %6540, %v6463
      %v6542 = vpop.permute.xlu0 %6541
      %v6544 = vmul.f32 %v5830, %v6467
      %v6545 = vmul.f32 %v5831, %v6472
      %v6546 = vmul.f32 %v5832, %v6477
      %v6547 = vmul.f32 %v5833, %v6482
      %v6548 = vmul.f32 %v5834, %v6487
      %v6549 = vmul.f32 %v5835, %v6492
      %v6550 = vmul.f32 %v5836, %v6497
      %v6551 = vmul.f32 %v5837, %v6502
      %v6552 = vmul.f32 %v5838, %v6507
      %v6553 = vmul.f32 %v5839, %v6512
      %v6554 = vmul.f32 %v5840, %v6517
      %v6555 = vmul.f32 %v5841, %v6522
      %v6556 = vmul.f32 %v5842, %v6527
      %v6557 = vmul.f32 %v5843, %v6532
      %v6558 = vmul.f32 %v5844, %v6537
      %v6559 = vmul.f32 %v5845, %v6542
      %v6560 = vsel %vm275, %v6544, 0.0
      %v6561 = vrot.slane %v6560, 4
      %v6562 = vadd.f32 %v6560, %v6561
      %v6563 = vrot.slane %v6562, 2
      %v6564 = vadd.f32 %v6562, %v6563
      %v6565 = vrot.slane %v6564, 1
      %v6566 = vadd.f32 %v6564, %v6565
      %v6567 = vsel %vm275, %v6545, 0.0
      %v6568 = vrot.slane %v6567, 4
      %v6569 = vadd.f32 %v6567, %v6568
      %v6570 = vrot.slane %v6569, 2
      %v6571 = vadd.f32 %v6569, %v6570
      %v6572 = vrot.slane %v6571, 1
      %v6573 = vadd.f32 %v6571, %v6572
      %v6574 = vsel %vm275, %v6546, 0.0
      %v6575 = vrot.slane %v6574, 4
      %v6576 = vadd.f32 %v6574, %v6575
      %v6577 = vrot.slane %v6576, 2
      %v6578 = vadd.f32 %v6576, %v6577
      %v6579 = vrot.slane %v6578, 1
      %v6580 = vadd.f32 %v6578, %v6579
      %v6581 = vsel %vm275, %v6547, 0.0
      %v6582 = vrot.slane %v6581, 4
      %v6583 = vadd.f32 %v6581, %v6582
      %v6584 = vrot.slane %v6583, 2
      %v6585 = vadd.f32 %v6583, %v6584
      %v6586 = vrot.slane %v6585, 1
      %v6587 = vadd.f32 %v6585, %v6586
      %v6588 = vsel %vm275, %v6548, 0.0
      %v6589 = vrot.slane %v6588, 4
      %v6590 = vadd.f32 %v6588, %v6589
      %v6591 = vrot.slane %v6590, 2
      %v6592 = vadd.f32 %v6590, %v6591
      %v6593 = vrot.slane %v6592, 1
      %v6594 = vadd.f32 %v6592, %v6593
      %v6595 = vsel %vm275, %v6549, 0.0
      %v6596 = vrot.slane %v6595, 4
      %v6597 = vadd.f32 %v6595, %v6596
      %v6598 = vrot.slane %v6597, 2
      %v6599 = vadd.f32 %v6597, %v6598
      %v6600 = vrot.slane %v6599, 1
      %v6601 = vadd.f32 %v6599, %v6600
      %v6602 = vsel %vm275, %v6550, 0.0
      %v6603 = vrot.slane %v6602, 4
      %v6604 = vadd.f32 %v6602, %v6603
      %v6605 = vrot.slane %v6604, 2
      %v6606 = vadd.f32 %v6604, %v6605
      %v6607 = vrot.slane %v6606, 1
      %v6608 = vadd.f32 %v6606, %v6607
      %v6609 = vsel %vm275, %v6551, 0.0
      %v6610 = vrot.slane %v6609, 4
      %v6611 = vadd.f32 %v6609, %v6610
      %v6612 = vrot.slane %v6611, 2
      %v6613 = vadd.f32 %v6611, %v6612
      %v6614 = vrot.slane %v6613, 1
      %v6615 = vadd.f32 %v6613, %v6614
      %v6616 = vsel %vm275, %v6552, 0.0
      %v6617 = vrot.slane %v6616, 4
      %v6618 = vadd.f32 %v6616, %v6617
      %v6619 = vrot.slane %v6618, 2
      %v6620 = vadd.f32 %v6618, %v6619
      %v6621 = vrot.slane %v6620, 1
      %v6622 = vadd.f32 %v6620, %v6621
      %v6623 = vsel %vm275, %v6553, 0.0
      %v6624 = vrot.slane %v6623, 4
      %v6625 = vadd.f32 %v6623, %v6624
      %v6626 = vrot.slane %v6625, 2
      %v6627 = vadd.f32 %v6625, %v6626
      %v6628 = vrot.slane %v6627, 1
      %v6629 = vadd.f32 %v6627, %v6628
      %v6630 = vsel %vm275, %v6554, 0.0
      %v6631 = vrot.slane %v6630, 4
      %v6632 = vadd.f32 %v6630, %v6631
      %v6633 = vrot.slane %v6632, 2
      %v6634 = vadd.f32 %v6632, %v6633
      %v6635 = vrot.slane %v6634, 1
      %v6636 = vadd.f32 %v6634, %v6635
      %v6637 = vsel %vm275, %v6555, 0.0
      %v6638 = vrot.slane %v6637, 4
      %v6639 = vadd.f32 %v6637, %v6638
      %v6640 = vrot.slane %v6639, 2
      %v6641 = vadd.f32 %v6639, %v6640
      %v6642 = vrot.slane %v6641, 1
      %v6643 = vadd.f32 %v6641, %v6642
      %v6644 = vsel %vm275, %v6556, 0.0
      %v6645 = vrot.slane %v6644, 4
      %v6646 = vadd.f32 %v6644, %v6645
      %v6647 = vrot.slane %v6646, 2
      %v6648 = vadd.f32 %v6646, %v6647
      %v6649 = vrot.slane %v6648, 1
      %v6650 = vadd.f32 %v6648, %v6649
      %v6651 = vsel %vm275, %v6557, 0.0
      %v6652 = vrot.slane %v6651, 4
      %v6653 = vadd.f32 %v6651, %v6652
      %v6654 = vrot.slane %v6653, 2
      %v6655 = vadd.f32 %v6653, %v6654
      %v6656 = vrot.slane %v6655, 1
      %v6657 = vadd.f32 %v6655, %v6656
      %v6658 = vsel %vm275, %v6558, 0.0
      %v6659 = vrot.slane %v6658, 4
      %v6660 = vadd.f32 %v6658, %v6659
      %v6661 = vrot.slane %v6660, 2
      %v6662 = vadd.f32 %v6660, %v6661
      %v6663 = vrot.slane %v6662, 1
      %v6664 = vadd.f32 %v6662, %v6663
      %v6665 = vsel %vm275, %v6559, 0.0
      %v6666 = vrot.slane %v6665, 4
      %v6667 = vadd.f32 %v6665, %v6666
      %v6668 = vrot.slane %v6667, 2
      %v6669 = vadd.f32 %v6667, %v6668
      %v6670 = vrot.slane %v6669, 1
      %v6671 = vadd.f32 %v6669, %v6670
      %vm6688 = vcmask 1041409
      %v6689 = vsel %vm6688, %v6573, %v6566
      %vm6690 = vcmask 1042434
      %v6691 = vsel %vm6690, %v6580, %v6689
      %vm6692 = vcmask 1043459
      %v6693 = vsel %vm6692, %v6587, %v6691
      %vm6694 = vcmask 1044484
      %v6695 = vsel %vm6694, %v6594, %v6693
      %vm6696 = vcmask 1045509
      %v6697 = vsel %vm6696, %v6601, %v6695
      %vm6698 = vcmask 1046534
      %v6699 = vsel %vm6698, %v6608, %v6697
      %vm6700 = vcmask 1047559
      %v6701 = vsel %vm6700, %v6615, %v6699
      %v6702 = vsel %vm6688, %v6629, %v6622
      %v6703 = vsel %vm6690, %v6636, %v6702
      %v6704 = vsel %vm6692, %v6643, %v6703
      %v6705 = vsel %vm6694, %v6650, %v6704
      %v6706 = vsel %vm6696, %v6657, %v6705
      %v6707 = vsel %vm6698, %v6664, %v6706
      %v6708 = vsel %vm6700, %v6671, %v6707
      %6711 = vst.msk [vmem:[%s255] sm:$0xff] %vm275, %v6701
      %6712 = vst.msk [vmem:[%s255 + $0x8] sm:$0xff] %vm275, %v6708
      %s6713 = smul.u32 2, %s19
      %p6714 = scmp.lt.s32.totalorder %s6713, 3
      %s6715 = scalar_select %p6714, %s6713, 3
      %s6716 = smul.addr %s6715, 8
      %s6717 = scalar_lea.vmem %s6, %s6716
      // Predicated region
      $region45: #{tpu_custom_call.1} parent=43 // pred_check
        %p6718 = pneg %p168
      $region46: #{tpu_custom_call.1} parent=43 // pred_check_branch
        %6720 = sbr.rel (%p6718) target = $region48
      $region47: #{tpu_custom_call.1} parent=43 // pred_region
        %s6721 = smul.u32 2, %s19
      $region48: #{tpu_custom_call.1} parent=43 // pred_fallthru
        _
    $region44: #{tpu_custom_call.1} parent=5 // pred_fallthru
      _
    %p6722 = scmp.le.s32.totalorder 2, %s14
    // Predicated region
    $region49: #{tpu_custom_call.1} parent=5 // pred_check
      %p6723 = pneg %p6722
    $region50: #{tpu_custom_call.1} parent=5 // pred_check_branch
      %6725 = sbr.rel (%p6723) target = $region52
    $region51: #{tpu_custom_call.1} parent=5 // pred_region
      %s6726 = ssub.s32 %s14, 2
      // Predicated region
      $region53: #{tpu_custom_call.1} parent=51 // pred_check
        %p6727 = pneg %p174
      $region54: #{tpu_custom_call.1} parent=51 // pred_check_branch
        %6729 = sbr.rel (%p6727) target = $region56
      $region55: #{tpu_custom_call.1} parent=51 // pred_region
        %s6730 = smul.u32 2, %s20
        %p6731 = scmp.lt.s32.totalorder %s6730, 3
        %s6732 = scalar_select %p6731, %s6730, 3
        %s6733 = smul.addr %s6732, 8
        %s6734 = scalar_lea.vmem %s6, %s6733
      $region56: #{tpu_custom_call.1} parent=51 // pred_fallthru
        _
    $region52: #{tpu_custom_call.1} parent=5 // pred_fallthru
      _
  $region6: #{tpu_custom_call.1} parent=0 // loop_footer
    %s18 = sadd.s32 1, %s14
  $region7: #{tpu_custom_call.1} parent=0 // loop_footer_branch
    %13 = sbr.rel target = $region3
  $region8: #{tpu_custom_call.1} parent=0 // loop_exit
    _

</llo_original>
